<compile_context>
chip_gen: v5e
topology: v5e:2x2
jax: 0.10.0
libtpu: 0.0.40
codegen_flags: <defaults>
</compile_context>

<pallas_src>
import jax
import jax.numpy as jnp
from jax import lax
from jax.experimental import pallas as pl
from jax.experimental.pallas import tpu as pltpu

NEG_SLOPE = 0.2


def _leaky_relu(x):
    return jnp.where(x > 0, x, NEG_SLOPE * x)


def _disc_kernel(x_ref,
                 w1_ref, b1_ref, w2_ref, b2_ref, w3_ref, b3_ref, w4_ref, b4_ref,
                 wf1_ref, bf1_ref, wf2_ref, bf2_ref,
                 o_ref,
                 a1_ref, a2_ref, p1_ref, a3_ref, a4_ref):
    # x_ref : (1, 34, 36, 3)  sample n, H padded by 1 and W padded by 2 (see wrapper)
    # a1_ref: (34, 34, 16)    conv1 output with zero border == conv2's pad=1
    # a2_ref: (32, 32, 32)    conv2 output
    # p1_ref: (16, 16, 32)    maxpool(2,2) output
    # a3_ref: (14, 14, 32)    conv3 output
    # a4_ref: (10, 10, 64)    conv4 output
    # o_ref : (1, 1, 1)       final logit for sample n
    f32 = jnp.float32

    def conv_rows(read, write, w_ref, b_ref, Ho, Wo, KH, KW):
        # Stride-1 valid conv + LeakyReLU, one output row per fori iteration.
        cout = w_ref.shape[-1]

        def body(i, carry):
            acc = jnp.zeros((Wo, cout), f32)
            for dy in range(KH):
                for dx in range(KW):
                    acc = acc + jnp.dot(read(i + dy, dx, Wo), w_ref[dy, dx],
                                        preferred_element_type=f32)
            write(i, _leaky_relu(acc + b_ref[...]))
            return carry

        lax.fori_loop(0, Ho, body, 0)

    # ---------------- conv1: 3x3, 3->16, pad=1, + LeakyReLU ----------------
    # Writes directly into the zero-bordered buffer that conv2 (pad=1) reads.
    a1_ref[0] = jnp.zeros((34, 16), f32)
    a1_ref[33] = jnp.zeros((34, 16), f32)
    col = lax.broadcasted_iota(jnp.int32, (34, 1), 0)
    edge = jnp.where((col > 0) & (col < 33), f32(1.0), f32(0.0))  # zero W-border

    def read1(r, dx, wo):
        return x_ref[0, r, pl.ds(dx, wo), :]                      # (34, 3)

    def write1(i, row):            # row: (34, 16); cols 0/33 are over-padding
        a1_ref[i + 1] = row * edge                                # -> exact zeros

    conv_rows(read1, write1, w1_ref, b1_ref, Ho=32, Wo=34, KH=3, KW=3)

    # ---------------- conv2: 3x3, 16->32, pad=1 (via a1 border) ------------
    def read2(r, dx, wo):
        return a1_ref[r, pl.ds(dx, wo), :]                        # (32, 16)

    def write2(i, row):
        a2_ref[i] = row

    conv_rows(read2, write2, w2_ref, b2_ref, Ho=32, Wo=32, KH=3, KW=3)

    # ---------------- maxpool 2x2 stride 2: (32,32,32) -> (16,16,32) -------
    def pool1_body(i, carry):
        m = jnp.maximum(a2_ref[2 * i, pl.ds(0, 16, stride=2), :],
                        a2_ref[2 * i, pl.ds(1, 16, stride=2), :])
        m = jnp.maximum(m, a2_ref[2 * i + 1, pl.ds(0, 16, stride=2), :])
        m = jnp.maximum(m, a2_ref[2 * i + 1, pl.ds(1, 16, stride=2), :])
        p1_ref[i] = m                                             # (16, 32)
        return carry

    lax.fori_loop(0, 16, pool1_body, 0)

    # ---------------- conv3: 3x3, 32->32, pad=0 ----------------------------
    def read3(r, dx, wo):
        return p1_ref[r, pl.ds(dx, wo), :]                        # (14, 32)

    def write3(i, row):
        a3_ref[i] = row

    conv_rows(read3, write3, w3_ref, b3_ref, Ho=14, Wo=14, KH=3, KW=3)

    # ---------------- conv4: 5x5, 32->64, pad=0 ----------------------------
    def read4(r, dx, wo):
        return a3_ref[r, pl.ds(dx, wo), :]                        # (10, 32)

    def write4(i, row):
        a4_ref[i] = row

    conv_rows(read4, write4, w4_ref, b4_ref, Ho=10, Wo=10, KH=5, KW=5)

    # ---- maxpool 3x3 stride 2 fused with Flatten + Linear(1024,256) -------
    # wf1_ref is pre-permuted to (ph, pw, c, 256) == NHWC flatten order, so no
    # transpose/flatten of the feature map is ever materialized.
    f1 = jnp.zeros((1, 256), f32)
    for ph in range(4):
        for pw in range(4):
            v = a4_ref[2 * ph, pl.ds(2 * pw, 1), :]               # (1, 64)
            for dy in range(3):
                for dx in range(3):
                    if dy == 0 and dx == 0:
                        continue
                    v = jnp.maximum(
                        v, a4_ref[2 * ph + dy, pl.ds(2 * pw + dx, 1), :])
            f1 = f1 + jnp.dot(v, wf1_ref[ph, pw],
                              preferred_element_type=f32)
    h1 = _leaky_relu(f1 + bf1_ref[...])                           # (1, 256)

    # ---------------- Linear(256, 1): lane reduction ------------------------
    o_ref[0] = jnp.sum(h1 * wf2_ref[...], axis=-1, keepdims=True) + bf2_ref[...]


@jax.jit
def discriminator_forward(params, x_nchw):
    # x_nchw: (N, 3, 32, 32) float32 (PyTorch conv input layout)
    x = jnp.transpose(x_nchw, (0, 2, 3, 1)).astype(jnp.float32)   # -> NHWC
    # H padded by 1 (conv1's pad=1); W padded by 2 so conv1 can directly emit
    # the 34-wide rows of conv2's zero-padded input (edges re-zeroed in-kernel).
    x = jnp.pad(x, ((0, 0), (1, 1), (2, 2), (0, 0)))              # (N, 34, 36, 3)
    N = x.shape[0]

    w1, b1 = params["c1"]
    w2, b2 = params["c2"]
    w3, b3 = params["c3"]
    w4, b4 = params["c4"]
    wf1, bf1 = params["f1"]
    wf2, bf2 = params["f2"]

    def whole(a):  # whole-array block, same block for every grid step
        nd = a.ndim
        return pl.BlockSpec(a.shape, lambda n, _nd=nd: (0,) * _nd)

    out = pl.pallas_call(
        _disc_kernel,
        out_shape=jax.ShapeDtypeStruct((N, 1, 1), jnp.float32),
        grid=(N,),
        in_specs=[
            pl.BlockSpec((1, 34, 36, 3), lambda n: (n, 0, 0, 0)),
            whole(w1), whole(b1), whole(w2), whole(b2),
            whole(w3), whole(b3), whole(w4), whole(b4),
            whole(wf1), whole(bf1), whole(wf2), whole(bf2),
        ],
        out_specs=pl.BlockSpec((1, 1, 1), lambda n: (n, 0, 0)),
        scratch_shapes=[
            pltpu.VMEM((34, 34, 16), jnp.float32),   # conv1 out (padded for conv2)
            pltpu.VMEM((32, 32, 32), jnp.float32),   # conv2 out
            pltpu.VMEM((16, 16, 32), jnp.float32),   # pool1 out
            pltpu.VMEM((14, 14, 32), jnp.float32),   # conv3 out
            pltpu.VMEM((10, 10, 64), jnp.float32),   # conv4 out
        ],
        compiler_params=pltpu.CompilerParams(
            dimension_semantics=("parallel",)),      # v7x: samples across 2 TCs
    )(x, w1, b1, w2, b2, w3, b3, w4, b4, wf1, bf1, wf2, bf2)
    return out.reshape(N, 1)


# -------- Parameters (deterministic; PyTorch shapes -> kernel layout) --------
def init_params(key):
    ks = jax.random.split(key, 12)

    def convp(kw_, kb_, cout, cin, kh, kw):
        w = jax.random.normal(kw_, (cout, cin, kh, kw), jnp.float32) * 0.05
        b = jax.random.normal(kb_, (cout,), jnp.float32) * 0.05
        # torch (Cout, Cin, KH, KW) -> kernel (KH, KW, Cin, Cout)
        return jnp.transpose(w, (2, 3, 1, 0)), b.reshape(1, cout)

    def f1p(kw_, kb_):
        # torch Linear(1024, 256); input index = c*16 + h*4 + w (NCHW flatten).
        w = jax.random.normal(kw_, (256, 1024), jnp.float32) * 0.05
        b = jax.random.normal(kb_, (256,), jnp.float32) * 0.05
        # (Dout, C, H, W) -> (H, W, C, Dout): rows permuted to NHWC flatten order.
        w = jnp.transpose(w.reshape(256, 64, 4, 4), (2, 3, 1, 0))
        return w, b.reshape(1, 256)

    def f2p(kw_, kb_):
        w = jax.random.normal(kw_, (1, 256), jnp.float32) * 0.05
        b = jax.random.normal(kb_, (1,), jnp.float32) * 0.05
        return w, b.reshape(1, 1)

    return {
        "c1": convp(ks[0], ks[1], 16, 3, 3, 3),
        "c2": convp(ks[2], ks[3], 32, 16, 3, 3),
        "c3": convp(ks[4], ks[5], 32, 32, 3, 3),
        "c4": convp(ks[6], ks[7], 64, 32, 5, 5),
        "f1": f1p(ks[8], ks[9]),
        "f2": f2p(ks[10], ks[11]),
    }


if __name__ == "__main__":
    key = jax.random.PRNGKey(0)
    pkey, xkey = jax.random.split(key)
    params = init_params(pkey)
    # Spatial size fixed at 32x32 by nn.Linear(1024, 256) (= 64 * 4 * 4); batch = 2.
    x = jax.random.normal(xkey, (2, 3, 32, 32), jnp.float32)
    out = jax.block_until_ready(discriminator_forward(params, x))
    assert out.shape == (2, 1)
    assert bool(jnp.all(jnp.isfinite(out)))
    print("KERNEL_OK")
</pallas_src>

<mosaic_0001>
module attributes {stable_mosaic.version = 11 : i64} {
  func.func @_disc_kernel(%arg0: i32, %arg1: memref<1x34x36x3xf32, #tpu.memory_space<vmem>>, %arg2: memref<3x3x3x16xf32, #tpu.memory_space<vmem>>, %arg3: memref<1x16xf32, #tpu.memory_space<vmem>>, %arg4: memref<3x3x16x32xf32, #tpu.memory_space<vmem>>, %arg5: memref<1x32xf32, #tpu.memory_space<vmem>>, %arg6: memref<3x3x32x32xf32, #tpu.memory_space<vmem>>, %arg7: memref<1x32xf32, #tpu.memory_space<vmem>>, %arg8: memref<5x5x32x64xf32, #tpu.memory_space<vmem>>, %arg9: memref<1x64xf32, #tpu.memory_space<vmem>>, %arg10: memref<4x4x64x256xf32, #tpu.memory_space<vmem>>, %arg11: memref<1x256xf32, #tpu.memory_space<vmem>>, %arg12: memref<1x256xf32, #tpu.memory_space<vmem>>, %arg13: memref<1x1xf32, #tpu.memory_space<vmem>>, %arg14: memref<1x1x1xf32, #tpu.memory_space<vmem>>, %arg15: memref<34x34x16xf32, #tpu.memory_space<vmem>>, %arg16: memref<32x32x32xf32, #tpu.memory_space<vmem>>, %arg17: memref<16x16x32xf32, #tpu.memory_space<vmem>>, %arg18: memref<14x14x32xf32, #tpu.memory_space<vmem>>, %arg19: memref<10x10x64xf32, #tpu.memory_space<vmem>>) attributes {dimension_semantics = [#tpu.dimension_semantics<parallel>], iteration_bounds = array<i64: 2>, scalar_prefetch = 0 : i64, scratch_operands = 5 : i64, tpu.core_type = #tpu.core_type<tc>, window_params = [{transform_indices = @transform_0, window_bounds = array<i64: 1, 34, 36, 3>}, {pipeline_mode = #tpu.pipeline_mode<synchronous>, transform_indices = @transform_1, window_bounds = array<i64: 3, 3, 3, 16>}, {pipeline_mode = #tpu.pipeline_mode<synchronous>, transform_indices = @transform_2, window_bounds = array<i64: 1, 16>}, {pipeline_mode = #tpu.pipeline_mode<synchronous>, transform_indices = @transform_3, window_bounds = array<i64: 3, 3, 16, 32>}, {pipeline_mode = #tpu.pipeline_mode<synchronous>, transform_indices = @transform_4, window_bounds = array<i64: 1, 32>}, {pipeline_mode = #tpu.pipeline_mode<synchronous>, transform_indices = @transform_5, window_bounds = array<i64: 3, 3, 32, 32>}, {pipeline_mode = #tpu.pipeline_mode<synchronous>, transform_indices = @transform_6, window_bounds = array<i64: 1, 32>}, {pipeline_mode = #tpu.pipeline_mode<synchronous>, transform_indices = @transform_7, window_bounds = array<i64: 5, 5, 32, 64>}, {pipeline_mode = #tpu.pipeline_mode<synchronous>, transform_indices = @transform_8, window_bounds = array<i64: 1, 64>}, {pipeline_mode = #tpu.pipeline_mode<synchronous>, transform_indices = @transform_9, window_bounds = array<i64: 4, 4, 64, 256>}, {pipeline_mode = #tpu.pipeline_mode<synchronous>, transform_indices = @transform_10, window_bounds = array<i64: 1, 256>}, {pipeline_mode = #tpu.pipeline_mode<synchronous>, transform_indices = @transform_11, window_bounds = array<i64: 1, 256>}, {pipeline_mode = #tpu.pipeline_mode<synchronous>, transform_indices = @transform_12, window_bounds = array<i64: 1, 1>}, {transform_indices = @transform_13, window_bounds = array<i64: 1, 1, 1>}]} {
    %cst = arith.constant 0.000000e+00 : f32
    %0 = vector.broadcast %cst : f32 to vector<34x16xf32>
    %c0 = arith.constant 0 : index
    %c0_0 = arith.constant 0 : index
    %c0_1 = arith.constant 0 : index
    %1 = vector.load %arg15[%c0, %c0_0, %c0_1] : memref<34x34x16xf32, #tpu.memory_space<vmem>>, vector<1x34x16xf32>
    %2 = vector.shape_cast %1 : vector<1x34x16xf32> to vector<34x16xf32>
    %3 = vector.shape_cast %0 : vector<34x16xf32> to vector<1x34x16xf32>
    tpu.vector_store %arg15[%c0, %c0_0, %c0_1], %3 {strides = array<i32>} : memref<34x34x16xf32, #tpu.memory_space<vmem>>, vector<1x34x16xf32>,
    %cst_2 = arith.constant 0.000000e+00 : f32
    %4 = vector.broadcast %cst_2 : f32 to vector<34x16xf32>
    %c33 = arith.constant 33 : index
    %c0_3 = arith.constant 0 : index
    %c0_4 = arith.constant 0 : index
    %5 = vector.load %arg15[%c33, %c0_3, %c0_4] : memref<34x34x16xf32, #tpu.memory_space<vmem>>, vector<1x34x16xf32>
    %6 = vector.shape_cast %5 : vector<1x34x16xf32> to vector<34x16xf32>
    %7 = vector.shape_cast %4 : vector<34x16xf32> to vector<1x34x16xf32>
    tpu.vector_store %arg15[%c33, %c0_3, %c0_4], %7 {strides = array<i32>} : memref<34x34x16xf32, #tpu.memory_space<vmem>>, vector<1x34x16xf32>,
    %8 = tpu.iota {dimensions = array<i32: 0>} : vector<34x1xi32>
    %c0_i32 = arith.constant 0 : i32
    %9 = vector.broadcast %c0_i32 : i32 to vector<34x1xi32>
    %10 = arith.cmpi sgt, %8, %9 : vector<34x1xi32>
    %c33_i32 = arith.constant 33 : i32
    %11 = vector.broadcast %c33_i32 : i32 to vector<34x1xi32>
    %12 = arith.cmpi slt, %8, %11 : vector<34x1xi32>
    %13 = arith.andi %10, %12 : vector<34x1xi1>
    %cst_5 = arith.constant 1.000000e+00 : f32
    %cst_6 = arith.constant 0.000000e+00 : f32
    %14 = vector.broadcast %cst_5 : f32 to vector<34x1xf32>
    %15 = vector.broadcast %cst_6 : f32 to vector<34x1xf32>
    %16 = arith.select %13, %14, %15 : vector<34x1xi1>, vector<34x1xf32>
    %c0_i32_7 = arith.constant 0 : i32
    %c32_i32 = arith.constant 32 : i32
    %17 = arith.addi %c0_i32_7, %c32_i32 : i32
    %c1_i32 = arith.constant 1 : i32
    scf.for %arg20 = %c0_i32_7 to %17 step %c1_i32  : i32 {
      %cst_539 = arith.constant 0.000000e+00 : f32
      %519 = vector.broadcast %cst_539 : f32 to vector<34x16xf32>
      %c0_i32_540 = arith.constant 0 : i32
      %520 = arith.addi %arg20, %c0_i32_540 : i32
      %c0_541 = arith.constant 0 : index
      %521 = arith.index_cast %520 : i32 to index
      %c0_542 = arith.constant 0 : index
      %c0_543 = arith.constant 0 : index
      %522 = vector.load %arg1[%c0_541, %521, %c0_542, %c0_543] : memref<1x34x36x3xf32, #tpu.memory_space<vmem>>, vector<1x1x34x3xf32>
      %523 = vector.shape_cast %522 : vector<1x1x34x3xf32> to vector<34x3xf32>
      %c0_544 = arith.constant 0 : index
      %c0_545 = arith.constant 0 : index
      %c0_546 = arith.constant 0 : index
      %c0_547 = arith.constant 0 : index
      %524 = vector.load %arg2[%c0_544, %c0_545, %c0_546, %c0_547] : memref<3x3x3x16xf32, #tpu.memory_space<vmem>>, vector<1x1x3x16xf32>
      %525 = vector.shape_cast %524 : vector<1x1x3x16xf32> to vector<3x16xf32>
      %cst_548 = arith.constant dense<0.000000e+00> : vector<34x16xf32>
      %526 = tpu.matmul %523, %525, %cst_548 {dimension_numbers = #tpu.dot_dimension_numbers<[1], [0], [0], [1], [0, 0, 1, 1], [], []>} : vector<34x3xf32>, vector<3x16xf32>, vector<34x16xf32> -> vector<34x16xf32>
      %527 = arith.addf %519, %526 : vector<34x16xf32>
      %c0_i32_549 = arith.constant 0 : i32
      %528 = arith.addi %arg20, %c0_i32_549 : i32
      %c0_550 = arith.constant 0 : index
      %529 = arith.index_cast %528 : i32 to index
      %c1_551 = arith.constant 1 : index
      %c0_552 = arith.constant 0 : index
      %530 = vector.load %arg1[%c0_550, %529, %c1_551, %c0_552] : memref<1x34x36x3xf32, #tpu.memory_space<vmem>>, vector<1x1x34x3xf32>
      %531 = vector.shape_cast %530 : vector<1x1x34x3xf32> to vector<34x3xf32>
      %c0_553 = arith.constant 0 : index
      %c1_554 = arith.constant 1 : index
      %c0_555 = arith.constant 0 : index
      %c0_556 = arith.constant 0 : index
      %532 = vector.load %arg2[%c0_553, %c1_554, %c0_555, %c0_556] : memref<3x3x3x16xf32, #tpu.memory_space<vmem>>, vector<1x1x3x16xf32>
      %533 = vector.shape_cast %532 : vector<1x1x3x16xf32> to vector<3x16xf32>
      %cst_557 = arith.constant dense<0.000000e+00> : vector<34x16xf32>
      %534 = tpu.matmul %531, %533, %cst_557 {dimension_numbers = #tpu.dot_dimension_numbers<[1], [0], [0], [1], [0, 0, 1, 1], [], []>} : vector<34x3xf32>, vector<3x16xf32>, vector<34x16xf32> -> vector<34x16xf32>
      %535 = arith.addf %527, %534 : vector<34x16xf32>
      %c0_i32_558 = arith.constant 0 : i32
      %536 = arith.addi %arg20, %c0_i32_558 : i32
      %c0_559 = arith.constant 0 : index
      %537 = arith.index_cast %536 : i32 to index
      %c2_560 = arith.constant 2 : index
      %c0_561 = arith.constant 0 : index
      %538 = vector.load %arg1[%c0_559, %537, %c2_560, %c0_561] : memref<1x34x36x3xf32, #tpu.memory_space<vmem>>, vector<1x1x34x3xf32>
      %539 = vector.shape_cast %538 : vector<1x1x34x3xf32> to vector<34x3xf32>
      %c0_562 = arith.constant 0 : index
      %c2_563 = arith.constant 2 : index
      %c0_564 = arith.constant 0 : index
      %c0_565 = arith.constant 0 : index
      %540 = vector.load %arg2[%c0_562, %c2_563, %c0_564, %c0_565] : memref<3x3x3x16xf32, #tpu.memory_space<vmem>>, vector<1x1x3x16xf32>
      %541 = vector.shape_cast %540 : vector<1x1x3x16xf32> to vector<3x16xf32>
      %cst_566 = arith.constant dense<0.000000e+00> : vector<34x16xf32>
      %542 = tpu.matmul %539, %541, %cst_566 {dimension_numbers = #tpu.dot_dimension_numbers<[1], [0], [0], [1], [0, 0, 1, 1], [], []>} : vector<34x3xf32>, vector<3x16xf32>, vector<34x16xf32> -> vector<34x16xf32>
      %543 = arith.addf %535, %542 : vector<34x16xf32>
      %c1_i32_567 = arith.constant 1 : i32
      %544 = arith.addi %arg20, %c1_i32_567 : i32
      %c0_568 = arith.constant 0 : index
      %545 = arith.index_cast %544 : i32 to index
      %c0_569 = arith.constant 0 : index
      %c0_570 = arith.constant 0 : index
      %546 = vector.load %arg1[%c0_568, %545, %c0_569, %c0_570] : memref<1x34x36x3xf32, #tpu.memory_space<vmem>>, vector<1x1x34x3xf32>
      %547 = vector.shape_cast %546 : vector<1x1x34x3xf32> to vector<34x3xf32>
      %c1_571 = arith.constant 1 : index
      %c0_572 = arith.constant 0 : index
      %c0_573 = arith.constant 0 : index
      %c0_574 = arith.constant 0 : index
      %548 = vector.load %arg2[%c1_571, %c0_572, %c0_573, %c0_574] : memref<3x3x3x16xf32, #tpu.memory_space<vmem>>, vector<1x1x3x16xf32>
      %549 = vector.shape_cast %548 : vector<1x1x3x16xf32> to vector<3x16xf32>
      %cst_575 = arith.constant dense<0.000000e+00> : vector<34x16xf32>
      %550 = tpu.matmul %547, %549, %cst_575 {dimension_numbers = #tpu.dot_dimension_numbers<[1], [0], [0], [1], [0, 0, 1, 1], [], []>} : vector<34x3xf32>, vector<3x16xf32>, vector<34x16xf32> -> vector<34x16xf32>
      %551 = arith.addf %543, %550 : vector<34x16xf32>
      %c1_i32_576 = arith.constant 1 : i32
      %552 = arith.addi %arg20, %c1_i32_576 : i32
      %c0_577 = arith.constant 0 : index
      %553 = arith.index_cast %552 : i32 to index
      %c1_578 = arith.constant 1 : index
      %c0_579 = arith.constant 0 : index
      %554 = vector.load %arg1[%c0_577, %553, %c1_578, %c0_579] : memref<1x34x36x3xf32, #tpu.memory_space<vmem>>, vector<1x1x34x3xf32>
      %555 = vector.shape_cast %554 : vector<1x1x34x3xf32> to vector<34x3xf32>
      %c1_580 = arith.constant 1 : index
      %c1_581 = arith.constant 1 : index
      %c0_582 = arith.constant 0 : index
      %c0_583 = arith.constant 0 : index
      %556 = vector.load %arg2[%c1_580, %c1_581, %c0_582, %c0_583] : memref<3x3x3x16xf32, #tpu.memory_space<vmem>>, vector<1x1x3x16xf32>
      %557 = vector.shape_cast %556 : vector<1x1x3x16xf32> to vector<3x16xf32>
      %cst_584 = arith.constant dense<0.000000e+00> : vector<34x16xf32>
      %558 = tpu.matmul %555, %557, %cst_584 {dimension_numbers = #tpu.dot_dimension_numbers<[1], [0], [0], [1], [0, 0, 1, 1], [], []>} : vector<34x3xf32>, vector<3x16xf32>, vector<34x16xf32> -> vector<34x16xf32>
      %559 = arith.addf %551, %558 : vector<34x16xf32>
      %c1_i32_585 = arith.constant 1 : i32
      %560 = arith.addi %arg20, %c1_i32_585 : i32
      %c0_586 = arith.constant 0 : index
      %561 = arith.index_cast %560 : i32 to index
      %c2_587 = arith.constant 2 : index
      %c0_588 = arith.constant 0 : index
      %562 = vector.load %arg1[%c0_586, %561, %c2_587, %c0_588] : memref<1x34x36x3xf32, #tpu.memory_space<vmem>>, vector<1x1x34x3xf32>
      %563 = vector.shape_cast %562 : vector<1x1x34x3xf32> to vector<34x3xf32>
      %c1_589 = arith.constant 1 : index
      %c2_590 = arith.constant 2 : index
      %c0_591 = arith.constant 0 : index
      %c0_592 = arith.constant 0 : index
      %564 = vector.load %arg2[%c1_589, %c2_590, %c0_591, %c0_592] : memref<3x3x3x16xf32, #tpu.memory_space<vmem>>, vector<1x1x3x16xf32>
      %565 = vector.shape_cast %564 : vector<1x1x3x16xf32> to vector<3x16xf32>
      %cst_593 = arith.constant dense<0.000000e+00> : vector<34x16xf32>
      %566 = tpu.matmul %563, %565, %cst_593 {dimension_numbers = #tpu.dot_dimension_numbers<[1], [0], [0], [1], [0, 0, 1, 1], [], []>} : vector<34x3xf32>, vector<3x16xf32>, vector<34x16xf32> -> vector<34x16xf32>
      %567 = arith.addf %559, %566 : vector<34x16xf32>
      %c2_i32 = arith.constant 2 : i32
      %568 = arith.addi %arg20, %c2_i32 : i32
      %c0_594 = arith.constant 0 : index
      %569 = arith.index_cast %568 : i32 to index
      %c0_595 = arith.constant 0 : index
      %c0_596 = arith.constant 0 : index
      %570 = vector.load %arg1[%c0_594, %569, %c0_595, %c0_596] : memref<1x34x36x3xf32, #tpu.memory_space<vmem>>, vector<1x1x34x3xf32>
      %571 = vector.shape_cast %570 : vector<1x1x34x3xf32> to vector<34x3xf32>
      %c2_597 = arith.constant 2 : index
      %c0_598 = arith.constant 0 : index
      %c0_599 = arith.constant 0 : index
      %c0_600 = arith.constant 0 : index
      %572 = vector.load %arg2[%c2_597, %c0_598, %c0_599, %c0_600] : memref<3x3x3x16xf32, #tpu.memory_space<vmem>>, vector<1x1x3x16xf32>
      %573 = vector.shape_cast %572 : vector<1x1x3x16xf32> to vector<3x16xf32>
      %cst_601 = arith.constant dense<0.000000e+00> : vector<34x16xf32>
      %574 = tpu.matmul %571, %573, %cst_601 {dimension_numbers = #tpu.dot_dimension_numbers<[1], [0], [0], [1], [0, 0, 1, 1], [], []>} : vector<34x3xf32>, vector<3x16xf32>, vector<34x16xf32> -> vector<34x16xf32>
      %575 = arith.addf %567, %574 : vector<34x16xf32>
      %c2_i32_602 = arith.constant 2 : i32
      %576 = arith.addi %arg20, %c2_i32_602 : i32
      %c0_603 = arith.constant 0 : index
      %577 = arith.index_cast %576 : i32 to index
      %c1_604 = arith.constant 1 : index
      %c0_605 = arith.constant 0 : index
      %578 = vector.load %arg1[%c0_603, %577, %c1_604, %c0_605] : memref<1x34x36x3xf32, #tpu.memory_space<vmem>>, vector<1x1x34x3xf32>
      %579 = vector.shape_cast %578 : vector<1x1x34x3xf32> to vector<34x3xf32>
      %c2_606 = arith.constant 2 : index
      %c1_607 = arith.constant 1 : index
      %c0_608 = arith.constant 0 : index
      %c0_609 = arith.constant 0 : index
      %580 = vector.load %arg2[%c2_606, %c1_607, %c0_608, %c0_609] : memref<3x3x3x16xf32, #tpu.memory_space<vmem>>, vector<1x1x3x16xf32>
      %581 = vector.shape_cast %580 : vector<1x1x3x16xf32> to vector<3x16xf32>
      %cst_610 = arith.constant dense<0.000000e+00> : vector<34x16xf32>
      %582 = tpu.matmul %579, %581, %cst_610 {dimension_numbers = #tpu.dot_dimension_numbers<[1], [0], [0], [1], [0, 0, 1, 1], [], []>} : vector<34x3xf32>, vector<3x16xf32>, vector<34x16xf32> -> vector<34x16xf32>
      %583 = arith.addf %575, %582 : vector<34x16xf32>
      %c2_i32_611 = arith.constant 2 : i32
      %584 = arith.addi %arg20, %c2_i32_611 : i32
      %c0_612 = arith.constant 0 : index
      %585 = arith.index_cast %584 : i32 to index
      %c2_613 = arith.constant 2 : index
      %c0_614 = arith.constant 0 : index
      %586 = vector.load %arg1[%c0_612, %585, %c2_613, %c0_614] : memref<1x34x36x3xf32, #tpu.memory_space<vmem>>, vector<1x1x34x3xf32>
      %587 = vector.shape_cast %586 : vector<1x1x34x3xf32> to vector<34x3xf32>
      %c2_615 = arith.constant 2 : index
      %c2_616 = arith.constant 2 : index
      %c0_617 = arith.constant 0 : index
      %c0_618 = arith.constant 0 : index
      %588 = vector.load %arg2[%c2_615, %c2_616, %c0_617, %c0_618] : memref<3x3x3x16xf32, #tpu.memory_space<vmem>>, vector<1x1x3x16xf32>
      %589 = vector.shape_cast %588 : vector<1x1x3x16xf32> to vector<3x16xf32>
      %cst_619 = arith.constant dense<0.000000e+00> : vector<34x16xf32>
      %590 = tpu.matmul %587, %589, %cst_619 {dimension_numbers = #tpu.dot_dimension_numbers<[1], [0], [0], [1], [0, 0, 1, 1], [], []>} : vector<34x3xf32>, vector<3x16xf32>, vector<34x16xf32> -> vector<34x16xf32>
      %591 = arith.addf %583, %590 : vector<34x16xf32>
      %c0_620 = arith.constant 0 : index
      %c0_621 = arith.constant 0 : index
      %592 = vector.load %arg3[%c0_620, %c0_621] : memref<1x16xf32, #tpu.memory_space<vmem>>, vector<1x16xf32>
      %593 = vector.broadcast %592 : vector<1x16xf32> to vector<34x16xf32>
      %594 = arith.addf %591, %593 : vector<34x16xf32>
      %cst_622 = arith.constant 0.000000e+00 : f32
      %595 = vector.broadcast %cst_622 : f32 to vector<34x16xf32>
      %596 = arith.cmpf ogt, %594, %595 : vector<34x16xf32>
      %cst_623 = arith.constant 2.000000e-01 : f32
      %597 = vector.broadcast %cst_623 : f32 to vector<34x16xf32>
      %598 = arith.mulf %597, %594 : vector<34x16xf32>
      %599 = arith.select %596, %594, %598 : vector<34x16xi1>, vector<34x16xf32>
      %600 = vector.broadcast %16 : vector<34x1xf32> to vector<34x16xf32>
      %601 = arith.mulf %599, %600 : vector<34x16xf32>
      %c1_i32_624 = arith.constant 1 : i32
      %602 = arith.addi %arg20, %c1_i32_624 : i32
      %603 = arith.index_cast %602 : i32 to index
      %c0_625 = arith.constant 0 : index
      %c0_626 = arith.constant 0 : index
      %604 = vector.load %arg15[%603, %c0_625, %c0_626] : memref<34x34x16xf32, #tpu.memory_space<vmem>>, vector<1x34x16xf32>
      %605 = vector.shape_cast %604 : vector<1x34x16xf32> to vector<34x16xf32>
      %606 = vector.shape_cast %601 : vector<34x16xf32> to vector<1x34x16xf32>
      tpu.vector_store %arg15[%603, %c0_625, %c0_626], %606 {strides = array<i32>} : memref<34x34x16xf32, #tpu.memory_space<vmem>>, vector<1x34x16xf32>,
    }
    %c32_i32_8 = arith.constant 32 : i32
    %c0_i32_9 = arith.constant 0 : i32
    %c32_i32_10 = arith.constant 32 : i32
    %18 = arith.addi %c0_i32_9, %c32_i32_10 : i32
    %c1_i32_11 = arith.constant 1 : i32
    scf.for %arg20 = %c0_i32_9 to %18 step %c1_i32_11  : i32 {
      %cst_539 = arith.constant 0.000000e+00 : f32
      %519 = vector.broadcast %cst_539 : f32 to vector<32x32xf32>
      %c0_i32_540 = arith.constant 0 : i32
      %520 = arith.addi %arg20, %c0_i32_540 : i32
      %521 = arith.index_cast %520 : i32 to index
      %c0_541 = arith.constant 0 : index
      %c0_542 = arith.constant 0 : index
      %522 = vector.load %arg15[%521, %c0_541, %c0_542] : memref<34x34x16xf32, #tpu.memory_space<vmem>>, vector<1x32x16xf32>
      %523 = vector.shape_cast %522 : vector<1x32x16xf32> to vector<32x16xf32>
      %c0_543 = arith.constant 0 : index
      %c0_544 = arith.constant 0 : index
      %c0_545 = arith.constant 0 : index
      %c0_546 = arith.constant 0 : index
      %524 = vector.load %arg4[%c0_543, %c0_544, %c0_545, %c0_546] : memref<3x3x16x32xf32, #tpu.memory_space<vmem>>, vector<1x1x16x32xf32>
      %525 = vector.shape_cast %524 : vector<1x1x16x32xf32> to vector<16x32xf32>
      %cst_547 = arith.constant dense<0.000000e+00> : vector<32x32xf32>
      %526 = tpu.matmul %523, %525, %cst_547 {dimension_numbers = #tpu.dot_dimension_numbers<[1], [0], [0], [1], [0, 0, 1, 1], [], []>} : vector<32x16xf32>, vector<16x32xf32>, vector<32x32xf32> -> vector<32x32xf32>
      %527 = arith.addf %519, %526 : vector<32x32xf32>
      %c0_i32_548 = arith.constant 0 : i32
      %528 = arith.addi %arg20, %c0_i32_548 : i32
      %529 = arith.index_cast %528 : i32 to index
      %c1_549 = arith.constant 1 : index
      %c0_550 = arith.constant 0 : index
      %530 = vector.load %arg15[%529, %c1_549, %c0_550] : memref<34x34x16xf32, #tpu.memory_space<vmem>>, vector<1x32x16xf32>
      %531 = vector.shape_cast %530 : vector<1x32x16xf32> to vector<32x16xf32>
      %c0_551 = arith.constant 0 : index
      %c1_552 = arith.constant 1 : index
      %c0_553 = arith.constant 0 : index
      %c0_554 = arith.constant 0 : index
      %532 = vector.load %arg4[%c0_551, %c1_552, %c0_553, %c0_554] : memref<3x3x16x32xf32, #tpu.memory_space<vmem>>, vector<1x1x16x32xf32>
      %533 = vector.shape_cast %532 : vector<1x1x16x32xf32> to vector<16x32xf32>
      %cst_555 = arith.constant dense<0.000000e+00> : vector<32x32xf32>
      %534 = tpu.matmul %531, %533, %cst_555 {dimension_numbers = #tpu.dot_dimension_numbers<[1], [0], [0], [1], [0, 0, 1, 1], [], []>} : vector<32x16xf32>, vector<16x32xf32>, vector<32x32xf32> -> vector<32x32xf32>
      %535 = arith.addf %527, %534 : vector<32x32xf32>
      %c0_i32_556 = arith.constant 0 : i32
      %536 = arith.addi %arg20, %c0_i32_556 : i32
      %537 = arith.index_cast %536 : i32 to index
      %c2_557 = arith.constant 2 : index
      %c0_558 = arith.constant 0 : index
      %538 = vector.load %arg15[%537, %c2_557, %c0_558] : memref<34x34x16xf32, #tpu.memory_space<vmem>>, vector<1x32x16xf32>
      %539 = vector.shape_cast %538 : vector<1x32x16xf32> to vector<32x16xf32>
      %c0_559 = arith.constant 0 : index
      %c2_560 = arith.constant 2 : index
      %c0_561 = arith.constant 0 : index
      %c0_562 = arith.constant 0 : index
      %540 = vector.load %arg4[%c0_559, %c2_560, %c0_561, %c0_562] : memref<3x3x16x32xf32, #tpu.memory_space<vmem>>, vector<1x1x16x32xf32>
      %541 = vector.shape_cast %540 : vector<1x1x16x32xf32> to vector<16x32xf32>
      %cst_563 = arith.constant dense<0.000000e+00> : vector<32x32xf32>
      %542 = tpu.matmul %539, %541, %cst_563 {dimension_numbers = #tpu.dot_dimension_numbers<[1], [0], [0], [1], [0, 0, 1, 1], [], []>} : vector<32x16xf32>, vector<16x32xf32>, vector<32x32xf32> -> vector<32x32xf32>
      %543 = arith.addf %535, %542 : vector<32x32xf32>
      %c1_i32_564 = arith.constant 1 : i32
      %544 = arith.addi %arg20, %c1_i32_564 : i32
      %545 = arith.index_cast %544 : i32 to index
      %c0_565 = arith.constant 0 : index
      %c0_566 = arith.constant 0 : index
      %546 = vector.load %arg15[%545, %c0_565, %c0_566] : memref<34x34x16xf32, #tpu.memory_space<vmem>>, vector<1x32x16xf32>
      %547 = vector.shape_cast %546 : vector<1x32x16xf32> to vector<32x16xf32>
      %c1_567 = arith.constant 1 : index
      %c0_568 = arith.constant 0 : index
      %c0_569 = arith.constant 0 : index
      %c0_570 = arith.constant 0 : index
      %548 = vector.load %arg4[%c1_567, %c0_568, %c0_569, %c0_570] : memref<3x3x16x32xf32, #tpu.memory_space<vmem>>, vector<1x1x16x32xf32>
      %549 = vector.shape_cast %548 : vector<1x1x16x32xf32> to vector<16x32xf32>
      %cst_571 = arith.constant dense<0.000000e+00> : vector<32x32xf32>
      %550 = tpu.matmul %547, %549, %cst_571 {dimension_numbers = #tpu.dot_dimension_numbers<[1], [0], [0], [1], [0, 0, 1, 1], [], []>} : vector<32x16xf32>, vector<16x32xf32>, vector<32x32xf32> -> vector<32x32xf32>
      %551 = arith.addf %543, %550 : vector<32x32xf32>
      %c1_i32_572 = arith.constant 1 : i32
      %552 = arith.addi %arg20, %c1_i32_572 : i32
      %553 = arith.index_cast %552 : i32 to index
      %c1_573 = arith.constant 1 : index
      %c0_574 = arith.constant 0 : index
      %554 = vector.load %arg15[%553, %c1_573, %c0_574] : memref<34x34x16xf32, #tpu.memory_space<vmem>>, vector<1x32x16xf32>
      %555 = vector.shape_cast %554 : vector<1x32x16xf32> to vector<32x16xf32>
      %c1_575 = arith.constant 1 : index
      %c1_576 = arith.constant 1 : index
      %c0_577 = arith.constant 0 : index
      %c0_578 = arith.constant 0 : index
      %556 = vector.load %arg4[%c1_575, %c1_576, %c0_577, %c0_578] : memref<3x3x16x32xf32, #tpu.memory_space<vmem>>, vector<1x1x16x32xf32>
      %557 = vector.shape_cast %556 : vector<1x1x16x32xf32> to vector<16x32xf32>
      %cst_579 = arith.constant dense<0.000000e+00> : vector<32x32xf32>
      %558 = tpu.matmul %555, %557, %cst_579 {dimension_numbers = #tpu.dot_dimension_numbers<[1], [0], [0], [1], [0, 0, 1, 1], [], []>} : vector<32x16xf32>, vector<16x32xf32>, vector<32x32xf32> -> vector<32x32xf32>
      %559 = arith.addf %551, %558 : vector<32x32xf32>
      %c1_i32_580 = arith.constant 1 : i32
      %560 = arith.addi %arg20, %c1_i32_580 : i32
      %561 = arith.index_cast %560 : i32 to index
      %c2_581 = arith.constant 2 : index
      %c0_582 = arith.constant 0 : index
      %562 = vector.load %arg15[%561, %c2_581, %c0_582] : memref<34x34x16xf32, #tpu.memory_space<vmem>>, vector<1x32x16xf32>
      %563 = vector.shape_cast %562 : vector<1x32x16xf32> to vector<32x16xf32>
      %c1_583 = arith.constant 1 : index
      %c2_584 = arith.constant 2 : index
      %c0_585 = arith.constant 0 : index
      %c0_586 = arith.constant 0 : index
      %564 = vector.load %arg4[%c1_583, %c2_584, %c0_585, %c0_586] : memref<3x3x16x32xf32, #tpu.memory_space<vmem>>, vector<1x1x16x32xf32>
      %565 = vector.shape_cast %564 : vector<1x1x16x32xf32> to vector<16x32xf32>
      %cst_587 = arith.constant dense<0.000000e+00> : vector<32x32xf32>
      %566 = tpu.matmul %563, %565, %cst_587 {dimension_numbers = #tpu.dot_dimension_numbers<[1], [0], [0], [1], [0, 0, 1, 1], [], []>} : vector<32x16xf32>, vector<16x32xf32>, vector<32x32xf32> -> vector<32x32xf32>
      %567 = arith.addf %559, %566 : vector<32x32xf32>
      %c2_i32 = arith.constant 2 : i32
      %568 = arith.addi %arg20, %c2_i32 : i32
      %569 = arith.index_cast %568 : i32 to index
      %c0_588 = arith.constant 0 : index
      %c0_589 = arith.constant 0 : index
      %570 = vector.load %arg15[%569, %c0_588, %c0_589] : memref<34x34x16xf32, #tpu.memory_space<vmem>>, vector<1x32x16xf32>
      %571 = vector.shape_cast %570 : vector<1x32x16xf32> to vector<32x16xf32>
      %c2_590 = arith.constant 2 : index
      %c0_591 = arith.constant 0 : index
      %c0_592 = arith.constant 0 : index
      %c0_593 = arith.constant 0 : index
      %572 = vector.load %arg4[%c2_590, %c0_591, %c0_592, %c0_593] : memref<3x3x16x32xf32, #tpu.memory_space<vmem>>, vector<1x1x16x32xf32>
      %573 = vector.shape_cast %572 : vector<1x1x16x32xf32> to vector<16x32xf32>
      %cst_594 = arith.constant dense<0.000000e+00> : vector<32x32xf32>
      %574 = tpu.matmul %571, %573, %cst_594 {dimension_numbers = #tpu.dot_dimension_numbers<[1], [0], [0], [1], [0, 0, 1, 1], [], []>} : vector<32x16xf32>, vector<16x32xf32>, vector<32x32xf32> -> vector<32x32xf32>
      %575 = arith.addf %567, %574 : vector<32x32xf32>
      %c2_i32_595 = arith.constant 2 : i32
      %576 = arith.addi %arg20, %c2_i32_595 : i32
      %577 = arith.index_cast %576 : i32 to index
      %c1_596 = arith.constant 1 : index
      %c0_597 = arith.constant 0 : index
      %578 = vector.load %arg15[%577, %c1_596, %c0_597] : memref<34x34x16xf32, #tpu.memory_space<vmem>>, vector<1x32x16xf32>
      %579 = vector.shape_cast %578 : vector<1x32x16xf32> to vector<32x16xf32>
      %c2_598 = arith.constant 2 : index
      %c1_599 = arith.constant 1 : index
      %c0_600 = arith.constant 0 : index
      %c0_601 = arith.constant 0 : index
      %580 = vector.load %arg4[%c2_598, %c1_599, %c0_600, %c0_601] : memref<3x3x16x32xf32, #tpu.memory_space<vmem>>, vector<1x1x16x32xf32>
      %581 = vector.shape_cast %580 : vector<1x1x16x32xf32> to vector<16x32xf32>
      %cst_602 = arith.constant dense<0.000000e+00> : vector<32x32xf32>
      %582 = tpu.matmul %579, %581, %cst_602 {dimension_numbers = #tpu.dot_dimension_numbers<[1], [0], [0], [1], [0, 0, 1, 1], [], []>} : vector<32x16xf32>, vector<16x32xf32>, vector<32x32xf32> -> vector<32x32xf32>
      %583 = arith.addf %575, %582 : vector<32x32xf32>
      %c2_i32_603 = arith.constant 2 : i32
      %584 = arith.addi %arg20, %c2_i32_603 : i32
      %585 = arith.index_cast %584 : i32 to index
      %c2_604 = arith.constant 2 : index
      %c0_605 = arith.constant 0 : index
      %586 = vector.load %arg15[%585, %c2_604, %c0_605] : memref<34x34x16xf32, #tpu.memory_space<vmem>>, vector<1x32x16xf32>
      %587 = vector.shape_cast %586 : vector<1x32x16xf32> to vector<32x16xf32>
      %c2_606 = arith.constant 2 : index
      %c2_607 = arith.constant 2 : index
      %c0_608 = arith.constant 0 : index
      %c0_609 = arith.constant 0 : index
      %588 = vector.load %arg4[%c2_606, %c2_607, %c0_608, %c0_609] : memref<3x3x16x32xf32, #tpu.memory_space<vmem>>, vector<1x1x16x32xf32>
      %589 = vector.shape_cast %588 : vector<1x1x16x32xf32> to vector<16x32xf32>
      %cst_610 = arith.constant dense<0.000000e+00> : vector<32x32xf32>
      %590 = tpu.matmul %587, %589, %cst_610 {dimension_numbers = #tpu.dot_dimension_numbers<[1], [0], [0], [1], [0, 0, 1, 1], [], []>} : vector<32x16xf32>, vector<16x32xf32>, vector<32x32xf32> -> vector<32x32xf32>
      %591 = arith.addf %583, %590 : vector<32x32xf32>
      %c0_611 = arith.constant 0 : index
      %c0_612 = arith.constant 0 : index
      %592 = vector.load %arg5[%c0_611, %c0_612] : memref<1x32xf32, #tpu.memory_space<vmem>>, vector<1x32xf32>
      %593 = vector.broadcast %592 : vector<1x32xf32> to vector<32x32xf32>
      %594 = arith.addf %591, %593 : vector<32x32xf32>
      %cst_613 = arith.constant 0.000000e+00 : f32
      %595 = vector.broadcast %cst_613 : f32 to vector<32x32xf32>
      %596 = arith.cmpf ogt, %594, %595 : vector<32x32xf32>
      %cst_614 = arith.constant 2.000000e-01 : f32
      %597 = vector.broadcast %cst_614 : f32 to vector<32x32xf32>
      %598 = arith.mulf %597, %594 : vector<32x32xf32>
      %599 = arith.select %596, %594, %598 : vector<32x32xi1>, vector<32x32xf32>
      %600 = arith.index_cast %arg20 : i32 to index
      %c0_615 = arith.constant 0 : index
      %c0_616 = arith.constant 0 : index
      %601 = vector.load %arg16[%600, %c0_615, %c0_616] : memref<32x32x32xf32, #tpu.memory_space<vmem>>, vector<1x32x32xf32>
      %602 = vector.shape_cast %601 : vector<1x32x32xf32> to vector<32x32xf32>
      %603 = vector.shape_cast %599 : vector<32x32xf32> to vector<1x32x32xf32>
      tpu.vector_store %arg16[%600, %c0_615, %c0_616], %603 {strides = array<i32>} : memref<32x32x32xf32, #tpu.memory_space<vmem>>, vector<1x32x32xf32>,
    }
    %c32_i32_12 = arith.constant 32 : i32
    %c0_i32_13 = arith.constant 0 : i32
    %c16_i32 = arith.constant 16 : i32
    %19 = arith.addi %c0_i32_13, %c16_i32 : i32
    %c1_i32_14 = arith.constant 1 : i32
    scf.for %arg20 = %c0_i32_13 to %19 step %c1_i32_14  : i32 {
      %c2_i32 = arith.constant 2 : i32
      %519 = arith.muli %c2_i32, %arg20 : i32
      %520 = arith.index_cast %519 : i32 to index
      %c0_539 = arith.constant 0 : index
      %c0_540 = arith.constant 0 : index
      %521 = tpu.strided_load %arg16[%520, %c0_539, %c0_540] {strides = array<i32: 1, 2, 1>} : memref<32x32x32xf32, #tpu.memory_space<vmem>>, vector<1x16x32xf32>
      %522 = vector.shape_cast %521 : vector<1x16x32xf32> to vector<16x32xf32>
      %c2_i32_541 = arith.constant 2 : i32
      %523 = arith.muli %c2_i32_541, %arg20 : i32
      %524 = arith.index_cast %523 : i32 to index
      %c1_542 = arith.constant 1 : index
      %c0_543 = arith.constant 0 : index
      %525 = tpu.strided_load %arg16[%524, %c1_542, %c0_543] {strides = array<i32: 1, 2, 1>} : memref<32x32x32xf32, #tpu.memory_space<vmem>>, vector<1x16x32xf32>
      %526 = vector.shape_cast %525 : vector<1x16x32xf32> to vector<16x32xf32>
      %527 = arith.maximumf %522, %526 : vector<16x32xf32>
      %c2_i32_544 = arith.constant 2 : i32
      %528 = arith.muli %c2_i32_544, %arg20 : i32
      %c1_i32_545 = arith.constant 1 : i32
      %529 = arith.addi %528, %c1_i32_545 : i32
      %530 = arith.index_cast %529 : i32 to index
      %c0_546 = arith.constant 0 : index
      %c0_547 = arith.constant 0 : index
      %531 = tpu.strided_load %arg16[%530, %c0_546, %c0_547] {strides = array<i32: 1, 2, 1>} : memref<32x32x32xf32, #tpu.memory_space<vmem>>, vector<1x16x32xf32>
      %532 = vector.shape_cast %531 : vector<1x16x32xf32> to vector<16x32xf32>
      %533 = arith.maximumf %527, %532 : vector<16x32xf32>
      %c2_i32_548 = arith.constant 2 : i32
      %534 = arith.muli %c2_i32_548, %arg20 : i32
      %c1_i32_549 = arith.constant 1 : i32
      %535 = arith.addi %534, %c1_i32_549 : i32
      %536 = arith.index_cast %535 : i32 to index
      %c1_550 = arith.constant 1 : index
      %c0_551 = arith.constant 0 : index
      %537 = tpu.strided_load %arg16[%536, %c1_550, %c0_551] {strides = array<i32: 1, 2, 1>} : memref<32x32x32xf32, #tpu.memory_space<vmem>>, vector<1x16x32xf32>
      %538 = vector.shape_cast %537 : vector<1x16x32xf32> to vector<16x32xf32>
      %539 = arith.maximumf %533, %538 : vector<16x32xf32>
      %540 = arith.index_cast %arg20 : i32 to index
      %c0_552 = arith.constant 0 : index
      %c0_553 = arith.constant 0 : index
      %541 = vector.load %arg17[%540, %c0_552, %c0_553] : memref<16x16x32xf32, #tpu.memory_space<vmem>>, vector<1x16x32xf32>
      %542 = vector.shape_cast %541 : vector<1x16x32xf32> to vector<16x32xf32>
      %543 = vector.shape_cast %539 : vector<16x32xf32> to vector<1x16x32xf32>
      tpu.vector_store %arg17[%540, %c0_552, %c0_553], %543 {strides = array<i32>} : memref<16x16x32xf32, #tpu.memory_space<vmem>>, vector<1x16x32xf32>,
    }
    %c16_i32_15 = arith.constant 16 : i32
    %c0_i32_16 = arith.constant 0 : i32
    %c14_i32 = arith.constant 14 : i32
    %20 = arith.addi %c0_i32_16, %c14_i32 : i32
    %c1_i32_17 = arith.constant 1 : i32
    scf.for %arg20 = %c0_i32_16 to %20 step %c1_i32_17  : i32 {
      %cst_539 = arith.constant 0.000000e+00 : f32
      %519 = vector.broadcast %cst_539 : f32 to vector<14x32xf32>
      %c0_i32_540 = arith.constant 0 : i32
      %520 = arith.addi %arg20, %c0_i32_540 : i32
      %521 = arith.index_cast %520 : i32 to index
      %c0_541 = arith.constant 0 : index
      %c0_542 = arith.constant 0 : index
      %522 = vector.load %arg17[%521, %c0_541, %c0_542] : memref<16x16x32xf32, #tpu.memory_space<vmem>>, vector<1x14x32xf32>
      %523 = vector.shape_cast %522 : vector<1x14x32xf32> to vector<14x32xf32>
      %c0_543 = arith.constant 0 : index
      %c0_544 = arith.constant 0 : index
      %c0_545 = arith.constant 0 : index
      %c0_546 = arith.constant 0 : index
      %524 = vector.load %arg6[%c0_543, %c0_544, %c0_545, %c0_546] : memref<3x3x32x32xf32, #tpu.memory_space<vmem>>, vector<1x1x32x32xf32>
      %525 = vector.shape_cast %524 : vector<1x1x32x32xf32> to vector<32x32xf32>
      %cst_547 = arith.constant dense<0.000000e+00> : vector<14x32xf32>
      %526 = tpu.matmul %523, %525, %cst_547 {dimension_numbers = #tpu.dot_dimension_numbers<[1], [0], [0], [1], [0, 0, 1, 1], [], []>} : vector<14x32xf32>, vector<32x32xf32>, vector<14x32xf32> -> vector<14x32xf32>
      %527 = arith.addf %519, %526 : vector<14x32xf32>
      %c0_i32_548 = arith.constant 0 : i32
      %528 = arith.addi %arg20, %c0_i32_548 : i32
      %529 = arith.index_cast %528 : i32 to index
      %c1_549 = arith.constant 1 : index
      %c0_550 = arith.constant 0 : index
      %530 = vector.load %arg17[%529, %c1_549, %c0_550] : memref<16x16x32xf32, #tpu.memory_space<vmem>>, vector<1x14x32xf32>
      %531 = vector.shape_cast %530 : vector<1x14x32xf32> to vector<14x32xf32>
      %c0_551 = arith.constant 0 : index
      %c1_552 = arith.constant 1 : index
      %c0_553 = arith.constant 0 : index
      %c0_554 = arith.constant 0 : index
      %532 = vector.load %arg6[%c0_551, %c1_552, %c0_553, %c0_554] : memref<3x3x32x32xf32, #tpu.memory_space<vmem>>, vector<1x1x32x32xf32>
      %533 = vector.shape_cast %532 : vector<1x1x32x32xf32> to vector<32x32xf32>
      %cst_555 = arith.constant dense<0.000000e+00> : vector<14x32xf32>
      %534 = tpu.matmul %531, %533, %cst_555 {dimension_numbers = #tpu.dot_dimension_numbers<[1], [0], [0], [1], [0, 0, 1, 1], [], []>} : vector<14x32xf32>, vector<32x32xf32>, vector<14x32xf32> -> vector<14x32xf32>
      %535 = arith.addf %527, %534 : vector<14x32xf32>
      %c0_i32_556 = arith.constant 0 : i32
      %536 = arith.addi %arg20, %c0_i32_556 : i32
      %537 = arith.index_cast %536 : i32 to index
      %c2_557 = arith.constant 2 : index
      %c0_558 = arith.constant 0 : index
      %538 = vector.load %arg17[%537, %c2_557, %c0_558] : memref<16x16x32xf32, #tpu.memory_space<vmem>>, vector<1x14x32xf32>
      %539 = vector.shape_cast %538 : vector<1x14x32xf32> to vector<14x32xf32>
      %c0_559 = arith.constant 0 : index
      %c2_560 = arith.constant 2 : index
      %c0_561 = arith.constant 0 : index
      %c0_562 = arith.constant 0 : index
      %540 = vector.load %arg6[%c0_559, %c2_560, %c0_561, %c0_562] : memref<3x3x32x32xf32, #tpu.memory_space<vmem>>, vector<1x1x32x32xf32>
      %541 = vector.shape_cast %540 : vector<1x1x32x32xf32> to vector<32x32xf32>
      %cst_563 = arith.constant dense<0.000000e+00> : vector<14x32xf32>
      %542 = tpu.matmul %539, %541, %cst_563 {dimension_numbers = #tpu.dot_dimension_numbers<[1], [0], [0], [1], [0, 0, 1, 1], [], []>} : vector<14x32xf32>, vector<32x32xf32>, vector<14x32xf32> -> vector<14x32xf32>
      %543 = arith.addf %535, %542 : vector<14x32xf32>
      %c1_i32_564 = arith.constant 1 : i32
      %544 = arith.addi %arg20, %c1_i32_564 : i32
      %545 = arith.index_cast %544 : i32 to index
      %c0_565 = arith.constant 0 : index
      %c0_566 = arith.constant 0 : index
      %546 = vector.load %arg17[%545, %c0_565, %c0_566] : memref<16x16x32xf32, #tpu.memory_space<vmem>>, vector<1x14x32xf32>
      %547 = vector.shape_cast %546 : vector<1x14x32xf32> to vector<14x32xf32>
      %c1_567 = arith.constant 1 : index
      %c0_568 = arith.constant 0 : index
      %c0_569 = arith.constant 0 : index
      %c0_570 = arith.constant 0 : index
      %548 = vector.load %arg6[%c1_567, %c0_568, %c0_569, %c0_570] : memref<3x3x32x32xf32, #tpu.memory_space<vmem>>, vector<1x1x32x32xf32>
      %549 = vector.shape_cast %548 : vector<1x1x32x32xf32> to vector<32x32xf32>
      %cst_571 = arith.constant dense<0.000000e+00> : vector<14x32xf32>
      %550 = tpu.matmul %547, %549, %cst_571 {dimension_numbers = #tpu.dot_dimension_numbers<[1], [0], [0], [1], [0, 0, 1, 1], [], []>} : vector<14x32xf32>, vector<32x32xf32>, vector<14x32xf32> -> vector<14x32xf32>
      %551 = arith.addf %543, %550 : vector<14x32xf32>
      %c1_i32_572 = arith.constant 1 : i32
      %552 = arith.addi %arg20, %c1_i32_572 : i32
      %553 = arith.index_cast %552 : i32 to index
      %c1_573 = arith.constant 1 : index
      %c0_574 = arith.constant 0 : index
      %554 = vector.load %arg17[%553, %c1_573, %c0_574] : memref<16x16x32xf32, #tpu.memory_space<vmem>>, vector<1x14x32xf32>
      %555 = vector.shape_cast %554 : vector<1x14x32xf32> to vector<14x32xf32>
      %c1_575 = arith.constant 1 : index
      %c1_576 = arith.constant 1 : index
      %c0_577 = arith.constant 0 : index
      %c0_578 = arith.constant 0 : index
      %556 = vector.load %arg6[%c1_575, %c1_576, %c0_577, %c0_578] : memref<3x3x32x32xf32, #tpu.memory_space<vmem>>, vector<1x1x32x32xf32>
      %557 = vector.shape_cast %556 : vector<1x1x32x32xf32> to vector<32x32xf32>
      %cst_579 = arith.constant dense<0.000000e+00> : vector<14x32xf32>
      %558 = tpu.matmul %555, %557, %cst_579 {dimension_numbers = #tpu.dot_dimension_numbers<[1], [0], [0], [1], [0, 0, 1, 1], [], []>} : vector<14x32xf32>, vector<32x32xf32>, vector<14x32xf32> -> vector<14x32xf32>
      %559 = arith.addf %551, %558 : vector<14x32xf32>
      %c1_i32_580 = arith.constant 1 : i32
      %560 = arith.addi %arg20, %c1_i32_580 : i32
      %561 = arith.index_cast %560 : i32 to index
      %c2_581 = arith.constant 2 : index
      %c0_582 = arith.constant 0 : index
      %562 = vector.load %arg17[%561, %c2_581, %c0_582] : memref<16x16x32xf32, #tpu.memory_space<vmem>>, vector<1x14x32xf32>
      %563 = vector.shape_cast %562 : vector<1x14x32xf32> to vector<14x32xf32>
      %c1_583 = arith.constant 1 : index
      %c2_584 = arith.constant 2 : index
      %c0_585 = arith.constant 0 : index
      %c0_586 = arith.constant 0 : index
      %564 = vector.load %arg6[%c1_583, %c2_584, %c0_585, %c0_586] : memref<3x3x32x32xf32, #tpu.memory_space<vmem>>, vector<1x1x32x32xf32>
      %565 = vector.shape_cast %564 : vector<1x1x32x32xf32> to vector<32x32xf32>
      %cst_587 = arith.constant dense<0.000000e+00> : vector<14x32xf32>
      %566 = tpu.matmul %563, %565, %cst_587 {dimension_numbers = #tpu.dot_dimension_numbers<[1], [0], [0], [1], [0, 0, 1, 1], [], []>} : vector<14x32xf32>, vector<32x32xf32>, vector<14x32xf32> -> vector<14x32xf32>
      %567 = arith.addf %559, %566 : vector<14x32xf32>
      %c2_i32 = arith.constant 2 : i32
      %568 = arith.addi %arg20, %c2_i32 : i32
      %569 = arith.index_cast %568 : i32 to index
      %c0_588 = arith.constant 0 : index
      %c0_589 = arith.constant 0 : index
      %570 = vector.load %arg17[%569, %c0_588, %c0_589] : memref<16x16x32xf32, #tpu.memory_space<vmem>>, vector<1x14x32xf32>
      %571 = vector.shape_cast %570 : vector<1x14x32xf32> to vector<14x32xf32>
      %c2_590 = arith.constant 2 : index
      %c0_591 = arith.constant 0 : index
      %c0_592 = arith.constant 0 : index
      %c0_593 = arith.constant 0 : index
      %572 = vector.load %arg6[%c2_590, %c0_591, %c0_592, %c0_593] : memref<3x3x32x32xf32, #tpu.memory_space<vmem>>, vector<1x1x32x32xf32>
      %573 = vector.shape_cast %572 : vector<1x1x32x32xf32> to vector<32x32xf32>
      %cst_594 = arith.constant dense<0.000000e+00> : vector<14x32xf32>
      %574 = tpu.matmul %571, %573, %cst_594 {dimension_numbers = #tpu.dot_dimension_numbers<[1], [0], [0], [1], [0, 0, 1, 1], [], []>} : vector<14x32xf32>, vector<32x32xf32>, vector<14x32xf32> -> vector<14x32xf32>
      %575 = arith.addf %567, %574 : vector<14x32xf32>
      %c2_i32_595 = arith.constant 2 : i32
      %576 = arith.addi %arg20, %c2_i32_595 : i32
      %577 = arith.index_cast %576 : i32 to index
      %c1_596 = arith.constant 1 : index
      %c0_597 = arith.constant 0 : index
      %578 = vector.load %arg17[%577, %c1_596, %c0_597] : memref<16x16x32xf32, #tpu.memory_space<vmem>>, vector<1x14x32xf32>
      %579 = vector.shape_cast %578 : vector<1x14x32xf32> to vector<14x32xf32>
      %c2_598 = arith.constant 2 : index
      %c1_599 = arith.constant 1 : index
      %c0_600 = arith.constant 0 : index
      %c0_601 = arith.constant 0 : index
      %580 = vector.load %arg6[%c2_598, %c1_599, %c0_600, %c0_601] : memref<3x3x32x32xf32, #tpu.memory_space<vmem>>, vector<1x1x32x32xf32>
      %581 = vector.shape_cast %580 : vector<1x1x32x32xf32> to vector<32x32xf32>
      %cst_602 = arith.constant dense<0.000000e+00> : vector<14x32xf32>
      %582 = tpu.matmul %579, %581, %cst_602 {dimension_numbers = #tpu.dot_dimension_numbers<[1], [0], [0], [1], [0, 0, 1, 1], [], []>} : vector<14x32xf32>, vector<32x32xf32>, vector<14x32xf32> -> vector<14x32xf32>
      %583 = arith.addf %575, %582 : vector<14x32xf32>
      %c2_i32_603 = arith.constant 2 : i32
      %584 = arith.addi %arg20, %c2_i32_603 : i32
      %585 = arith.index_cast %584 : i32 to index
      %c2_604 = arith.constant 2 : index
      %c0_605 = arith.constant 0 : index
      %586 = vector.load %arg17[%585, %c2_604, %c0_605] : memref<16x16x32xf32, #tpu.memory_space<vmem>>, vector<1x14x32xf32>
      %587 = vector.shape_cast %586 : vector<1x14x32xf32> to vector<14x32xf32>
      %c2_606 = arith.constant 2 : index
      %c2_607 = arith.constant 2 : index
      %c0_608 = arith.constant 0 : index
      %c0_609 = arith.constant 0 : index
      %588 = vector.load %arg6[%c2_606, %c2_607, %c0_608, %c0_609] : memref<3x3x32x32xf32, #tpu.memory_space<vmem>>, vector<1x1x32x32xf32>
      %589 = vector.shape_cast %588 : vector<1x1x32x32xf32> to vector<32x32xf32>
      %cst_610 = arith.constant dense<0.000000e+00> : vector<14x32xf32>
      %590 = tpu.matmul %587, %589, %cst_610 {dimension_numbers = #tpu.dot_dimension_numbers<[1], [0], [0], [1], [0, 0, 1, 1], [], []>} : vector<14x32xf32>, vector<32x32xf32>, vector<14x32xf32> -> vector<14x32xf32>
      %591 = arith.addf %583, %590 : vector<14x32xf32>
      %c0_611 = arith.constant 0 : index
      %c0_612 = arith.constant 0 : index
      %592 = vector.load %arg7[%c0_611, %c0_612] : memref<1x32xf32, #tpu.memory_space<vmem>>, vector<1x32xf32>
      %593 = vector.broadcast %592 : vector<1x32xf32> to vector<14x32xf32>
      %594 = arith.addf %591, %593 : vector<14x32xf32>
      %cst_613 = arith.constant 0.000000e+00 : f32
      %595 = vector.broadcast %cst_613 : f32 to vector<14x32xf32>
      %596 = arith.cmpf ogt, %594, %595 : vector<14x32xf32>
      %cst_614 = arith.constant 2.000000e-01 : f32
      %597 = vector.broadcast %cst_614 : f32 to vector<14x32xf32>
      %598 = arith.mulf %597, %594 : vector<14x32xf32>
      %599 = arith.select %596, %594, %598 : vector<14x32xi1>, vector<14x32xf32>
      %600 = arith.index_cast %arg20 : i32 to index
      %c0_615 = arith.constant 0 : index
      %c0_616 = arith.constant 0 : index
      %601 = vector.load %arg18[%600, %c0_615, %c0_616] : memref<14x14x32xf32, #tpu.memory_space<vmem>>, vector<1x14x32xf32>
      %602 = vector.shape_cast %601 : vector<1x14x32xf32> to vector<14x32xf32>
      %603 = vector.shape_cast %599 : vector<14x32xf32> to vector<1x14x32xf32>
      tpu.vector_store %arg18[%600, %c0_615, %c0_616], %603 {strides = array<i32>} : memref<14x14x32xf32, #tpu.memory_space<vmem>>, vector<1x14x32xf32>,
    }
    %c14_i32_18 = arith.constant 14 : i32
    %c0_i32_19 = arith.constant 0 : i32
    %c10_i32 = arith.constant 10 : i32
    %21 = arith.addi %c0_i32_19, %c10_i32 : i32
    %c1_i32_20 = arith.constant 1 : i32
    scf.for %arg20 = %c0_i32_19 to %21 step %c1_i32_20  : i32 {
      %cst_539 = arith.constant 0.000000e+00 : f32
      %519 = vector.broadcast %cst_539 : f32 to vector<10x64xf32>
      %c0_i32_540 = arith.constant 0 : i32
      %520 = arith.addi %arg20, %c0_i32_540 : i32
      %521 = arith.index_cast %520 : i32 to index
      %c0_541 = arith.constant 0 : index
      %c0_542 = arith.constant 0 : index
      %522 = vector.load %arg18[%521, %c0_541, %c0_542] : memref<14x14x32xf32, #tpu.memory_space<vmem>>, vector<1x10x32xf32>
      %523 = vector.shape_cast %522 : vector<1x10x32xf32> to vector<10x32xf32>
      %c0_543 = arith.constant 0 : index
      %c0_544 = arith.constant 0 : index
      %c0_545 = arith.constant 0 : index
      %c0_546 = arith.constant 0 : index
      %524 = vector.load %arg8[%c0_543, %c0_544, %c0_545, %c0_546] : memref<5x5x32x64xf32, #tpu.memory_space<vmem>>, vector<1x1x32x64xf32>
      %525 = vector.shape_cast %524 : vector<1x1x32x64xf32> to vector<32x64xf32>
      %cst_547 = arith.constant dense<0.000000e+00> : vector<10x64xf32>
      %526 = tpu.matmul %523, %525, %cst_547 {dimension_numbers = #tpu.dot_dimension_numbers<[1], [0], [0], [1], [0, 0, 1, 1], [], []>} : vector<10x32xf32>, vector<32x64xf32>, vector<10x64xf32> -> vector<10x64xf32>
      %527 = arith.addf %519, %526 : vector<10x64xf32>
      %c0_i32_548 = arith.constant 0 : i32
      %528 = arith.addi %arg20, %c0_i32_548 : i32
      %529 = arith.index_cast %528 : i32 to index
      %c1_549 = arith.constant 1 : index
      %c0_550 = arith.constant 0 : index
      %530 = vector.load %arg18[%529, %c1_549, %c0_550] : memref<14x14x32xf32, #tpu.memory_space<vmem>>, vector<1x10x32xf32>
      %531 = vector.shape_cast %530 : vector<1x10x32xf32> to vector<10x32xf32>
      %c0_551 = arith.constant 0 : index
      %c1_552 = arith.constant 1 : index
      %c0_553 = arith.constant 0 : index
      %c0_554 = arith.constant 0 : index
      %532 = vector.load %arg8[%c0_551, %c1_552, %c0_553, %c0_554] : memref<5x5x32x64xf32, #tpu.memory_space<vmem>>, vector<1x1x32x64xf32>
      %533 = vector.shape_cast %532 : vector<1x1x32x64xf32> to vector<32x64xf32>
      %cst_555 = arith.constant dense<0.000000e+00> : vector<10x64xf32>
      %534 = tpu.matmul %531, %533, %cst_555 {dimension_numbers = #tpu.dot_dimension_numbers<[1], [0], [0], [1], [0, 0, 1, 1], [], []>} : vector<10x32xf32>, vector<32x64xf32>, vector<10x64xf32> -> vector<10x64xf32>
      %535 = arith.addf %527, %534 : vector<10x64xf32>
      %c0_i32_556 = arith.constant 0 : i32
      %536 = arith.addi %arg20, %c0_i32_556 : i32
      %537 = arith.index_cast %536 : i32 to index
      %c2_557 = arith.constant 2 : index
      %c0_558 = arith.constant 0 : index
      %538 = vector.load %arg18[%537, %c2_557, %c0_558] : memref<14x14x32xf32, #tpu.memory_space<vmem>>, vector<1x10x32xf32>
      %539 = vector.shape_cast %538 : vector<1x10x32xf32> to vector<10x32xf32>
      %c0_559 = arith.constant 0 : index
      %c2_560 = arith.constant 2 : index
      %c0_561 = arith.constant 0 : index
      %c0_562 = arith.constant 0 : index
      %540 = vector.load %arg8[%c0_559, %c2_560, %c0_561, %c0_562] : memref<5x5x32x64xf32, #tpu.memory_space<vmem>>, vector<1x1x32x64xf32>
      %541 = vector.shape_cast %540 : vector<1x1x32x64xf32> to vector<32x64xf32>
      %cst_563 = arith.constant dense<0.000000e+00> : vector<10x64xf32>
      %542 = tpu.matmul %539, %541, %cst_563 {dimension_numbers = #tpu.dot_dimension_numbers<[1], [0], [0], [1], [0, 0, 1, 1], [], []>} : vector<10x32xf32>, vector<32x64xf32>, vector<10x64xf32> -> vector<10x64xf32>
      %543 = arith.addf %535, %542 : vector<10x64xf32>
      %c0_i32_564 = arith.constant 0 : i32
      %544 = arith.addi %arg20, %c0_i32_564 : i32
      %545 = arith.index_cast %544 : i32 to index
      %c3_565 = arith.constant 3 : index
      %c0_566 = arith.constant 0 : index
      %546 = vector.load %arg18[%545, %c3_565, %c0_566] : memref<14x14x32xf32, #tpu.memory_space<vmem>>, vector<1x10x32xf32>
      %547 = vector.shape_cast %546 : vector<1x10x32xf32> to vector<10x32xf32>
      %c0_567 = arith.constant 0 : index
      %c3_568 = arith.constant 3 : index
      %c0_569 = arith.constant 0 : index
      %c0_570 = arith.constant 0 : index
      %548 = vector.load %arg8[%c0_567, %c3_568, %c0_569, %c0_570] : memref<5x5x32x64xf32, #tpu.memory_space<vmem>>, vector<1x1x32x64xf32>
      %549 = vector.shape_cast %548 : vector<1x1x32x64xf32> to vector<32x64xf32>
      %cst_571 = arith.constant dense<0.000000e+00> : vector<10x64xf32>
      %550 = tpu.matmul %547, %549, %cst_571 {dimension_numbers = #tpu.dot_dimension_numbers<[1], [0], [0], [1], [0, 0, 1, 1], [], []>} : vector<10x32xf32>, vector<32x64xf32>, vector<10x64xf32> -> vector<10x64xf32>
      %551 = arith.addf %543, %550 : vector<10x64xf32>
      %c0_i32_572 = arith.constant 0 : i32
      %552 = arith.addi %arg20, %c0_i32_572 : i32
      %553 = arith.index_cast %552 : i32 to index
      %c4_573 = arith.constant 4 : index
      %c0_574 = arith.constant 0 : index
      %554 = vector.load %arg18[%553, %c4_573, %c0_574] : memref<14x14x32xf32, #tpu.memory_space<vmem>>, vector<1x10x32xf32>
      %555 = vector.shape_cast %554 : vector<1x10x32xf32> to vector<10x32xf32>
      %c0_575 = arith.constant 0 : index
      %c4_576 = arith.constant 4 : index
      %c0_577 = arith.constant 0 : index
      %c0_578 = arith.constant 0 : index
      %556 = vector.load %arg8[%c0_575, %c4_576, %c0_577, %c0_578] : memref<5x5x32x64xf32, #tpu.memory_space<vmem>>, vector<1x1x32x64xf32>
      %557 = vector.shape_cast %556 : vector<1x1x32x64xf32> to vector<32x64xf32>
      %cst_579 = arith.constant dense<0.000000e+00> : vector<10x64xf32>
      %558 = tpu.matmul %555, %557, %cst_579 {dimension_numbers = #tpu.dot_dimension_numbers<[1], [0], [0], [1], [0, 0, 1, 1], [], []>} : vector<10x32xf32>, vector<32x64xf32>, vector<10x64xf32> -> vector<10x64xf32>
      %559 = arith.addf %551, %558 : vector<10x64xf32>
      %c1_i32_580 = arith.constant 1 : i32
      %560 = arith.addi %arg20, %c1_i32_580 : i32
      %561 = arith.index_cast %560 : i32 to index
      %c0_581 = arith.constant 0 : index
      %c0_582 = arith.constant 0 : index
      %562 = vector.load %arg18[%561, %c0_581, %c0_582] : memref<14x14x32xf32, #tpu.memory_space<vmem>>, vector<1x10x32xf32>
      %563 = vector.shape_cast %562 : vector<1x10x32xf32> to vector<10x32xf32>
      %c1_583 = arith.constant 1 : index
      %c0_584 = arith.constant 0 : index
      %c0_585 = arith.constant 0 : index
      %c0_586 = arith.constant 0 : index
      %564 = vector.load %arg8[%c1_583, %c0_584, %c0_585, %c0_586] : memref<5x5x32x64xf32, #tpu.memory_space<vmem>>, vector<1x1x32x64xf32>
      %565 = vector.shape_cast %564 : vector<1x1x32x64xf32> to vector<32x64xf32>
      %cst_587 = arith.constant dense<0.000000e+00> : vector<10x64xf32>
      %566 = tpu.matmul %563, %565, %cst_587 {dimension_numbers = #tpu.dot_dimension_numbers<[1], [0], [0], [1], [0, 0, 1, 1], [], []>} : vector<10x32xf32>, vector<32x64xf32>, vector<10x64xf32> -> vector<10x64xf32>
      %567 = arith.addf %559, %566 : vector<10x64xf32>
      %c1_i32_588 = arith.constant 1 : i32
      %568 = arith.addi %arg20, %c1_i32_588 : i32
      %569 = arith.index_cast %568 : i32 to index
      %c1_589 = arith.constant 1 : index
      %c0_590 = arith.constant 0 : index
      %570 = vector.load %arg18[%569, %c1_589, %c0_590] : memref<14x14x32xf32, #tpu.memory_space<vmem>>, vector<1x10x32xf32>
      %571 = vector.shape_cast %570 : vector<1x10x32xf32> to vector<10x32xf32>
      %c1_591 = arith.constant 1 : index
      %c1_592 = arith.constant 1 : index
      %c0_593 = arith.constant 0 : index
      %c0_594 = arith.constant 0 : index
      %572 = vector.load %arg8[%c1_591, %c1_592, %c0_593, %c0_594] : memref<5x5x32x64xf32, #tpu.memory_space<vmem>>, vector<1x1x32x64xf32>
      %573 = vector.shape_cast %572 : vector<1x1x32x64xf32> to vector<32x64xf32>
      %cst_595 = arith.constant dense<0.000000e+00> : vector<10x64xf32>
      %574 = tpu.matmul %571, %573, %cst_595 {dimension_numbers = #tpu.dot_dimension_numbers<[1], [0], [0], [1], [0, 0, 1, 1], [], []>} : vector<10x32xf32>, vector<32x64xf32>, vector<10x64xf32> -> vector<10x64xf32>
      %575 = arith.addf %567, %574 : vector<10x64xf32>
      %c1_i32_596 = arith.constant 1 : i32
      %576 = arith.addi %arg20, %c1_i32_596 : i32
      %577 = arith.index_cast %576 : i32 to index
      %c2_597 = arith.constant 2 : index
      %c0_598 = arith.constant 0 : index
      %578 = vector.load %arg18[%577, %c2_597, %c0_598] : memref<14x14x32xf32, #tpu.memory_space<vmem>>, vector<1x10x32xf32>
      %579 = vector.shape_cast %578 : vector<1x10x32xf32> to vector<10x32xf32>
      %c1_599 = arith.constant 1 : index
      %c2_600 = arith.constant 2 : index
      %c0_601 = arith.constant 0 : index
      %c0_602 = arith.constant 0 : index
      %580 = vector.load %arg8[%c1_599, %c2_600, %c0_601, %c0_602] : memref<5x5x32x64xf32, #tpu.memory_space<vmem>>, vector<1x1x32x64xf32>
      %581 = vector.shape_cast %580 : vector<1x1x32x64xf32> to vector<32x64xf32>
      %cst_603 = arith.constant dense<0.000000e+00> : vector<10x64xf32>
      %582 = tpu.matmul %579, %581, %cst_603 {dimension_numbers = #tpu.dot_dimension_numbers<[1], [0], [0], [1], [0, 0, 1, 1], [], []>} : vector<10x32xf32>, vector<32x64xf32>, vector<10x64xf32> -> vector<10x64xf32>
      %583 = arith.addf %575, %582 : vector<10x64xf32>
      %c1_i32_604 = arith.constant 1 : i32
      %584 = arith.addi %arg20, %c1_i32_604 : i32
      %585 = arith.index_cast %584 : i32 to index
      %c3_605 = arith.constant 3 : index
      %c0_606 = arith.constant 0 : index
      %586 = vector.load %arg18[%585, %c3_605, %c0_606] : memref<14x14x32xf32, #tpu.memory_space<vmem>>, vector<1x10x32xf32>
      %587 = vector.shape_cast %586 : vector<1x10x32xf32> to vector<10x32xf32>
      %c1_607 = arith.constant 1 : index
      %c3_608 = arith.constant 3 : index
      %c0_609 = arith.constant 0 : index
      %c0_610 = arith.constant 0 : index
      %588 = vector.load %arg8[%c1_607, %c3_608, %c0_609, %c0_610] : memref<5x5x32x64xf32, #tpu.memory_space<vmem>>, vector<1x1x32x64xf32>
      %589 = vector.shape_cast %588 : vector<1x1x32x64xf32> to vector<32x64xf32>
      %cst_611 = arith.constant dense<0.000000e+00> : vector<10x64xf32>
      %590 = tpu.matmul %587, %589, %cst_611 {dimension_numbers = #tpu.dot_dimension_numbers<[1], [0], [0], [1], [0, 0, 1, 1], [], []>} : vector<10x32xf32>, vector<32x64xf32>, vector<10x64xf32> -> vector<10x64xf32>
      %591 = arith.addf %583, %590 : vector<10x64xf32>
      %c1_i32_612 = arith.constant 1 : i32
      %592 = arith.addi %arg20, %c1_i32_612 : i32
      %593 = arith.index_cast %592 : i32 to index
      %c4_613 = arith.constant 4 : index
      %c0_614 = arith.constant 0 : index
      %594 = vector.load %arg18[%593, %c4_613, %c0_614] : memref<14x14x32xf32, #tpu.memory_space<vmem>>, vector<1x10x32xf32>
      %595 = vector.shape_cast %594 : vector<1x10x32xf32> to vector<10x32xf32>
      %c1_615 = arith.constant 1 : index
      %c4_616 = arith.constant 4 : index
      %c0_617 = arith.constant 0 : index
      %c0_618 = arith.constant 0 : index
      %596 = vector.load %arg8[%c1_615, %c4_616, %c0_617, %c0_618] : memref<5x5x32x64xf32, #tpu.memory_space<vmem>>, vector<1x1x32x64xf32>
      %597 = vector.shape_cast %596 : vector<1x1x32x64xf32> to vector<32x64xf32>
      %cst_619 = arith.constant dense<0.000000e+00> : vector<10x64xf32>
      %598 = tpu.matmul %595, %597, %cst_619 {dimension_numbers = #tpu.dot_dimension_numbers<[1], [0], [0], [1], [0, 0, 1, 1], [], []>} : vector<10x32xf32>, vector<32x64xf32>, vector<10x64xf32> -> vector<10x64xf32>
      %599 = arith.addf %591, %598 : vector<10x64xf32>
      %c2_i32 = arith.constant 2 : i32
      %600 = arith.addi %arg20, %c2_i32 : i32
      %601 = arith.index_cast %600 : i32 to index
      %c0_620 = arith.constant 0 : index
      %c0_621 = arith.constant 0 : index
      %602 = vector.load %arg18[%601, %c0_620, %c0_621] : memref<14x14x32xf32, #tpu.memory_space<vmem>>, vector<1x10x32xf32>
      %603 = vector.shape_cast %602 : vector<1x10x32xf32> to vector<10x32xf32>
      %c2_622 = arith.constant 2 : index
      %c0_623 = arith.constant 0 : index
      %c0_624 = arith.constant 0 : index
      %c0_625 = arith.constant 0 : index
      %604 = vector.load %arg8[%c2_622, %c0_623, %c0_624, %c0_625] : memref<5x5x32x64xf32, #tpu.memory_space<vmem>>, vector<1x1x32x64xf32>
      %605 = vector.shape_cast %604 : vector<1x1x32x64xf32> to vector<32x64xf32>
      %cst_626 = arith.constant dense<0.000000e+00> : vector<10x64xf32>
      %606 = tpu.matmul %603, %605, %cst_626 {dimension_numbers = #tpu.dot_dimension_numbers<[1], [0], [0], [1], [0, 0, 1, 1], [], []>} : vector<10x32xf32>, vector<32x64xf32>, vector<10x64xf32> -> vector<10x64xf32>
      %607 = arith.addf %599, %606 : vector<10x64xf32>
      %c2_i32_627 = arith.constant 2 : i32
      %608 = arith.addi %arg20, %c2_i32_627 : i32
      %609 = arith.index_cast %608 : i32 to index
      %c1_628 = arith.constant 1 : index
      %c0_629 = arith.constant 0 : index
      %610 = vector.load %arg18[%609, %c1_628, %c0_629] : memref<14x14x32xf32, #tpu.memory_space<vmem>>, vector<1x10x32xf32>
      %611 = vector.shape_cast %610 : vector<1x10x32xf32> to vector<10x32xf32>
      %c2_630 = arith.constant 2 : index
      %c1_631 = arith.constant 1 : index
      %c0_632 = arith.constant 0 : index
      %c0_633 = arith.constant 0 : index
      %612 = vector.load %arg8[%c2_630, %c1_631, %c0_632, %c0_633] : memref<5x5x32x64xf32, #tpu.memory_space<vmem>>, vector<1x1x32x64xf32>
      %613 = vector.shape_cast %612 : vector<1x1x32x64xf32> to vector<32x64xf32>
      %cst_634 = arith.constant dense<0.000000e+00> : vector<10x64xf32>
      %614 = tpu.matmul %611, %613, %cst_634 {dimension_numbers = #tpu.dot_dimension_numbers<[1], [0], [0], [1], [0, 0, 1, 1], [], []>} : vector<10x32xf32>, vector<32x64xf32>, vector<10x64xf32> -> vector<10x64xf32>
      %615 = arith.addf %607, %614 : vector<10x64xf32>
      %c2_i32_635 = arith.constant 2 : i32
      %616 = arith.addi %arg20, %c2_i32_635 : i32
      %617 = arith.index_cast %616 : i32 to index
      %c2_636 = arith.constant 2 : index
      %c0_637 = arith.constant 0 : index
      %618 = vector.load %arg18[%617, %c2_636, %c0_637] : memref<14x14x32xf32, #tpu.memory_space<vmem>>, vector<1x10x32xf32>
      %619 = vector.shape_cast %618 : vector<1x10x32xf32> to vector<10x32xf32>
      %c2_638 = arith.constant 2 : index
      %c2_639 = arith.constant 2 : index
      %c0_640 = arith.constant 0 : index
      %c0_641 = arith.constant 0 : index
      %620 = vector.load %arg8[%c2_638, %c2_639, %c0_640, %c0_641] : memref<5x5x32x64xf32, #tpu.memory_space<vmem>>, vector<1x1x32x64xf32>
      %621 = vector.shape_cast %620 : vector<1x1x32x64xf32> to vector<32x64xf32>
      %cst_642 = arith.constant dense<0.000000e+00> : vector<10x64xf32>
      %622 = tpu.matmul %619, %621, %cst_642 {dimension_numbers = #tpu.dot_dimension_numbers<[1], [0], [0], [1], [0, 0, 1, 1], [], []>} : vector<10x32xf32>, vector<32x64xf32>, vector<10x64xf32> -> vector<10x64xf32>
      %623 = arith.addf %615, %622 : vector<10x64xf32>
      %c2_i32_643 = arith.constant 2 : i32
      %624 = arith.addi %arg20, %c2_i32_643 : i32
      %625 = arith.index_cast %624 : i32 to index
      %c3_644 = arith.constant 3 : index
      %c0_645 = arith.constant 0 : index
      %626 = vector.load %arg18[%625, %c3_644, %c0_645] : memref<14x14x32xf32, #tpu.memory_space<vmem>>, vector<1x10x32xf32>
      %627 = vector.shape_cast %626 : vector<1x10x32xf32> to vector<10x32xf32>
      %c2_646 = arith.constant 2 : index
      %c3_647 = arith.constant 3 : index
      %c0_648 = arith.constant 0 : index
      %c0_649 = arith.constant 0 : index
      %628 = vector.load %arg8[%c2_646, %c3_647, %c0_648, %c0_649] : memref<5x5x32x64xf32, #tpu.memory_space<vmem>>, vector<1x1x32x64xf32>
      %629 = vector.shape_cast %628 : vector<1x1x32x64xf32> to vector<32x64xf32>
      %cst_650 = arith.constant dense<0.000000e+00> : vector<10x64xf32>
      %630 = tpu.matmul %627, %629, %cst_650 {dimension_numbers = #tpu.dot_dimension_numbers<[1], [0], [0], [1], [0, 0, 1, 1], [], []>} : vector<10x32xf32>, vector<32x64xf32>, vector<10x64xf32> -> vector<10x64xf32>
      %631 = arith.addf %623, %630 : vector<10x64xf32>
      %c2_i32_651 = arith.constant 2 : i32
      %632 = arith.addi %arg20, %c2_i32_651 : i32
      %633 = arith.index_cast %632 : i32 to index
      %c4_652 = arith.constant 4 : index
      %c0_653 = arith.constant 0 : index
      %634 = vector.load %arg18[%633, %c4_652, %c0_653] : memref<14x14x32xf32, #tpu.memory_space<vmem>>, vector<1x10x32xf32>
      %635 = vector.shape_cast %634 : vector<1x10x32xf32> to vector<10x32xf32>
      %c2_654 = arith.constant 2 : index
      %c4_655 = arith.constant 4 : index
      %c0_656 = arith.constant 0 : index
      %c0_657 = arith.constant 0 : index
      %636 = vector.load %arg8[%c2_654, %c4_655, %c0_656, %c0_657] : memref<5x5x32x64xf32, #tpu.memory_space<vmem>>, vector<1x1x32x64xf32>
      %637 = vector.shape_cast %636 : vector<1x1x32x64xf32> to vector<32x64xf32>
      %cst_658 = arith.constant dense<0.000000e+00> : vector<10x64xf32>
      %638 = tpu.matmul %635, %637, %cst_658 {dimension_numbers = #tpu.dot_dimension_numbers<[1], [0], [0], [1], [0, 0, 1, 1], [], []>} : vector<10x32xf32>, vector<32x64xf32>, vector<10x64xf32> -> vector<10x64xf32>
      %639 = arith.addf %631, %638 : vector<10x64xf32>
      %c3_i32 = arith.constant 3 : i32
      %640 = arith.addi %arg20, %c3_i32 : i32
      %641 = arith.index_cast %640 : i32 to index
      %c0_659 = arith.constant 0 : index
      %c0_660 = arith.constant 0 : index
      %642 = vector.load %arg18[%641, %c0_659, %c0_660] : memref<14x14x32xf32, #tpu.memory_space<vmem>>, vector<1x10x32xf32>
      %643 = vector.shape_cast %642 : vector<1x10x32xf32> to vector<10x32xf32>
      %c3_661 = arith.constant 3 : index
      %c0_662 = arith.constant 0 : index
      %c0_663 = arith.constant 0 : index
      %c0_664 = arith.constant 0 : index
      %644 = vector.load %arg8[%c3_661, %c0_662, %c0_663, %c0_664] : memref<5x5x32x64xf32, #tpu.memory_space<vmem>>, vector<1x1x32x64xf32>
      %645 = vector.shape_cast %644 : vector<1x1x32x64xf32> to vector<32x64xf32>
      %cst_665 = arith.constant dense<0.000000e+00> : vector<10x64xf32>
      %646 = tpu.matmul %643, %645, %cst_665 {dimension_numbers = #tpu.dot_dimension_numbers<[1], [0], [0], [1], [0, 0, 1, 1], [], []>} : vector<10x32xf32>, vector<32x64xf32>, vector<10x64xf32> -> vector<10x64xf32>
      %647 = arith.addf %639, %646 : vector<10x64xf32>
      %c3_i32_666 = arith.constant 3 : i32
      %648 = arith.addi %arg20, %c3_i32_666 : i32
      %649 = arith.index_cast %648 : i32 to index
      %c1_667 = arith.constant 1 : index
      %c0_668 = arith.constant 0 : index
      %650 = vector.load %arg18[%649, %c1_667, %c0_668] : memref<14x14x32xf32, #tpu.memory_space<vmem>>, vector<1x10x32xf32>
      %651 = vector.shape_cast %650 : vector<1x10x32xf32> to vector<10x32xf32>
      %c3_669 = arith.constant 3 : index
      %c1_670 = arith.constant 1 : index
      %c0_671 = arith.constant 0 : index
      %c0_672 = arith.constant 0 : index
      %652 = vector.load %arg8[%c3_669, %c1_670, %c0_671, %c0_672] : memref<5x5x32x64xf32, #tpu.memory_space<vmem>>, vector<1x1x32x64xf32>
      %653 = vector.shape_cast %652 : vector<1x1x32x64xf32> to vector<32x64xf32>
      %cst_673 = arith.constant dense<0.000000e+00> : vector<10x64xf32>
      %654 = tpu.matmul %651, %653, %cst_673 {dimension_numbers = #tpu.dot_dimension_numbers<[1], [0], [0], [1], [0, 0, 1, 1], [], []>} : vector<10x32xf32>, vector<32x64xf32>, vector<10x64xf32> -> vector<10x64xf32>
      %655 = arith.addf %647, %654 : vector<10x64xf32>
      %c3_i32_674 = arith.constant 3 : i32
      %656 = arith.addi %arg20, %c3_i32_674 : i32
      %657 = arith.index_cast %656 : i32 to index
      %c2_675 = arith.constant 2 : index
      %c0_676 = arith.constant 0 : index
      %658 = vector.load %arg18[%657, %c2_675, %c0_676] : memref<14x14x32xf32, #tpu.memory_space<vmem>>, vector<1x10x32xf32>
      %659 = vector.shape_cast %658 : vector<1x10x32xf32> to vector<10x32xf32>
      %c3_677 = arith.constant 3 : index
      %c2_678 = arith.constant 2 : index
      %c0_679 = arith.constant 0 : index
      %c0_680 = arith.constant 0 : index
      %660 = vector.load %arg8[%c3_677, %c2_678, %c0_679, %c0_680] : memref<5x5x32x64xf32, #tpu.memory_space<vmem>>, vector<1x1x32x64xf32>
      %661 = vector.shape_cast %660 : vector<1x1x32x64xf32> to vector<32x64xf32>
      %cst_681 = arith.constant dense<0.000000e+00> : vector<10x64xf32>
      %662 = tpu.matmul %659, %661, %cst_681 {dimension_numbers = #tpu.dot_dimension_numbers<[1], [0], [0], [1], [0, 0, 1, 1], [], []>} : vector<10x32xf32>, vector<32x64xf32>, vector<10x64xf32> -> vector<10x64xf32>
      %663 = arith.addf %655, %662 : vector<10x64xf32>
      %c3_i32_682 = arith.constant 3 : i32
      %664 = arith.addi %arg20, %c3_i32_682 : i32
      %665 = arith.index_cast %664 : i32 to index
      %c3_683 = arith.constant 3 : index
      %c0_684 = arith.constant 0 : index
      %666 = vector.load %arg18[%665, %c3_683, %c0_684] : memref<14x14x32xf32, #tpu.memory_space<vmem>>, vector<1x10x32xf32>
      %667 = vector.shape_cast %666 : vector<1x10x32xf32> to vector<10x32xf32>
      %c3_685 = arith.constant 3 : index
      %c3_686 = arith.constant 3 : index
      %c0_687 = arith.constant 0 : index
      %c0_688 = arith.constant 0 : index
      %668 = vector.load %arg8[%c3_685, %c3_686, %c0_687, %c0_688] : memref<5x5x32x64xf32, #tpu.memory_space<vmem>>, vector<1x1x32x64xf32>
      %669 = vector.shape_cast %668 : vector<1x1x32x64xf32> to vector<32x64xf32>
      %cst_689 = arith.constant dense<0.000000e+00> : vector<10x64xf32>
      %670 = tpu.matmul %667, %669, %cst_689 {dimension_numbers = #tpu.dot_dimension_numbers<[1], [0], [0], [1], [0, 0, 1, 1], [], []>} : vector<10x32xf32>, vector<32x64xf32>, vector<10x64xf32> -> vector<10x64xf32>
      %671 = arith.addf %663, %670 : vector<10x64xf32>
      %c3_i32_690 = arith.constant 3 : i32
      %672 = arith.addi %arg20, %c3_i32_690 : i32
      %673 = arith.index_cast %672 : i32 to index
      %c4_691 = arith.constant 4 : index
      %c0_692 = arith.constant 0 : index
      %674 = vector.load %arg18[%673, %c4_691, %c0_692] : memref<14x14x32xf32, #tpu.memory_space<vmem>>, vector<1x10x32xf32>
      %675 = vector.shape_cast %674 : vector<1x10x32xf32> to vector<10x32xf32>
      %c3_693 = arith.constant 3 : index
      %c4_694 = arith.constant 4 : index
      %c0_695 = arith.constant 0 : index
      %c0_696 = arith.constant 0 : index
      %676 = vector.load %arg8[%c3_693, %c4_694, %c0_695, %c0_696] : memref<5x5x32x64xf32, #tpu.memory_space<vmem>>, vector<1x1x32x64xf32>
      %677 = vector.shape_cast %676 : vector<1x1x32x64xf32> to vector<32x64xf32>
      %cst_697 = arith.constant dense<0.000000e+00> : vector<10x64xf32>
      %678 = tpu.matmul %675, %677, %cst_697 {dimension_numbers = #tpu.dot_dimension_numbers<[1], [0], [0], [1], [0, 0, 1, 1], [], []>} : vector<10x32xf32>, vector<32x64xf32>, vector<10x64xf32> -> vector<10x64xf32>
      %679 = arith.addf %671, %678 : vector<10x64xf32>
      %c4_i32 = arith.constant 4 : i32
      %680 = arith.addi %arg20, %c4_i32 : i32
      %681 = arith.index_cast %680 : i32 to index
      %c0_698 = arith.constant 0 : index
      %c0_699 = arith.constant 0 : index
      %682 = vector.load %arg18[%681, %c0_698, %c0_699] : memref<14x14x32xf32, #tpu.memory_space<vmem>>, vector<1x10x32xf32>
      %683 = vector.shape_cast %682 : vector<1x10x32xf32> to vector<10x32xf32>
      %c4_700 = arith.constant 4 : index
      %c0_701 = arith.constant 0 : index
      %c0_702 = arith.constant 0 : index
      %c0_703 = arith.constant 0 : index
      %684 = vector.load %arg8[%c4_700, %c0_701, %c0_702, %c0_703] : memref<5x5x32x64xf32, #tpu.memory_space<vmem>>, vector<1x1x32x64xf32>
      %685 = vector.shape_cast %684 : vector<1x1x32x64xf32> to vector<32x64xf32>
      %cst_704 = arith.constant dense<0.000000e+00> : vector<10x64xf32>
      %686 = tpu.matmul %683, %685, %cst_704 {dimension_numbers = #tpu.dot_dimension_numbers<[1], [0], [0], [1], [0, 0, 1, 1], [], []>} : vector<10x32xf32>, vector<32x64xf32>, vector<10x64xf32> -> vector<10x64xf32>
      %687 = arith.addf %679, %686 : vector<10x64xf32>
      %c4_i32_705 = arith.constant 4 : i32
      %688 = arith.addi %arg20, %c4_i32_705 : i32
      %689 = arith.index_cast %688 : i32 to index
      %c1_706 = arith.constant 1 : index
      %c0_707 = arith.constant 0 : index
      %690 = vector.load %arg18[%689, %c1_706, %c0_707] : memref<14x14x32xf32, #tpu.memory_space<vmem>>, vector<1x10x32xf32>
      %691 = vector.shape_cast %690 : vector<1x10x32xf32> to vector<10x32xf32>
      %c4_708 = arith.constant 4 : index
      %c1_709 = arith.constant 1 : index
      %c0_710 = arith.constant 0 : index
      %c0_711 = arith.constant 0 : index
      %692 = vector.load %arg8[%c4_708, %c1_709, %c0_710, %c0_711] : memref<5x5x32x64xf32, #tpu.memory_space<vmem>>, vector<1x1x32x64xf32>
      %693 = vector.shape_cast %692 : vector<1x1x32x64xf32> to vector<32x64xf32>
      %cst_712 = arith.constant dense<0.000000e+00> : vector<10x64xf32>
      %694 = tpu.matmul %691, %693, %cst_712 {dimension_numbers = #tpu.dot_dimension_numbers<[1], [0], [0], [1], [0, 0, 1, 1], [], []>} : vector<10x32xf32>, vector<32x64xf32>, vector<10x64xf32> -> vector<10x64xf32>
      %695 = arith.addf %687, %694 : vector<10x64xf32>
      %c4_i32_713 = arith.constant 4 : i32
      %696 = arith.addi %arg20, %c4_i32_713 : i32
      %697 = arith.index_cast %696 : i32 to index
      %c2_714 = arith.constant 2 : index
      %c0_715 = arith.constant 0 : index
      %698 = vector.load %arg18[%697, %c2_714, %c0_715] : memref<14x14x32xf32, #tpu.memory_space<vmem>>, vector<1x10x32xf32>
      %699 = vector.shape_cast %698 : vector<1x10x32xf32> to vector<10x32xf32>
      %c4_716 = arith.constant 4 : index
      %c2_717 = arith.constant 2 : index
      %c0_718 = arith.constant 0 : index
      %c0_719 = arith.constant 0 : index
      %700 = vector.load %arg8[%c4_716, %c2_717, %c0_718, %c0_719] : memref<5x5x32x64xf32, #tpu.memory_space<vmem>>, vector<1x1x32x64xf32>
      %701 = vector.shape_cast %700 : vector<1x1x32x64xf32> to vector<32x64xf32>
      %cst_720 = arith.constant dense<0.000000e+00> : vector<10x64xf32>
      %702 = tpu.matmul %699, %701, %cst_720 {dimension_numbers = #tpu.dot_dimension_numbers<[1], [0], [0], [1], [0, 0, 1, 1], [], []>} : vector<10x32xf32>, vector<32x64xf32>, vector<10x64xf32> -> vector<10x64xf32>
      %703 = arith.addf %695, %702 : vector<10x64xf32>
      %c4_i32_721 = arith.constant 4 : i32
      %704 = arith.addi %arg20, %c4_i32_721 : i32
      %705 = arith.index_cast %704 : i32 to index
      %c3_722 = arith.constant 3 : index
      %c0_723 = arith.constant 0 : index
      %706 = vector.load %arg18[%705, %c3_722, %c0_723] : memref<14x14x32xf32, #tpu.memory_space<vmem>>, vector<1x10x32xf32>
      %707 = vector.shape_cast %706 : vector<1x10x32xf32> to vector<10x32xf32>
      %c4_724 = arith.constant 4 : index
      %c3_725 = arith.constant 3 : index
      %c0_726 = arith.constant 0 : index
      %c0_727 = arith.constant 0 : index
      %708 = vector.load %arg8[%c4_724, %c3_725, %c0_726, %c0_727] : memref<5x5x32x64xf32, #tpu.memory_space<vmem>>, vector<1x1x32x64xf32>
      %709 = vector.shape_cast %708 : vector<1x1x32x64xf32> to vector<32x64xf32>
      %cst_728 = arith.constant dense<0.000000e+00> : vector<10x64xf32>
      %710 = tpu.matmul %707, %709, %cst_728 {dimension_numbers = #tpu.dot_dimension_numbers<[1], [0], [0], [1], [0, 0, 1, 1], [], []>} : vector<10x32xf32>, vector<32x64xf32>, vector<10x64xf32> -> vector<10x64xf32>
      %711 = arith.addf %703, %710 : vector<10x64xf32>
      %c4_i32_729 = arith.constant 4 : i32
      %712 = arith.addi %arg20, %c4_i32_729 : i32
      %713 = arith.index_cast %712 : i32 to index
      %c4_730 = arith.constant 4 : index
      %c0_731 = arith.constant 0 : index
      %714 = vector.load %arg18[%713, %c4_730, %c0_731] : memref<14x14x32xf32, #tpu.memory_space<vmem>>, vector<1x10x32xf32>
      %715 = vector.shape_cast %714 : vector<1x10x32xf32> to vector<10x32xf32>
      %c4_732 = arith.constant 4 : index
      %c4_733 = arith.constant 4 : index
      %c0_734 = arith.constant 0 : index
      %c0_735 = arith.constant 0 : index
      %716 = vector.load %arg8[%c4_732, %c4_733, %c0_734, %c0_735] : memref<5x5x32x64xf32, #tpu.memory_space<vmem>>, vector<1x1x32x64xf32>
      %717 = vector.shape_cast %716 : vector<1x1x32x64xf32> to vector<32x64xf32>
      %cst_736 = arith.constant dense<0.000000e+00> : vector<10x64xf32>
      %718 = tpu.matmul %715, %717, %cst_736 {dimension_numbers = #tpu.dot_dimension_numbers<[1], [0], [0], [1], [0, 0, 1, 1], [], []>} : vector<10x32xf32>, vector<32x64xf32>, vector<10x64xf32> -> vector<10x64xf32>
      %719 = arith.addf %711, %718 : vector<10x64xf32>
      %c0_737 = arith.constant 0 : index
      %c0_738 = arith.constant 0 : index
      %720 = vector.load %arg9[%c0_737, %c0_738] : memref<1x64xf32, #tpu.memory_space<vmem>>, vector<1x64xf32>
      %721 = vector.broadcast %720 : vector<1x64xf32> to vector<10x64xf32>
      %722 = arith.addf %719, %721 : vector<10x64xf32>
      %cst_739 = arith.constant 0.000000e+00 : f32
      %723 = vector.broadcast %cst_739 : f32 to vector<10x64xf32>
      %724 = arith.cmpf ogt, %722, %723 : vector<10x64xf32>
      %cst_740 = arith.constant 2.000000e-01 : f32
      %725 = vector.broadcast %cst_740 : f32 to vector<10x64xf32>
      %726 = arith.mulf %725, %722 : vector<10x64xf32>
      %727 = arith.select %724, %722, %726 : vector<10x64xi1>, vector<10x64xf32>
      %728 = arith.index_cast %arg20 : i32 to index
      %c0_741 = arith.constant 0 : index
      %c0_742 = arith.constant 0 : index
      %729 = vector.load %arg19[%728, %c0_741, %c0_742] : memref<10x10x64xf32, #tpu.memory_space<vmem>>, vector<1x10x64xf32>
      %730 = vector.shape_cast %729 : vector<1x10x64xf32> to vector<10x64xf32>
      %731 = vector.shape_cast %727 : vector<10x64xf32> to vector<1x10x64xf32>
      tpu.vector_store %arg19[%728, %c0_741, %c0_742], %731 {strides = array<i32>} : memref<10x10x64xf32, #tpu.memory_space<vmem>>, vector<1x10x64xf32>,
    }
    %c10_i32_21 = arith.constant 10 : i32
    %cst_22 = arith.constant 0.000000e+00 : f32
    %22 = vector.broadcast %cst_22 : f32 to vector<1x256xf32>
    %c0_23 = arith.constant 0 : index
    %c0_24 = arith.constant 0 : index
    %c0_25 = arith.constant 0 : index
    %23 = vector.load %arg19[%c0_23, %c0_24, %c0_25] : memref<10x10x64xf32, #tpu.memory_space<vmem>>, vector<1x1x64xf32>
    %24 = vector.shape_cast %23 : vector<1x1x64xf32> to vector<1x64xf32>
    %c0_26 = arith.constant 0 : index
    %c1 = arith.constant 1 : index
    %c0_27 = arith.constant 0 : index
    %25 = vector.load %arg19[%c0_26, %c1, %c0_27] : memref<10x10x64xf32, #tpu.memory_space<vmem>>, vector<1x1x64xf32>
    %26 = vector.shape_cast %25 : vector<1x1x64xf32> to vector<1x64xf32>
    %27 = arith.maximumf %24, %26 : vector<1x64xf32>
    %c0_28 = arith.constant 0 : index
    %c2 = arith.constant 2 : index
    %c0_29 = arith.constant 0 : index
    %28 = vector.load %arg19[%c0_28, %c2, %c0_29] : memref<10x10x64xf32, #tpu.memory_space<vmem>>, vector<1x1x64xf32>
    %29 = vector.shape_cast %28 : vector<1x1x64xf32> to vector<1x64xf32>
    %30 = arith.maximumf %27, %29 : vector<1x64xf32>
    %c1_30 = arith.constant 1 : index
    %c0_31 = arith.constant 0 : index
    %c0_32 = arith.constant 0 : index
    %31 = vector.load %arg19[%c1_30, %c0_31, %c0_32] : memref<10x10x64xf32, #tpu.memory_space<vmem>>, vector<1x1x64xf32>
    %32 = vector.shape_cast %31 : vector<1x1x64xf32> to vector<1x64xf32>
    %33 = arith.maximumf %30, %32 : vector<1x64xf32>
    %c1_33 = arith.constant 1 : index
    %c1_34 = arith.constant 1 : index
    %c0_35 = arith.constant 0 : index
    %34 = vector.load %arg19[%c1_33, %c1_34, %c0_35] : memref<10x10x64xf32, #tpu.memory_space<vmem>>, vector<1x1x64xf32>
    %35 = vector.shape_cast %34 : vector<1x1x64xf32> to vector<1x64xf32>
    %36 = arith.maximumf %33, %35 : vector<1x64xf32>
    %c1_36 = arith.constant 1 : index
    %c2_37 = arith.constant 2 : index
    %c0_38 = arith.constant 0 : index
    %37 = vector.load %arg19[%c1_36, %c2_37, %c0_38] : memref<10x10x64xf32, #tpu.memory_space<vmem>>, vector<1x1x64xf32>
    %38 = vector.shape_cast %37 : vector<1x1x64xf32> to vector<1x64xf32>
    %39 = arith.maximumf %36, %38 : vector<1x64xf32>
    %c2_39 = arith.constant 2 : index
    %c0_40 = arith.constant 0 : index
    %c0_41 = arith.constant 0 : index
    %40 = vector.load %arg19[%c2_39, %c0_40, %c0_41] : memref<10x10x64xf32, #tpu.memory_space<vmem>>, vector<1x1x64xf32>
    %41 = vector.shape_cast %40 : vector<1x1x64xf32> to vector<1x64xf32>
    %42 = arith.maximumf %39, %41 : vector<1x64xf32>
    %c2_42 = arith.constant 2 : index
    %c1_43 = arith.constant 1 : index
    %c0_44 = arith.constant 0 : index
    %43 = vector.load %arg19[%c2_42, %c1_43, %c0_44] : memref<10x10x64xf32, #tpu.memory_space<vmem>>, vector<1x1x64xf32>
    %44 = vector.shape_cast %43 : vector<1x1x64xf32> to vector<1x64xf32>
    %45 = arith.maximumf %42, %44 : vector<1x64xf32>
    %c2_45 = arith.constant 2 : index
    %c2_46 = arith.constant 2 : index
    %c0_47 = arith.constant 0 : index
    %46 = vector.load %arg19[%c2_45, %c2_46, %c0_47] : memref<10x10x64xf32, #tpu.memory_space<vmem>>, vector<1x1x64xf32>
    %47 = vector.shape_cast %46 : vector<1x1x64xf32> to vector<1x64xf32>
    %48 = arith.maximumf %45, %47 : vector<1x64xf32>
    %c0_48 = arith.constant 0 : index
    %c0_49 = arith.constant 0 : index
    %c0_50 = arith.constant 0 : index
    %c0_51 = arith.constant 0 : index
    %49 = vector.load %arg10[%c0_48, %c0_49, %c0_50, %c0_51] : memref<4x4x64x256xf32, #tpu.memory_space<vmem>>, vector<1x1x64x256xf32>
    %50 = vector.shape_cast %49 : vector<1x1x64x256xf32> to vector<64x256xf32>
    %cst_52 = arith.constant dense<0.000000e+00> : vector<1x256xf32>
    %51 = tpu.matmul %48, %50, %cst_52 {dimension_numbers = #tpu.dot_dimension_numbers<[1], [0], [0], [1], [0, 0, 1, 1], [], []>} : vector<1x64xf32>, vector<64x256xf32>, vector<1x256xf32> -> vector<1x256xf32>
    %52 = arith.addf %22, %51 : vector<1x256xf32>
    %c0_53 = arith.constant 0 : index
    %c2_54 = arith.constant 2 : index
    %c0_55 = arith.constant 0 : index
    %53 = vector.load %arg19[%c0_53, %c2_54, %c0_55] : memref<10x10x64xf32, #tpu.memory_space<vmem>>, vector<1x1x64xf32>
    %54 = vector.shape_cast %53 : vector<1x1x64xf32> to vector<1x64xf32>
    %c0_56 = arith.constant 0 : index
    %c3 = arith.constant 3 : index
    %c0_57 = arith.constant 0 : index
    %55 = vector.load %arg19[%c0_56, %c3, %c0_57] : memref<10x10x64xf32, #tpu.memory_space<vmem>>, vector<1x1x64xf32>
    %56 = vector.shape_cast %55 : vector<1x1x64xf32> to vector<1x64xf32>
    %57 = arith.maximumf %54, %56 : vector<1x64xf32>
    %c0_58 = arith.constant 0 : index
    %c4 = arith.constant 4 : index
    %c0_59 = arith.constant 0 : index
    %58 = vector.load %arg19[%c0_58, %c4, %c0_59] : memref<10x10x64xf32, #tpu.memory_space<vmem>>, vector<1x1x64xf32>
    %59 = vector.shape_cast %58 : vector<1x1x64xf32> to vector<1x64xf32>
    %60 = arith.maximumf %57, %59 : vector<1x64xf32>
    %c1_60 = arith.constant 1 : index
    %c2_61 = arith.constant 2 : index
    %c0_62 = arith.constant 0 : index
    %61 = vector.load %arg19[%c1_60, %c2_61, %c0_62] : memref<10x10x64xf32, #tpu.memory_space<vmem>>, vector<1x1x64xf32>
    %62 = vector.shape_cast %61 : vector<1x1x64xf32> to vector<1x64xf32>
    %63 = arith.maximumf %60, %62 : vector<1x64xf32>
    %c1_63 = arith.constant 1 : index
    %c3_64 = arith.constant 3 : index
    %c0_65 = arith.constant 0 : index
    %64 = vector.load %arg19[%c1_63, %c3_64, %c0_65] : memref<10x10x64xf32, #tpu.memory_space<vmem>>, vector<1x1x64xf32>
    %65 = vector.shape_cast %64 : vector<1x1x64xf32> to vector<1x64xf32>
    %66 = arith.maximumf %63, %65 : vector<1x64xf32>
    %c1_66 = arith.constant 1 : index
    %c4_67 = arith.constant 4 : index
    %c0_68 = arith.constant 0 : index
    %67 = vector.load %arg19[%c1_66, %c4_67, %c0_68] : memref<10x10x64xf32, #tpu.memory_space<vmem>>, vector<1x1x64xf32>
    %68 = vector.shape_cast %67 : vector<1x1x64xf32> to vector<1x64xf32>
    %69 = arith.maximumf %66, %68 : vector<1x64xf32>
    %c2_69 = arith.constant 2 : index
    %c2_70 = arith.constant 2 : index
    %c0_71 = arith.constant 0 : index
    %70 = vector.load %arg19[%c2_69, %c2_70, %c0_71] : memref<10x10x64xf32, #tpu.memory_space<vmem>>, vector<1x1x64xf32>
    %71 = vector.shape_cast %70 : vector<1x1x64xf32> to vector<1x64xf32>
    %72 = arith.maximumf %69, %71 : vector<1x64xf32>
    %c2_72 = arith.constant 2 : index
    %c3_73 = arith.constant 3 : index
    %c0_74 = arith.constant 0 : index
    %73 = vector.load %arg19[%c2_72, %c3_73, %c0_74] : memref<10x10x64xf32, #tpu.memory_space<vmem>>, vector<1x1x64xf32>
    %74 = vector.shape_cast %73 : vector<1x1x64xf32> to vector<1x64xf32>
    %75 = arith.maximumf %72, %74 : vector<1x64xf32>
    %c2_75 = arith.constant 2 : index
    %c4_76 = arith.constant 4 : index
    %c0_77 = arith.constant 0 : index
    %76 = vector.load %arg19[%c2_75, %c4_76, %c0_77] : memref<10x10x64xf32, #tpu.memory_space<vmem>>, vector<1x1x64xf32>
    %77 = vector.shape_cast %76 : vector<1x1x64xf32> to vector<1x64xf32>
    %78 = arith.maximumf %75, %77 : vector<1x64xf32>
    %c0_78 = arith.constant 0 : index
    %c1_79 = arith.constant 1 : index
    %c0_80 = arith.constant 0 : index
    %c0_81 = arith.constant 0 : index
    %79 = vector.load %arg10[%c0_78, %c1_79, %c0_80, %c0_81] : memref<4x4x64x256xf32, #tpu.memory_space<vmem>>, vector<1x1x64x256xf32>
    %80 = vector.shape_cast %79 : vector<1x1x64x256xf32> to vector<64x256xf32>
    %cst_82 = arith.constant dense<0.000000e+00> : vector<1x256xf32>
    %81 = tpu.matmul %78, %80, %cst_82 {dimension_numbers = #tpu.dot_dimension_numbers<[1], [0], [0], [1], [0, 0, 1, 1], [], []>} : vector<1x64xf32>, vector<64x256xf32>, vector<1x256xf32> -> vector<1x256xf32>
    %82 = arith.addf %52, %81 : vector<1x256xf32>
    %c0_83 = arith.constant 0 : index
    %c4_84 = arith.constant 4 : index
    %c0_85 = arith.constant 0 : index
    %83 = vector.load %arg19[%c0_83, %c4_84, %c0_85] : memref<10x10x64xf32, #tpu.memory_space<vmem>>, vector<1x1x64xf32>
    %84 = vector.shape_cast %83 : vector<1x1x64xf32> to vector<1x64xf32>
    %c0_86 = arith.constant 0 : index
    %c5 = arith.constant 5 : index
    %c0_87 = arith.constant 0 : index
    %85 = vector.load %arg19[%c0_86, %c5, %c0_87] : memref<10x10x64xf32, #tpu.memory_space<vmem>>, vector<1x1x64xf32>
    %86 = vector.shape_cast %85 : vector<1x1x64xf32> to vector<1x64xf32>
    %87 = arith.maximumf %84, %86 : vector<1x64xf32>
    %c0_88 = arith.constant 0 : index
    %c6 = arith.constant 6 : index
    %c0_89 = arith.constant 0 : index
    %88 = vector.load %arg19[%c0_88, %c6, %c0_89] : memref<10x10x64xf32, #tpu.memory_space<vmem>>, vector<1x1x64xf32>
    %89 = vector.shape_cast %88 : vector<1x1x64xf32> to vector<1x64xf32>
    %90 = arith.maximumf %87, %89 : vector<1x64xf32>
    %c1_90 = arith.constant 1 : index
    %c4_91 = arith.constant 4 : index
    %c0_92 = arith.constant 0 : index
    %91 = vector.load %arg19[%c1_90, %c4_91, %c0_92] : memref<10x10x64xf32, #tpu.memory_space<vmem>>, vector<1x1x64xf32>
    %92 = vector.shape_cast %91 : vector<1x1x64xf32> to vector<1x64xf32>
    %93 = arith.maximumf %90, %92 : vector<1x64xf32>
    %c1_93 = arith.constant 1 : index
    %c5_94 = arith.constant 5 : index
    %c0_95 = arith.constant 0 : index
    %94 = vector.load %arg19[%c1_93, %c5_94, %c0_95] : memref<10x10x64xf32, #tpu.memory_space<vmem>>, vector<1x1x64xf32>
    %95 = vector.shape_cast %94 : vector<1x1x64xf32> to vector<1x64xf32>
    %96 = arith.maximumf %93, %95 : vector<1x64xf32>
    %c1_96 = arith.constant 1 : index
    %c6_97 = arith.constant 6 : index
    %c0_98 = arith.constant 0 : index
    %97 = vector.load %arg19[%c1_96, %c6_97, %c0_98] : memref<10x10x64xf32, #tpu.memory_space<vmem>>, vector<1x1x64xf32>
    %98 = vector.shape_cast %97 : vector<1x1x64xf32> to vector<1x64xf32>
    %99 = arith.maximumf %96, %98 : vector<1x64xf32>
    %c2_99 = arith.constant 2 : index
    %c4_100 = arith.constant 4 : index
    %c0_101 = arith.constant 0 : index
    %100 = vector.load %arg19[%c2_99, %c4_100, %c0_101] : memref<10x10x64xf32, #tpu.memory_space<vmem>>, vector<1x1x64xf32>
    %101 = vector.shape_cast %100 : vector<1x1x64xf32> to vector<1x64xf32>
    %102 = arith.maximumf %99, %101 : vector<1x64xf32>
    %c2_102 = arith.constant 2 : index
    %c5_103 = arith.constant 5 : index
    %c0_104 = arith.constant 0 : index
    %103 = vector.load %arg19[%c2_102, %c5_103, %c0_104] : memref<10x10x64xf32, #tpu.memory_space<vmem>>, vector<1x1x64xf32>
    %104 = vector.shape_cast %103 : vector<1x1x64xf32> to vector<1x64xf32>
    %105 = arith.maximumf %102, %104 : vector<1x64xf32>
    %c2_105 = arith.constant 2 : index
    %c6_106 = arith.constant 6 : index
    %c0_107 = arith.constant 0 : index
    %106 = vector.load %arg19[%c2_105, %c6_106, %c0_107] : memref<10x10x64xf32, #tpu.memory_space<vmem>>, vector<1x1x64xf32>
    %107 = vector.shape_cast %106 : vector<1x1x64xf32> to vector<1x64xf32>
    %108 = arith.maximumf %105, %107 : vector<1x64xf32>
    %c0_108 = arith.constant 0 : index
    %c2_109 = arith.constant 2 : index
    %c0_110 = arith.constant 0 : index
    %c0_111 = arith.constant 0 : index
    %109 = vector.load %arg10[%c0_108, %c2_109, %c0_110, %c0_111] : memref<4x4x64x256xf32, #tpu.memory_space<vmem>>, vector<1x1x64x256xf32>
    %110 = vector.shape_cast %109 : vector<1x1x64x256xf32> to vector<64x256xf32>
    %cst_112 = arith.constant dense<0.000000e+00> : vector<1x256xf32>
    %111 = tpu.matmul %108, %110, %cst_112 {dimension_numbers = #tpu.dot_dimension_numbers<[1], [0], [0], [1], [0, 0, 1, 1], [], []>} : vector<1x64xf32>, vector<64x256xf32>, vector<1x256xf32> -> vector<1x256xf32>
    %112 = arith.addf %82, %111 : vector<1x256xf32>
    %c0_113 = arith.constant 0 : index
    %c6_114 = arith.constant 6 : index
    %c0_115 = arith.constant 0 : index
    %113 = vector.load %arg19[%c0_113, %c6_114, %c0_115] : memref<10x10x64xf32, #tpu.memory_space<vmem>>, vector<1x1x64xf32>
    %114 = vector.shape_cast %113 : vector<1x1x64xf32> to vector<1x64xf32>
    %c0_116 = arith.constant 0 : index
    %c7 = arith.constant 7 : index
    %c0_117 = arith.constant 0 : index
    %115 = vector.load %arg19[%c0_116, %c7, %c0_117] : memref<10x10x64xf32, #tpu.memory_space<vmem>>, vector<1x1x64xf32>
    %116 = vector.shape_cast %115 : vector<1x1x64xf32> to vector<1x64xf32>
    %117 = arith.maximumf %114, %116 : vector<1x64xf32>
    %c0_118 = arith.constant 0 : index
    %c8 = arith.constant 8 : index
    %c0_119 = arith.constant 0 : index
    %118 = vector.load %arg19[%c0_118, %c8, %c0_119] : memref<10x10x64xf32, #tpu.memory_space<vmem>>, vector<1x1x64xf32>
    %119 = vector.shape_cast %118 : vector<1x1x64xf32> to vector<1x64xf32>
    %120 = arith.maximumf %117, %119 : vector<1x64xf32>
    %c1_120 = arith.constant 1 : index
    %c6_121 = arith.constant 6 : index
    %c0_122 = arith.constant 0 : index
    %121 = vector.load %arg19[%c1_120, %c6_121, %c0_122] : memref<10x10x64xf32, #tpu.memory_space<vmem>>, vector<1x1x64xf32>
    %122 = vector.shape_cast %121 : vector<1x1x64xf32> to vector<1x64xf32>
    %123 = arith.maximumf %120, %122 : vector<1x64xf32>
    %c1_123 = arith.constant 1 : index
    %c7_124 = arith.constant 7 : index
    %c0_125 = arith.constant 0 : index
    %124 = vector.load %arg19[%c1_123, %c7_124, %c0_125] : memref<10x10x64xf32, #tpu.memory_space<vmem>>, vector<1x1x64xf32>
    %125 = vector.shape_cast %124 : vector<1x1x64xf32> to vector<1x64xf32>
    %126 = arith.maximumf %123, %125 : vector<1x64xf32>
    %c1_126 = arith.constant 1 : index
    %c8_127 = arith.constant 8 : index
    %c0_128 = arith.constant 0 : index
    %127 = vector.load %arg19[%c1_126, %c8_127, %c0_128] : memref<10x10x64xf32, #tpu.memory_space<vmem>>, vector<1x1x64xf32>
    %128 = vector.shape_cast %127 : vector<1x1x64xf32> to vector<1x64xf32>
    %129 = arith.maximumf %126, %128 : vector<1x64xf32>
    %c2_129 = arith.constant 2 : index
    %c6_130 = arith.constant 6 : index
    %c0_131 = arith.constant 0 : index
    %130 = vector.load %arg19[%c2_129, %c6_130, %c0_131] : memref<10x10x64xf32, #tpu.memory_space<vmem>>, vector<1x1x64xf32>
    %131 = vector.shape_cast %130 : vector<1x1x64xf32> to vector<1x64xf32>
    %132 = arith.maximumf %129, %131 : vector<1x64xf32>
    %c2_132 = arith.constant 2 : index
    %c7_133 = arith.constant 7 : index
    %c0_134 = arith.constant 0 : index
    %133 = vector.load %arg19[%c2_132, %c7_133, %c0_134] : memref<10x10x64xf32, #tpu.memory_space<vmem>>, vector<1x1x64xf32>
    %134 = vector.shape_cast %133 : vector<1x1x64xf32> to vector<1x64xf32>
    %135 = arith.maximumf %132, %134 : vector<1x64xf32>
    %c2_135 = arith.constant 2 : index
    %c8_136 = arith.constant 8 : index
    %c0_137 = arith.constant 0 : index
    %136 = vector.load %arg19[%c2_135, %c8_136, %c0_137] : memref<10x10x64xf32, #tpu.memory_space<vmem>>, vector<1x1x64xf32>
    %137 = vector.shape_cast %136 : vector<1x1x64xf32> to vector<1x64xf32>
    %138 = arith.maximumf %135, %137 : vector<1x64xf32>
    %c0_138 = arith.constant 0 : index
    %c3_139 = arith.constant 3 : index
    %c0_140 = arith.constant 0 : index
    %c0_141 = arith.constant 0 : index
    %139 = vector.load %arg10[%c0_138, %c3_139, %c0_140, %c0_141] : memref<4x4x64x256xf32, #tpu.memory_space<vmem>>, vector<1x1x64x256xf32>
    %140 = vector.shape_cast %139 : vector<1x1x64x256xf32> to vector<64x256xf32>
    %cst_142 = arith.constant dense<0.000000e+00> : vector<1x256xf32>
    %141 = tpu.matmul %138, %140, %cst_142 {dimension_numbers = #tpu.dot_dimension_numbers<[1], [0], [0], [1], [0, 0, 1, 1], [], []>} : vector<1x64xf32>, vector<64x256xf32>, vector<1x256xf32> -> vector<1x256xf32>
    %142 = arith.addf %112, %141 : vector<1x256xf32>
    %c2_143 = arith.constant 2 : index
    %c0_144 = arith.constant 0 : index
    %c0_145 = arith.constant 0 : index
    %143 = vector.load %arg19[%c2_143, %c0_144, %c0_145] : memref<10x10x64xf32, #tpu.memory_space<vmem>>, vector<1x1x64xf32>
    %144 = vector.shape_cast %143 : vector<1x1x64xf32> to vector<1x64xf32>
    %c2_146 = arith.constant 2 : index
    %c1_147 = arith.constant 1 : index
    %c0_148 = arith.constant 0 : index
    %145 = vector.load %arg19[%c2_146, %c1_147, %c0_148] : memref<10x10x64xf32, #tpu.memory_space<vmem>>, vector<1x1x64xf32>
    %146 = vector.shape_cast %145 : vector<1x1x64xf32> to vector<1x64xf32>
    %147 = arith.maximumf %144, %146 : vector<1x64xf32>
    %c2_149 = arith.constant 2 : index
    %c2_150 = arith.constant 2 : index
    %c0_151 = arith.constant 0 : index
    %148 = vector.load %arg19[%c2_149, %c2_150, %c0_151] : memref<10x10x64xf32, #tpu.memory_space<vmem>>, vector<1x1x64xf32>
    %149 = vector.shape_cast %148 : vector<1x1x64xf32> to vector<1x64xf32>
    %150 = arith.maximumf %147, %149 : vector<1x64xf32>
    %c3_152 = arith.constant 3 : index
    %c0_153 = arith.constant 0 : index
    %c0_154 = arith.constant 0 : index
    %151 = vector.load %arg19[%c3_152, %c0_153, %c0_154] : memref<10x10x64xf32, #tpu.memory_space<vmem>>, vector<1x1x64xf32>
    %152 = vector.shape_cast %151 : vector<1x1x64xf32> to vector<1x64xf32>
    %153 = arith.maximumf %150, %152 : vector<1x64xf32>
    %c3_155 = arith.constant 3 : index
    %c1_156 = arith.constant 1 : index
    %c0_157 = arith.constant 0 : index
    %154 = vector.load %arg19[%c3_155, %c1_156, %c0_157] : memref<10x10x64xf32, #tpu.memory_space<vmem>>, vector<1x1x64xf32>
    %155 = vector.shape_cast %154 : vector<1x1x64xf32> to vector<1x64xf32>
    %156 = arith.maximumf %153, %155 : vector<1x64xf32>
    %c3_158 = arith.constant 3 : index
    %c2_159 = arith.constant 2 : index
    %c0_160 = arith.constant 0 : index
    %157 = vector.load %arg19[%c3_158, %c2_159, %c0_160] : memref<10x10x64xf32, #tpu.memory_space<vmem>>, vector<1x1x64xf32>
    %158 = vector.shape_cast %157 : vector<1x1x64xf32> to vector<1x64xf32>
    %159 = arith.maximumf %156, %158 : vector<1x64xf32>
    %c4_161 = arith.constant 4 : index
    %c0_162 = arith.constant 0 : index
    %c0_163 = arith.constant 0 : index
    %160 = vector.load %arg19[%c4_161, %c0_162, %c0_163] : memref<10x10x64xf32, #tpu.memory_space<vmem>>, vector<1x1x64xf32>
    %161 = vector.shape_cast %160 : vector<1x1x64xf32> to vector<1x64xf32>
    %162 = arith.maximumf %159, %161 : vector<1x64xf32>
    %c4_164 = arith.constant 4 : index
    %c1_165 = arith.constant 1 : index
    %c0_166 = arith.constant 0 : index
    %163 = vector.load %arg19[%c4_164, %c1_165, %c0_166] : memref<10x10x64xf32, #tpu.memory_space<vmem>>, vector<1x1x64xf32>
    %164 = vector.shape_cast %163 : vector<1x1x64xf32> to vector<1x64xf32>
    %165 = arith.maximumf %162, %164 : vector<1x64xf32>
    %c4_167 = arith.constant 4 : index
    %c2_168 = arith.constant 2 : index
    %c0_169 = arith.constant 0 : index
    %166 = vector.load %arg19[%c4_167, %c2_168, %c0_169] : memref<10x10x64xf32, #tpu.memory_space<vmem>>, vector<1x1x64xf32>
    %167 = vector.shape_cast %166 : vector<1x1x64xf32> to vector<1x64xf32>
    %168 = arith.maximumf %165, %167 : vector<1x64xf32>
    %c1_170 = arith.constant 1 : index
    %c0_171 = arith.constant 0 : index
    %c0_172 = arith.constant 0 : index
    %c0_173 = arith.constant 0 : index
    %169 = vector.load %arg10[%c1_170, %c0_171, %c0_172, %c0_173] : memref<4x4x64x256xf32, #tpu.memory_space<vmem>>, vector<1x1x64x256xf32>
    %170 = vector.shape_cast %169 : vector<1x1x64x256xf32> to vector<64x256xf32>
    %cst_174 = arith.constant dense<0.000000e+00> : vector<1x256xf32>
    %171 = tpu.matmul %168, %170, %cst_174 {dimension_numbers = #tpu.dot_dimension_numbers<[1], [0], [0], [1], [0, 0, 1, 1], [], []>} : vector<1x64xf32>, vector<64x256xf32>, vector<1x256xf32> -> vector<1x256xf32>
    %172 = arith.addf %142, %171 : vector<1x256xf32>
    %c2_175 = arith.constant 2 : index
    %c2_176 = arith.constant 2 : index
    %c0_177 = arith.constant 0 : index
    %173 = vector.load %arg19[%c2_175, %c2_176, %c0_177] : memref<10x10x64xf32, #tpu.memory_space<vmem>>, vector<1x1x64xf32>
    %174 = vector.shape_cast %173 : vector<1x1x64xf32> to vector<1x64xf32>
    %c2_178 = arith.constant 2 : index
    %c3_179 = arith.constant 3 : index
    %c0_180 = arith.constant 0 : index
    %175 = vector.load %arg19[%c2_178, %c3_179, %c0_180] : memref<10x10x64xf32, #tpu.memory_space<vmem>>, vector<1x1x64xf32>
    %176 = vector.shape_cast %175 : vector<1x1x64xf32> to vector<1x64xf32>
    %177 = arith.maximumf %174, %176 : vector<1x64xf32>
    %c2_181 = arith.constant 2 : index
    %c4_182 = arith.constant 4 : index
    %c0_183 = arith.constant 0 : index
    %178 = vector.load %arg19[%c2_181, %c4_182, %c0_183] : memref<10x10x64xf32, #tpu.memory_space<vmem>>, vector<1x1x64xf32>
    %179 = vector.shape_cast %178 : vector<1x1x64xf32> to vector<1x64xf32>
    %180 = arith.maximumf %177, %179 : vector<1x64xf32>
    %c3_184 = arith.constant 3 : index
    %c2_185 = arith.constant 2 : index
    %c0_186 = arith.constant 0 : index
    %181 = vector.load %arg19[%c3_184, %c2_185, %c0_186] : memref<10x10x64xf32, #tpu.memory_space<vmem>>, vector<1x1x64xf32>
    %182 = vector.shape_cast %181 : vector<1x1x64xf32> to vector<1x64xf32>
    %183 = arith.maximumf %180, %182 : vector<1x64xf32>
    %c3_187 = arith.constant 3 : index
    %c3_188 = arith.constant 3 : index
    %c0_189 = arith.constant 0 : index
    %184 = vector.load %arg19[%c3_187, %c3_188, %c0_189] : memref<10x10x64xf32, #tpu.memory_space<vmem>>, vector<1x1x64xf32>
    %185 = vector.shape_cast %184 : vector<1x1x64xf32> to vector<1x64xf32>
    %186 = arith.maximumf %183, %185 : vector<1x64xf32>
    %c3_190 = arith.constant 3 : index
    %c4_191 = arith.constant 4 : index
    %c0_192 = arith.constant 0 : index
    %187 = vector.load %arg19[%c3_190, %c4_191, %c0_192] : memref<10x10x64xf32, #tpu.memory_space<vmem>>, vector<1x1x64xf32>
    %188 = vector.shape_cast %187 : vector<1x1x64xf32> to vector<1x64xf32>
    %189 = arith.maximumf %186, %188 : vector<1x64xf32>
    %c4_193 = arith.constant 4 : index
    %c2_194 = arith.constant 2 : index
    %c0_195 = arith.constant 0 : index
    %190 = vector.load %arg19[%c4_193, %c2_194, %c0_195] : memref<10x10x64xf32, #tpu.memory_space<vmem>>, vector<1x1x64xf32>
    %191 = vector.shape_cast %190 : vector<1x1x64xf32> to vector<1x64xf32>
    %192 = arith.maximumf %189, %191 : vector<1x64xf32>
    %c4_196 = arith.constant 4 : index
    %c3_197 = arith.constant 3 : index
    %c0_198 = arith.constant 0 : index
    %193 = vector.load %arg19[%c4_196, %c3_197, %c0_198] : memref<10x10x64xf32, #tpu.memory_space<vmem>>, vector<1x1x64xf32>
    %194 = vector.shape_cast %193 : vector<1x1x64xf32> to vector<1x64xf32>
    %195 = arith.maximumf %192, %194 : vector<1x64xf32>
    %c4_199 = arith.constant 4 : index
    %c4_200 = arith.constant 4 : index
    %c0_201 = arith.constant 0 : index
    %196 = vector.load %arg19[%c4_199, %c4_200, %c0_201] : memref<10x10x64xf32, #tpu.memory_space<vmem>>, vector<1x1x64xf32>
    %197 = vector.shape_cast %196 : vector<1x1x64xf32> to vector<1x64xf32>
    %198 = arith.maximumf %195, %197 : vector<1x64xf32>
    %c1_202 = arith.constant 1 : index
    %c1_203 = arith.constant 1 : index
    %c0_204 = arith.constant 0 : index
    %c0_205 = arith.constant 0 : index
    %199 = vector.load %arg10[%c1_202, %c1_203, %c0_204, %c0_205] : memref<4x4x64x256xf32, #tpu.memory_space<vmem>>, vector<1x1x64x256xf32>
    %200 = vector.shape_cast %199 : vector<1x1x64x256xf32> to vector<64x256xf32>
    %cst_206 = arith.constant dense<0.000000e+00> : vector<1x256xf32>
    %201 = tpu.matmul %198, %200, %cst_206 {dimension_numbers = #tpu.dot_dimension_numbers<[1], [0], [0], [1], [0, 0, 1, 1], [], []>} : vector<1x64xf32>, vector<64x256xf32>, vector<1x256xf32> -> vector<1x256xf32>
    %202 = arith.addf %172, %201 : vector<1x256xf32>
    %c2_207 = arith.constant 2 : index
    %c4_208 = arith.constant 4 : index
    %c0_209 = arith.constant 0 : index
    %203 = vector.load %arg19[%c2_207, %c4_208, %c0_209] : memref<10x10x64xf32, #tpu.memory_space<vmem>>, vector<1x1x64xf32>
    %204 = vector.shape_cast %203 : vector<1x1x64xf32> to vector<1x64xf32>
    %c2_210 = arith.constant 2 : index
    %c5_211 = arith.constant 5 : index
    %c0_212 = arith.constant 0 : index
    %205 = vector.load %arg19[%c2_210, %c5_211, %c0_212] : memref<10x10x64xf32, #tpu.memory_space<vmem>>, vector<1x1x64xf32>
    %206 = vector.shape_cast %205 : vector<1x1x64xf32> to vector<1x64xf32>
    %207 = arith.maximumf %204, %206 : vector<1x64xf32>
    %c2_213 = arith.constant 2 : index
    %c6_214 = arith.constant 6 : index
    %c0_215 = arith.constant 0 : index
    %208 = vector.load %arg19[%c2_213, %c6_214, %c0_215] : memref<10x10x64xf32, #tpu.memory_space<vmem>>, vector<1x1x64xf32>
    %209 = vector.shape_cast %208 : vector<1x1x64xf32> to vector<1x64xf32>
    %210 = arith.maximumf %207, %209 : vector<1x64xf32>
    %c3_216 = arith.constant 3 : index
    %c4_217 = arith.constant 4 : index
    %c0_218 = arith.constant 0 : index
    %211 = vector.load %arg19[%c3_216, %c4_217, %c0_218] : memref<10x10x64xf32, #tpu.memory_space<vmem>>, vector<1x1x64xf32>
    %212 = vector.shape_cast %211 : vector<1x1x64xf32> to vector<1x64xf32>
    %213 = arith.maximumf %210, %212 : vector<1x64xf32>
    %c3_219 = arith.constant 3 : index
    %c5_220 = arith.constant 5 : index
    %c0_221 = arith.constant 0 : index
    %214 = vector.load %arg19[%c3_219, %c5_220, %c0_221] : memref<10x10x64xf32, #tpu.memory_space<vmem>>, vector<1x1x64xf32>
    %215 = vector.shape_cast %214 : vector<1x1x64xf32> to vector<1x64xf32>
    %216 = arith.maximumf %213, %215 : vector<1x64xf32>
    %c3_222 = arith.constant 3 : index
    %c6_223 = arith.constant 6 : index
    %c0_224 = arith.constant 0 : index
    %217 = vector.load %arg19[%c3_222, %c6_223, %c0_224] : memref<10x10x64xf32, #tpu.memory_space<vmem>>, vector<1x1x64xf32>
    %218 = vector.shape_cast %217 : vector<1x1x64xf32> to vector<1x64xf32>
    %219 = arith.maximumf %216, %218 : vector<1x64xf32>
    %c4_225 = arith.constant 4 : index
    %c4_226 = arith.constant 4 : index
    %c0_227 = arith.constant 0 : index
    %220 = vector.load %arg19[%c4_225, %c4_226, %c0_227] : memref<10x10x64xf32, #tpu.memory_space<vmem>>, vector<1x1x64xf32>
    %221 = vector.shape_cast %220 : vector<1x1x64xf32> to vector<1x64xf32>
    %222 = arith.maximumf %219, %221 : vector<1x64xf32>
    %c4_228 = arith.constant 4 : index
    %c5_229 = arith.constant 5 : index
    %c0_230 = arith.constant 0 : index
    %223 = vector.load %arg19[%c4_228, %c5_229, %c0_230] : memref<10x10x64xf32, #tpu.memory_space<vmem>>, vector<1x1x64xf32>
    %224 = vector.shape_cast %223 : vector<1x1x64xf32> to vector<1x64xf32>
    %225 = arith.maximumf %222, %224 : vector<1x64xf32>
    %c4_231 = arith.constant 4 : index
    %c6_232 = arith.constant 6 : index
    %c0_233 = arith.constant 0 : index
    %226 = vector.load %arg19[%c4_231, %c6_232, %c0_233] : memref<10x10x64xf32, #tpu.memory_space<vmem>>, vector<1x1x64xf32>
    %227 = vector.shape_cast %226 : vector<1x1x64xf32> to vector<1x64xf32>
    %228 = arith.maximumf %225, %227 : vector<1x64xf32>
    %c1_234 = arith.constant 1 : index
    %c2_235 = arith.constant 2 : index
    %c0_236 = arith.constant 0 : index
    %c0_237 = arith.constant 0 : index
    %229 = vector.load %arg10[%c1_234, %c2_235, %c0_236, %c0_237] : memref<4x4x64x256xf32, #tpu.memory_space<vmem>>, vector<1x1x64x256xf32>
    %230 = vector.shape_cast %229 : vector<1x1x64x256xf32> to vector<64x256xf32>
    %cst_238 = arith.constant dense<0.000000e+00> : vector<1x256xf32>
    %231 = tpu.matmul %228, %230, %cst_238 {dimension_numbers = #tpu.dot_dimension_numbers<[1], [0], [0], [1], [0, 0, 1, 1], [], []>} : vector<1x64xf32>, vector<64x256xf32>, vector<1x256xf32> -> vector<1x256xf32>
    %232 = arith.addf %202, %231 : vector<1x256xf32>
    %c2_239 = arith.constant 2 : index
    %c6_240 = arith.constant 6 : index
    %c0_241 = arith.constant 0 : index
    %233 = vector.load %arg19[%c2_239, %c6_240, %c0_241] : memref<10x10x64xf32, #tpu.memory_space<vmem>>, vector<1x1x64xf32>
    %234 = vector.shape_cast %233 : vector<1x1x64xf32> to vector<1x64xf32>
    %c2_242 = arith.constant 2 : index
    %c7_243 = arith.constant 7 : index
    %c0_244 = arith.constant 0 : index
    %235 = vector.load %arg19[%c2_242, %c7_243, %c0_244] : memref<10x10x64xf32, #tpu.memory_space<vmem>>, vector<1x1x64xf32>
    %236 = vector.shape_cast %235 : vector<1x1x64xf32> to vector<1x64xf32>
    %237 = arith.maximumf %234, %236 : vector<1x64xf32>
    %c2_245 = arith.constant 2 : index
    %c8_246 = arith.constant 8 : index
    %c0_247 = arith.constant 0 : index
    %238 = vector.load %arg19[%c2_245, %c8_246, %c0_247] : memref<10x10x64xf32, #tpu.memory_space<vmem>>, vector<1x1x64xf32>
    %239 = vector.shape_cast %238 : vector<1x1x64xf32> to vector<1x64xf32>
    %240 = arith.maximumf %237, %239 : vector<1x64xf32>
    %c3_248 = arith.constant 3 : index
    %c6_249 = arith.constant 6 : index
    %c0_250 = arith.constant 0 : index
    %241 = vector.load %arg19[%c3_248, %c6_249, %c0_250] : memref<10x10x64xf32, #tpu.memory_space<vmem>>, vector<1x1x64xf32>
    %242 = vector.shape_cast %241 : vector<1x1x64xf32> to vector<1x64xf32>
    %243 = arith.maximumf %240, %242 : vector<1x64xf32>
    %c3_251 = arith.constant 3 : index
    %c7_252 = arith.constant 7 : index
    %c0_253 = arith.constant 0 : index
    %244 = vector.load %arg19[%c3_251, %c7_252, %c0_253] : memref<10x10x64xf32, #tpu.memory_space<vmem>>, vector<1x1x64xf32>
    %245 = vector.shape_cast %244 : vector<1x1x64xf32> to vector<1x64xf32>
    %246 = arith.maximumf %243, %245 : vector<1x64xf32>
    %c3_254 = arith.constant 3 : index
    %c8_255 = arith.constant 8 : index
    %c0_256 = arith.constant 0 : index
    %247 = vector.load %arg19[%c3_254, %c8_255, %c0_256] : memref<10x10x64xf32, #tpu.memory_space<vmem>>, vector<1x1x64xf32>
    %248 = vector.shape_cast %247 : vector<1x1x64xf32> to vector<1x64xf32>
    %249 = arith.maximumf %246, %248 : vector<1x64xf32>
    %c4_257 = arith.constant 4 : index
    %c6_258 = arith.constant 6 : index
    %c0_259 = arith.constant 0 : index
    %250 = vector.load %arg19[%c4_257, %c6_258, %c0_259] : memref<10x10x64xf32, #tpu.memory_space<vmem>>, vector<1x1x64xf32>
    %251 = vector.shape_cast %250 : vector<1x1x64xf32> to vector<1x64xf32>
    %252 = arith.maximumf %249, %251 : vector<1x64xf32>
    %c4_260 = arith.constant 4 : index
    %c7_261 = arith.constant 7 : index
    %c0_262 = arith.constant 0 : index
    %253 = vector.load %arg19[%c4_260, %c7_261, %c0_262] : memref<10x10x64xf32, #tpu.memory_space<vmem>>, vector<1x1x64xf32>
    %254 = vector.shape_cast %253 : vector<1x1x64xf32> to vector<1x64xf32>
    %255 = arith.maximumf %252, %254 : vector<1x64xf32>
    %c4_263 = arith.constant 4 : index
    %c8_264 = arith.constant 8 : index
    %c0_265 = arith.constant 0 : index
    %256 = vector.load %arg19[%c4_263, %c8_264, %c0_265] : memref<10x10x64xf32, #tpu.memory_space<vmem>>, vector<1x1x64xf32>
    %257 = vector.shape_cast %256 : vector<1x1x64xf32> to vector<1x64xf32>
    %258 = arith.maximumf %255, %257 : vector<1x64xf32>
    %c1_266 = arith.constant 1 : index
    %c3_267 = arith.constant 3 : index
    %c0_268 = arith.constant 0 : index
    %c0_269 = arith.constant 0 : index
    %259 = vector.load %arg10[%c1_266, %c3_267, %c0_268, %c0_269] : memref<4x4x64x256xf32, #tpu.memory_space<vmem>>, vector<1x1x64x256xf32>
    %260 = vector.shape_cast %259 : vector<1x1x64x256xf32> to vector<64x256xf32>
    %cst_270 = arith.constant dense<0.000000e+00> : vector<1x256xf32>
    %261 = tpu.matmul %258, %260, %cst_270 {dimension_numbers = #tpu.dot_dimension_numbers<[1], [0], [0], [1], [0, 0, 1, 1], [], []>} : vector<1x64xf32>, vector<64x256xf32>, vector<1x256xf32> -> vector<1x256xf32>
    %262 = arith.addf %232, %261 : vector<1x256xf32>
    %c4_271 = arith.constant 4 : index
    %c0_272 = arith.constant 0 : index
    %c0_273 = arith.constant 0 : index
    %263 = vector.load %arg19[%c4_271, %c0_272, %c0_273] : memref<10x10x64xf32, #tpu.memory_space<vmem>>, vector<1x1x64xf32>
    %264 = vector.shape_cast %263 : vector<1x1x64xf32> to vector<1x64xf32>
    %c4_274 = arith.constant 4 : index
    %c1_275 = arith.constant 1 : index
    %c0_276 = arith.constant 0 : index
    %265 = vector.load %arg19[%c4_274, %c1_275, %c0_276] : memref<10x10x64xf32, #tpu.memory_space<vmem>>, vector<1x1x64xf32>
    %266 = vector.shape_cast %265 : vector<1x1x64xf32> to vector<1x64xf32>
    %267 = arith.maximumf %264, %266 : vector<1x64xf32>
    %c4_277 = arith.constant 4 : index
    %c2_278 = arith.constant 2 : index
    %c0_279 = arith.constant 0 : index
    %268 = vector.load %arg19[%c4_277, %c2_278, %c0_279] : memref<10x10x64xf32, #tpu.memory_space<vmem>>, vector<1x1x64xf32>
    %269 = vector.shape_cast %268 : vector<1x1x64xf32> to vector<1x64xf32>
    %270 = arith.maximumf %267, %269 : vector<1x64xf32>
    %c5_280 = arith.constant 5 : index
    %c0_281 = arith.constant 0 : index
    %c0_282 = arith.constant 0 : index
    %271 = vector.load %arg19[%c5_280, %c0_281, %c0_282] : memref<10x10x64xf32, #tpu.memory_space<vmem>>, vector<1x1x64xf32>
    %272 = vector.shape_cast %271 : vector<1x1x64xf32> to vector<1x64xf32>
    %273 = arith.maximumf %270, %272 : vector<1x64xf32>
    %c5_283 = arith.constant 5 : index
    %c1_284 = arith.constant 1 : index
    %c0_285 = arith.constant 0 : index
    %274 = vector.load %arg19[%c5_283, %c1_284, %c0_285] : memref<10x10x64xf32, #tpu.memory_space<vmem>>, vector<1x1x64xf32>
    %275 = vector.shape_cast %274 : vector<1x1x64xf32> to vector<1x64xf32>
    %276 = arith.maximumf %273, %275 : vector<1x64xf32>
    %c5_286 = arith.constant 5 : index
    %c2_287 = arith.constant 2 : index
    %c0_288 = arith.constant 0 : index
    %277 = vector.load %arg19[%c5_286, %c2_287, %c0_288] : memref<10x10x64xf32, #tpu.memory_space<vmem>>, vector<1x1x64xf32>
    %278 = vector.shape_cast %277 : vector<1x1x64xf32> to vector<1x64xf32>
    %279 = arith.maximumf %276, %278 : vector<1x64xf32>
    %c6_289 = arith.constant 6 : index
    %c0_290 = arith.constant 0 : index
    %c0_291 = arith.constant 0 : index
    %280 = vector.load %arg19[%c6_289, %c0_290, %c0_291] : memref<10x10x64xf32, #tpu.memory_space<vmem>>, vector<1x1x64xf32>
    %281 = vector.shape_cast %280 : vector<1x1x64xf32> to vector<1x64xf32>
    %282 = arith.maximumf %279, %281 : vector<1x64xf32>
    %c6_292 = arith.constant 6 : index
    %c1_293 = arith.constant 1 : index
    %c0_294 = arith.constant 0 : index
    %283 = vector.load %arg19[%c6_292, %c1_293, %c0_294] : memref<10x10x64xf32, #tpu.memory_space<vmem>>, vector<1x1x64xf32>
    %284 = vector.shape_cast %283 : vector<1x1x64xf32> to vector<1x64xf32>
    %285 = arith.maximumf %282, %284 : vector<1x64xf32>
    %c6_295 = arith.constant 6 : index
    %c2_296 = arith.constant 2 : index
    %c0_297 = arith.constant 0 : index
    %286 = vector.load %arg19[%c6_295, %c2_296, %c0_297] : memref<10x10x64xf32, #tpu.memory_space<vmem>>, vector<1x1x64xf32>
    %287 = vector.shape_cast %286 : vector<1x1x64xf32> to vector<1x64xf32>
    %288 = arith.maximumf %285, %287 : vector<1x64xf32>
    %c2_298 = arith.constant 2 : index
    %c0_299 = arith.constant 0 : index
    %c0_300 = arith.constant 0 : index
    %c0_301 = arith.constant 0 : index
    %289 = vector.load %arg10[%c2_298, %c0_299, %c0_300, %c0_301] : memref<4x4x64x256xf32, #tpu.memory_space<vmem>>, vector<1x1x64x256xf32>
    %290 = vector.shape_cast %289 : vector<1x1x64x256xf32> to vector<64x256xf32>
    %cst_302 = arith.constant dense<0.000000e+00> : vector<1x256xf32>
    %291 = tpu.matmul %288, %290, %cst_302 {dimension_numbers = #tpu.dot_dimension_numbers<[1], [0], [0], [1], [0, 0, 1, 1], [], []>} : vector<1x64xf32>, vector<64x256xf32>, vector<1x256xf32> -> vector<1x256xf32>
    %292 = arith.addf %262, %291 : vector<1x256xf32>
    %c4_303 = arith.constant 4 : index
    %c2_304 = arith.constant 2 : index
    %c0_305 = arith.constant 0 : index
    %293 = vector.load %arg19[%c4_303, %c2_304, %c0_305] : memref<10x10x64xf32, #tpu.memory_space<vmem>>, vector<1x1x64xf32>
    %294 = vector.shape_cast %293 : vector<1x1x64xf32> to vector<1x64xf32>
    %c4_306 = arith.constant 4 : index
    %c3_307 = arith.constant 3 : index
    %c0_308 = arith.constant 0 : index
    %295 = vector.load %arg19[%c4_306, %c3_307, %c0_308] : memref<10x10x64xf32, #tpu.memory_space<vmem>>, vector<1x1x64xf32>
    %296 = vector.shape_cast %295 : vector<1x1x64xf32> to vector<1x64xf32>
    %297 = arith.maximumf %294, %296 : vector<1x64xf32>
    %c4_309 = arith.constant 4 : index
    %c4_310 = arith.constant 4 : index
    %c0_311 = arith.constant 0 : index
    %298 = vector.load %arg19[%c4_309, %c4_310, %c0_311] : memref<10x10x64xf32, #tpu.memory_space<vmem>>, vector<1x1x64xf32>
    %299 = vector.shape_cast %298 : vector<1x1x64xf32> to vector<1x64xf32>
    %300 = arith.maximumf %297, %299 : vector<1x64xf32>
    %c5_312 = arith.constant 5 : index
    %c2_313 = arith.constant 2 : index
    %c0_314 = arith.constant 0 : index
    %301 = vector.load %arg19[%c5_312, %c2_313, %c0_314] : memref<10x10x64xf32, #tpu.memory_space<vmem>>, vector<1x1x64xf32>
    %302 = vector.shape_cast %301 : vector<1x1x64xf32> to vector<1x64xf32>
    %303 = arith.maximumf %300, %302 : vector<1x64xf32>
    %c5_315 = arith.constant 5 : index
    %c3_316 = arith.constant 3 : index
    %c0_317 = arith.constant 0 : index
    %304 = vector.load %arg19[%c5_315, %c3_316, %c0_317] : memref<10x10x64xf32, #tpu.memory_space<vmem>>, vector<1x1x64xf32>
    %305 = vector.shape_cast %304 : vector<1x1x64xf32> to vector<1x64xf32>
    %306 = arith.maximumf %303, %305 : vector<1x64xf32>
    %c5_318 = arith.constant 5 : index
    %c4_319 = arith.constant 4 : index
    %c0_320 = arith.constant 0 : index
    %307 = vector.load %arg19[%c5_318, %c4_319, %c0_320] : memref<10x10x64xf32, #tpu.memory_space<vmem>>, vector<1x1x64xf32>
    %308 = vector.shape_cast %307 : vector<1x1x64xf32> to vector<1x64xf32>
    %309 = arith.maximumf %306, %308 : vector<1x64xf32>
    %c6_321 = arith.constant 6 : index
    %c2_322 = arith.constant 2 : index
    %c0_323 = arith.constant 0 : index
    %310 = vector.load %arg19[%c6_321, %c2_322, %c0_323] : memref<10x10x64xf32, #tpu.memory_space<vmem>>, vector<1x1x64xf32>
    %311 = vector.shape_cast %310 : vector<1x1x64xf32> to vector<1x64xf32>
    %312 = arith.maximumf %309, %311 : vector<1x64xf32>
    %c6_324 = arith.constant 6 : index
    %c3_325 = arith.constant 3 : index
    %c0_326 = arith.constant 0 : index
    %313 = vector.load %arg19[%c6_324, %c3_325, %c0_326] : memref<10x10x64xf32, #tpu.memory_space<vmem>>, vector<1x1x64xf32>
    %314 = vector.shape_cast %313 : vector<1x1x64xf32> to vector<1x64xf32>
    %315 = arith.maximumf %312, %314 : vector<1x64xf32>
    %c6_327 = arith.constant 6 : index
    %c4_328 = arith.constant 4 : index
    %c0_329 = arith.constant 0 : index
    %316 = vector.load %arg19[%c6_327, %c4_328, %c0_329] : memref<10x10x64xf32, #tpu.memory_space<vmem>>, vector<1x1x64xf32>
    %317 = vector.shape_cast %316 : vector<1x1x64xf32> to vector<1x64xf32>
    %318 = arith.maximumf %315, %317 : vector<1x64xf32>
    %c2_330 = arith.constant 2 : index
    %c1_331 = arith.constant 1 : index
    %c0_332 = arith.constant 0 : index
    %c0_333 = arith.constant 0 : index
    %319 = vector.load %arg10[%c2_330, %c1_331, %c0_332, %c0_333] : memref<4x4x64x256xf32, #tpu.memory_space<vmem>>, vector<1x1x64x256xf32>
    %320 = vector.shape_cast %319 : vector<1x1x64x256xf32> to vector<64x256xf32>
    %cst_334 = arith.constant dense<0.000000e+00> : vector<1x256xf32>
    %321 = tpu.matmul %318, %320, %cst_334 {dimension_numbers = #tpu.dot_dimension_numbers<[1], [0], [0], [1], [0, 0, 1, 1], [], []>} : vector<1x64xf32>, vector<64x256xf32>, vector<1x256xf32> -> vector<1x256xf32>
    %322 = arith.addf %292, %321 : vector<1x256xf32>
    %c4_335 = arith.constant 4 : index
    %c4_336 = arith.constant 4 : index
    %c0_337 = arith.constant 0 : index
    %323 = vector.load %arg19[%c4_335, %c4_336, %c0_337] : memref<10x10x64xf32, #tpu.memory_space<vmem>>, vector<1x1x64xf32>
    %324 = vector.shape_cast %323 : vector<1x1x64xf32> to vector<1x64xf32>
    %c4_338 = arith.constant 4 : index
    %c5_339 = arith.constant 5 : index
    %c0_340 = arith.constant 0 : index
    %325 = vector.load %arg19[%c4_338, %c5_339, %c0_340] : memref<10x10x64xf32, #tpu.memory_space<vmem>>, vector<1x1x64xf32>
    %326 = vector.shape_cast %325 : vector<1x1x64xf32> to vector<1x64xf32>
    %327 = arith.maximumf %324, %326 : vector<1x64xf32>
    %c4_341 = arith.constant 4 : index
    %c6_342 = arith.constant 6 : index
    %c0_343 = arith.constant 0 : index
    %328 = vector.load %arg19[%c4_341, %c6_342, %c0_343] : memref<10x10x64xf32, #tpu.memory_space<vmem>>, vector<1x1x64xf32>
    %329 = vector.shape_cast %328 : vector<1x1x64xf32> to vector<1x64xf32>
    %330 = arith.maximumf %327, %329 : vector<1x64xf32>
    %c5_344 = arith.constant 5 : index
    %c4_345 = arith.constant 4 : index
    %c0_346 = arith.constant 0 : index
    %331 = vector.load %arg19[%c5_344, %c4_345, %c0_346] : memref<10x10x64xf32, #tpu.memory_space<vmem>>, vector<1x1x64xf32>
    %332 = vector.shape_cast %331 : vector<1x1x64xf32> to vector<1x64xf32>
    %333 = arith.maximumf %330, %332 : vector<1x64xf32>
    %c5_347 = arith.constant 5 : index
    %c5_348 = arith.constant 5 : index
    %c0_349 = arith.constant 0 : index
    %334 = vector.load %arg19[%c5_347, %c5_348, %c0_349] : memref<10x10x64xf32, #tpu.memory_space<vmem>>, vector<1x1x64xf32>
    %335 = vector.shape_cast %334 : vector<1x1x64xf32> to vector<1x64xf32>
    %336 = arith.maximumf %333, %335 : vector<1x64xf32>
    %c5_350 = arith.constant 5 : index
    %c6_351 = arith.constant 6 : index
    %c0_352 = arith.constant 0 : index
    %337 = vector.load %arg19[%c5_350, %c6_351, %c0_352] : memref<10x10x64xf32, #tpu.memory_space<vmem>>, vector<1x1x64xf32>
    %338 = vector.shape_cast %337 : vector<1x1x64xf32> to vector<1x64xf32>
    %339 = arith.maximumf %336, %338 : vector<1x64xf32>
    %c6_353 = arith.constant 6 : index
    %c4_354 = arith.constant 4 : index
    %c0_355 = arith.constant 0 : index
    %340 = vector.load %arg19[%c6_353, %c4_354, %c0_355] : memref<10x10x64xf32, #tpu.memory_space<vmem>>, vector<1x1x64xf32>
    %341 = vector.shape_cast %340 : vector<1x1x64xf32> to vector<1x64xf32>
    %342 = arith.maximumf %339, %341 : vector<1x64xf32>
    %c6_356 = arith.constant 6 : index
    %c5_357 = arith.constant 5 : index
    %c0_358 = arith.constant 0 : index
    %343 = vector.load %arg19[%c6_356, %c5_357, %c0_358] : memref<10x10x64xf32, #tpu.memory_space<vmem>>, vector<1x1x64xf32>
    %344 = vector.shape_cast %343 : vector<1x1x64xf32> to vector<1x64xf32>
    %345 = arith.maximumf %342, %344 : vector<1x64xf32>
    %c6_359 = arith.constant 6 : index
    %c6_360 = arith.constant 6 : index
    %c0_361 = arith.constant 0 : index
    %346 = vector.load %arg19[%c6_359, %c6_360, %c0_361] : memref<10x10x64xf32, #tpu.memory_space<vmem>>, vector<1x1x64xf32>
    %347 = vector.shape_cast %346 : vector<1x1x64xf32> to vector<1x64xf32>
    %348 = arith.maximumf %345, %347 : vector<1x64xf32>
    %c2_362 = arith.constant 2 : index
    %c2_363 = arith.constant 2 : index
    %c0_364 = arith.constant 0 : index
    %c0_365 = arith.constant 0 : index
    %349 = vector.load %arg10[%c2_362, %c2_363, %c0_364, %c0_365] : memref<4x4x64x256xf32, #tpu.memory_space<vmem>>, vector<1x1x64x256xf32>
    %350 = vector.shape_cast %349 : vector<1x1x64x256xf32> to vector<64x256xf32>
    %cst_366 = arith.constant dense<0.000000e+00> : vector<1x256xf32>
    %351 = tpu.matmul %348, %350, %cst_366 {dimension_numbers = #tpu.dot_dimension_numbers<[1], [0], [0], [1], [0, 0, 1, 1], [], []>} : vector<1x64xf32>, vector<64x256xf32>, vector<1x256xf32> -> vector<1x256xf32>
    %352 = arith.addf %322, %351 : vector<1x256xf32>
    %c4_367 = arith.constant 4 : index
    %c6_368 = arith.constant 6 : index
    %c0_369 = arith.constant 0 : index
    %353 = vector.load %arg19[%c4_367, %c6_368, %c0_369] : memref<10x10x64xf32, #tpu.memory_space<vmem>>, vector<1x1x64xf32>
    %354 = vector.shape_cast %353 : vector<1x1x64xf32> to vector<1x64xf32>
    %c4_370 = arith.constant 4 : index
    %c7_371 = arith.constant 7 : index
    %c0_372 = arith.constant 0 : index
    %355 = vector.load %arg19[%c4_370, %c7_371, %c0_372] : memref<10x10x64xf32, #tpu.memory_space<vmem>>, vector<1x1x64xf32>
    %356 = vector.shape_cast %355 : vector<1x1x64xf32> to vector<1x64xf32>
    %357 = arith.maximumf %354, %356 : vector<1x64xf32>
    %c4_373 = arith.constant 4 : index
    %c8_374 = arith.constant 8 : index
    %c0_375 = arith.constant 0 : index
    %358 = vector.load %arg19[%c4_373, %c8_374, %c0_375] : memref<10x10x64xf32, #tpu.memory_space<vmem>>, vector<1x1x64xf32>
    %359 = vector.shape_cast %358 : vector<1x1x64xf32> to vector<1x64xf32>
    %360 = arith.maximumf %357, %359 : vector<1x64xf32>
    %c5_376 = arith.constant 5 : index
    %c6_377 = arith.constant 6 : index
    %c0_378 = arith.constant 0 : index
    %361 = vector.load %arg19[%c5_376, %c6_377, %c0_378] : memref<10x10x64xf32, #tpu.memory_space<vmem>>, vector<1x1x64xf32>
    %362 = vector.shape_cast %361 : vector<1x1x64xf32> to vector<1x64xf32>
    %363 = arith.maximumf %360, %362 : vector<1x64xf32>
    %c5_379 = arith.constant 5 : index
    %c7_380 = arith.constant 7 : index
    %c0_381 = arith.constant 0 : index
    %364 = vector.load %arg19[%c5_379, %c7_380, %c0_381] : memref<10x10x64xf32, #tpu.memory_space<vmem>>, vector<1x1x64xf32>
    %365 = vector.shape_cast %364 : vector<1x1x64xf32> to vector<1x64xf32>
    %366 = arith.maximumf %363, %365 : vector<1x64xf32>
    %c5_382 = arith.constant 5 : index
    %c8_383 = arith.constant 8 : index
    %c0_384 = arith.constant 0 : index
    %367 = vector.load %arg19[%c5_382, %c8_383, %c0_384] : memref<10x10x64xf32, #tpu.memory_space<vmem>>, vector<1x1x64xf32>
    %368 = vector.shape_cast %367 : vector<1x1x64xf32> to vector<1x64xf32>
    %369 = arith.maximumf %366, %368 : vector<1x64xf32>
    %c6_385 = arith.constant 6 : index
    %c6_386 = arith.constant 6 : index
    %c0_387 = arith.constant 0 : index
    %370 = vector.load %arg19[%c6_385, %c6_386, %c0_387] : memref<10x10x64xf32, #tpu.memory_space<vmem>>, vector<1x1x64xf32>
    %371 = vector.shape_cast %370 : vector<1x1x64xf32> to vector<1x64xf32>
    %372 = arith.maximumf %369, %371 : vector<1x64xf32>
    %c6_388 = arith.constant 6 : index
    %c7_389 = arith.constant 7 : index
    %c0_390 = arith.constant 0 : index
    %373 = vector.load %arg19[%c6_388, %c7_389, %c0_390] : memref<10x10x64xf32, #tpu.memory_space<vmem>>, vector<1x1x64xf32>
    %374 = vector.shape_cast %373 : vector<1x1x64xf32> to vector<1x64xf32>
    %375 = arith.maximumf %372, %374 : vector<1x64xf32>
    %c6_391 = arith.constant 6 : index
    %c8_392 = arith.constant 8 : index
    %c0_393 = arith.constant 0 : index
    %376 = vector.load %arg19[%c6_391, %c8_392, %c0_393] : memref<10x10x64xf32, #tpu.memory_space<vmem>>, vector<1x1x64xf32>
    %377 = vector.shape_cast %376 : vector<1x1x64xf32> to vector<1x64xf32>
    %378 = arith.maximumf %375, %377 : vector<1x64xf32>
    %c2_394 = arith.constant 2 : index
    %c3_395 = arith.constant 3 : index
    %c0_396 = arith.constant 0 : index
    %c0_397 = arith.constant 0 : index
    %379 = vector.load %arg10[%c2_394, %c3_395, %c0_396, %c0_397] : memref<4x4x64x256xf32, #tpu.memory_space<vmem>>, vector<1x1x64x256xf32>
    %380 = vector.shape_cast %379 : vector<1x1x64x256xf32> to vector<64x256xf32>
    %cst_398 = arith.constant dense<0.000000e+00> : vector<1x256xf32>
    %381 = tpu.matmul %378, %380, %cst_398 {dimension_numbers = #tpu.dot_dimension_numbers<[1], [0], [0], [1], [0, 0, 1, 1], [], []>} : vector<1x64xf32>, vector<64x256xf32>, vector<1x256xf32> -> vector<1x256xf32>
    %382 = arith.addf %352, %381 : vector<1x256xf32>
    %c6_399 = arith.constant 6 : index
    %c0_400 = arith.constant 0 : index
    %c0_401 = arith.constant 0 : index
    %383 = vector.load %arg19[%c6_399, %c0_400, %c0_401] : memref<10x10x64xf32, #tpu.memory_space<vmem>>, vector<1x1x64xf32>
    %384 = vector.shape_cast %383 : vector<1x1x64xf32> to vector<1x64xf32>
    %c6_402 = arith.constant 6 : index
    %c1_403 = arith.constant 1 : index
    %c0_404 = arith.constant 0 : index
    %385 = vector.load %arg19[%c6_402, %c1_403, %c0_404] : memref<10x10x64xf32, #tpu.memory_space<vmem>>, vector<1x1x64xf32>
    %386 = vector.shape_cast %385 : vector<1x1x64xf32> to vector<1x64xf32>
    %387 = arith.maximumf %384, %386 : vector<1x64xf32>
    %c6_405 = arith.constant 6 : index
    %c2_406 = arith.constant 2 : index
    %c0_407 = arith.constant 0 : index
    %388 = vector.load %arg19[%c6_405, %c2_406, %c0_407] : memref<10x10x64xf32, #tpu.memory_space<vmem>>, vector<1x1x64xf32>
    %389 = vector.shape_cast %388 : vector<1x1x64xf32> to vector<1x64xf32>
    %390 = arith.maximumf %387, %389 : vector<1x64xf32>
    %c7_408 = arith.constant 7 : index
    %c0_409 = arith.constant 0 : index
    %c0_410 = arith.constant 0 : index
    %391 = vector.load %arg19[%c7_408, %c0_409, %c0_410] : memref<10x10x64xf32, #tpu.memory_space<vmem>>, vector<1x1x64xf32>
    %392 = vector.shape_cast %391 : vector<1x1x64xf32> to vector<1x64xf32>
    %393 = arith.maximumf %390, %392 : vector<1x64xf32>
    %c7_411 = arith.constant 7 : index
    %c1_412 = arith.constant 1 : index
    %c0_413 = arith.constant 0 : index
    %394 = vector.load %arg19[%c7_411, %c1_412, %c0_413] : memref<10x10x64xf32, #tpu.memory_space<vmem>>, vector<1x1x64xf32>
    %395 = vector.shape_cast %394 : vector<1x1x64xf32> to vector<1x64xf32>
    %396 = arith.maximumf %393, %395 : vector<1x64xf32>
    %c7_414 = arith.constant 7 : index
    %c2_415 = arith.constant 2 : index
    %c0_416 = arith.constant 0 : index
    %397 = vector.load %arg19[%c7_414, %c2_415, %c0_416] : memref<10x10x64xf32, #tpu.memory_space<vmem>>, vector<1x1x64xf32>
    %398 = vector.shape_cast %397 : vector<1x1x64xf32> to vector<1x64xf32>
    %399 = arith.maximumf %396, %398 : vector<1x64xf32>
    %c8_417 = arith.constant 8 : index
    %c0_418 = arith.constant 0 : index
    %c0_419 = arith.constant 0 : index
    %400 = vector.load %arg19[%c8_417, %c0_418, %c0_419] : memref<10x10x64xf32, #tpu.memory_space<vmem>>, vector<1x1x64xf32>
    %401 = vector.shape_cast %400 : vector<1x1x64xf32> to vector<1x64xf32>
    %402 = arith.maximumf %399, %401 : vector<1x64xf32>
    %c8_420 = arith.constant 8 : index
    %c1_421 = arith.constant 1 : index
    %c0_422 = arith.constant 0 : index
    %403 = vector.load %arg19[%c8_420, %c1_421, %c0_422] : memref<10x10x64xf32, #tpu.memory_space<vmem>>, vector<1x1x64xf32>
    %404 = vector.shape_cast %403 : vector<1x1x64xf32> to vector<1x64xf32>
    %405 = arith.maximumf %402, %404 : vector<1x64xf32>
    %c8_423 = arith.constant 8 : index
    %c2_424 = arith.constant 2 : index
    %c0_425 = arith.constant 0 : index
    %406 = vector.load %arg19[%c8_423, %c2_424, %c0_425] : memref<10x10x64xf32, #tpu.memory_space<vmem>>, vector<1x1x64xf32>
    %407 = vector.shape_cast %406 : vector<1x1x64xf32> to vector<1x64xf32>
    %408 = arith.maximumf %405, %407 : vector<1x64xf32>
    %c3_426 = arith.constant 3 : index
    %c0_427 = arith.constant 0 : index
    %c0_428 = arith.constant 0 : index
    %c0_429 = arith.constant 0 : index
    %409 = vector.load %arg10[%c3_426, %c0_427, %c0_428, %c0_429] : memref<4x4x64x256xf32, #tpu.memory_space<vmem>>, vector<1x1x64x256xf32>
    %410 = vector.shape_cast %409 : vector<1x1x64x256xf32> to vector<64x256xf32>
    %cst_430 = arith.constant dense<0.000000e+00> : vector<1x256xf32>
    %411 = tpu.matmul %408, %410, %cst_430 {dimension_numbers = #tpu.dot_dimension_numbers<[1], [0], [0], [1], [0, 0, 1, 1], [], []>} : vector<1x64xf32>, vector<64x256xf32>, vector<1x256xf32> -> vector<1x256xf32>
    %412 = arith.addf %382, %411 : vector<1x256xf32>
    %c6_431 = arith.constant 6 : index
    %c2_432 = arith.constant 2 : index
    %c0_433 = arith.constant 0 : index
    %413 = vector.load %arg19[%c6_431, %c2_432, %c0_433] : memref<10x10x64xf32, #tpu.memory_space<vmem>>, vector<1x1x64xf32>
    %414 = vector.shape_cast %413 : vector<1x1x64xf32> to vector<1x64xf32>
    %c6_434 = arith.constant 6 : index
    %c3_435 = arith.constant 3 : index
    %c0_436 = arith.constant 0 : index
    %415 = vector.load %arg19[%c6_434, %c3_435, %c0_436] : memref<10x10x64xf32, #tpu.memory_space<vmem>>, vector<1x1x64xf32>
    %416 = vector.shape_cast %415 : vector<1x1x64xf32> to vector<1x64xf32>
    %417 = arith.maximumf %414, %416 : vector<1x64xf32>
    %c6_437 = arith.constant 6 : index
    %c4_438 = arith.constant 4 : index
    %c0_439 = arith.constant 0 : index
    %418 = vector.load %arg19[%c6_437, %c4_438, %c0_439] : memref<10x10x64xf32, #tpu.memory_space<vmem>>, vector<1x1x64xf32>
    %419 = vector.shape_cast %418 : vector<1x1x64xf32> to vector<1x64xf32>
    %420 = arith.maximumf %417, %419 : vector<1x64xf32>
    %c7_440 = arith.constant 7 : index
    %c2_441 = arith.constant 2 : index
    %c0_442 = arith.constant 0 : index
    %421 = vector.load %arg19[%c7_440, %c2_441, %c0_442] : memref<10x10x64xf32, #tpu.memory_space<vmem>>, vector<1x1x64xf32>
    %422 = vector.shape_cast %421 : vector<1x1x64xf32> to vector<1x64xf32>
    %423 = arith.maximumf %420, %422 : vector<1x64xf32>
    %c7_443 = arith.constant 7 : index
    %c3_444 = arith.constant 3 : index
    %c0_445 = arith.constant 0 : index
    %424 = vector.load %arg19[%c7_443, %c3_444, %c0_445] : memref<10x10x64xf32, #tpu.memory_space<vmem>>, vector<1x1x64xf32>
    %425 = vector.shape_cast %424 : vector<1x1x64xf32> to vector<1x64xf32>
    %426 = arith.maximumf %423, %425 : vector<1x64xf32>
    %c7_446 = arith.constant 7 : index
    %c4_447 = arith.constant 4 : index
    %c0_448 = arith.constant 0 : index
    %427 = vector.load %arg19[%c7_446, %c4_447, %c0_448] : memref<10x10x64xf32, #tpu.memory_space<vmem>>, vector<1x1x64xf32>
    %428 = vector.shape_cast %427 : vector<1x1x64xf32> to vector<1x64xf32>
    %429 = arith.maximumf %426, %428 : vector<1x64xf32>
    %c8_449 = arith.constant 8 : index
    %c2_450 = arith.constant 2 : index
    %c0_451 = arith.constant 0 : index
    %430 = vector.load %arg19[%c8_449, %c2_450, %c0_451] : memref<10x10x64xf32, #tpu.memory_space<vmem>>, vector<1x1x64xf32>
    %431 = vector.shape_cast %430 : vector<1x1x64xf32> to vector<1x64xf32>
    %432 = arith.maximumf %429, %431 : vector<1x64xf32>
    %c8_452 = arith.constant 8 : index
    %c3_453 = arith.constant 3 : index
    %c0_454 = arith.constant 0 : index
    %433 = vector.load %arg19[%c8_452, %c3_453, %c0_454] : memref<10x10x64xf32, #tpu.memory_space<vmem>>, vector<1x1x64xf32>
    %434 = vector.shape_cast %433 : vector<1x1x64xf32> to vector<1x64xf32>
    %435 = arith.maximumf %432, %434 : vector<1x64xf32>
    %c8_455 = arith.constant 8 : index
    %c4_456 = arith.constant 4 : index
    %c0_457 = arith.constant 0 : index
    %436 = vector.load %arg19[%c8_455, %c4_456, %c0_457] : memref<10x10x64xf32, #tpu.memory_space<vmem>>, vector<1x1x64xf32>
    %437 = vector.shape_cast %436 : vector<1x1x64xf32> to vector<1x64xf32>
    %438 = arith.maximumf %435, %437 : vector<1x64xf32>
    %c3_458 = arith.constant 3 : index
    %c1_459 = arith.constant 1 : index
    %c0_460 = arith.constant 0 : index
    %c0_461 = arith.constant 0 : index
    %439 = vector.load %arg10[%c3_458, %c1_459, %c0_460, %c0_461] : memref<4x4x64x256xf32, #tpu.memory_space<vmem>>, vector<1x1x64x256xf32>
    %440 = vector.shape_cast %439 : vector<1x1x64x256xf32> to vector<64x256xf32>
    %cst_462 = arith.constant dense<0.000000e+00> : vector<1x256xf32>
    %441 = tpu.matmul %438, %440, %cst_462 {dimension_numbers = #tpu.dot_dimension_numbers<[1], [0], [0], [1], [0, 0, 1, 1], [], []>} : vector<1x64xf32>, vector<64x256xf32>, vector<1x256xf32> -> vector<1x256xf32>
    %442 = arith.addf %412, %441 : vector<1x256xf32>
    %c6_463 = arith.constant 6 : index
    %c4_464 = arith.constant 4 : index
    %c0_465 = arith.constant 0 : index
    %443 = vector.load %arg19[%c6_463, %c4_464, %c0_465] : memref<10x10x64xf32, #tpu.memory_space<vmem>>, vector<1x1x64xf32>
    %444 = vector.shape_cast %443 : vector<1x1x64xf32> to vector<1x64xf32>
    %c6_466 = arith.constant 6 : index
    %c5_467 = arith.constant 5 : index
    %c0_468 = arith.constant 0 : index
    %445 = vector.load %arg19[%c6_466, %c5_467, %c0_468] : memref<10x10x64xf32, #tpu.memory_space<vmem>>, vector<1x1x64xf32>
    %446 = vector.shape_cast %445 : vector<1x1x64xf32> to vector<1x64xf32>
    %447 = arith.maximumf %444, %446 : vector<1x64xf32>
    %c6_469 = arith.constant 6 : index
    %c6_470 = arith.constant 6 : index
    %c0_471 = arith.constant 0 : index
    %448 = vector.load %arg19[%c6_469, %c6_470, %c0_471] : memref<10x10x64xf32, #tpu.memory_space<vmem>>, vector<1x1x64xf32>
    %449 = vector.shape_cast %448 : vector<1x1x64xf32> to vector<1x64xf32>
    %450 = arith.maximumf %447, %449 : vector<1x64xf32>
    %c7_472 = arith.constant 7 : index
    %c4_473 = arith.constant 4 : index
    %c0_474 = arith.constant 0 : index
    %451 = vector.load %arg19[%c7_472, %c4_473, %c0_474] : memref<10x10x64xf32, #tpu.memory_space<vmem>>, vector<1x1x64xf32>
    %452 = vector.shape_cast %451 : vector<1x1x64xf32> to vector<1x64xf32>
    %453 = arith.maximumf %450, %452 : vector<1x64xf32>
    %c7_475 = arith.constant 7 : index
    %c5_476 = arith.constant 5 : index
    %c0_477 = arith.constant 0 : index
    %454 = vector.load %arg19[%c7_475, %c5_476, %c0_477] : memref<10x10x64xf32, #tpu.memory_space<vmem>>, vector<1x1x64xf32>
    %455 = vector.shape_cast %454 : vector<1x1x64xf32> to vector<1x64xf32>
    %456 = arith.maximumf %453, %455 : vector<1x64xf32>
    %c7_478 = arith.constant 7 : index
    %c6_479 = arith.constant 6 : index
    %c0_480 = arith.constant 0 : index
    %457 = vector.load %arg19[%c7_478, %c6_479, %c0_480] : memref<10x10x64xf32, #tpu.memory_space<vmem>>, vector<1x1x64xf32>
    %458 = vector.shape_cast %457 : vector<1x1x64xf32> to vector<1x64xf32>
    %459 = arith.maximumf %456, %458 : vector<1x64xf32>
    %c8_481 = arith.constant 8 : index
    %c4_482 = arith.constant 4 : index
    %c0_483 = arith.constant 0 : index
    %460 = vector.load %arg19[%c8_481, %c4_482, %c0_483] : memref<10x10x64xf32, #tpu.memory_space<vmem>>, vector<1x1x64xf32>
    %461 = vector.shape_cast %460 : vector<1x1x64xf32> to vector<1x64xf32>
    %462 = arith.maximumf %459, %461 : vector<1x64xf32>
    %c8_484 = arith.constant 8 : index
    %c5_485 = arith.constant 5 : index
    %c0_486 = arith.constant 0 : index
    %463 = vector.load %arg19[%c8_484, %c5_485, %c0_486] : memref<10x10x64xf32, #tpu.memory_space<vmem>>, vector<1x1x64xf32>
    %464 = vector.shape_cast %463 : vector<1x1x64xf32> to vector<1x64xf32>
    %465 = arith.maximumf %462, %464 : vector<1x64xf32>
    %c8_487 = arith.constant 8 : index
    %c6_488 = arith.constant 6 : index
    %c0_489 = arith.constant 0 : index
    %466 = vector.load %arg19[%c8_487, %c6_488, %c0_489] : memref<10x10x64xf32, #tpu.memory_space<vmem>>, vector<1x1x64xf32>
    %467 = vector.shape_cast %466 : vector<1x1x64xf32> to vector<1x64xf32>
    %468 = arith.maximumf %465, %467 : vector<1x64xf32>
    %c3_490 = arith.constant 3 : index
    %c2_491 = arith.constant 2 : index
    %c0_492 = arith.constant 0 : index
    %c0_493 = arith.constant 0 : index
    %469 = vector.load %arg10[%c3_490, %c2_491, %c0_492, %c0_493] : memref<4x4x64x256xf32, #tpu.memory_space<vmem>>, vector<1x1x64x256xf32>
    %470 = vector.shape_cast %469 : vector<1x1x64x256xf32> to vector<64x256xf32>
    %cst_494 = arith.constant dense<0.000000e+00> : vector<1x256xf32>
    %471 = tpu.matmul %468, %470, %cst_494 {dimension_numbers = #tpu.dot_dimension_numbers<[1], [0], [0], [1], [0, 0, 1, 1], [], []>} : vector<1x64xf32>, vector<64x256xf32>, vector<1x256xf32> -> vector<1x256xf32>
    %472 = arith.addf %442, %471 : vector<1x256xf32>
    %c6_495 = arith.constant 6 : index
    %c6_496 = arith.constant 6 : index
    %c0_497 = arith.constant 0 : index
    %473 = vector.load %arg19[%c6_495, %c6_496, %c0_497] : memref<10x10x64xf32, #tpu.memory_space<vmem>>, vector<1x1x64xf32>
    %474 = vector.shape_cast %473 : vector<1x1x64xf32> to vector<1x64xf32>
    %c6_498 = arith.constant 6 : index
    %c7_499 = arith.constant 7 : index
    %c0_500 = arith.constant 0 : index
    %475 = vector.load %arg19[%c6_498, %c7_499, %c0_500] : memref<10x10x64xf32, #tpu.memory_space<vmem>>, vector<1x1x64xf32>
    %476 = vector.shape_cast %475 : vector<1x1x64xf32> to vector<1x64xf32>
    %477 = arith.maximumf %474, %476 : vector<1x64xf32>
    %c6_501 = arith.constant 6 : index
    %c8_502 = arith.constant 8 : index
    %c0_503 = arith.constant 0 : index
    %478 = vector.load %arg19[%c6_501, %c8_502, %c0_503] : memref<10x10x64xf32, #tpu.memory_space<vmem>>, vector<1x1x64xf32>
    %479 = vector.shape_cast %478 : vector<1x1x64xf32> to vector<1x64xf32>
    %480 = arith.maximumf %477, %479 : vector<1x64xf32>
    %c7_504 = arith.constant 7 : index
    %c6_505 = arith.constant 6 : index
    %c0_506 = arith.constant 0 : index
    %481 = vector.load %arg19[%c7_504, %c6_505, %c0_506] : memref<10x10x64xf32, #tpu.memory_space<vmem>>, vector<1x1x64xf32>
    %482 = vector.shape_cast %481 : vector<1x1x64xf32> to vector<1x64xf32>
    %483 = arith.maximumf %480, %482 : vector<1x64xf32>
    %c7_507 = arith.constant 7 : index
    %c7_508 = arith.constant 7 : index
    %c0_509 = arith.constant 0 : index
    %484 = vector.load %arg19[%c7_507, %c7_508, %c0_509] : memref<10x10x64xf32, #tpu.memory_space<vmem>>, vector<1x1x64xf32>
    %485 = vector.shape_cast %484 : vector<1x1x64xf32> to vector<1x64xf32>
    %486 = arith.maximumf %483, %485 : vector<1x64xf32>
    %c7_510 = arith.constant 7 : index
    %c8_511 = arith.constant 8 : index
    %c0_512 = arith.constant 0 : index
    %487 = vector.load %arg19[%c7_510, %c8_511, %c0_512] : memref<10x10x64xf32, #tpu.memory_space<vmem>>, vector<1x1x64xf32>
    %488 = vector.shape_cast %487 : vector<1x1x64xf32> to vector<1x64xf32>
    %489 = arith.maximumf %486, %488 : vector<1x64xf32>
    %c8_513 = arith.constant 8 : index
    %c6_514 = arith.constant 6 : index
    %c0_515 = arith.constant 0 : index
    %490 = vector.load %arg19[%c8_513, %c6_514, %c0_515] : memref<10x10x64xf32, #tpu.memory_space<vmem>>, vector<1x1x64xf32>
    %491 = vector.shape_cast %490 : vector<1x1x64xf32> to vector<1x64xf32>
    %492 = arith.maximumf %489, %491 : vector<1x64xf32>
    %c8_516 = arith.constant 8 : index
    %c7_517 = arith.constant 7 : index
    %c0_518 = arith.constant 0 : index
    %493 = vector.load %arg19[%c8_516, %c7_517, %c0_518] : memref<10x10x64xf32, #tpu.memory_space<vmem>>, vector<1x1x64xf32>
    %494 = vector.shape_cast %493 : vector<1x1x64xf32> to vector<1x64xf32>
    %495 = arith.maximumf %492, %494 : vector<1x64xf32>
    %c8_519 = arith.constant 8 : index
    %c8_520 = arith.constant 8 : index
    %c0_521 = arith.constant 0 : index
    %496 = vector.load %arg19[%c8_519, %c8_520, %c0_521] : memref<10x10x64xf32, #tpu.memory_space<vmem>>, vector<1x1x64xf32>
    %497 = vector.shape_cast %496 : vector<1x1x64xf32> to vector<1x64xf32>
    %498 = arith.maximumf %495, %497 : vector<1x64xf32>
    %c3_522 = arith.constant 3 : index
    %c3_523 = arith.constant 3 : index
    %c0_524 = arith.constant 0 : index
    %c0_525 = arith.constant 0 : index
    %499 = vector.load %arg10[%c3_522, %c3_523, %c0_524, %c0_525] : memref<4x4x64x256xf32, #tpu.memory_space<vmem>>, vector<1x1x64x256xf32>
    %500 = vector.shape_cast %499 : vector<1x1x64x256xf32> to vector<64x256xf32>
    %cst_526 = arith.constant dense<0.000000e+00> : vector<1x256xf32>
    %501 = tpu.matmul %498, %500, %cst_526 {dimension_numbers = #tpu.dot_dimension_numbers<[1], [0], [0], [1], [0, 0, 1, 1], [], []>} : vector<1x64xf32>, vector<64x256xf32>, vector<1x256xf32> -> vector<1x256xf32>
    %502 = arith.addf %472, %501 : vector<1x256xf32>
    %c0_527 = arith.constant 0 : index
    %c0_528 = arith.constant 0 : index
    %503 = vector.load %arg11[%c0_527, %c0_528] : memref<1x256xf32, #tpu.memory_space<vmem>>, vector<1x256xf32>
    %504 = arith.addf %502, %503 : vector<1x256xf32>
    %cst_529 = arith.constant 0.000000e+00 : f32
    %505 = vector.broadcast %cst_529 : f32 to vector<1x256xf32>
    %506 = arith.cmpf ogt, %504, %505 : vector<1x256xf32>
    %cst_530 = arith.constant 2.000000e-01 : f32
    %507 = vector.broadcast %cst_530 : f32 to vector<1x256xf32>
    %508 = arith.mulf %507, %504 : vector<1x256xf32>
    %509 = arith.select %506, %504, %508 : vector<1x256xi1>, vector<1x256xf32>
    %c0_531 = arith.constant 0 : index
    %c0_532 = arith.constant 0 : index
    %510 = vector.load %arg12[%c0_531, %c0_532] : memref<1x256xf32, #tpu.memory_space<vmem>>, vector<1x256xf32>
    %511 = arith.mulf %509, %510 : vector<1x256xf32>
    %cst_533 = arith.constant dense<0.000000e+00> : vector<1xf32>
    %512 = vector.multi_reduction <add>, %511, %cst_533 [1] : vector<1x256xf32> to vector<1xf32>
    %513 = vector.shape_cast %512 : vector<1xf32> to vector<1x1xf32>
    %c0_534 = arith.constant 0 : index
    %c0_535 = arith.constant 0 : index
    %514 = vector.load %arg13[%c0_534, %c0_535] : memref<1x1xf32, #tpu.memory_space<vmem>>, vector<1x1xf32>
    %515 = arith.addf %513, %514 : vector<1x1xf32>
    %c0_536 = arith.constant 0 : index
    %c0_537 = arith.constant 0 : index
    %c0_538 = arith.constant 0 : index
    %516 = vector.load %arg14[%c0_536, %c0_537, %c0_538] : memref<1x1x1xf32, #tpu.memory_space<vmem>>, vector<1x1x1xf32>
    %517 = vector.shape_cast %516 : vector<1x1x1xf32> to vector<1x1xf32>
    %518 = vector.shape_cast %515 : vector<1x1xf32> to vector<1x1x1xf32>
    tpu.vector_store %arg14[%c0_536, %c0_537, %c0_538], %518 {strides = array<i32>} : memref<1x1x1xf32, #tpu.memory_space<vmem>>, vector<1x1x1xf32>,
    return
  }
  func.func @transform_0(%arg0: i32) -> (i32, i32, i32, i32) {
    %c0_i32 = arith.constant 0 : i32
    %c0_i32_0 = arith.constant 0 : i32
    %c0_i32_1 = arith.constant 0 : i32
    %c0_i32_2 = arith.constant 0 : i32
    return %arg0, %c0_i32, %c0_i32_0, %c0_i32_1 : i32, i32, i32, i32
  }
  func.func @transform_1(%arg0: i32) -> (i32, i32, i32, i32) {
    %c0_i32 = arith.constant 0 : i32
    %c0_i32_0 = arith.constant 0 : i32
    %c0_i32_1 = arith.constant 0 : i32
    %c0_i32_2 = arith.constant 0 : i32
    %c0_i32_3 = arith.constant 0 : i32
    return %c0_i32, %c0_i32_0, %c0_i32_1, %c0_i32_2 : i32, i32, i32, i32
  }
  func.func @transform_2(%arg0: i32) -> (i32, i32) {
    %c0_i32 = arith.constant 0 : i32
    %c0_i32_0 = arith.constant 0 : i32
    %c0_i32_1 = arith.constant 0 : i32
    return %c0_i32, %c0_i32_0 : i32, i32
  }
  func.func @transform_3(%arg0: i32) -> (i32, i32, i32, i32) {
    %c0_i32 = arith.constant 0 : i32
    %c0_i32_0 = arith.constant 0 : i32
    %c0_i32_1 = arith.constant 0 : i32
    %c0_i32_2 = arith.constant 0 : i32
    %c0_i32_3 = arith.constant 0 : i32
    return %c0_i32, %c0_i32_0, %c0_i32_1, %c0_i32_2 : i32, i32, i32, i32
  }
  func.func @transform_4(%arg0: i32) -> (i32, i32) {
    %c0_i32 = arith.constant 0 : i32
    %c0_i32_0 = arith.constant 0 : i32
    %c0_i32_1 = arith.constant 0 : i32
    return %c0_i32, %c0_i32_0 : i32, i32
  }
  func.func @transform_5(%arg0: i32) -> (i32, i32, i32, i32) {
    %c0_i32 = arith.constant 0 : i32
    %c0_i32_0 = arith.constant 0 : i32
    %c0_i32_1 = arith.constant 0 : i32
    %c0_i32_2 = arith.constant 0 : i32
    %c0_i32_3 = arith.constant 0 : i32
    return %c0_i32, %c0_i32_0, %c0_i32_1, %c0_i32_2 : i32, i32, i32, i32
  }
  func.func @transform_6(%arg0: i32) -> (i32, i32) {
    %c0_i32 = arith.constant 0 : i32
    %c0_i32_0 = arith.constant 0 : i32
    %c0_i32_1 = arith.constant 0 : i32
    return %c0_i32, %c0_i32_0 : i32, i32
  }
  func.func @transform_7(%arg0: i32) -> (i32, i32, i32, i32) {
    %c0_i32 = arith.constant 0 : i32
    %c0_i32_0 = arith.constant 0 : i32
    %c0_i32_1 = arith.constant 0 : i32
    %c0_i32_2 = arith.constant 0 : i32
    %c0_i32_3 = arith.constant 0 : i32
    return %c0_i32, %c0_i32_0, %c0_i32_1, %c0_i32_2 : i32, i32, i32, i32
  }
  func.func @transform_8(%arg0: i32) -> (i32, i32) {
    %c0_i32 = arith.constant 0 : i32
    %c0_i32_0 = arith.constant 0 : i32
    %c0_i32_1 = arith.constant 0 : i32
    return %c0_i32, %c0_i32_0 : i32, i32
  }
  func.func @transform_9(%arg0: i32) -> (i32, i32, i32, i32) {
    %c0_i32 = arith.constant 0 : i32
    %c0_i32_0 = arith.constant 0 : i32
    %c0_i32_1 = arith.constant 0 : i32
    %c0_i32_2 = arith.constant 0 : i32
    %c0_i32_3 = arith.constant 0 : i32
    return %c0_i32, %c0_i32_0, %c0_i32_1, %c0_i32_2 : i32, i32, i32, i32
  }
  func.func @transform_10(%arg0: i32) -> (i32, i32) {
    %c0_i32 = arith.constant 0 : i32
    %c0_i32_0 = arith.constant 0 : i32
    %c0_i32_1 = arith.constant 0 : i32
    return %c0_i32, %c0_i32_0 : i32, i32
  }
  func.func @transform_11(%arg0: i32) -> (i32, i32) {
    %c0_i32 = arith.constant 0 : i32
    %c0_i32_0 = arith.constant 0 : i32
    %c0_i32_1 = arith.constant 0 : i32
    return %c0_i32, %c0_i32_0 : i32, i32
  }
  func.func @transform_12(%arg0: i32) -> (i32, i32) {
    %c0_i32 = arith.constant 0 : i32
    %c0_i32_0 = arith.constant 0 : i32
    %c0_i32_1 = arith.constant 0 : i32
    return %c0_i32, %c0_i32_0 : i32, i32
  }
  func.func @transform_13(%arg0: i32) -> (i32, i32, i32) {
    %c0_i32 = arith.constant 0 : i32
    %c0_i32_0 = arith.constant 0 : i32
    %c0_i32_1 = arith.constant 0 : i32
    return %arg0, %c0_i32, %c0_i32_0 : i32, i32, i32
  }
}

</mosaic_0001>

<llo_original>
// kernel: discriminator_forward.1
$region0: #{discriminator_forward.1}
  #allocation0 [shape = 'u32[]', space=smem, size = 0x4, offset = 0x4, fixed_abs, tag = 'smem constant byte address 0x4 - core index']
  #allocation1 [shape = 'u32[72,128]{1,0:T(1,128)}', space=vmem, size = 0x9000, scoped, tag = 'internal scratch']
  #allocation2 [shape = 'f32[34,34,16]{2,1,0:T(8,128)}', space=vmem, size = 0xaa000, scoped, tag = 'scratch operand']
  #allocation3 [shape = 'f32[32,32,32]{2,1,0:T(8,128)}', space=vmem, size = 0x80000, scoped, tag = 'scratch operand']
  #allocation4 [shape = 'f32[16,16,32]{2,1,0:T(8,128)}', space=vmem, size = 0x20000, scoped, tag = 'scratch operand']
  #allocation5 [shape = 'f32[14,14,32]{2,1,0:T(8,128)}', space=vmem, size = 0x1c000, scoped, tag = 'scratch operand']
  #allocation6 [shape = 'f32[10,10,64]{2,1,0:T(8,128)}', space=vmem, size = 0x14000, scoped, tag = 'scratch operand']
  #allocation7 [shape = 'f32[1,1]{1,0:T(1,128)S(1)}', space=vmem, size = 0x200, scoped, tag = 'scoped memory for discriminator_forward.1']
  %s0 = inlined_call_operand.vmem [shape: f32[2,34,36,3], index: 0, kind: input, shape index: {}]
  %s1 = inlined_call_operand.vmem [shape: f32[3,3,3,16], index: 1, kind: input, shape index: {}]
  %s2 = inlined_call_operand.vmem [shape: f32[1,16], index: 2, kind: input, shape index: {}]
  %s3 = inlined_call_operand.vmem [shape: f32[3,3,16,32], index: 3, kind: input, shape index: {}]
  %s4 = inlined_call_operand.vmem [shape: f32[1,32], index: 4, kind: input, shape index: {}]
  %s5 = inlined_call_operand.vmem [shape: f32[3,3,32,32], index: 5, kind: input, shape index: {}]
  %s6 = inlined_call_operand.vmem [shape: f32[1,32], index: 6, kind: input, shape index: {}]
  %s7 = inlined_call_operand.vmem [shape: f32[5,5,32,64], index: 7, kind: input, shape index: {}]
  %s8 = inlined_call_operand.vmem [shape: f32[1,64], index: 8, kind: input, shape index: {}]
  %s9 = inlined_call_operand.vmem [shape: f32[4,4,64,256], index: 9, kind: input, shape index: {}]
  %s10 = inlined_call_operand.vmem [shape: f32[1,256], index: 10, kind: input, shape index: {}]
  %s11 = inlined_call_operand.vmem [shape: f32[1,256], index: 11, kind: input, shape index: {}]
  %s12 = inlined_call_operand.<no memory space> [shape: f32[1,1], index: 12, kind: input, shape index: {}]
  %s13 = inlined_call_operand.vmem [shape: f32[2,1,1], index: 13, kind: output, shape index: {}]
  %s14 = sld [smem:[#allocation0]]
  $region120: #{discriminator_forward.1} parent=0
    _
  %s16 = ssub.s32 1, %s14
  %s17 = scalar_select 0, %s16, %s14
  %v18 = vstv %s12
  %19 = vst [vmem:[#allocation7] sm:$0x1] %v18
  loop: start=0, step=1, limit=4
  $region2: #{discriminator_forward.1} parent=0 // loop_pre_header
    _
  $region3: #{discriminator_forward.1} parent=0 // loop_header
    %s21 = sphi 0, %s25
    %p22 = scmp.ge.s32.totalorder %s21, 4
    %s31 = sphi 0, %s33
    %s34 = sphi 0, %s31
    %s35 = sphi 0, %s34
    %s51 = sphi 0, %s35
    %s55 = sphi 0, %s55
    %s57 = sphi 0, %s55
    %s58 = sphi 0, %s57
    %s72 = sphi 0, %s58
    %s76 = sphi 0, %s76
    %s78 = sphi 0, %s76
    %s79 = sphi 0, %s78
    %s93 = sphi 0, %s79
    %s97 = sphi 0, %s97
    %s99 = sphi 0, %s97
    %s100 = sphi 0, %s99
    %s114 = sphi 0, %s100
    %s118 = sphi 0, %s118
    %s120 = sphi 0, %s118
    %s121 = sphi 0, %s120
    %s135 = sphi 0, %s121
    %s139 = sphi 0, %s139
    %s141 = sphi 0, %s139
    %s142 = sphi 0, %s141
    %s156 = sphi 0, %s142
    %s160 = sphi 0, %s160
    %s162 = sphi 0, %s160
    %s163 = sphi 0, %s162
    %s177 = sphi 0, %s163
    %s181 = sphi 0, %s181
    %s183 = sphi 0, %s181
    %s184 = sphi 0, %s183
    %s198 = sphi 0, %s184
    %s202 = sphi 0, %s202
    %s204 = sphi 0, %s202
    %s205 = sphi 0, %s204
    %s219 = sphi 0, %s205
    %s223 = sphi 0, %s223
    %s225 = sphi 0, %s223
    %s226 = sphi 0, %s225
    %s240 = sphi 0, %s226
    %s244 = sphi 0, %s244
    %s246 = sphi 0, %s244
    %s247 = sphi 0, %s246
    %s261 = sphi 0, %s247
    %s265 = sphi 0, %s265
    %s267 = sphi 0, %s265
    %s268 = sphi 0, %s267
    %s282 = sphi 0, %s268
    %s286 = sphi 0, %s286
    %s288 = sphi 0, %s286
    %s289 = sphi 0, %s288
    %s303 = sphi 0, %s289
    %s309 = sphi 0, %s311
    %s312 = sphi 0, %s309
    %s313 = sphi 0, %s312
    %s329 = sphi 0, %s313
  $region4: #{discriminator_forward.1} parent=0 // loop_header_branch
    %24 = sbr.rel (%p22) target = $region8
  $region5: #{discriminator_forward.1} parent=0 // loop_body
    %s26 = ssub.s32 %s21, 1
    %s27 = ssub.s32 %s21, 2
    %s28 = sadd.s32 %s21, 1
    %s29 = ssub.s32 %s21, %s28
    %p30 = scmp.eq.s32.totalorder %s29, 0
    %s32 = sadd.s32 %s31, 1
    %s33 = scalar_select %p30, %s31, %s32
    %p36 = pneg %p30
    %p37 = scmp.eq.s32.totalorder %s21, 1
    %p38 = por %p36, %p37
    %p39 = scmp.ne.s32.totalorder %s31, %s34
    %p40 = scmp.eq.s32.totalorder %s21, 0
    %p41 = por %p39, %p40
    %p42 = scmp.ne.s32.totalorder %s31, %s34
    %p43 = scmp.eq.s32.totalorder %s26, 1
    %p44 = por %p42, %p43
    %p45 = scmp.ne.s32.totalorder %s34, %s35
    %p46 = scmp.eq.s32.totalorder %s26, 0
    %p47 = por %p45, %p46
    %p48 = scmp.ne.s32.totalorder %s34, %s35
    %p49 = scmp.eq.s32.totalorder %s27, 1
    %p50 = por %p48, %p49
    %p52 = scmp.ne.s32.totalorder %s35, %s51
    %p53 = scmp.eq.s32.totalorder %s27, 0
    %p54 = por %p52, %p53
    %s56 = sadd.s32 %s55, 1
    %p59 = scmp.eq.s32.totalorder %s21, 1
    %p60 = scmp.ne.s32.totalorder %s55, %s57
    %p61 = scmp.eq.s32.totalorder %s21, 0
    %p62 = por %p60, %p61
    %p63 = scmp.ne.s32.totalorder %s55, %s57
    %p64 = scmp.eq.s32.totalorder %s26, 1
    %p65 = por %p63, %p64
    %p66 = scmp.ne.s32.totalorder %s57, %s58
    %p67 = scmp.eq.s32.totalorder %s26, 0
    %p68 = por %p66, %p67
    %p69 = scmp.ne.s32.totalorder %s57, %s58
    %p70 = scmp.eq.s32.totalorder %s27, 1
    %p71 = por %p69, %p70
    %p73 = scmp.ne.s32.totalorder %s58, %s72
    %p74 = scmp.eq.s32.totalorder %s27, 0
    %p75 = por %p73, %p74
    %s77 = sadd.s32 %s76, 1
    %p80 = scmp.eq.s32.totalorder %s21, 1
    %p81 = scmp.ne.s32.totalorder %s76, %s78
    %p82 = scmp.eq.s32.totalorder %s21, 0
    %p83 = por %p81, %p82
    %p84 = scmp.ne.s32.totalorder %s76, %s78
    %p85 = scmp.eq.s32.totalorder %s26, 1
    %p86 = por %p84, %p85
    %p87 = scmp.ne.s32.totalorder %s78, %s79
    %p88 = scmp.eq.s32.totalorder %s26, 0
    %p89 = por %p87, %p88
    %p90 = scmp.ne.s32.totalorder %s78, %s79
    %p91 = scmp.eq.s32.totalorder %s27, 1
    %p92 = por %p90, %p91
    %p94 = scmp.ne.s32.totalorder %s79, %s93
    %p95 = scmp.eq.s32.totalorder %s27, 0
    %p96 = por %p94, %p95
    %s98 = sadd.s32 %s97, 1
    %p101 = scmp.eq.s32.totalorder %s21, 1
    %p102 = scmp.ne.s32.totalorder %s97, %s99
    %p103 = scmp.eq.s32.totalorder %s21, 0
    %p104 = por %p102, %p103
    %p105 = scmp.ne.s32.totalorder %s97, %s99
    %p106 = scmp.eq.s32.totalorder %s26, 1
    %p107 = por %p105, %p106
    %p108 = scmp.ne.s32.totalorder %s99, %s100
    %p109 = scmp.eq.s32.totalorder %s26, 0
    %p110 = por %p108, %p109
    %p111 = scmp.ne.s32.totalorder %s99, %s100
    %p112 = scmp.eq.s32.totalorder %s27, 1
    %p113 = por %p111, %p112
    %p115 = scmp.ne.s32.totalorder %s100, %s114
    %p116 = scmp.eq.s32.totalorder %s27, 0
    %p117 = por %p115, %p116
    %s119 = sadd.s32 %s118, 1
    %p122 = scmp.eq.s32.totalorder %s21, 1
    %p123 = scmp.ne.s32.totalorder %s118, %s120
    %p124 = scmp.eq.s32.totalorder %s21, 0
    %p125 = por %p123, %p124
    %p126 = scmp.ne.s32.totalorder %s118, %s120
    %p127 = scmp.eq.s32.totalorder %s26, 1
    %p128 = por %p126, %p127
    %p129 = scmp.ne.s32.totalorder %s120, %s121
    %p130 = scmp.eq.s32.totalorder %s26, 0
    %p131 = por %p129, %p130
    %p132 = scmp.ne.s32.totalorder %s120, %s121
    %p133 = scmp.eq.s32.totalorder %s27, 1
    %p134 = por %p132, %p133
    %p136 = scmp.ne.s32.totalorder %s121, %s135
    %p137 = scmp.eq.s32.totalorder %s27, 0
    %p138 = por %p136, %p137
    %s140 = sadd.s32 %s139, 1
    %p143 = scmp.eq.s32.totalorder %s21, 1
    %p144 = scmp.ne.s32.totalorder %s139, %s141
    %p145 = scmp.eq.s32.totalorder %s21, 0
    %p146 = por %p144, %p145
    %p147 = scmp.ne.s32.totalorder %s139, %s141
    %p148 = scmp.eq.s32.totalorder %s26, 1
    %p149 = por %p147, %p148
    %p150 = scmp.ne.s32.totalorder %s141, %s142
    %p151 = scmp.eq.s32.totalorder %s26, 0
    %p152 = por %p150, %p151
    %p153 = scmp.ne.s32.totalorder %s141, %s142
    %p154 = scmp.eq.s32.totalorder %s27, 1
    %p155 = por %p153, %p154
    %p157 = scmp.ne.s32.totalorder %s142, %s156
    %p158 = scmp.eq.s32.totalorder %s27, 0
    %p159 = por %p157, %p158
    %s161 = sadd.s32 %s160, 1
    %p164 = scmp.eq.s32.totalorder %s21, 1
    %p165 = scmp.ne.s32.totalorder %s160, %s162
    %p166 = scmp.eq.s32.totalorder %s21, 0
    %p167 = por %p165, %p166
    %p168 = scmp.ne.s32.totalorder %s160, %s162
    %p169 = scmp.eq.s32.totalorder %s26, 1
    %p170 = por %p168, %p169
    %p171 = scmp.ne.s32.totalorder %s162, %s163
    %p172 = scmp.eq.s32.totalorder %s26, 0
    %p173 = por %p171, %p172
    %p174 = scmp.ne.s32.totalorder %s162, %s163
    %p175 = scmp.eq.s32.totalorder %s27, 1
    %p176 = por %p174, %p175
    %p178 = scmp.ne.s32.totalorder %s163, %s177
    %p179 = scmp.eq.s32.totalorder %s27, 0
    %p180 = por %p178, %p179
    %s182 = sadd.s32 %s181, 1
    %p185 = scmp.eq.s32.totalorder %s21, 1
    %p186 = scmp.ne.s32.totalorder %s181, %s183
    %p187 = scmp.eq.s32.totalorder %s21, 0
    %p188 = por %p186, %p187
    %p189 = scmp.ne.s32.totalorder %s181, %s183
    %p190 = scmp.eq.s32.totalorder %s26, 1
    %p191 = por %p189, %p190
    %p192 = scmp.ne.s32.totalorder %s183, %s184
    %p193 = scmp.eq.s32.totalorder %s26, 0
    %p194 = por %p192, %p193
    %p195 = scmp.ne.s32.totalorder %s183, %s184
    %p196 = scmp.eq.s32.totalorder %s27, 1
    %p197 = por %p195, %p196
    %p199 = scmp.ne.s32.totalorder %s184, %s198
    %p200 = scmp.eq.s32.totalorder %s27, 0
    %p201 = por %p199, %p200
    %s203 = sadd.s32 %s202, 1
    %p206 = scmp.eq.s32.totalorder %s21, 1
    %p207 = scmp.ne.s32.totalorder %s202, %s204
    %p208 = scmp.eq.s32.totalorder %s21, 0
    %p209 = por %p207, %p208
    %p210 = scmp.ne.s32.totalorder %s202, %s204
    %p211 = scmp.eq.s32.totalorder %s26, 1
    %p212 = por %p210, %p211
    %p213 = scmp.ne.s32.totalorder %s204, %s205
    %p214 = scmp.eq.s32.totalorder %s26, 0
    %p215 = por %p213, %p214
    %p216 = scmp.ne.s32.totalorder %s204, %s205
    %p217 = scmp.eq.s32.totalorder %s27, 1
    %p218 = por %p216, %p217
    %p220 = scmp.ne.s32.totalorder %s205, %s219
    %p221 = scmp.eq.s32.totalorder %s27, 0
    %p222 = por %p220, %p221
    %s224 = sadd.s32 %s223, 1
    %p227 = scmp.eq.s32.totalorder %s21, 1
    %p228 = scmp.ne.s32.totalorder %s223, %s225
    %p229 = scmp.eq.s32.totalorder %s21, 0
    %p230 = por %p228, %p229
    %p231 = scmp.ne.s32.totalorder %s223, %s225
    %p232 = scmp.eq.s32.totalorder %s26, 1
    %p233 = por %p231, %p232
    %p234 = scmp.ne.s32.totalorder %s225, %s226
    %p235 = scmp.eq.s32.totalorder %s26, 0
    %p236 = por %p234, %p235
    %p237 = scmp.ne.s32.totalorder %s225, %s226
    %p238 = scmp.eq.s32.totalorder %s27, 1
    %p239 = por %p237, %p238
    %p241 = scmp.ne.s32.totalorder %s226, %s240
    %p242 = scmp.eq.s32.totalorder %s27, 0
    %p243 = por %p241, %p242
    %s245 = sadd.s32 %s244, 1
    %p248 = scmp.eq.s32.totalorder %s21, 1
    %p249 = scmp.ne.s32.totalorder %s244, %s246
    %p250 = scmp.eq.s32.totalorder %s21, 0
    %p251 = por %p249, %p250
    %p252 = scmp.ne.s32.totalorder %s244, %s246
    %p253 = scmp.eq.s32.totalorder %s26, 1
    %p254 = por %p252, %p253
    %p255 = scmp.ne.s32.totalorder %s246, %s247
    %p256 = scmp.eq.s32.totalorder %s26, 0
    %p257 = por %p255, %p256
    %p258 = scmp.ne.s32.totalorder %s246, %s247
    %p259 = scmp.eq.s32.totalorder %s27, 1
    %p260 = por %p258, %p259
    %p262 = scmp.ne.s32.totalorder %s247, %s261
    %p263 = scmp.eq.s32.totalorder %s27, 0
    %p264 = por %p262, %p263
    %s266 = sadd.s32 %s265, 1
    %p269 = scmp.eq.s32.totalorder %s21, 1
    %p270 = scmp.ne.s32.totalorder %s265, %s267
    %p271 = scmp.eq.s32.totalorder %s21, 0
    %p272 = por %p270, %p271
    %p273 = scmp.ne.s32.totalorder %s265, %s267
    %p274 = scmp.eq.s32.totalorder %s26, 1
    %p275 = por %p273, %p274
    %p276 = scmp.ne.s32.totalorder %s267, %s268
    %p277 = scmp.eq.s32.totalorder %s26, 0
    %p278 = por %p276, %p277
    %p279 = scmp.ne.s32.totalorder %s267, %s268
    %p280 = scmp.eq.s32.totalorder %s27, 1
    %p281 = por %p279, %p280
    %p283 = scmp.ne.s32.totalorder %s268, %s282
    %p284 = scmp.eq.s32.totalorder %s27, 0
    %p285 = por %p283, %p284
    %s287 = sadd.s32 %s286, 1
    %p290 = scmp.eq.s32.totalorder %s21, 1
    %p291 = scmp.ne.s32.totalorder %s286, %s288
    %p292 = scmp.eq.s32.totalorder %s21, 0
    %p293 = por %p291, %p292
    %p294 = scmp.ne.s32.totalorder %s286, %s288
    %p295 = scmp.eq.s32.totalorder %s26, 1
    %p296 = por %p294, %p295
    %p297 = scmp.ne.s32.totalorder %s288, %s289
    %p298 = scmp.eq.s32.totalorder %s26, 0
    %p299 = por %p297, %p298
    %p300 = scmp.ne.s32.totalorder %s288, %s289
    %p301 = scmp.eq.s32.totalorder %s27, 1
    %p302 = por %p300, %p301
    %p304 = scmp.ne.s32.totalorder %s289, %s303
    %p305 = scmp.eq.s32.totalorder %s27, 0
    %p306 = por %p304, %p305
    %s307 = ssub.s32 %s21, %s28
    %p308 = scmp.eq.s32.totalorder %s307, 0
    %s310 = sadd.s32 %s309, 1
    %s311 = scalar_select %p308, %s309, %s310
    %p314 = pneg %p308
    %p315 = scmp.eq.s32.totalorder %s21, 1
    %p316 = por %p314, %p315
    %p317 = scmp.ne.s32.totalorder %s309, %s312
    %p318 = scmp.eq.s32.totalorder %s21, 0
    %p319 = por %p317, %p318
    %p320 = scmp.ne.s32.totalorder %s309, %s312
    %p321 = scmp.eq.s32.totalorder %s26, 1
    %p322 = por %p320, %p321
    %p323 = scmp.ne.s32.totalorder %s312, %s313
    %p324 = scmp.eq.s32.totalorder %s26, 0
    %p325 = por %p323, %p324
    %p326 = scmp.ne.s32.totalorder %s312, %s313
    %p327 = scmp.eq.s32.totalorder %s27, 1
    %p328 = por %p326, %p327
    %p330 = scmp.ne.s32.totalorder %s313, %s329
    %p331 = scmp.eq.s32.totalorder %s27, 0
    %p332 = por %p330, %p331
    %p333 = scmp.le.s32.totalorder 1, %s21
    %p334 = scmp.lt.s32.totalorder %s21, 3
    %p335 = pnand %p333, %p334
    %p336 = pneg %p335
    // Predicated region
    $region9: #{discriminator_forward.1} parent=5 // pred_check
      _
    $region10: #{discriminator_forward.1} parent=5 // pred_check_branch
      %338 = sbr.rel (%p335) target = $region12
    $region11: #{discriminator_forward.1} parent=5 // pred_region
      %s339 = ssub.s32 %s21, 1
      // Predicated region
      $region13: #{discriminator_forward.1} parent=11 // pred_check
        %p340 = pneg %p68
      $region14: #{discriminator_forward.1} parent=11 // pred_check_branch
        %342 = sbr.rel (%p340) target = $region16
      $region15: #{discriminator_forward.1} parent=11 // pred_region
        _
      $region16: #{discriminator_forward.1} parent=11 // pred_fallthru
        _
      // Predicated region
      $region17: #{discriminator_forward.1} parent=11 // pred_check
        %p343 = pneg %p89
      $region18: #{discriminator_forward.1} parent=11 // pred_check_branch
        %345 = sbr.rel (%p343) target = $region20
      $region19: #{discriminator_forward.1} parent=11 // pred_region
        _
      $region20: #{discriminator_forward.1} parent=11 // pred_fallthru
        _
      // Predicated region
      $region21: #{discriminator_forward.1} parent=11 // pred_check
        %p346 = pneg %p110
      $region22: #{discriminator_forward.1} parent=11 // pred_check_branch
        %348 = sbr.rel (%p346) target = $region24
      $region23: #{discriminator_forward.1} parent=11 // pred_region
        _
      $region24: #{discriminator_forward.1} parent=11 // pred_fallthru
        _
      // Predicated region
      $region25: #{discriminator_forward.1} parent=11 // pred_check
        %p349 = pneg %p131
      $region26: #{discriminator_forward.1} parent=11 // pred_check_branch
        %351 = sbr.rel (%p349) target = $region28
      $region27: #{discriminator_forward.1} parent=11 // pred_region
        _
      $region28: #{discriminator_forward.1} parent=11 // pred_fallthru
        _
      // Predicated region
      $region29: #{discriminator_forward.1} parent=11 // pred_check
        %p352 = pneg %p152
      $region30: #{discriminator_forward.1} parent=11 // pred_check_branch
        %354 = sbr.rel (%p352) target = $region32
      $region31: #{discriminator_forward.1} parent=11 // pred_region
        _
      $region32: #{discriminator_forward.1} parent=11 // pred_fallthru
        _
      // Predicated region
      $region33: #{discriminator_forward.1} parent=11 // pred_check
        %p355 = pneg %p173
      $region34: #{discriminator_forward.1} parent=11 // pred_check_branch
        %357 = sbr.rel (%p355) target = $region36
      $region35: #{discriminator_forward.1} parent=11 // pred_region
        _
      $region36: #{discriminator_forward.1} parent=11 // pred_fallthru
        _
      // Predicated region
      $region37: #{discriminator_forward.1} parent=11 // pred_check
        %p358 = pneg %p194
      $region38: #{discriminator_forward.1} parent=11 // pred_check_branch
        %360 = sbr.rel (%p358) target = $region40
      $region39: #{discriminator_forward.1} parent=11 // pred_region
        _
      $region40: #{discriminator_forward.1} parent=11 // pred_fallthru
        _
      // Predicated region
      $region41: #{discriminator_forward.1} parent=11 // pred_check
        %p361 = pneg %p215
      $region42: #{discriminator_forward.1} parent=11 // pred_check_branch
        %363 = sbr.rel (%p361) target = $region44
      $region43: #{discriminator_forward.1} parent=11 // pred_region
        _
      $region44: #{discriminator_forward.1} parent=11 // pred_fallthru
        _
      // Predicated region
      $region45: #{discriminator_forward.1} parent=11 // pred_check
        %p364 = pneg %p236
      $region46: #{discriminator_forward.1} parent=11 // pred_check_branch
        %366 = sbr.rel (%p364) target = $region48
      $region47: #{discriminator_forward.1} parent=11 // pred_region
        _
      $region48: #{discriminator_forward.1} parent=11 // pred_fallthru
        _
      // Predicated region
      $region49: #{discriminator_forward.1} parent=11 // pred_check
        %p367 = pneg %p257
      $region50: #{discriminator_forward.1} parent=11 // pred_check_branch
        %369 = sbr.rel (%p367) target = $region52
      $region51: #{discriminator_forward.1} parent=11 // pred_region
        _
      $region52: #{discriminator_forward.1} parent=11 // pred_fallthru
        _
      // Predicated region
      $region53: #{discriminator_forward.1} parent=11 // pred_check
        %p370 = pneg %p278
      $region54: #{discriminator_forward.1} parent=11 // pred_check_branch
        %372 = sbr.rel (%p370) target = $region56
      $region55: #{discriminator_forward.1} parent=11 // pred_region
        _
      $region56: #{discriminator_forward.1} parent=11 // pred_fallthru
        _
      // Predicated region
      $region57: #{discriminator_forward.1} parent=11 // pred_check
        %p373 = pneg %p299
      $region58: #{discriminator_forward.1} parent=11 // pred_check_branch
        %375 = sbr.rel (%p373) target = $region60
      $region59: #{discriminator_forward.1} parent=11 // pred_region
        _
      $region60: #{discriminator_forward.1} parent=11 // pred_fallthru
        _
    $region12: #{discriminator_forward.1} parent=5 // pred_fallthru
      _
    %p376 = scmp.lt.s32.totalorder %s21, 2
    // Predicated region
    $region61: #{discriminator_forward.1} parent=5 // pred_check
      %p377 = pneg %p376
    $region62: #{discriminator_forward.1} parent=5 // pred_check_branch
      %379 = sbr.rel (%p377) target = $region64
    $region63: #{discriminator_forward.1} parent=5 // pred_region
      // Predicated region
      $region65: #{discriminator_forward.1} parent=63 // pred_check
        %p380 = pneg %p41
      $region66: #{discriminator_forward.1} parent=63 // pred_check_branch
        %382 = sbr.rel (%p380) target = $region68
      $region67: #{discriminator_forward.1} parent=63 // pred_region
        %p383 = scmp.lt.s32.totalorder %s21, 1
        %s384 = scalar_select %p383, %s21, 1
        %s385 = smul.addr %s384, 170
        %s386 = smul.addr %s385, 8
        %s387 = scalar_lea.vmem %s0, %s386
      $region68: #{discriminator_forward.1} parent=63 // pred_fallthru
        _
    $region64: #{discriminator_forward.1} parent=5 // pred_fallthru
      _
    %p388 = scmp.le.s32.totalorder 1, %s21
    %p389 = scmp.lt.s32.totalorder %s21, 3
    %p390 = pnand %p388, %p389
    %p391 = pneg %p390
    // Predicated region
    $region69: #{discriminator_forward.1} parent=5 // pred_check
      _
    $region70: #{discriminator_forward.1} parent=5 // pred_check_branch
      %393 = sbr.rel (%p390) target = $region72
    $region71: #{discriminator_forward.1} parent=5 // pred_region
      %s394 = ssub.s32 %s21, 1
      %p395 = scmp.lt.s32.totalorder %s26, 1
      %s396 = scalar_select %p395, %s26, 1
      %s397 = smul.addr %s396, 170
      %s398 = smul.addr %s397, 8
      %s399 = scalar_lea.vmem %s0, %s398
      %p400 = pneg %p47
      %p401 = pneg %p44
      %p402 = pneg %p68
      %p403 = pneg %p65
      %p404 = pneg %p89
      %p405 = pneg %p86
      %p406 = pneg %p110
      %p407 = pneg %p107
      %p408 = pneg %p131
      %p409 = pneg %p128
      %p410 = pneg %p152
      %p411 = pneg %p149
      %p412 = pneg %p173
      %p413 = pneg %p170
      %p414 = pneg %p194
      %p415 = pneg %p191
      %p416 = pneg %p215
      %p417 = pneg %p212
      %p418 = pneg %p236
      %p419 = pneg %p233
      %p420 = pneg %p257
      %p421 = pneg %p254
      %p422 = pneg %p278
      %p423 = pneg %p275
      %p424 = pneg %p299
      %p425 = pneg %p296
      %p426 = pneg %p325
      %p427 = pneg %p322
      %p428 = scmp.lt.s32.totalorder %s26, 1
      %s429 = scalar_select %p428, %s26, 1
      %s430 = scalar_lea.vmem %s13, %s429
      %p431 = scmp.lt.s32.totalorder %s26, 1
      %s432 = scalar_select %p431, %s26, 1
      %s433 = smul.addr %s432, 170
      %s434 = smul.addr %s433, 8
      %s435 = scalar_lea.vmem %s0, %s434
      %p436 = scmp.lt.s32.totalorder %s26, 1
      %s437 = scalar_select %p436, %s26, 1
      %s438 = scalar_lea.vmem %s13, %s437
      %vm439 = vcmask 130048
      %440 = vst.msk [vmem:[#allocation2] sm:$0xff] %vm439, 0.0
      %441 = vst.msk [vmem:[#allocation2 + $0x8] sm:$0xff] %vm439, 0.0
      %442 = vst.msk [vmem:[#allocation2 + $0x10] sm:$0xff] %vm439, 0.0
      %443 = vst.msk [vmem:[#allocation2 + $0x18] sm:$0xff] %vm439, 0.0
      %vm444 = vcmask 123904
      %445 = vst.msk [vmem:[#allocation2 + $0x20] sm:$0x3] %vm444, 0.0
      %s446 = scalar_lea.vmem [#allocation2], 1320
      %447 = vst.msk [vmem:[%s446] sm:$0xff] %vm439, 0.0
      %448 = vst.msk [vmem:[%s446 + $0x8] sm:$0xff] %vm439, 0.0
      %449 = vst.msk [vmem:[%s446 + $0x10] sm:$0xff] %vm439, 0.0
      %450 = vst.msk [vmem:[%s446 + $0x18] sm:$0xff] %vm439, 0.0
      %451 = vst.msk [vmem:[%s446 + $0x20] sm:$0x3] %vm444, 0.0
      %v452 = vlaneseq
      %v453 = vshrl.u32 %v452, 7
      %v454 = vadd.s32 %v453, 8
      %v455 = vadd.s32 %v453, 16
      %v456 = vadd.s32 %v453, 24
      %v457 = vadd.s32 %v453, 32
      %vm458 = vcmp.gt.s32.totalorder %v453, 0
      %vm459 = vcmp.gt.s32.totalorder %v454, 0
      %vm460 = vcmp.gt.s32.totalorder %v455, 0
      %vm461 = vcmp.gt.s32.totalorder %v456, 0
      %vm462 = vcmp.gt.s32.totalorder %v457, 0
      %vm463 = vcmp.lt.s32.totalorder %v453, 33
      %vm464 = vcmp.lt.s32.totalorder %v454, 33
      %vm465 = vcmp.lt.s32.totalorder %v455, 33
      %vm466 = vcmp.lt.s32.totalorder %v456, 33
      %vm467 = vcmp.lt.s32.totalorder %v457, 33
      %vm468 = vmand %vm458, %vm463
      %vm469 = vmand %vm459, %vm464
      %vm470 = vmand %vm460, %vm465
      %vm471 = vmand %vm461, %vm466
      %vm472 = vmand %vm462, %vm467
      %v473 = vsel %vm468, 1.0, 0.0
      %v474 = vsel %vm469, 1.0, 0.0
      %v475 = vsel %vm470, 1.0, 0.0
      %v476 = vsel %vm471, 1.0, 0.0
      %v477 = vsel %vm472, 1.0, 0.0
      loop: start=0, step=1, limit=32
      $region73: #{discriminator_forward.1} parent=71 // loop_pre_header
        _
      $region74: #{discriminator_forward.1} parent=71 // loop_header
        %s479 = sphi 0, %s483
        %p480 = scmp.ge.s32.totalorder %s479, 32
      $region75: #{discriminator_forward.1} parent=71 // loop_header_branch
        %482 = sbr.rel (%p480) target = $region79
      $region76: #{discriminator_forward.1} parent=71 // loop_body
        %s484 = smul.u32 %s479, 40
        %s485 = scalar_lea.vmem %s435, %s484
        %v486 = vld [vmem:[%s485] sm:$0xff]
        %v487 = vld [vmem:[%s485 + $0x8] sm:$0xff]
        %v488 = vld [vmem:[%s485 + $0x10] sm:$0xff]
        %v489 = vld [vmem:[%s485 + $0x18] sm:$0xff]
        %v490 = vld [vmem:[%s485 + $0x20] sm:$0x3]
        %v491 = vld [vmem:[%s1] sm:$0x7]
        %v492 = vld [vmem:[%s485 + $0x1] sm:$0xff]
        %v493 = vld [vmem:[%s485 + $0x9] sm:$0xff]
        %v494 = vld [vmem:[%s485 + $0x11] sm:$0xff]
        %v495 = vld [vmem:[%s485 + $0x19] sm:$0xff]
        %v496 = vld [vmem:[%s485 + $0x21] sm:$0x3]
        %s497 = scalar_lea.vmem %s1, 4
        %v498 = vld [vmem:[%s497] sm:$0x7]
        %vm499 = vcmask 23552
        %v501 = vsel %vm499, %v492, 0
        %v504 = vsel %vm499, %v493, 0
        %v507 = vsel %vm499, %v494, 0
        %v510 = vsel %vm499, %v495, 0
        %v513 = vsel %vm499, %v496, 0
        %vm515 = vcmask 1042432
        %v517 = vsel %vm515, %v498, 0
        %519 = vmatpush.msra.mxu0 0.0
        %520 = vmatpush.msra.mxu0 0.0
        %521 = vmatpush.msra.mxu0 0.0
        %522 = vmatpush.msra.mxu0 0.0
        %523 = vmatpush.msra.mxu0 0.0
        %524 = vmatpush.msra.mxu0 0.0
        %525 = vmatpush.msra.mxu0 0.0
        %526 = vmatpush.msra.mxu0 0.0
        %527 = vmatpush.msra.mxu0 0.0
        %528 = vmatpush.msra.mxu0 0.0
        %529 = vmatpush.msra.mxu0 0.0
        %530 = vmatpush.msra.mxu0 0.0
        %531 = vmatpush.msra.mxu0 0.0
        %532 = vmatpush.msra.mxu0 0.0
        %533 = vmatpush.msra.mxu0 0.0
        %534 = vmatpush.msra.mxu0 %v517
        %535 = vmatmul.f32.gmra.mxu0 %v501
        %v536 = vpop.f32.mrf.mxu0
        %v537 = vadd.f32 0.0, %v536
        %538 = vmatmul.f32.gmra.mxu0 %v504
        %v539 = vpop.f32.mrf.mxu0
        %v540 = vadd.f32 0.0, %v539
        %541 = vmatmul.f32.gmra.mxu0 %v507
        %v542 = vpop.f32.mrf.mxu0
        %v543 = vadd.f32 0.0, %v542
        %544 = vmatmul.f32.gmra.mxu0 %v510
        %v545 = vpop.f32.mrf.mxu0
        %v546 = vadd.f32 0.0, %v545
        %547 = vmatmul.f32.gmra.mxu0 %v513
        %v548 = vpop.f32.mrf.mxu0
        %v549 = vadd.f32 0.0, %v548
        %550 = vdwg.mxu0
        %v552 = vsel %vm499, %v486, 0
        %v555 = vsel %vm499, %v487, 0
        %v558 = vsel %vm499, %v488, 0
        %v561 = vsel %vm499, %v489, 0
        %v564 = vsel %vm499, %v490, 0
        %v567 = vsel %vm515, %v491, 0
        %569 = vmatpush.msra.mxu0 0.0
        %570 = vmatpush.msra.mxu0 0.0
        %571 = vmatpush.msra.mxu0 0.0
        %572 = vmatpush.msra.mxu0 0.0
        %573 = vmatpush.msra.mxu0 0.0
        %574 = vmatpush.msra.mxu0 0.0
        %575 = vmatpush.msra.mxu0 0.0
        %576 = vmatpush.msra.mxu0 0.0
        %577 = vmatpush.msra.mxu0 0.0
        %578 = vmatpush.msra.mxu0 0.0
        %579 = vmatpush.msra.mxu0 0.0
        %580 = vmatpush.msra.mxu0 0.0
        %581 = vmatpush.msra.mxu0 0.0
        %582 = vmatpush.msra.mxu0 0.0
        %583 = vmatpush.msra.mxu0 0.0
        %584 = vmatpush.msra.mxu0 %v567
        %585 = vmatmul.f32.gmra.mxu0 %v552
        %v586 = vpop.f32.mrf.mxu0
        %v587 = vadd.f32 %v537, %v586
        %588 = vmatmul.f32.gmra.mxu0 %v555
        %v589 = vpop.f32.mrf.mxu0
        %v590 = vadd.f32 %v540, %v589
        %591 = vmatmul.f32.gmra.mxu0 %v558
        %v592 = vpop.f32.mrf.mxu0
        %v593 = vadd.f32 %v543, %v592
        %594 = vmatmul.f32.gmra.mxu0 %v561
        %v595 = vpop.f32.mrf.mxu0
        %v596 = vadd.f32 %v546, %v595
        %597 = vmatmul.f32.gmra.mxu0 %v564
        %v598 = vpop.f32.mrf.mxu0
        %v599 = vadd.f32 %v549, %v598
        %600 = vdwg.mxu0
        %v601 = vld [vmem:[%s485 + $0x2] sm:$0xff]
        %v602 = vld [vmem:[%s485 + $0xa] sm:$0xff]
        %v603 = vld [vmem:[%s485 + $0x12] sm:$0xff]
        %v604 = vld [vmem:[%s485 + $0x1a] sm:$0xff]
        %v605 = vld [vmem:[%s485 + $0x22] sm:$0x3]
        %s606 = scalar_lea.vmem %s1, 8
        %v607 = vld [vmem:[%s606] sm:$0x7]
        %v609 = vsel %vm499, %v601, 0
        %v612 = vsel %vm499, %v602, 0
        %v615 = vsel %vm499, %v603, 0
        %v618 = vsel %vm499, %v604, 0
        %v621 = vsel %vm499, %v605, 0
        %v624 = vsel %vm515, %v607, 0
        %626 = vmatpush.msra.mxu0 0.0
        %627 = vmatpush.msra.mxu0 0.0
        %628 = vmatpush.msra.mxu0 0.0
        %629 = vmatpush.msra.mxu0 0.0
        %630 = vmatpush.msra.mxu0 0.0
        %631 = vmatpush.msra.mxu0 0.0
        %632 = vmatpush.msra.mxu0 0.0
        %633 = vmatpush.msra.mxu0 0.0
        %634 = vmatpush.msra.mxu0 0.0
        %635 = vmatpush.msra.mxu0 0.0
        %636 = vmatpush.msra.mxu0 0.0
        %637 = vmatpush.msra.mxu0 0.0
        %638 = vmatpush.msra.mxu0 0.0
        %639 = vmatpush.msra.mxu0 0.0
        %640 = vmatpush.msra.mxu0 0.0
        %641 = vmatpush.msra.mxu0 %v624
        %642 = vmatmul.f32.gmra.mxu0 %v609
        %v643 = vpop.f32.mrf.mxu0
        %v644 = vadd.f32 0.0, %v643
        %645 = vmatmul.f32.gmra.mxu0 %v612
        %v646 = vpop.f32.mrf.mxu0
        %v647 = vadd.f32 0.0, %v646
        %648 = vmatmul.f32.gmra.mxu0 %v615
        %v649 = vpop.f32.mrf.mxu0
        %v650 = vadd.f32 0.0, %v649
        %651 = vmatmul.f32.gmra.mxu0 %v618
        %v652 = vpop.f32.mrf.mxu0
        %v653 = vadd.f32 0.0, %v652
        %654 = vmatmul.f32.gmra.mxu0 %v621
        %v655 = vpop.f32.mrf.mxu0
        %v656 = vadd.f32 0.0, %v655
        %657 = vdwg.mxu0
        %v658 = vadd.f32 %v587, %v644
        %v659 = vadd.f32 %v590, %v647
        %v660 = vadd.f32 %v593, %v650
        %v661 = vadd.f32 %v596, %v653
        %v662 = vadd.f32 %v599, %v656
        %s663 = sadd.s32 %s479, 1
        %s664 = smul.u32 %s663, 40
        %s665 = scalar_lea.vmem %s435, %s664
        %v666 = vld [vmem:[%s665] sm:$0xff]
        %v667 = vld [vmem:[%s665 + $0x8] sm:$0xff]
        %v668 = vld [vmem:[%s665 + $0x10] sm:$0xff]
        %v669 = vld [vmem:[%s665 + $0x18] sm:$0xff]
        %v670 = vld [vmem:[%s665 + $0x20] sm:$0x3]
        %s671 = scalar_lea.vmem %s1, 12
        %v672 = vld [vmem:[%s671] sm:$0x7]
        %v674 = vsel %vm499, %v666, 0
        %v677 = vsel %vm499, %v667, 0
        %v680 = vsel %vm499, %v668, 0
        %v683 = vsel %vm499, %v669, 0
        %v686 = vsel %vm499, %v670, 0
        %v689 = vsel %vm515, %v672, 0
        %691 = vmatpush.msra.mxu0 0.0
        %692 = vmatpush.msra.mxu0 0.0
        %693 = vmatpush.msra.mxu0 0.0
        %694 = vmatpush.msra.mxu0 0.0
        %695 = vmatpush.msra.mxu0 0.0
        %696 = vmatpush.msra.mxu0 0.0
        %697 = vmatpush.msra.mxu0 0.0
        %698 = vmatpush.msra.mxu0 0.0
        %699 = vmatpush.msra.mxu0 0.0
        %700 = vmatpush.msra.mxu0 0.0
        %701 = vmatpush.msra.mxu0 0.0
        %702 = vmatpush.msra.mxu0 0.0
        %703 = vmatpush.msra.mxu0 0.0
        %704 = vmatpush.msra.mxu0 0.0
        %705 = vmatpush.msra.mxu0 0.0
        %706 = vmatpush.msra.mxu0 %v689
        %707 = vmatmul.f32.gmra.mxu0 %v674
        %v708 = vpop.f32.mrf.mxu0
        %v709 = vadd.f32 0.0, %v708
        %710 = vmatmul.f32.gmra.mxu0 %v677
        %v711 = vpop.f32.mrf.mxu0
        %v712 = vadd.f32 0.0, %v711
        %713 = vmatmul.f32.gmra.mxu0 %v680
        %v714 = vpop.f32.mrf.mxu0
        %v715 = vadd.f32 0.0, %v714
        %716 = vmatmul.f32.gmra.mxu0 %v683
        %v717 = vpop.f32.mrf.mxu0
        %v718 = vadd.f32 0.0, %v717
        %719 = vmatmul.f32.gmra.mxu0 %v686
        %v720 = vpop.f32.mrf.mxu0
        %v721 = vadd.f32 0.0, %v720
        %722 = vdwg.mxu0
        %v723 = vadd.f32 %v658, %v709
        %v724 = vadd.f32 %v659, %v712
        %v725 = vadd.f32 %v660, %v715
        %v726 = vadd.f32 %v661, %v718
        %v727 = vadd.f32 %v662, %v721
        %v728 = vld [vmem:[%s665 + $0x1] sm:$0xff]
        %v729 = vld [vmem:[%s665 + $0x9] sm:$0xff]
        %v730 = vld [vmem:[%s665 + $0x11] sm:$0xff]
        %v731 = vld [vmem:[%s665 + $0x19] sm:$0xff]
        %v732 = vld [vmem:[%s665 + $0x21] sm:$0x3]
        %s733 = scalar_lea.vmem %s1, 16
        %v734 = vld [vmem:[%s733] sm:$0x7]
        %v736 = vsel %vm499, %v728, 0
        %v739 = vsel %vm499, %v729, 0
        %v742 = vsel %vm499, %v730, 0
        %v745 = vsel %vm499, %v731, 0
        %v748 = vsel %vm499, %v732, 0
        %v751 = vsel %vm515, %v734, 0
        %753 = vmatpush.msra.mxu0 0.0
        %754 = vmatpush.msra.mxu0 0.0
        %755 = vmatpush.msra.mxu0 0.0
        %756 = vmatpush.msra.mxu0 0.0
        %757 = vmatpush.msra.mxu0 0.0
        %758 = vmatpush.msra.mxu0 0.0
        %759 = vmatpush.msra.mxu0 0.0
        %760 = vmatpush.msra.mxu0 0.0
        %761 = vmatpush.msra.mxu0 0.0
        %762 = vmatpush.msra.mxu0 0.0
        %763 = vmatpush.msra.mxu0 0.0
        %764 = vmatpush.msra.mxu0 0.0
        %765 = vmatpush.msra.mxu0 0.0
        %766 = vmatpush.msra.mxu0 0.0
        %767 = vmatpush.msra.mxu0 0.0
        %768 = vmatpush.msra.mxu0 %v751
        %769 = vmatmul.f32.gmra.mxu0 %v736
        %v770 = vpop.f32.mrf.mxu0
        %v771 = vadd.f32 0.0, %v770
        %772 = vmatmul.f32.gmra.mxu0 %v739
        %v773 = vpop.f32.mrf.mxu0
        %v774 = vadd.f32 0.0, %v773
        %775 = vmatmul.f32.gmra.mxu0 %v742
        %v776 = vpop.f32.mrf.mxu0
        %v777 = vadd.f32 0.0, %v776
        %778 = vmatmul.f32.gmra.mxu0 %v745
        %v779 = vpop.f32.mrf.mxu0
        %v780 = vadd.f32 0.0, %v779
        %781 = vmatmul.f32.gmra.mxu0 %v748
        %v782 = vpop.f32.mrf.mxu0
        %v783 = vadd.f32 0.0, %v782
        %784 = vdwg.mxu0
        %v785 = vadd.f32 %v723, %v771
        %v786 = vadd.f32 %v724, %v774
        %v787 = vadd.f32 %v725, %v777
        %v788 = vadd.f32 %v726, %v780
        %v789 = vadd.f32 %v727, %v783
        %v790 = vld [vmem:[%s665 + $0x2] sm:$0xff]
        %v791 = vld [vmem:[%s665 + $0xa] sm:$0xff]
        %v792 = vld [vmem:[%s665 + $0x12] sm:$0xff]
        %v793 = vld [vmem:[%s665 + $0x1a] sm:$0xff]
        %v794 = vld [vmem:[%s665 + $0x22] sm:$0x3]
        %s795 = scalar_lea.vmem %s1, 20
        %v796 = vld [vmem:[%s795] sm:$0x7]
        %v798 = vsel %vm499, %v790, 0
        %v801 = vsel %vm499, %v791, 0
        %v804 = vsel %vm499, %v792, 0
        %v807 = vsel %vm499, %v793, 0
        %v810 = vsel %vm499, %v794, 0
        %v813 = vsel %vm515, %v796, 0
        %815 = vmatpush.msra.mxu0 0.0
        %816 = vmatpush.msra.mxu0 0.0
        %817 = vmatpush.msra.mxu0 0.0
        %818 = vmatpush.msra.mxu0 0.0
        %819 = vmatpush.msra.mxu0 0.0
        %820 = vmatpush.msra.mxu0 0.0
        %821 = vmatpush.msra.mxu0 0.0
        %822 = vmatpush.msra.mxu0 0.0
        %823 = vmatpush.msra.mxu0 0.0
        %824 = vmatpush.msra.mxu0 0.0
        %825 = vmatpush.msra.mxu0 0.0
        %826 = vmatpush.msra.mxu0 0.0
        %827 = vmatpush.msra.mxu0 0.0
        %828 = vmatpush.msra.mxu0 0.0
        %829 = vmatpush.msra.mxu0 0.0
        %830 = vmatpush.msra.mxu0 %v813
        %831 = vmatmul.f32.gmra.mxu0 %v798
        %v832 = vpop.f32.mrf.mxu0
        %v833 = vadd.f32 0.0, %v832
        %834 = vmatmul.f32.gmra.mxu0 %v801
        %v835 = vpop.f32.mrf.mxu0
        %v836 = vadd.f32 0.0, %v835
        %837 = vmatmul.f32.gmra.mxu0 %v804
        %v838 = vpop.f32.mrf.mxu0
        %v839 = vadd.f32 0.0, %v838
        %840 = vmatmul.f32.gmra.mxu0 %v807
        %v841 = vpop.f32.mrf.mxu0
        %v842 = vadd.f32 0.0, %v841
        %843 = vmatmul.f32.gmra.mxu0 %v810
        %v844 = vpop.f32.mrf.mxu0
        %v845 = vadd.f32 0.0, %v844
        %846 = vdwg.mxu0
        %v847 = vadd.f32 %v785, %v833
        %v848 = vadd.f32 %v786, %v836
        %v849 = vadd.f32 %v787, %v839
        %v850 = vadd.f32 %v788, %v842
        %v851 = vadd.f32 %v789, %v845
        %s852 = sadd.s32 %s479, 2
        %s853 = smul.u32 %s852, 40
        %s854 = scalar_lea.vmem %s435, %s853
        %v855 = vld [vmem:[%s854] sm:$0xff]
        %v856 = vld [vmem:[%s854 + $0x8] sm:$0xff]
        %v857 = vld [vmem:[%s854 + $0x10] sm:$0xff]
        %v858 = vld [vmem:[%s854 + $0x18] sm:$0xff]
        %v859 = vld [vmem:[%s854 + $0x20] sm:$0x3]
        %s860 = scalar_lea.vmem %s1, 24
        %v861 = vld [vmem:[%s860] sm:$0x7]
        %v863 = vsel %vm499, %v855, 0
        %v866 = vsel %vm499, %v856, 0
        %v869 = vsel %vm499, %v857, 0
        %v872 = vsel %vm499, %v858, 0
        %v875 = vsel %vm499, %v859, 0
        %v878 = vsel %vm515, %v861, 0
        %880 = vmatpush.msra.mxu0 0.0
        %881 = vmatpush.msra.mxu0 0.0
        %882 = vmatpush.msra.mxu0 0.0
        %883 = vmatpush.msra.mxu0 0.0
        %884 = vmatpush.msra.mxu0 0.0
        %885 = vmatpush.msra.mxu0 0.0
        %886 = vmatpush.msra.mxu0 0.0
        %887 = vmatpush.msra.mxu0 0.0
        %888 = vmatpush.msra.mxu0 0.0
        %889 = vmatpush.msra.mxu0 0.0
        %890 = vmatpush.msra.mxu0 0.0
        %891 = vmatpush.msra.mxu0 0.0
        %892 = vmatpush.msra.mxu0 0.0
        %893 = vmatpush.msra.mxu0 0.0
        %894 = vmatpush.msra.mxu0 0.0
        %895 = vmatpush.msra.mxu0 %v878
        %896 = vmatmul.f32.gmra.mxu0 %v863
        %v897 = vpop.f32.mrf.mxu0
        %v898 = vadd.f32 0.0, %v897
        %899 = vmatmul.f32.gmra.mxu0 %v866
        %v900 = vpop.f32.mrf.mxu0
        %v901 = vadd.f32 0.0, %v900
        %902 = vmatmul.f32.gmra.mxu0 %v869
        %v903 = vpop.f32.mrf.mxu0
        %v904 = vadd.f32 0.0, %v903
        %905 = vmatmul.f32.gmra.mxu0 %v872
        %v906 = vpop.f32.mrf.mxu0
        %v907 = vadd.f32 0.0, %v906
        %908 = vmatmul.f32.gmra.mxu0 %v875
        %v909 = vpop.f32.mrf.mxu0
        %v910 = vadd.f32 0.0, %v909
        %911 = vdwg.mxu0
        %v912 = vadd.f32 %v847, %v898
        %v913 = vadd.f32 %v848, %v901
        %v914 = vadd.f32 %v849, %v904
        %v915 = vadd.f32 %v850, %v907
        %v916 = vadd.f32 %v851, %v910
        %v917 = vld [vmem:[%s854 + $0x1] sm:$0xff]
        %v918 = vld [vmem:[%s854 + $0x9] sm:$0xff]
        %v919 = vld [vmem:[%s854 + $0x11] sm:$0xff]
        %v920 = vld [vmem:[%s854 + $0x19] sm:$0xff]
        %v921 = vld [vmem:[%s854 + $0x21] sm:$0x3]
        %s922 = scalar_lea.vmem %s1, 28
        %v923 = vld [vmem:[%s922] sm:$0x7]
        %v925 = vsel %vm499, %v917, 0
        %v928 = vsel %vm499, %v918, 0
        %v931 = vsel %vm499, %v919, 0
        %v934 = vsel %vm499, %v920, 0
        %v937 = vsel %vm499, %v921, 0
        %v940 = vsel %vm515, %v923, 0
        %942 = vmatpush.msra.mxu0 0.0
        %943 = vmatpush.msra.mxu0 0.0
        %944 = vmatpush.msra.mxu0 0.0
        %945 = vmatpush.msra.mxu0 0.0
        %946 = vmatpush.msra.mxu0 0.0
        %947 = vmatpush.msra.mxu0 0.0
        %948 = vmatpush.msra.mxu0 0.0
        %949 = vmatpush.msra.mxu0 0.0
        %950 = vmatpush.msra.mxu0 0.0
        %951 = vmatpush.msra.mxu0 0.0
        %952 = vmatpush.msra.mxu0 0.0
        %953 = vmatpush.msra.mxu0 0.0
        %954 = vmatpush.msra.mxu0 0.0
        %955 = vmatpush.msra.mxu0 0.0
        %956 = vmatpush.msra.mxu0 0.0
        %957 = vmatpush.msra.mxu0 %v940
        %958 = vmatmul.f32.gmra.mxu0 %v925
        %v959 = vpop.f32.mrf.mxu0
        %v960 = vadd.f32 0.0, %v959
        %961 = vmatmul.f32.gmra.mxu0 %v928
        %v962 = vpop.f32.mrf.mxu0
        %v963 = vadd.f32 0.0, %v962
        %964 = vmatmul.f32.gmra.mxu0 %v931
        %v965 = vpop.f32.mrf.mxu0
        %v966 = vadd.f32 0.0, %v965
        %967 = vmatmul.f32.gmra.mxu0 %v934
        %v968 = vpop.f32.mrf.mxu0
        %v969 = vadd.f32 0.0, %v968
        %970 = vmatmul.f32.gmra.mxu0 %v937
        %v971 = vpop.f32.mrf.mxu0
        %v972 = vadd.f32 0.0, %v971
        %973 = vdwg.mxu0
        %v974 = vadd.f32 %v912, %v960
        %v975 = vadd.f32 %v913, %v963
        %v976 = vadd.f32 %v914, %v966
        %v977 = vadd.f32 %v915, %v969
        %v978 = vadd.f32 %v916, %v972
        %v979 = vld [vmem:[%s854 + $0x2] sm:$0xff]
        %v980 = vld [vmem:[%s854 + $0xa] sm:$0xff]
        %v981 = vld [vmem:[%s854 + $0x12] sm:$0xff]
        %v982 = vld [vmem:[%s854 + $0x1a] sm:$0xff]
        %v983 = vld [vmem:[%s854 + $0x22] sm:$0x3]
        %s984 = scalar_lea.vmem %s1, 32
        %v985 = vld [vmem:[%s984] sm:$0x7]
        %v987 = vsel %vm499, %v979, 0
        %v990 = vsel %vm499, %v980, 0
        %v993 = vsel %vm499, %v981, 0
        %v996 = vsel %vm499, %v982, 0
        %v999 = vsel %vm499, %v983, 0
        %v1002 = vsel %vm515, %v985, 0
        %1004 = vmatpush.msra.mxu0 0.0
        %1005 = vmatpush.msra.mxu0 0.0
        %1006 = vmatpush.msra.mxu0 0.0
        %1007 = vmatpush.msra.mxu0 0.0
        %1008 = vmatpush.msra.mxu0 0.0
        %1009 = vmatpush.msra.mxu0 0.0
        %1010 = vmatpush.msra.mxu0 0.0
        %1011 = vmatpush.msra.mxu0 0.0
        %1012 = vmatpush.msra.mxu0 0.0
        %1013 = vmatpush.msra.mxu0 0.0
        %1014 = vmatpush.msra.mxu0 0.0
        %1015 = vmatpush.msra.mxu0 0.0
        %1016 = vmatpush.msra.mxu0 0.0
        %1017 = vmatpush.msra.mxu0 0.0
        %1018 = vmatpush.msra.mxu0 0.0
        %1019 = vmatpush.msra.mxu0 %v1002
        %1020 = vmatmul.f32.gmra.mxu0 %v987
        %v1021 = vpop.f32.mrf.mxu0
        %v1022 = vadd.f32 0.0, %v1021
        %1023 = vmatmul.f32.gmra.mxu0 %v990
        %v1024 = vpop.f32.mrf.mxu0
        %v1025 = vadd.f32 0.0, %v1024
        %1026 = vmatmul.f32.gmra.mxu0 %v993
        %v1027 = vpop.f32.mrf.mxu0
        %v1028 = vadd.f32 0.0, %v1027
        %1029 = vmatmul.f32.gmra.mxu0 %v996
        %v1030 = vpop.f32.mrf.mxu0
        %v1031 = vadd.f32 0.0, %v1030
        %1032 = vmatmul.f32.gmra.mxu0 %v999
        %v1033 = vpop.f32.mrf.mxu0
        %v1034 = vadd.f32 0.0, %v1033
        %1035 = vdwg.mxu0
        %v1036 = vadd.f32 %v974, %v1022
        %v1037 = vadd.f32 %v975, %v1025
        %v1038 = vadd.f32 %v976, %v1028
        %v1039 = vadd.f32 %v977, %v1031
        %v1040 = vadd.f32 %v978, %v1034
        %v1041 = vld [vmem:[%s2] sm:$0x1]
        %v1043 = vperm.slane %v1041, 0
        %v1045 = vadd.f32 %v1036, %v1043
        %v1046 = vadd.f32 %v1037, %v1043
        %v1047 = vadd.f32 %v1038, %v1043
        %v1048 = vadd.f32 %v1039, %v1043
        %v1049 = vadd.f32 %v1040, %v1043
        %vm1050 = vcmp.gt.f32.partialorder %v1045, 0.0
        %vm1051 = vcmp.gt.f32.partialorder %v1046, 0.0
        %vm1052 = vcmp.gt.f32.partialorder %v1047, 0.0
        %vm1053 = vcmp.gt.f32.partialorder %v1048, 0.0
        %vm1054 = vcmp.gt.f32.partialorder %v1049, 0.0
        %v1055 = vmul.f32 %v1045, 0.2
        %v1056 = vmul.f32 %v1046, 0.2
        %v1057 = vmul.f32 %v1047, 0.2
        %v1058 = vmul.f32 %v1048, 0.2
        %v1059 = vmul.f32 %v1049, 0.2
        %v1060 = vsel %vm1050, %v1045, %v1055
        %v1061 = vsel %vm1051, %v1046, %v1056
        %v1062 = vsel %vm1052, %v1047, %v1057
        %v1063 = vsel %vm1053, %v1048, %v1058
        %v1064 = vsel %vm1054, %v1049, %v1059
        %v1065 = vmul.f32 %v1060, %v473
        %v1066 = vmul.f32 %v1061, %v474
        %v1067 = vmul.f32 %v1062, %v475
        %v1068 = vmul.f32 %v1063, %v476
        %v1069 = vmul.f32 %v1064, %v477
        %s1070 = scalar_lea.vmem [#allocation2], %s664
        %1071 = vst.msk [vmem:[%s1070] sm:$0xff] %vm439, %v1065
        %1072 = vst.msk [vmem:[%s1070 + $0x8] sm:$0xff] %vm439, %v1066
        %1073 = vst.msk [vmem:[%s1070 + $0x10] sm:$0xff] %vm439, %v1067
        %1074 = vst.msk [vmem:[%s1070 + $0x18] sm:$0xff] %vm439, %v1068
        %1075 = vst.msk [vmem:[%s1070 + $0x20] sm:$0x3] %vm444, %v1069
      $region77: #{discriminator_forward.1} parent=71 // loop_footer
        %s483 = sadd.s32 1, %s479
      $region78: #{discriminator_forward.1} parent=71 // loop_footer_branch
        %478 = sbr.rel target = $region74
      $region79: #{discriminator_forward.1} parent=71 // loop_exit
        _
      loop: start=0, step=1, limit=32
      $region80: #{discriminator_forward.1} parent=71 // loop_pre_header
        _
      $region81: #{discriminator_forward.1} parent=71 // loop_header
        %s1077 = sphi 0, %s1081
        %p1078 = scmp.ge.s32.totalorder %s1077, 32
      $region82: #{discriminator_forward.1} parent=71 // loop_header_branch
        %1080 = sbr.rel (%p1078) target = $region86
      $region83: #{discriminator_forward.1} parent=71 // loop_body
        %s1082 = smul.u32 %s1077, 40
        %s1083 = scalar_lea.vmem [#allocation2], %s1082
        %v1084 = vld [vmem:[%s1083] sm:$0xff]
        %v1085 = vld [vmem:[%s1083 + $0x8] sm:$0xff]
        %v1086 = vld [vmem:[%s1083 + $0x10] sm:$0xff]
        %v1087 = vld [vmem:[%s1083 + $0x18] sm:$0xff]
        %v1088 = vld [vmem:[%s3] sm:$0xff]
        %v1089 = vld [vmem:[%s3 + $0x8] sm:$0xff]
        %v1090 = vld [vmem:[%s1083 + $0x1] sm:$0xff]
        %v1091 = vld [vmem:[%s1083 + $0x9] sm:$0xff]
        %v1092 = vld [vmem:[%s1083 + $0x11] sm:$0xff]
        %v1093 = vld [vmem:[%s1083 + $0x19] sm:$0xff]
        %s1094 = scalar_lea.vmem %s3, 16
        %v1095 = vld [vmem:[%s1094] sm:$0xff]
        %v1096 = vld [vmem:[%s1094 + $0x8] sm:$0xff]
        %v1098 = vsel %vm439, %v1090, 0
        %v1101 = vsel %vm439, %v1091, 0
        %v1104 = vsel %vm439, %v1092, 0
        %v1107 = vsel %vm439, %v1093, 0
        %1109 = vmatpush.msra.mxu0 0.0
        %1110 = vmatpush.msra.mxu0 0.0
        %1111 = vmatpush.msra.mxu0 0.0
        %1112 = vmatpush.msra.mxu0 0.0
        %1113 = vmatpush.msra.mxu0 0.0
        %1114 = vmatpush.msra.mxu0 0.0
        %1115 = vmatpush.msra.mxu0 0.0
        %1116 = vmatpush.msra.mxu0 0.0
        %1117 = vmatpush.msra.mxu0 0.0
        %1118 = vmatpush.msra.mxu0 0.0
        %1119 = vmatpush.msra.mxu0 0.0
        %1120 = vmatpush.msra.mxu0 0.0
        %1121 = vmatpush.msra.mxu0 0.0
        %1122 = vmatpush.msra.mxu0 0.0
        %1123 = vmatpush.msra.mxu0 %v1096
        %1124 = vmatpush.msra.mxu0 %v1095
        %1125 = vmatmul.f32.gmra.mxu0 %v1098
        %v1126 = vpop.f32.mrf.mxu0
        %v1127 = vadd.f32 0.0, %v1126
        %1128 = vmatmul.f32.gmra.mxu0 %v1101
        %v1129 = vpop.f32.mrf.mxu0
        %v1130 = vadd.f32 0.0, %v1129
        %1131 = vmatmul.f32.gmra.mxu0 %v1104
        %v1132 = vpop.f32.mrf.mxu0
        %v1133 = vadd.f32 0.0, %v1132
        %1134 = vmatmul.f32.gmra.mxu0 %v1107
        %v1135 = vpop.f32.mrf.mxu0
        %v1136 = vadd.f32 0.0, %v1135
        %1137 = vdwg.mxu0
        %v1139 = vsel %vm439, %v1084, 0
        %v1142 = vsel %vm439, %v1085, 0
        %v1145 = vsel %vm439, %v1086, 0
        %v1148 = vsel %vm439, %v1087, 0
        %1150 = vmatpush.msra.mxu0 0.0
        %1151 = vmatpush.msra.mxu0 0.0
        %1152 = vmatpush.msra.mxu0 0.0
        %1153 = vmatpush.msra.mxu0 0.0
        %1154 = vmatpush.msra.mxu0 0.0
        %1155 = vmatpush.msra.mxu0 0.0
        %1156 = vmatpush.msra.mxu0 0.0
        %1157 = vmatpush.msra.mxu0 0.0
        %1158 = vmatpush.msra.mxu0 0.0
        %1159 = vmatpush.msra.mxu0 0.0
        %1160 = vmatpush.msra.mxu0 0.0
        %1161 = vmatpush.msra.mxu0 0.0
        %1162 = vmatpush.msra.mxu0 0.0
        %1163 = vmatpush.msra.mxu0 0.0
        %1164 = vmatpush.msra.mxu0 %v1089
        %1165 = vmatpush.msra.mxu0 %v1088
        %1166 = vmatmul.f32.gmra.mxu0 %v1139
        %v1167 = vpop.f32.mrf.mxu0
        %v1168 = vadd.f32 %v1127, %v1167
        %1169 = vmatmul.f32.gmra.mxu0 %v1142
        %v1170 = vpop.f32.mrf.mxu0
        %v1171 = vadd.f32 %v1130, %v1170
        %1172 = vmatmul.f32.gmra.mxu0 %v1145
        %v1173 = vpop.f32.mrf.mxu0
        %v1174 = vadd.f32 %v1133, %v1173
        %1175 = vmatmul.f32.gmra.mxu0 %v1148
        %v1176 = vpop.f32.mrf.mxu0
        %v1177 = vadd.f32 %v1136, %v1176
        %1178 = vdwg.mxu0
        %v1179 = vld [vmem:[%s1083 + $0x2] sm:$0xff]
        %v1180 = vld [vmem:[%s1083 + $0xa] sm:$0xff]
        %v1181 = vld [vmem:[%s1083 + $0x12] sm:$0xff]
        %v1182 = vld [vmem:[%s1083 + $0x1a] sm:$0xff]
        %s1183 = scalar_lea.vmem %s3, 32
        %v1184 = vld [vmem:[%s1183] sm:$0xff]
        %v1185 = vld [vmem:[%s1183 + $0x8] sm:$0xff]
        %v1187 = vsel %vm439, %v1179, 0
        %v1190 = vsel %vm439, %v1180, 0
        %v1193 = vsel %vm439, %v1181, 0
        %v1196 = vsel %vm439, %v1182, 0
        %1198 = vmatpush.msra.mxu0 0.0
        %1199 = vmatpush.msra.mxu0 0.0
        %1200 = vmatpush.msra.mxu0 0.0
        %1201 = vmatpush.msra.mxu0 0.0
        %1202 = vmatpush.msra.mxu0 0.0
        %1203 = vmatpush.msra.mxu0 0.0
        %1204 = vmatpush.msra.mxu0 0.0
        %1205 = vmatpush.msra.mxu0 0.0
        %1206 = vmatpush.msra.mxu0 0.0
        %1207 = vmatpush.msra.mxu0 0.0
        %1208 = vmatpush.msra.mxu0 0.0
        %1209 = vmatpush.msra.mxu0 0.0
        %1210 = vmatpush.msra.mxu0 0.0
        %1211 = vmatpush.msra.mxu0 0.0
        %1212 = vmatpush.msra.mxu0 %v1185
        %1213 = vmatpush.msra.mxu0 %v1184
        %1214 = vmatmul.f32.gmra.mxu0 %v1187
        %v1215 = vpop.f32.mrf.mxu0
        %v1216 = vadd.f32 0.0, %v1215
        %1217 = vmatmul.f32.gmra.mxu0 %v1190
        %v1218 = vpop.f32.mrf.mxu0
        %v1219 = vadd.f32 0.0, %v1218
        %1220 = vmatmul.f32.gmra.mxu0 %v1193
        %v1221 = vpop.f32.mrf.mxu0
        %v1222 = vadd.f32 0.0, %v1221
        %1223 = vmatmul.f32.gmra.mxu0 %v1196
        %v1224 = vpop.f32.mrf.mxu0
        %v1225 = vadd.f32 0.0, %v1224
        %1226 = vdwg.mxu0
        %v1227 = vadd.f32 %v1168, %v1216
        %v1228 = vadd.f32 %v1171, %v1219
        %v1229 = vadd.f32 %v1174, %v1222
        %v1230 = vadd.f32 %v1177, %v1225
        %s1231 = sadd.s32 %s1077, 1
        %s1232 = smul.u32 %s1231, 40
        %s1233 = scalar_lea.vmem [#allocation2], %s1232
        %v1234 = vld [vmem:[%s1233] sm:$0xff]
        %v1235 = vld [vmem:[%s1233 + $0x8] sm:$0xff]
        %v1236 = vld [vmem:[%s1233 + $0x10] sm:$0xff]
        %v1237 = vld [vmem:[%s1233 + $0x18] sm:$0xff]
        %s1238 = scalar_lea.vmem %s3, 48
        %v1239 = vld [vmem:[%s1238] sm:$0xff]
        %v1240 = vld [vmem:[%s1238 + $0x8] sm:$0xff]
        %v1242 = vsel %vm439, %v1234, 0
        %v1245 = vsel %vm439, %v1235, 0
        %v1248 = vsel %vm439, %v1236, 0
        %v1251 = vsel %vm439, %v1237, 0
        %1253 = vmatpush.msra.mxu0 0.0
        %1254 = vmatpush.msra.mxu0 0.0
        %1255 = vmatpush.msra.mxu0 0.0
        %1256 = vmatpush.msra.mxu0 0.0
        %1257 = vmatpush.msra.mxu0 0.0
        %1258 = vmatpush.msra.mxu0 0.0
        %1259 = vmatpush.msra.mxu0 0.0
        %1260 = vmatpush.msra.mxu0 0.0
        %1261 = vmatpush.msra.mxu0 0.0
        %1262 = vmatpush.msra.mxu0 0.0
        %1263 = vmatpush.msra.mxu0 0.0
        %1264 = vmatpush.msra.mxu0 0.0
        %1265 = vmatpush.msra.mxu0 0.0
        %1266 = vmatpush.msra.mxu0 0.0
        %1267 = vmatpush.msra.mxu0 %v1240
        %1268 = vmatpush.msra.mxu0 %v1239
        %1269 = vmatmul.f32.gmra.mxu0 %v1242
        %v1270 = vpop.f32.mrf.mxu0
        %v1271 = vadd.f32 0.0, %v1270
        %1272 = vmatmul.f32.gmra.mxu0 %v1245
        %v1273 = vpop.f32.mrf.mxu0
        %v1274 = vadd.f32 0.0, %v1273
        %1275 = vmatmul.f32.gmra.mxu0 %v1248
        %v1276 = vpop.f32.mrf.mxu0
        %v1277 = vadd.f32 0.0, %v1276
        %1278 = vmatmul.f32.gmra.mxu0 %v1251
        %v1279 = vpop.f32.mrf.mxu0
        %v1280 = vadd.f32 0.0, %v1279
        %1281 = vdwg.mxu0
        %v1282 = vadd.f32 %v1227, %v1271
        %v1283 = vadd.f32 %v1228, %v1274
        %v1284 = vadd.f32 %v1229, %v1277
        %v1285 = vadd.f32 %v1230, %v1280
        %v1286 = vld [vmem:[%s1233 + $0x1] sm:$0xff]
        %v1287 = vld [vmem:[%s1233 + $0x9] sm:$0xff]
        %v1288 = vld [vmem:[%s1233 + $0x11] sm:$0xff]
        %v1289 = vld [vmem:[%s1233 + $0x19] sm:$0xff]
        %s1290 = scalar_lea.vmem %s3, 64
        %v1291 = vld [vmem:[%s1290] sm:$0xff]
        %v1292 = vld [vmem:[%s1290 + $0x8] sm:$0xff]
        %v1294 = vsel %vm439, %v1286, 0
        %v1297 = vsel %vm439, %v1287, 0
        %v1300 = vsel %vm439, %v1288, 0
        %v1303 = vsel %vm439, %v1289, 0
        %1305 = vmatpush.msra.mxu0 0.0
        %1306 = vmatpush.msra.mxu0 0.0
        %1307 = vmatpush.msra.mxu0 0.0
        %1308 = vmatpush.msra.mxu0 0.0
        %1309 = vmatpush.msra.mxu0 0.0
        %1310 = vmatpush.msra.mxu0 0.0
        %1311 = vmatpush.msra.mxu0 0.0
        %1312 = vmatpush.msra.mxu0 0.0
        %1313 = vmatpush.msra.mxu0 0.0
        %1314 = vmatpush.msra.mxu0 0.0
        %1315 = vmatpush.msra.mxu0 0.0
        %1316 = vmatpush.msra.mxu0 0.0
        %1317 = vmatpush.msra.mxu0 0.0
        %1318 = vmatpush.msra.mxu0 0.0
        %1319 = vmatpush.msra.mxu0 %v1292
        %1320 = vmatpush.msra.mxu0 %v1291
        %1321 = vmatmul.f32.gmra.mxu0 %v1294
        %v1322 = vpop.f32.mrf.mxu0
        %v1323 = vadd.f32 0.0, %v1322
        %1324 = vmatmul.f32.gmra.mxu0 %v1297
        %v1325 = vpop.f32.mrf.mxu0
        %v1326 = vadd.f32 0.0, %v1325
        %1327 = vmatmul.f32.gmra.mxu0 %v1300
        %v1328 = vpop.f32.mrf.mxu0
        %v1329 = vadd.f32 0.0, %v1328
        %1330 = vmatmul.f32.gmra.mxu0 %v1303
        %v1331 = vpop.f32.mrf.mxu0
        %v1332 = vadd.f32 0.0, %v1331
        %1333 = vdwg.mxu0
        %v1334 = vadd.f32 %v1282, %v1323
        %v1335 = vadd.f32 %v1283, %v1326
        %v1336 = vadd.f32 %v1284, %v1329
        %v1337 = vadd.f32 %v1285, %v1332
        %v1338 = vld [vmem:[%s1233 + $0x2] sm:$0xff]
        %v1339 = vld [vmem:[%s1233 + $0xa] sm:$0xff]
        %v1340 = vld [vmem:[%s1233 + $0x12] sm:$0xff]
        %v1341 = vld [vmem:[%s1233 + $0x1a] sm:$0xff]
        %s1342 = scalar_lea.vmem %s3, 80
        %v1343 = vld [vmem:[%s1342] sm:$0xff]
        %v1344 = vld [vmem:[%s1342 + $0x8] sm:$0xff]
        %v1346 = vsel %vm439, %v1338, 0
        %v1349 = vsel %vm439, %v1339, 0
        %v1352 = vsel %vm439, %v1340, 0
        %v1355 = vsel %vm439, %v1341, 0
        %1357 = vmatpush.msra.mxu0 0.0
        %1358 = vmatpush.msra.mxu0 0.0
        %1359 = vmatpush.msra.mxu0 0.0
        %1360 = vmatpush.msra.mxu0 0.0
        %1361 = vmatpush.msra.mxu0 0.0
        %1362 = vmatpush.msra.mxu0 0.0
        %1363 = vmatpush.msra.mxu0 0.0
        %1364 = vmatpush.msra.mxu0 0.0
        %1365 = vmatpush.msra.mxu0 0.0
        %1366 = vmatpush.msra.mxu0 0.0
        %1367 = vmatpush.msra.mxu0 0.0
        %1368 = vmatpush.msra.mxu0 0.0
        %1369 = vmatpush.msra.mxu0 0.0
        %1370 = vmatpush.msra.mxu0 0.0
        %1371 = vmatpush.msra.mxu0 %v1344
        %1372 = vmatpush.msra.mxu0 %v1343
        %1373 = vmatmul.f32.gmra.mxu0 %v1346
        %v1374 = vpop.f32.mrf.mxu0
        %v1375 = vadd.f32 0.0, %v1374
        %1376 = vmatmul.f32.gmra.mxu0 %v1349
        %v1377 = vpop.f32.mrf.mxu0
        %v1378 = vadd.f32 0.0, %v1377
        %1379 = vmatmul.f32.gmra.mxu0 %v1352
        %v1380 = vpop.f32.mrf.mxu0
        %v1381 = vadd.f32 0.0, %v1380
        %1382 = vmatmul.f32.gmra.mxu0 %v1355
        %v1383 = vpop.f32.mrf.mxu0
        %v1384 = vadd.f32 0.0, %v1383
        %1385 = vdwg.mxu0
        %v1386 = vadd.f32 %v1334, %v1375
        %v1387 = vadd.f32 %v1335, %v1378
        %v1388 = vadd.f32 %v1336, %v1381
        %v1389 = vadd.f32 %v1337, %v1384
        %s1390 = sadd.s32 %s1077, 2
        %s1391 = smul.u32 %s1390, 40
        %s1392 = scalar_lea.vmem [#allocation2], %s1391
        %v1393 = vld [vmem:[%s1392] sm:$0xff]
        %v1394 = vld [vmem:[%s1392 + $0x8] sm:$0xff]
        %v1395 = vld [vmem:[%s1392 + $0x10] sm:$0xff]
        %v1396 = vld [vmem:[%s1392 + $0x18] sm:$0xff]
        %s1397 = scalar_lea.vmem %s3, 96
        %v1398 = vld [vmem:[%s1397] sm:$0xff]
        %v1399 = vld [vmem:[%s1397 + $0x8] sm:$0xff]
        %v1401 = vsel %vm439, %v1393, 0
        %v1404 = vsel %vm439, %v1394, 0
        %v1407 = vsel %vm439, %v1395, 0
        %v1410 = vsel %vm439, %v1396, 0
        %1412 = vmatpush.msra.mxu0 0.0
        %1413 = vmatpush.msra.mxu0 0.0
        %1414 = vmatpush.msra.mxu0 0.0
        %1415 = vmatpush.msra.mxu0 0.0
        %1416 = vmatpush.msra.mxu0 0.0
        %1417 = vmatpush.msra.mxu0 0.0
        %1418 = vmatpush.msra.mxu0 0.0
        %1419 = vmatpush.msra.mxu0 0.0
        %1420 = vmatpush.msra.mxu0 0.0
        %1421 = vmatpush.msra.mxu0 0.0
        %1422 = vmatpush.msra.mxu0 0.0
        %1423 = vmatpush.msra.mxu0 0.0
        %1424 = vmatpush.msra.mxu0 0.0
        %1425 = vmatpush.msra.mxu0 0.0
        %1426 = vmatpush.msra.mxu0 %v1399
        %1427 = vmatpush.msra.mxu0 %v1398
        %1428 = vmatmul.f32.gmra.mxu0 %v1401
        %v1429 = vpop.f32.mrf.mxu0
        %v1430 = vadd.f32 0.0, %v1429
        %1431 = vmatmul.f32.gmra.mxu0 %v1404
        %v1432 = vpop.f32.mrf.mxu0
        %v1433 = vadd.f32 0.0, %v1432
        %1434 = vmatmul.f32.gmra.mxu0 %v1407
        %v1435 = vpop.f32.mrf.mxu0
        %v1436 = vadd.f32 0.0, %v1435
        %1437 = vmatmul.f32.gmra.mxu0 %v1410
        %v1438 = vpop.f32.mrf.mxu0
        %v1439 = vadd.f32 0.0, %v1438
        %1440 = vdwg.mxu0
        %v1441 = vadd.f32 %v1386, %v1430
        %v1442 = vadd.f32 %v1387, %v1433
        %v1443 = vadd.f32 %v1388, %v1436
        %v1444 = vadd.f32 %v1389, %v1439
        %v1445 = vld [vmem:[%s1392 + $0x1] sm:$0xff]
        %v1446 = vld [vmem:[%s1392 + $0x9] sm:$0xff]
        %v1447 = vld [vmem:[%s1392 + $0x11] sm:$0xff]
        %v1448 = vld [vmem:[%s1392 + $0x19] sm:$0xff]
        %s1449 = scalar_lea.vmem %s3, 112
        %v1450 = vld [vmem:[%s1449] sm:$0xff]
        %v1451 = vld [vmem:[%s1449 + $0x8] sm:$0xff]
        %v1453 = vsel %vm439, %v1445, 0
        %v1456 = vsel %vm439, %v1446, 0
        %v1459 = vsel %vm439, %v1447, 0
        %v1462 = vsel %vm439, %v1448, 0
        %1464 = vmatpush.msra.mxu0 0.0
        %1465 = vmatpush.msra.mxu0 0.0
        %1466 = vmatpush.msra.mxu0 0.0
        %1467 = vmatpush.msra.mxu0 0.0
        %1468 = vmatpush.msra.mxu0 0.0
        %1469 = vmatpush.msra.mxu0 0.0
        %1470 = vmatpush.msra.mxu0 0.0
        %1471 = vmatpush.msra.mxu0 0.0
        %1472 = vmatpush.msra.mxu0 0.0
        %1473 = vmatpush.msra.mxu0 0.0
        %1474 = vmatpush.msra.mxu0 0.0
        %1475 = vmatpush.msra.mxu0 0.0
        %1476 = vmatpush.msra.mxu0 0.0
        %1477 = vmatpush.msra.mxu0 0.0
        %1478 = vmatpush.msra.mxu0 %v1451
        %1479 = vmatpush.msra.mxu0 %v1450
        %1480 = vmatmul.f32.gmra.mxu0 %v1453
        %v1481 = vpop.f32.mrf.mxu0
        %v1482 = vadd.f32 0.0, %v1481
        %1483 = vmatmul.f32.gmra.mxu0 %v1456
        %v1484 = vpop.f32.mrf.mxu0
        %v1485 = vadd.f32 0.0, %v1484
        %1486 = vmatmul.f32.gmra.mxu0 %v1459
        %v1487 = vpop.f32.mrf.mxu0
        %v1488 = vadd.f32 0.0, %v1487
        %1489 = vmatmul.f32.gmra.mxu0 %v1462
        %v1490 = vpop.f32.mrf.mxu0
        %v1491 = vadd.f32 0.0, %v1490
        %1492 = vdwg.mxu0
        %v1493 = vadd.f32 %v1441, %v1482
        %v1494 = vadd.f32 %v1442, %v1485
        %v1495 = vadd.f32 %v1443, %v1488
        %v1496 = vadd.f32 %v1444, %v1491
        %v1497 = vld [vmem:[%s1392 + $0x2] sm:$0xff]
        %v1498 = vld [vmem:[%s1392 + $0xa] sm:$0xff]
        %v1499 = vld [vmem:[%s1392 + $0x12] sm:$0xff]
        %v1500 = vld [vmem:[%s1392 + $0x1a] sm:$0xff]
        %s1501 = scalar_lea.vmem %s3, 128
        %v1502 = vld [vmem:[%s1501] sm:$0xff]
        %v1503 = vld [vmem:[%s1501 + $0x8] sm:$0xff]
        %v1505 = vsel %vm439, %v1497, 0
        %v1508 = vsel %vm439, %v1498, 0
        %v1511 = vsel %vm439, %v1499, 0
        %v1514 = vsel %vm439, %v1500, 0
        %1516 = vmatpush.msra.mxu0 0.0
        %1517 = vmatpush.msra.mxu0 0.0
        %1518 = vmatpush.msra.mxu0 0.0
        %1519 = vmatpush.msra.mxu0 0.0
        %1520 = vmatpush.msra.mxu0 0.0
        %1521 = vmatpush.msra.mxu0 0.0
        %1522 = vmatpush.msra.mxu0 0.0
        %1523 = vmatpush.msra.mxu0 0.0
        %1524 = vmatpush.msra.mxu0 0.0
        %1525 = vmatpush.msra.mxu0 0.0
        %1526 = vmatpush.msra.mxu0 0.0
        %1527 = vmatpush.msra.mxu0 0.0
        %1528 = vmatpush.msra.mxu0 0.0
        %1529 = vmatpush.msra.mxu0 0.0
        %1530 = vmatpush.msra.mxu0 %v1503
        %1531 = vmatpush.msra.mxu0 %v1502
        %1532 = vmatmul.f32.gmra.mxu0 %v1505
        %v1533 = vpop.f32.mrf.mxu0
        %v1534 = vadd.f32 0.0, %v1533
        %1535 = vmatmul.f32.gmra.mxu0 %v1508
        %v1536 = vpop.f32.mrf.mxu0
        %v1537 = vadd.f32 0.0, %v1536
        %1538 = vmatmul.f32.gmra.mxu0 %v1511
        %v1539 = vpop.f32.mrf.mxu0
        %v1540 = vadd.f32 0.0, %v1539
        %1541 = vmatmul.f32.gmra.mxu0 %v1514
        %v1542 = vpop.f32.mrf.mxu0
        %v1543 = vadd.f32 0.0, %v1542
        %1544 = vdwg.mxu0
        %v1545 = vadd.f32 %v1493, %v1534
        %v1546 = vadd.f32 %v1494, %v1537
        %v1547 = vadd.f32 %v1495, %v1540
        %v1548 = vadd.f32 %v1496, %v1543
        %v1549 = vld [vmem:[%s4] sm:$0x1]
        %v1551 = vperm.slane %v1549, 0
        %v1553 = vadd.f32 %v1545, %v1551
        %v1554 = vadd.f32 %v1546, %v1551
        %v1555 = vadd.f32 %v1547, %v1551
        %v1556 = vadd.f32 %v1548, %v1551
        %vm1557 = vcmp.gt.f32.partialorder %v1553, 0.0
        %vm1558 = vcmp.gt.f32.partialorder %v1554, 0.0
        %vm1559 = vcmp.gt.f32.partialorder %v1555, 0.0
        %vm1560 = vcmp.gt.f32.partialorder %v1556, 0.0
        %v1561 = vmul.f32 %v1553, 0.2
        %v1562 = vmul.f32 %v1554, 0.2
        %v1563 = vmul.f32 %v1555, 0.2
        %v1564 = vmul.f32 %v1556, 0.2
        %v1565 = vsel %vm1557, %v1553, %v1561
        %v1566 = vsel %vm1558, %v1554, %v1562
        %v1567 = vsel %vm1559, %v1555, %v1563
        %v1568 = vsel %vm1560, %v1556, %v1564
        %s1569 = smul.u32 %s1077, 32
        %s1570 = scalar_lea.vmem [#allocation3], %s1569
        %vm1571 = vcmask 261120
        %1572 = vst.msk [vmem:[%s1570] sm:$0xff] %vm1571, %v1565
        %1573 = vst.msk [vmem:[%s1570 + $0x8] sm:$0xff] %vm1571, %v1566
        %1574 = vst.msk [vmem:[%s1570 + $0x10] sm:$0xff] %vm1571, %v1567
        %1575 = vst.msk [vmem:[%s1570 + $0x18] sm:$0xff] %vm1571, %v1568
      $region84: #{discriminator_forward.1} parent=71 // loop_footer
        %s1081 = sadd.s32 1, %s1077
      $region85: #{discriminator_forward.1} parent=71 // loop_footer_branch
        %1076 = sbr.rel target = $region81
      $region86: #{discriminator_forward.1} parent=71 // loop_exit
        _
      loop: start=0, step=1, limit=16
      $region87: #{discriminator_forward.1} parent=71 // loop_pre_header
        _
      $region88: #{discriminator_forward.1} parent=71 // loop_header
        %s1577 = sphi 0, %s1581
        %p1578 = scmp.ge.s32.totalorder %s1577, 16
      $region89: #{discriminator_forward.1} parent=71 // loop_header_branch
        %1580 = sbr.rel (%p1578) target = $region93
      $region90: #{discriminator_forward.1} parent=71 // loop_body
        %s1582 = smul.u32 %s1577, 2
        %s1583 = smul.u32 %s1582, 32
        %s1584 = scalar_lea.vmem [#allocation3], %s1583
        %v1585 = vld [vmem:[%s1584] ss:$2 sm:$0xff]
        %s1586 = scalar_lea.vmem %s1584, 16 [#allocation3]
        %v1587 = vld [vmem:[%s1586] ss:$2 sm:$0xff]
        %s1588 = scalar_lea.vmem %s1584, 1 [#allocation3]
        %v1589 = vld [vmem:[%s1588] ss:$2 sm:$0xff]
        %s1590 = scalar_lea.vmem %s1584, 17 [#allocation3]
        %v1591 = vld [vmem:[%s1590] ss:$2 sm:$0xff]
        %v1592 = vmax.f32 %v1585, %v1589
        %v1593 = vmax.f32 %v1587, %v1591
        %s1594 = sadd.s32 %s1582, 1
        %s1595 = smul.u32 %s1594, 32
        %s1596 = scalar_lea.vmem [#allocation3], %s1595
        %v1597 = vld [vmem:[%s1596] ss:$2 sm:$0xff]
        %s1598 = scalar_lea.vmem %s1596, 16 [#allocation3]
        %v1599 = vld [vmem:[%s1598] ss:$2 sm:$0xff]
        %v1600 = vmax.f32 %v1592, %v1597
        %v1601 = vmax.f32 %v1593, %v1599
        %s1602 = scalar_lea.vmem %s1596, 1 [#allocation3]
        %v1603 = vld [vmem:[%s1602] ss:$2 sm:$0xff]
        %s1604 = scalar_lea.vmem %s1596, 17 [#allocation3]
        %v1605 = vld [vmem:[%s1604] ss:$2 sm:$0xff]
        %v1606 = vmax.f32 %v1600, %v1603
        %v1607 = vmax.f32 %v1601, %v1605
        %s1608 = smul.u32 %s1577, 16
        %s1609 = scalar_lea.vmem [#allocation4], %s1608
        %vm1610 = vcmask 261120
        %1611 = vst.msk [vmem:[%s1609] sm:$0xff] %vm1610, %v1606
        %1612 = vst.msk [vmem:[%s1609 + $0x8] sm:$0xff] %vm1610, %v1607
      $region91: #{discriminator_forward.1} parent=71 // loop_footer
        %s1581 = sadd.s32 1, %s1577
      $region92: #{discriminator_forward.1} parent=71 // loop_footer_branch
        %1576 = sbr.rel target = $region88
      $region93: #{discriminator_forward.1} parent=71 // loop_exit
        _
      loop: start=0, step=1, limit=14
      $region94: #{discriminator_forward.1} parent=71 // loop_pre_header
        _
      $region95: #{discriminator_forward.1} parent=71 // loop_header
        %s1614 = sphi 0, %s1618
        %p1615 = scmp.ge.s32.totalorder %s1614, 14
      $region96: #{discriminator_forward.1} parent=71 // loop_header_branch
        %1617 = sbr.rel (%p1615) target = $region100
      $region97: #{discriminator_forward.1} parent=71 // loop_body
        %s1619 = smul.u32 %s1614, 16
        %s1620 = scalar_lea.vmem [#allocation4], %s1619
        %v1621 = vld [vmem:[%s1620] sm:$0xff]
        %v1622 = vld [vmem:[%s1620 + $0x8] sm:$0x3f]
        %v1623 = vld [vmem:[%s5] sm:$0xff]
        %v1624 = vld [vmem:[%s5 + $0x8] sm:$0xff]
        %v1625 = vld [vmem:[%s5 + $0x10] sm:$0xff]
        %v1626 = vld [vmem:[%s5 + $0x18] sm:$0xff]
        %v1627 = vld [vmem:[%s1620 + $0x1] sm:$0xff]
        %v1628 = vld [vmem:[%s1620 + $0x9] sm:$0x3f]
        %s1629 = scalar_lea.vmem %s5, 32
        %v1630 = vld [vmem:[%s1629] sm:$0xff]
        %v1631 = vld [vmem:[%s1629 + $0x8] sm:$0xff]
        %v1632 = vld [vmem:[%s1629 + $0x10] sm:$0xff]
        %v1633 = vld [vmem:[%s1629 + $0x18] sm:$0xff]
        %vm1634 = vcmask 261120
        %v1636 = vsel %vm1634, %v1627, 0
        %v1639 = vsel %vm1634, %v1628, 0
        %1641 = vmatpush.msra.mxu0 0.0
        %1642 = vmatpush.msra.mxu0 0.0
        %1643 = vmatpush.msra.mxu0 0.0
        %1644 = vmatpush.msra.mxu0 0.0
        %1645 = vmatpush.msra.mxu0 0.0
        %1646 = vmatpush.msra.mxu0 0.0
        %1647 = vmatpush.msra.mxu0 0.0
        %1648 = vmatpush.msra.mxu0 0.0
        %1649 = vmatpush.msra.mxu0 0.0
        %1650 = vmatpush.msra.mxu0 0.0
        %1651 = vmatpush.msra.mxu0 0.0
        %1652 = vmatpush.msra.mxu0 0.0
        %1653 = vmatpush.msra.mxu0 %v1633
        %1654 = vmatpush.msra.mxu0 %v1632
        %1655 = vmatpush.msra.mxu0 %v1631
        %1656 = vmatpush.msra.mxu0 %v1630
        %1657 = vmatmul.f32.gmra.mxu0 %v1636
        %v1658 = vpop.f32.mrf.mxu0
        %v1659 = vadd.f32 0.0, %v1658
        %1660 = vmatmul.f32.gmra.mxu0 %v1639
        %v1661 = vpop.f32.mrf.mxu0
        %v1662 = vadd.f32 0.0, %v1661
        %1663 = vdwg.mxu0
        %v1665 = vsel %vm1634, %v1621, 0
        %v1668 = vsel %vm1634, %v1622, 0
        %1670 = vmatpush.msra.mxu0 0.0
        %1671 = vmatpush.msra.mxu0 0.0
        %1672 = vmatpush.msra.mxu0 0.0
        %1673 = vmatpush.msra.mxu0 0.0
        %1674 = vmatpush.msra.mxu0 0.0
        %1675 = vmatpush.msra.mxu0 0.0
        %1676 = vmatpush.msra.mxu0 0.0
        %1677 = vmatpush.msra.mxu0 0.0
        %1678 = vmatpush.msra.mxu0 0.0
        %1679 = vmatpush.msra.mxu0 0.0
        %1680 = vmatpush.msra.mxu0 0.0
        %1681 = vmatpush.msra.mxu0 0.0
        %1682 = vmatpush.msra.mxu0 %v1626
        %1683 = vmatpush.msra.mxu0 %v1625
        %1684 = vmatpush.msra.mxu0 %v1624
        %1685 = vmatpush.msra.mxu0 %v1623
        %1686 = vmatmul.f32.gmra.mxu0 %v1665
        %v1687 = vpop.f32.mrf.mxu0
        %v1688 = vadd.f32 %v1659, %v1687
        %1689 = vmatmul.f32.gmra.mxu0 %v1668
        %v1690 = vpop.f32.mrf.mxu0
        %v1691 = vadd.f32 %v1662, %v1690
        %1692 = vdwg.mxu0
        %v1693 = vld [vmem:[%s1620 + $0x2] sm:$0xff]
        %v1694 = vld [vmem:[%s1620 + $0xa] sm:$0x3f]
        %s1695 = scalar_lea.vmem %s5, 64
        %v1696 = vld [vmem:[%s1695] sm:$0xff]
        %v1697 = vld [vmem:[%s1695 + $0x8] sm:$0xff]
        %v1698 = vld [vmem:[%s1695 + $0x10] sm:$0xff]
        %v1699 = vld [vmem:[%s1695 + $0x18] sm:$0xff]
        %v1701 = vsel %vm1634, %v1693, 0
        %v1704 = vsel %vm1634, %v1694, 0
        %1706 = vmatpush.msra.mxu0 0.0
        %1707 = vmatpush.msra.mxu0 0.0
        %1708 = vmatpush.msra.mxu0 0.0
        %1709 = vmatpush.msra.mxu0 0.0
        %1710 = vmatpush.msra.mxu0 0.0
        %1711 = vmatpush.msra.mxu0 0.0
        %1712 = vmatpush.msra.mxu0 0.0
        %1713 = vmatpush.msra.mxu0 0.0
        %1714 = vmatpush.msra.mxu0 0.0
        %1715 = vmatpush.msra.mxu0 0.0
        %1716 = vmatpush.msra.mxu0 0.0
        %1717 = vmatpush.msra.mxu0 0.0
        %1718 = vmatpush.msra.mxu0 %v1699
        %1719 = vmatpush.msra.mxu0 %v1698
        %1720 = vmatpush.msra.mxu0 %v1697
        %1721 = vmatpush.msra.mxu0 %v1696
        %1722 = vmatmul.f32.gmra.mxu0 %v1701
        %v1723 = vpop.f32.mrf.mxu0
        %v1724 = vadd.f32 0.0, %v1723
        %1725 = vmatmul.f32.gmra.mxu0 %v1704
        %v1726 = vpop.f32.mrf.mxu0
        %v1727 = vadd.f32 0.0, %v1726
        %1728 = vdwg.mxu0
        %v1729 = vadd.f32 %v1688, %v1724
        %v1730 = vadd.f32 %v1691, %v1727
        %s1731 = sadd.s32 %s1614, 1
        %s1732 = smul.u32 %s1731, 16
        %s1733 = scalar_lea.vmem [#allocation4], %s1732
        %v1734 = vld [vmem:[%s1733] sm:$0xff]
        %v1735 = vld [vmem:[%s1733 + $0x8] sm:$0x3f]
        %s1736 = scalar_lea.vmem %s5, 96
        %v1737 = vld [vmem:[%s1736] sm:$0xff]
        %v1738 = vld [vmem:[%s1736 + $0x8] sm:$0xff]
        %v1739 = vld [vmem:[%s1736 + $0x10] sm:$0xff]
        %v1740 = vld [vmem:[%s1736 + $0x18] sm:$0xff]
        %v1742 = vsel %vm1634, %v1734, 0
        %v1745 = vsel %vm1634, %v1735, 0
        %1747 = vmatpush.msra.mxu0 0.0
        %1748 = vmatpush.msra.mxu0 0.0
        %1749 = vmatpush.msra.mxu0 0.0
        %1750 = vmatpush.msra.mxu0 0.0
        %1751 = vmatpush.msra.mxu0 0.0
        %1752 = vmatpush.msra.mxu0 0.0
        %1753 = vmatpush.msra.mxu0 0.0
        %1754 = vmatpush.msra.mxu0 0.0
        %1755 = vmatpush.msra.mxu0 0.0
        %1756 = vmatpush.msra.mxu0 0.0
        %1757 = vmatpush.msra.mxu0 0.0
        %1758 = vmatpush.msra.mxu0 0.0
        %1759 = vmatpush.msra.mxu0 %v1740
        %1760 = vmatpush.msra.mxu0 %v1739
        %1761 = vmatpush.msra.mxu0 %v1738
        %1762 = vmatpush.msra.mxu0 %v1737
        %1763 = vmatmul.f32.gmra.mxu0 %v1742
        %v1764 = vpop.f32.mrf.mxu0
        %v1765 = vadd.f32 0.0, %v1764
        %1766 = vmatmul.f32.gmra.mxu0 %v1745
        %v1767 = vpop.f32.mrf.mxu0
        %v1768 = vadd.f32 0.0, %v1767
        %1769 = vdwg.mxu0
        %v1770 = vadd.f32 %v1729, %v1765
        %v1771 = vadd.f32 %v1730, %v1768
        %v1772 = vld [vmem:[%s1733 + $0x1] sm:$0xff]
        %v1773 = vld [vmem:[%s1733 + $0x9] sm:$0x3f]
        %s1774 = scalar_lea.vmem %s5, 128
        %v1775 = vld [vmem:[%s1774] sm:$0xff]
        %v1776 = vld [vmem:[%s1774 + $0x8] sm:$0xff]
        %v1777 = vld [vmem:[%s1774 + $0x10] sm:$0xff]
        %v1778 = vld [vmem:[%s1774 + $0x18] sm:$0xff]
        %v1780 = vsel %vm1634, %v1772, 0
        %v1783 = vsel %vm1634, %v1773, 0
        %1785 = vmatpush.msra.mxu0 0.0
        %1786 = vmatpush.msra.mxu0 0.0
        %1787 = vmatpush.msra.mxu0 0.0
        %1788 = vmatpush.msra.mxu0 0.0
        %1789 = vmatpush.msra.mxu0 0.0
        %1790 = vmatpush.msra.mxu0 0.0
        %1791 = vmatpush.msra.mxu0 0.0
        %1792 = vmatpush.msra.mxu0 0.0
        %1793 = vmatpush.msra.mxu0 0.0
        %1794 = vmatpush.msra.mxu0 0.0
        %1795 = vmatpush.msra.mxu0 0.0
        %1796 = vmatpush.msra.mxu0 0.0
        %1797 = vmatpush.msra.mxu0 %v1778
        %1798 = vmatpush.msra.mxu0 %v1777
        %1799 = vmatpush.msra.mxu0 %v1776
        %1800 = vmatpush.msra.mxu0 %v1775
        %1801 = vmatmul.f32.gmra.mxu0 %v1780
        %v1802 = vpop.f32.mrf.mxu0
        %v1803 = vadd.f32 0.0, %v1802
        %1804 = vmatmul.f32.gmra.mxu0 %v1783
        %v1805 = vpop.f32.mrf.mxu0
        %v1806 = vadd.f32 0.0, %v1805
        %1807 = vdwg.mxu0
        %v1808 = vadd.f32 %v1770, %v1803
        %v1809 = vadd.f32 %v1771, %v1806
        %v1810 = vld [vmem:[%s1733 + $0x2] sm:$0xff]
        %v1811 = vld [vmem:[%s1733 + $0xa] sm:$0x3f]
        %s1812 = scalar_lea.vmem %s5, 160
        %v1813 = vld [vmem:[%s1812] sm:$0xff]
        %v1814 = vld [vmem:[%s1812 + $0x8] sm:$0xff]
        %v1815 = vld [vmem:[%s1812 + $0x10] sm:$0xff]
        %v1816 = vld [vmem:[%s1812 + $0x18] sm:$0xff]
        %v1818 = vsel %vm1634, %v1810, 0
        %v1821 = vsel %vm1634, %v1811, 0
        %1823 = vmatpush.msra.mxu0 0.0
        %1824 = vmatpush.msra.mxu0 0.0
        %1825 = vmatpush.msra.mxu0 0.0
        %1826 = vmatpush.msra.mxu0 0.0
        %1827 = vmatpush.msra.mxu0 0.0
        %1828 = vmatpush.msra.mxu0 0.0
        %1829 = vmatpush.msra.mxu0 0.0
        %1830 = vmatpush.msra.mxu0 0.0
        %1831 = vmatpush.msra.mxu0 0.0
        %1832 = vmatpush.msra.mxu0 0.0
        %1833 = vmatpush.msra.mxu0 0.0
        %1834 = vmatpush.msra.mxu0 0.0
        %1835 = vmatpush.msra.mxu0 %v1816
        %1836 = vmatpush.msra.mxu0 %v1815
        %1837 = vmatpush.msra.mxu0 %v1814
        %1838 = vmatpush.msra.mxu0 %v1813
        %1839 = vmatmul.f32.gmra.mxu0 %v1818
        %v1840 = vpop.f32.mrf.mxu0
        %v1841 = vadd.f32 0.0, %v1840
        %1842 = vmatmul.f32.gmra.mxu0 %v1821
        %v1843 = vpop.f32.mrf.mxu0
        %v1844 = vadd.f32 0.0, %v1843
        %1845 = vdwg.mxu0
        %v1846 = vadd.f32 %v1808, %v1841
        %v1847 = vadd.f32 %v1809, %v1844
        %s1848 = sadd.s32 %s1614, 2
        %s1849 = smul.u32 %s1848, 16
        %s1850 = scalar_lea.vmem [#allocation4], %s1849
        %v1851 = vld [vmem:[%s1850] sm:$0xff]
        %v1852 = vld [vmem:[%s1850 + $0x8] sm:$0x3f]
        %s1853 = scalar_lea.vmem %s5, 192
        %v1854 = vld [vmem:[%s1853] sm:$0xff]
        %v1855 = vld [vmem:[%s1853 + $0x8] sm:$0xff]
        %v1856 = vld [vmem:[%s1853 + $0x10] sm:$0xff]
        %v1857 = vld [vmem:[%s1853 + $0x18] sm:$0xff]
        %v1859 = vsel %vm1634, %v1851, 0
        %v1862 = vsel %vm1634, %v1852, 0
        %1864 = vmatpush.msra.mxu0 0.0
        %1865 = vmatpush.msra.mxu0 0.0
        %1866 = vmatpush.msra.mxu0 0.0
        %1867 = vmatpush.msra.mxu0 0.0
        %1868 = vmatpush.msra.mxu0 0.0
        %1869 = vmatpush.msra.mxu0 0.0
        %1870 = vmatpush.msra.mxu0 0.0
        %1871 = vmatpush.msra.mxu0 0.0
        %1872 = vmatpush.msra.mxu0 0.0
        %1873 = vmatpush.msra.mxu0 0.0
        %1874 = vmatpush.msra.mxu0 0.0
        %1875 = vmatpush.msra.mxu0 0.0
        %1876 = vmatpush.msra.mxu0 %v1857
        %1877 = vmatpush.msra.mxu0 %v1856
        %1878 = vmatpush.msra.mxu0 %v1855
        %1879 = vmatpush.msra.mxu0 %v1854
        %1880 = vmatmul.f32.gmra.mxu0 %v1859
        %v1881 = vpop.f32.mrf.mxu0
        %v1882 = vadd.f32 0.0, %v1881
        %1883 = vmatmul.f32.gmra.mxu0 %v1862
        %v1884 = vpop.f32.mrf.mxu0
        %v1885 = vadd.f32 0.0, %v1884
        %1886 = vdwg.mxu0
        %v1887 = vadd.f32 %v1846, %v1882
        %v1888 = vadd.f32 %v1847, %v1885
        %v1889 = vld [vmem:[%s1850 + $0x1] sm:$0xff]
        %v1890 = vld [vmem:[%s1850 + $0x9] sm:$0x3f]
        %s1891 = scalar_lea.vmem %s5, 224
        %v1892 = vld [vmem:[%s1891] sm:$0xff]
        %v1893 = vld [vmem:[%s1891 + $0x8] sm:$0xff]
        %v1894 = vld [vmem:[%s1891 + $0x10] sm:$0xff]
        %v1895 = vld [vmem:[%s1891 + $0x18] sm:$0xff]
        %v1897 = vsel %vm1634, %v1889, 0
        %v1900 = vsel %vm1634, %v1890, 0
        %1902 = vmatpush.msra.mxu0 0.0
        %1903 = vmatpush.msra.mxu0 0.0
        %1904 = vmatpush.msra.mxu0 0.0
        %1905 = vmatpush.msra.mxu0 0.0
        %1906 = vmatpush.msra.mxu0 0.0
        %1907 = vmatpush.msra.mxu0 0.0
        %1908 = vmatpush.msra.mxu0 0.0
        %1909 = vmatpush.msra.mxu0 0.0
        %1910 = vmatpush.msra.mxu0 0.0
        %1911 = vmatpush.msra.mxu0 0.0
        %1912 = vmatpush.msra.mxu0 0.0
        %1913 = vmatpush.msra.mxu0 0.0
        %1914 = vmatpush.msra.mxu0 %v1895
        %1915 = vmatpush.msra.mxu0 %v1894
        %1916 = vmatpush.msra.mxu0 %v1893
        %1917 = vmatpush.msra.mxu0 %v1892
        %1918 = vmatmul.f32.gmra.mxu0 %v1897
        %v1919 = vpop.f32.mrf.mxu0
        %v1920 = vadd.f32 0.0, %v1919
        %1921 = vmatmul.f32.gmra.mxu0 %v1900
        %v1922 = vpop.f32.mrf.mxu0
        %v1923 = vadd.f32 0.0, %v1922
        %1924 = vdwg.mxu0
        %v1925 = vadd.f32 %v1887, %v1920
        %v1926 = vadd.f32 %v1888, %v1923
        %v1927 = vld [vmem:[%s1850 + $0x2] sm:$0xff]
        %v1928 = vld [vmem:[%s1850 + $0xa] sm:$0x3f]
        %s1929 = scalar_lea.vmem %s5, 256
        %v1930 = vld [vmem:[%s1929] sm:$0xff]
        %v1931 = vld [vmem:[%s1929 + $0x8] sm:$0xff]
        %v1932 = vld [vmem:[%s1929 + $0x10] sm:$0xff]
        %v1933 = vld [vmem:[%s1929 + $0x18] sm:$0xff]
        %v1935 = vsel %vm1634, %v1927, 0
        %v1938 = vsel %vm1634, %v1928, 0
        %1940 = vmatpush.msra.mxu0 0.0
        %1941 = vmatpush.msra.mxu0 0.0
        %1942 = vmatpush.msra.mxu0 0.0
        %1943 = vmatpush.msra.mxu0 0.0
        %1944 = vmatpush.msra.mxu0 0.0
        %1945 = vmatpush.msra.mxu0 0.0
        %1946 = vmatpush.msra.mxu0 0.0
        %1947 = vmatpush.msra.mxu0 0.0
        %1948 = vmatpush.msra.mxu0 0.0
        %1949 = vmatpush.msra.mxu0 0.0
        %1950 = vmatpush.msra.mxu0 0.0
        %1951 = vmatpush.msra.mxu0 0.0
        %1952 = vmatpush.msra.mxu0 %v1933
        %1953 = vmatpush.msra.mxu0 %v1932
        %1954 = vmatpush.msra.mxu0 %v1931
        %1955 = vmatpush.msra.mxu0 %v1930
        %1956 = vmatmul.f32.gmra.mxu0 %v1935
        %v1957 = vpop.f32.mrf.mxu0
        %v1958 = vadd.f32 0.0, %v1957
        %1959 = vmatmul.f32.gmra.mxu0 %v1938
        %v1960 = vpop.f32.mrf.mxu0
        %v1961 = vadd.f32 0.0, %v1960
        %1962 = vdwg.mxu0
        %v1963 = vadd.f32 %v1925, %v1958
        %v1964 = vadd.f32 %v1926, %v1961
        %v1965 = vld [vmem:[%s6] sm:$0x1]
        %v1967 = vperm.slane %v1965, 0
        %v1969 = vadd.f32 %v1963, %v1967
        %v1970 = vadd.f32 %v1964, %v1967
        %vm1971 = vcmp.gt.f32.partialorder %v1969, 0.0
        %vm1972 = vcmp.gt.f32.partialorder %v1970, 0.0
        %v1973 = vmul.f32 %v1969, 0.2
        %v1974 = vmul.f32 %v1970, 0.2
        %v1975 = vsel %vm1971, %v1969, %v1973
        %v1976 = vsel %vm1972, %v1970, %v1974
        %s1977 = scalar_lea.vmem [#allocation5], %s1619
        %1978 = vst.msk [vmem:[%s1977] sm:$0xff] %vm1634, %v1975
        %vm1979 = vcmask 259072
        %1980 = vst.msk [vmem:[%s1977 + $0x8] sm:$0x3f] %vm1979, %v1976
      $region98: #{discriminator_forward.1} parent=71 // loop_footer
        %s1618 = sadd.s32 1, %s1614
      $region99: #{discriminator_forward.1} parent=71 // loop_footer_branch
        %1613 = sbr.rel target = $region95
      $region100: #{discriminator_forward.1} parent=71 // loop_exit
        _
      loop: start=0, step=1, limit=10
      $region101: #{discriminator_forward.1} parent=71 // loop_pre_header
        _
      $region102: #{discriminator_forward.1} parent=71 // loop_header
        %s1982 = sphi 0, %s1986
        %p1983 = scmp.ge.s32.totalorder %s1982, 10
      $region103: #{discriminator_forward.1} parent=71 // loop_header_branch
        %1985 = sbr.rel (%p1983) target = $region107
      $region104: #{discriminator_forward.1} parent=71 // loop_body
        %s1987 = smul.u32 %s1982, 16
        %s1988 = scalar_lea.vmem [#allocation5], %s1987
        %v1989 = vld [vmem:[%s1988] sm:$0xff]
        %v1990 = vld [vmem:[%s1988 + $0x8] sm:$0x3]
        %v1991 = vld [vmem:[%s7] sm:$0xff]
        %v1992 = vld [vmem:[%s7 + $0x8] sm:$0xff]
        %v1993 = vld [vmem:[%s7 + $0x10] sm:$0xff]
        %v1994 = vld [vmem:[%s7 + $0x18] sm:$0xff]
        %v1995 = vld [vmem:[%s1988 + $0x1] sm:$0xff]
        %v1996 = vld [vmem:[%s1988 + $0x9] sm:$0x3]
        %s1997 = scalar_lea.vmem %s7, 32
        %v1998 = vld [vmem:[%s1997] sm:$0xff]
        %v1999 = vld [vmem:[%s1997 + $0x8] sm:$0xff]
        %v2000 = vld [vmem:[%s1997 + $0x10] sm:$0xff]
        %v2001 = vld [vmem:[%s1997 + $0x18] sm:$0xff]
        %vm2002 = vcmask 261120
        %v2004 = vsel %vm2002, %v1995, 0
        %v2007 = vsel %vm2002, %v1996, 0
        %2009 = vmatpush.msra.mxu0 0.0
        %2010 = vmatpush.msra.mxu0 0.0
        %2011 = vmatpush.msra.mxu0 0.0
        %2012 = vmatpush.msra.mxu0 0.0
        %2013 = vmatpush.msra.mxu0 0.0
        %2014 = vmatpush.msra.mxu0 0.0
        %2015 = vmatpush.msra.mxu0 0.0
        %2016 = vmatpush.msra.mxu0 0.0
        %2017 = vmatpush.msra.mxu0 0.0
        %2018 = vmatpush.msra.mxu0 0.0
        %2019 = vmatpush.msra.mxu0 0.0
        %2020 = vmatpush.msra.mxu0 0.0
        %2021 = vmatpush.msra.mxu0 %v2001
        %2022 = vmatpush.msra.mxu0 %v2000
        %2023 = vmatpush.msra.mxu0 %v1999
        %2024 = vmatpush.msra.mxu0 %v1998
        %2025 = vmatmul.f32.gmra.mxu0 %v2004
        %v2026 = vpop.f32.mrf.mxu0
        %v2027 = vadd.f32 0.0, %v2026
        %2028 = vmatmul.f32.gmra.mxu0 %v2007
        %v2029 = vpop.f32.mrf.mxu0
        %v2030 = vadd.f32 0.0, %v2029
        %2031 = vdwg.mxu0
        %v2033 = vsel %vm2002, %v1989, 0
        %v2036 = vsel %vm2002, %v1990, 0
        %2038 = vmatpush.msra.mxu0 0.0
        %2039 = vmatpush.msra.mxu0 0.0
        %2040 = vmatpush.msra.mxu0 0.0
        %2041 = vmatpush.msra.mxu0 0.0
        %2042 = vmatpush.msra.mxu0 0.0
        %2043 = vmatpush.msra.mxu0 0.0
        %2044 = vmatpush.msra.mxu0 0.0
        %2045 = vmatpush.msra.mxu0 0.0
        %2046 = vmatpush.msra.mxu0 0.0
        %2047 = vmatpush.msra.mxu0 0.0
        %2048 = vmatpush.msra.mxu0 0.0
        %2049 = vmatpush.msra.mxu0 0.0
        %2050 = vmatpush.msra.mxu0 %v1994
        %2051 = vmatpush.msra.mxu0 %v1993
        %2052 = vmatpush.msra.mxu0 %v1992
        %2053 = vmatpush.msra.mxu0 %v1991
        %2054 = vmatmul.f32.gmra.mxu0 %v2033
        %v2055 = vpop.f32.mrf.mxu0
        %v2056 = vadd.f32 %v2027, %v2055
        %2057 = vmatmul.f32.gmra.mxu0 %v2036
        %v2058 = vpop.f32.mrf.mxu0
        %v2059 = vadd.f32 %v2030, %v2058
        %2060 = vdwg.mxu0
        %v2061 = vld [vmem:[%s1988 + $0x2] sm:$0xff]
        %v2062 = vld [vmem:[%s1988 + $0xa] sm:$0x3]
        %s2063 = scalar_lea.vmem %s7, 64
        %v2064 = vld [vmem:[%s2063] sm:$0xff]
        %v2065 = vld [vmem:[%s2063 + $0x8] sm:$0xff]
        %v2066 = vld [vmem:[%s2063 + $0x10] sm:$0xff]
        %v2067 = vld [vmem:[%s2063 + $0x18] sm:$0xff]
        %v2069 = vsel %vm2002, %v2061, 0
        %v2072 = vsel %vm2002, %v2062, 0
        %2074 = vmatpush.msra.mxu0 0.0
        %2075 = vmatpush.msra.mxu0 0.0
        %2076 = vmatpush.msra.mxu0 0.0
        %2077 = vmatpush.msra.mxu0 0.0
        %2078 = vmatpush.msra.mxu0 0.0
        %2079 = vmatpush.msra.mxu0 0.0
        %2080 = vmatpush.msra.mxu0 0.0
        %2081 = vmatpush.msra.mxu0 0.0
        %2082 = vmatpush.msra.mxu0 0.0
        %2083 = vmatpush.msra.mxu0 0.0
        %2084 = vmatpush.msra.mxu0 0.0
        %2085 = vmatpush.msra.mxu0 0.0
        %2086 = vmatpush.msra.mxu0 %v2067
        %2087 = vmatpush.msra.mxu0 %v2066
        %2088 = vmatpush.msra.mxu0 %v2065
        %2089 = vmatpush.msra.mxu0 %v2064
        %2090 = vmatmul.f32.gmra.mxu0 %v2069
        %v2091 = vpop.f32.mrf.mxu0
        %v2092 = vadd.f32 0.0, %v2091
        %2093 = vmatmul.f32.gmra.mxu0 %v2072
        %v2094 = vpop.f32.mrf.mxu0
        %v2095 = vadd.f32 0.0, %v2094
        %2096 = vdwg.mxu0
        %v2097 = vadd.f32 %v2056, %v2092
        %v2098 = vadd.f32 %v2059, %v2095
        %v2099 = vld [vmem:[%s1988 + $0x3] sm:$0xff]
        %v2100 = vld [vmem:[%s1988 + $0xb] sm:$0x3]
        %s2101 = scalar_lea.vmem %s7, 96
        %v2102 = vld [vmem:[%s2101] sm:$0xff]
        %v2103 = vld [vmem:[%s2101 + $0x8] sm:$0xff]
        %v2104 = vld [vmem:[%s2101 + $0x10] sm:$0xff]
        %v2105 = vld [vmem:[%s2101 + $0x18] sm:$0xff]
        %v2107 = vsel %vm2002, %v2099, 0
        %v2110 = vsel %vm2002, %v2100, 0
        %2112 = vmatpush.msra.mxu0 0.0
        %2113 = vmatpush.msra.mxu0 0.0
        %2114 = vmatpush.msra.mxu0 0.0
        %2115 = vmatpush.msra.mxu0 0.0
        %2116 = vmatpush.msra.mxu0 0.0
        %2117 = vmatpush.msra.mxu0 0.0
        %2118 = vmatpush.msra.mxu0 0.0
        %2119 = vmatpush.msra.mxu0 0.0
        %2120 = vmatpush.msra.mxu0 0.0
        %2121 = vmatpush.msra.mxu0 0.0
        %2122 = vmatpush.msra.mxu0 0.0
        %2123 = vmatpush.msra.mxu0 0.0
        %2124 = vmatpush.msra.mxu0 %v2105
        %2125 = vmatpush.msra.mxu0 %v2104
        %2126 = vmatpush.msra.mxu0 %v2103
        %2127 = vmatpush.msra.mxu0 %v2102
        %2128 = vmatmul.f32.gmra.mxu0 %v2107
        %v2129 = vpop.f32.mrf.mxu0
        %v2130 = vadd.f32 0.0, %v2129
        %2131 = vmatmul.f32.gmra.mxu0 %v2110
        %v2132 = vpop.f32.mrf.mxu0
        %v2133 = vadd.f32 0.0, %v2132
        %2134 = vdwg.mxu0
        %v2135 = vadd.f32 %v2097, %v2130
        %v2136 = vadd.f32 %v2098, %v2133
        %v2137 = vld [vmem:[%s1988 + $0x4] sm:$0xff]
        %v2138 = vld [vmem:[%s1988 + $0xc] sm:$0x3]
        %s2139 = scalar_lea.vmem %s7, 128
        %v2140 = vld [vmem:[%s2139] sm:$0xff]
        %v2141 = vld [vmem:[%s2139 + $0x8] sm:$0xff]
        %v2142 = vld [vmem:[%s2139 + $0x10] sm:$0xff]
        %v2143 = vld [vmem:[%s2139 + $0x18] sm:$0xff]
        %v2145 = vsel %vm2002, %v2137, 0
        %v2148 = vsel %vm2002, %v2138, 0
        %2150 = vmatpush.msra.mxu0 0.0
        %2151 = vmatpush.msra.mxu0 0.0
        %2152 = vmatpush.msra.mxu0 0.0
        %2153 = vmatpush.msra.mxu0 0.0
        %2154 = vmatpush.msra.mxu0 0.0
        %2155 = vmatpush.msra.mxu0 0.0
        %2156 = vmatpush.msra.mxu0 0.0
        %2157 = vmatpush.msra.mxu0 0.0
        %2158 = vmatpush.msra.mxu0 0.0
        %2159 = vmatpush.msra.mxu0 0.0
        %2160 = vmatpush.msra.mxu0 0.0
        %2161 = vmatpush.msra.mxu0 0.0
        %2162 = vmatpush.msra.mxu0 %v2143
        %2163 = vmatpush.msra.mxu0 %v2142
        %2164 = vmatpush.msra.mxu0 %v2141
        %2165 = vmatpush.msra.mxu0 %v2140
        %2166 = vmatmul.f32.gmra.mxu0 %v2145
        %v2167 = vpop.f32.mrf.mxu0
        %v2168 = vadd.f32 0.0, %v2167
        %2169 = vmatmul.f32.gmra.mxu0 %v2148
        %v2170 = vpop.f32.mrf.mxu0
        %v2171 = vadd.f32 0.0, %v2170
        %2172 = vdwg.mxu0
        %v2173 = vadd.f32 %v2135, %v2168
        %v2174 = vadd.f32 %v2136, %v2171
        %s2175 = sadd.s32 %s1982, 1
        %s2176 = smul.u32 %s2175, 16
        %s2177 = scalar_lea.vmem [#allocation5], %s2176
        %v2178 = vld [vmem:[%s2177] sm:$0xff]
        %v2179 = vld [vmem:[%s2177 + $0x8] sm:$0x3]
        %s2180 = scalar_lea.vmem %s7, 160
        %v2181 = vld [vmem:[%s2180] sm:$0xff]
        %v2182 = vld [vmem:[%s2180 + $0x8] sm:$0xff]
        %v2183 = vld [vmem:[%s2180 + $0x10] sm:$0xff]
        %v2184 = vld [vmem:[%s2180 + $0x18] sm:$0xff]
        %v2186 = vsel %vm2002, %v2178, 0
        %v2189 = vsel %vm2002, %v2179, 0
        %2191 = vmatpush.msra.mxu0 0.0
        %2192 = vmatpush.msra.mxu0 0.0
        %2193 = vmatpush.msra.mxu0 0.0
        %2194 = vmatpush.msra.mxu0 0.0
        %2195 = vmatpush.msra.mxu0 0.0
        %2196 = vmatpush.msra.mxu0 0.0
        %2197 = vmatpush.msra.mxu0 0.0
        %2198 = vmatpush.msra.mxu0 0.0
        %2199 = vmatpush.msra.mxu0 0.0
        %2200 = vmatpush.msra.mxu0 0.0
        %2201 = vmatpush.msra.mxu0 0.0
        %2202 = vmatpush.msra.mxu0 0.0
        %2203 = vmatpush.msra.mxu0 %v2184
        %2204 = vmatpush.msra.mxu0 %v2183
        %2205 = vmatpush.msra.mxu0 %v2182
        %2206 = vmatpush.msra.mxu0 %v2181
        %2207 = vmatmul.f32.gmra.mxu0 %v2186
        %v2208 = vpop.f32.mrf.mxu0
        %v2209 = vadd.f32 0.0, %v2208
        %2210 = vmatmul.f32.gmra.mxu0 %v2189
        %v2211 = vpop.f32.mrf.mxu0
        %v2212 = vadd.f32 0.0, %v2211
        %2213 = vdwg.mxu0
        %v2214 = vadd.f32 %v2173, %v2209
        %v2215 = vadd.f32 %v2174, %v2212
        %v2216 = vld [vmem:[%s2177 + $0x1] sm:$0xff]
        %v2217 = vld [vmem:[%s2177 + $0x9] sm:$0x3]
        %s2218 = scalar_lea.vmem %s7, 192
        %v2219 = vld [vmem:[%s2218] sm:$0xff]
        %v2220 = vld [vmem:[%s2218 + $0x8] sm:$0xff]
        %v2221 = vld [vmem:[%s2218 + $0x10] sm:$0xff]
        %v2222 = vld [vmem:[%s2218 + $0x18] sm:$0xff]
        %v2224 = vsel %vm2002, %v2216, 0
        %v2227 = vsel %vm2002, %v2217, 0
        %2229 = vmatpush.msra.mxu0 0.0
        %2230 = vmatpush.msra.mxu0 0.0
        %2231 = vmatpush.msra.mxu0 0.0
        %2232 = vmatpush.msra.mxu0 0.0
        %2233 = vmatpush.msra.mxu0 0.0
        %2234 = vmatpush.msra.mxu0 0.0
        %2235 = vmatpush.msra.mxu0 0.0
        %2236 = vmatpush.msra.mxu0 0.0
        %2237 = vmatpush.msra.mxu0 0.0
        %2238 = vmatpush.msra.mxu0 0.0
        %2239 = vmatpush.msra.mxu0 0.0
        %2240 = vmatpush.msra.mxu0 0.0
        %2241 = vmatpush.msra.mxu0 %v2222
        %2242 = vmatpush.msra.mxu0 %v2221
        %2243 = vmatpush.msra.mxu0 %v2220
        %2244 = vmatpush.msra.mxu0 %v2219
        %2245 = vmatmul.f32.gmra.mxu0 %v2224
        %v2246 = vpop.f32.mrf.mxu0
        %v2247 = vadd.f32 0.0, %v2246
        %2248 = vmatmul.f32.gmra.mxu0 %v2227
        %v2249 = vpop.f32.mrf.mxu0
        %v2250 = vadd.f32 0.0, %v2249
        %2251 = vdwg.mxu0
        %v2252 = vadd.f32 %v2214, %v2247
        %v2253 = vadd.f32 %v2215, %v2250
        %v2254 = vld [vmem:[%s2177 + $0x2] sm:$0xff]
        %v2255 = vld [vmem:[%s2177 + $0xa] sm:$0x3]
        %s2256 = scalar_lea.vmem %s7, 224
        %v2257 = vld [vmem:[%s2256] sm:$0xff]
        %v2258 = vld [vmem:[%s2256 + $0x8] sm:$0xff]
        %v2259 = vld [vmem:[%s2256 + $0x10] sm:$0xff]
        %v2260 = vld [vmem:[%s2256 + $0x18] sm:$0xff]
        %v2262 = vsel %vm2002, %v2254, 0
        %v2265 = vsel %vm2002, %v2255, 0
        %2267 = vmatpush.msra.mxu0 0.0
        %2268 = vmatpush.msra.mxu0 0.0
        %2269 = vmatpush.msra.mxu0 0.0
        %2270 = vmatpush.msra.mxu0 0.0
        %2271 = vmatpush.msra.mxu0 0.0
        %2272 = vmatpush.msra.mxu0 0.0
        %2273 = vmatpush.msra.mxu0 0.0
        %2274 = vmatpush.msra.mxu0 0.0
        %2275 = vmatpush.msra.mxu0 0.0
        %2276 = vmatpush.msra.mxu0 0.0
        %2277 = vmatpush.msra.mxu0 0.0
        %2278 = vmatpush.msra.mxu0 0.0
        %2279 = vmatpush.msra.mxu0 %v2260
        %2280 = vmatpush.msra.mxu0 %v2259
        %2281 = vmatpush.msra.mxu0 %v2258
        %2282 = vmatpush.msra.mxu0 %v2257
        %2283 = vmatmul.f32.gmra.mxu0 %v2262
        %v2284 = vpop.f32.mrf.mxu0
        %v2285 = vadd.f32 0.0, %v2284
        %2286 = vmatmul.f32.gmra.mxu0 %v2265
        %v2287 = vpop.f32.mrf.mxu0
        %v2288 = vadd.f32 0.0, %v2287
        %2289 = vdwg.mxu0
        %v2290 = vadd.f32 %v2252, %v2285
        %v2291 = vadd.f32 %v2253, %v2288
        %v2292 = vld [vmem:[%s2177 + $0x3] sm:$0xff]
        %v2293 = vld [vmem:[%s2177 + $0xb] sm:$0x3]
        %s2294 = scalar_lea.vmem %s7, 256
        %v2295 = vld [vmem:[%s2294] sm:$0xff]
        %v2296 = vld [vmem:[%s2294 + $0x8] sm:$0xff]
        %v2297 = vld [vmem:[%s2294 + $0x10] sm:$0xff]
        %v2298 = vld [vmem:[%s2294 + $0x18] sm:$0xff]
        %v2300 = vsel %vm2002, %v2292, 0
        %v2303 = vsel %vm2002, %v2293, 0
        %2305 = vmatpush.msra.mxu0 0.0
        %2306 = vmatpush.msra.mxu0 0.0
        %2307 = vmatpush.msra.mxu0 0.0
        %2308 = vmatpush.msra.mxu0 0.0
        %2309 = vmatpush.msra.mxu0 0.0
        %2310 = vmatpush.msra.mxu0 0.0
        %2311 = vmatpush.msra.mxu0 0.0
        %2312 = vmatpush.msra.mxu0 0.0
        %2313 = vmatpush.msra.mxu0 0.0
        %2314 = vmatpush.msra.mxu0 0.0
        %2315 = vmatpush.msra.mxu0 0.0
        %2316 = vmatpush.msra.mxu0 0.0
        %2317 = vmatpush.msra.mxu0 %v2298
        %2318 = vmatpush.msra.mxu0 %v2297
        %2319 = vmatpush.msra.mxu0 %v2296
        %2320 = vmatpush.msra.mxu0 %v2295
        %2321 = vmatmul.f32.gmra.mxu0 %v2300
        %v2322 = vpop.f32.mrf.mxu0
        %v2323 = vadd.f32 0.0, %v2322
        %2324 = vmatmul.f32.gmra.mxu0 %v2303
        %v2325 = vpop.f32.mrf.mxu0
        %v2326 = vadd.f32 0.0, %v2325
        %2327 = vdwg.mxu0
        %v2328 = vadd.f32 %v2290, %v2323
        %v2329 = vadd.f32 %v2291, %v2326
        %v2330 = vld [vmem:[%s2177 + $0x4] sm:$0xff]
        %v2331 = vld [vmem:[%s2177 + $0xc] sm:$0x3]
        %s2332 = scalar_lea.vmem %s7, 288
        %v2333 = vld [vmem:[%s2332] sm:$0xff]
        %v2334 = vld [vmem:[%s2332 + $0x8] sm:$0xff]
        %v2335 = vld [vmem:[%s2332 + $0x10] sm:$0xff]
        %v2336 = vld [vmem:[%s2332 + $0x18] sm:$0xff]
        %v2338 = vsel %vm2002, %v2330, 0
        %v2341 = vsel %vm2002, %v2331, 0
        %2343 = vmatpush.msra.mxu0 0.0
        %2344 = vmatpush.msra.mxu0 0.0
        %2345 = vmatpush.msra.mxu0 0.0
        %2346 = vmatpush.msra.mxu0 0.0
        %2347 = vmatpush.msra.mxu0 0.0
        %2348 = vmatpush.msra.mxu0 0.0
        %2349 = vmatpush.msra.mxu0 0.0
        %2350 = vmatpush.msra.mxu0 0.0
        %2351 = vmatpush.msra.mxu0 0.0
        %2352 = vmatpush.msra.mxu0 0.0
        %2353 = vmatpush.msra.mxu0 0.0
        %2354 = vmatpush.msra.mxu0 0.0
        %2355 = vmatpush.msra.mxu0 %v2336
        %2356 = vmatpush.msra.mxu0 %v2335
        %2357 = vmatpush.msra.mxu0 %v2334
        %2358 = vmatpush.msra.mxu0 %v2333
        %2359 = vmatmul.f32.gmra.mxu0 %v2338
        %v2360 = vpop.f32.mrf.mxu0
        %v2361 = vadd.f32 0.0, %v2360
        %2362 = vmatmul.f32.gmra.mxu0 %v2341
        %v2363 = vpop.f32.mrf.mxu0
        %v2364 = vadd.f32 0.0, %v2363
        %2365 = vdwg.mxu0
        %v2366 = vadd.f32 %v2328, %v2361
        %v2367 = vadd.f32 %v2329, %v2364
        %s2368 = sadd.s32 %s1982, 2
        %s2369 = smul.u32 %s2368, 16
        %s2370 = scalar_lea.vmem [#allocation5], %s2369
        %v2371 = vld [vmem:[%s2370] sm:$0xff]
        %v2372 = vld [vmem:[%s2370 + $0x8] sm:$0x3]
        %s2373 = scalar_lea.vmem %s7, 320
        %v2374 = vld [vmem:[%s2373] sm:$0xff]
        %v2375 = vld [vmem:[%s2373 + $0x8] sm:$0xff]
        %v2376 = vld [vmem:[%s2373 + $0x10] sm:$0xff]
        %v2377 = vld [vmem:[%s2373 + $0x18] sm:$0xff]
        %v2379 = vsel %vm2002, %v2371, 0
        %v2382 = vsel %vm2002, %v2372, 0
        %2384 = vmatpush.msra.mxu0 0.0
        %2385 = vmatpush.msra.mxu0 0.0
        %2386 = vmatpush.msra.mxu0 0.0
        %2387 = vmatpush.msra.mxu0 0.0
        %2388 = vmatpush.msra.mxu0 0.0
        %2389 = vmatpush.msra.mxu0 0.0
        %2390 = vmatpush.msra.mxu0 0.0
        %2391 = vmatpush.msra.mxu0 0.0
        %2392 = vmatpush.msra.mxu0 0.0
        %2393 = vmatpush.msra.mxu0 0.0
        %2394 = vmatpush.msra.mxu0 0.0
        %2395 = vmatpush.msra.mxu0 0.0
        %2396 = vmatpush.msra.mxu0 %v2377
        %2397 = vmatpush.msra.mxu0 %v2376
        %2398 = vmatpush.msra.mxu0 %v2375
        %2399 = vmatpush.msra.mxu0 %v2374
        %2400 = vmatmul.f32.gmra.mxu0 %v2379
        %v2401 = vpop.f32.mrf.mxu0
        %v2402 = vadd.f32 0.0, %v2401
        %2403 = vmatmul.f32.gmra.mxu0 %v2382
        %v2404 = vpop.f32.mrf.mxu0
        %v2405 = vadd.f32 0.0, %v2404
        %2406 = vdwg.mxu0
        %v2407 = vadd.f32 %v2366, %v2402
        %v2408 = vadd.f32 %v2367, %v2405
        %v2409 = vld [vmem:[%s2370 + $0x1] sm:$0xff]
        %v2410 = vld [vmem:[%s2370 + $0x9] sm:$0x3]
        %s2411 = scalar_lea.vmem %s7, 352
        %v2412 = vld [vmem:[%s2411] sm:$0xff]
        %v2413 = vld [vmem:[%s2411 + $0x8] sm:$0xff]
        %v2414 = vld [vmem:[%s2411 + $0x10] sm:$0xff]
        %v2415 = vld [vmem:[%s2411 + $0x18] sm:$0xff]
        %v2417 = vsel %vm2002, %v2409, 0
        %v2420 = vsel %vm2002, %v2410, 0
        %2422 = vmatpush.msra.mxu0 0.0
        %2423 = vmatpush.msra.mxu0 0.0
        %2424 = vmatpush.msra.mxu0 0.0
        %2425 = vmatpush.msra.mxu0 0.0
        %2426 = vmatpush.msra.mxu0 0.0
        %2427 = vmatpush.msra.mxu0 0.0
        %2428 = vmatpush.msra.mxu0 0.0
        %2429 = vmatpush.msra.mxu0 0.0
        %2430 = vmatpush.msra.mxu0 0.0
        %2431 = vmatpush.msra.mxu0 0.0
        %2432 = vmatpush.msra.mxu0 0.0
        %2433 = vmatpush.msra.mxu0 0.0
        %2434 = vmatpush.msra.mxu0 %v2415
        %2435 = vmatpush.msra.mxu0 %v2414
        %2436 = vmatpush.msra.mxu0 %v2413
        %2437 = vmatpush.msra.mxu0 %v2412
        %2438 = vmatmul.f32.gmra.mxu0 %v2417
        %v2439 = vpop.f32.mrf.mxu0
        %v2440 = vadd.f32 0.0, %v2439
        %2441 = vmatmul.f32.gmra.mxu0 %v2420
        %v2442 = vpop.f32.mrf.mxu0
        %v2443 = vadd.f32 0.0, %v2442
        %2444 = vdwg.mxu0
        %v2445 = vadd.f32 %v2407, %v2440
        %v2446 = vadd.f32 %v2408, %v2443
        %v2447 = vld [vmem:[%s2370 + $0x2] sm:$0xff]
        %v2448 = vld [vmem:[%s2370 + $0xa] sm:$0x3]
        %s2449 = scalar_lea.vmem %s7, 384
        %v2450 = vld [vmem:[%s2449] sm:$0xff]
        %v2451 = vld [vmem:[%s2449 + $0x8] sm:$0xff]
        %v2452 = vld [vmem:[%s2449 + $0x10] sm:$0xff]
        %v2453 = vld [vmem:[%s2449 + $0x18] sm:$0xff]
        %v2455 = vsel %vm2002, %v2447, 0
        %v2458 = vsel %vm2002, %v2448, 0
        %2460 = vmatpush.msra.mxu0 0.0
        %2461 = vmatpush.msra.mxu0 0.0
        %2462 = vmatpush.msra.mxu0 0.0
        %2463 = vmatpush.msra.mxu0 0.0
        %2464 = vmatpush.msra.mxu0 0.0
        %2465 = vmatpush.msra.mxu0 0.0
        %2466 = vmatpush.msra.mxu0 0.0
        %2467 = vmatpush.msra.mxu0 0.0
        %2468 = vmatpush.msra.mxu0 0.0
        %2469 = vmatpush.msra.mxu0 0.0
        %2470 = vmatpush.msra.mxu0 0.0
        %2471 = vmatpush.msra.mxu0 0.0
        %2472 = vmatpush.msra.mxu0 %v2453
        %2473 = vmatpush.msra.mxu0 %v2452
        %2474 = vmatpush.msra.mxu0 %v2451
        %2475 = vmatpush.msra.mxu0 %v2450
        %2476 = vmatmul.f32.gmra.mxu0 %v2455
        %v2477 = vpop.f32.mrf.mxu0
        %v2478 = vadd.f32 0.0, %v2477
        %2479 = vmatmul.f32.gmra.mxu0 %v2458
        %v2480 = vpop.f32.mrf.mxu0
        %v2481 = vadd.f32 0.0, %v2480
        %2482 = vdwg.mxu0
        %v2483 = vadd.f32 %v2445, %v2478
        %v2484 = vadd.f32 %v2446, %v2481
        %v2485 = vld [vmem:[%s2370 + $0x3] sm:$0xff]
        %v2486 = vld [vmem:[%s2370 + $0xb] sm:$0x3]
        %s2487 = scalar_lea.vmem %s7, 416
        %v2488 = vld [vmem:[%s2487] sm:$0xff]
        %v2489 = vld [vmem:[%s2487 + $0x8] sm:$0xff]
        %v2490 = vld [vmem:[%s2487 + $0x10] sm:$0xff]
        %v2491 = vld [vmem:[%s2487 + $0x18] sm:$0xff]
        %v2493 = vsel %vm2002, %v2485, 0
        %v2496 = vsel %vm2002, %v2486, 0
        %2498 = vmatpush.msra.mxu0 0.0
        %2499 = vmatpush.msra.mxu0 0.0
        %2500 = vmatpush.msra.mxu0 0.0
        %2501 = vmatpush.msra.mxu0 0.0
        %2502 = vmatpush.msra.mxu0 0.0
        %2503 = vmatpush.msra.mxu0 0.0
        %2504 = vmatpush.msra.mxu0 0.0
        %2505 = vmatpush.msra.mxu0 0.0
        %2506 = vmatpush.msra.mxu0 0.0
        %2507 = vmatpush.msra.mxu0 0.0
        %2508 = vmatpush.msra.mxu0 0.0
        %2509 = vmatpush.msra.mxu0 0.0
        %2510 = vmatpush.msra.mxu0 %v2491
        %2511 = vmatpush.msra.mxu0 %v2490
        %2512 = vmatpush.msra.mxu0 %v2489
        %2513 = vmatpush.msra.mxu0 %v2488
        %2514 = vmatmul.f32.gmra.mxu0 %v2493
        %v2515 = vpop.f32.mrf.mxu0
        %v2516 = vadd.f32 0.0, %v2515
        %2517 = vmatmul.f32.gmra.mxu0 %v2496
        %v2518 = vpop.f32.mrf.mxu0
        %v2519 = vadd.f32 0.0, %v2518
        %2520 = vdwg.mxu0
        %v2521 = vadd.f32 %v2483, %v2516
        %v2522 = vadd.f32 %v2484, %v2519
        %v2523 = vld [vmem:[%s2370 + $0x4] sm:$0xff]
        %v2524 = vld [vmem:[%s2370 + $0xc] sm:$0x3]
        %s2525 = scalar_lea.vmem %s7, 448
        %v2526 = vld [vmem:[%s2525] sm:$0xff]
        %v2527 = vld [vmem:[%s2525 + $0x8] sm:$0xff]
        %v2528 = vld [vmem:[%s2525 + $0x10] sm:$0xff]
        %v2529 = vld [vmem:[%s2525 + $0x18] sm:$0xff]
        %v2531 = vsel %vm2002, %v2523, 0
        %v2534 = vsel %vm2002, %v2524, 0
        %2536 = vmatpush.msra.mxu0 0.0
        %2537 = vmatpush.msra.mxu0 0.0
        %2538 = vmatpush.msra.mxu0 0.0
        %2539 = vmatpush.msra.mxu0 0.0
        %2540 = vmatpush.msra.mxu0 0.0
        %2541 = vmatpush.msra.mxu0 0.0
        %2542 = vmatpush.msra.mxu0 0.0
        %2543 = vmatpush.msra.mxu0 0.0
        %2544 = vmatpush.msra.mxu0 0.0
        %2545 = vmatpush.msra.mxu0 0.0
        %2546 = vmatpush.msra.mxu0 0.0
        %2547 = vmatpush.msra.mxu0 0.0
        %2548 = vmatpush.msra.mxu0 %v2529
        %2549 = vmatpush.msra.mxu0 %v2528
        %2550 = vmatpush.msra.mxu0 %v2527
        %2551 = vmatpush.msra.mxu0 %v2526
        %2552 = vmatmul.f32.gmra.mxu0 %v2531
        %v2553 = vpop.f32.mrf.mxu0
        %v2554 = vadd.f32 0.0, %v2553
        %2555 = vmatmul.f32.gmra.mxu0 %v2534
        %v2556 = vpop.f32.mrf.mxu0
        %v2557 = vadd.f32 0.0, %v2556
        %2558 = vdwg.mxu0
        %v2559 = vadd.f32 %v2521, %v2554
        %v2560 = vadd.f32 %v2522, %v2557
        %s2561 = sadd.s32 %s1982, 3
        %s2562 = smul.u32 %s2561, 16
        %s2563 = scalar_lea.vmem [#allocation5], %s2562
        %v2564 = vld [vmem:[%s2563] sm:$0xff]
        %v2565 = vld [vmem:[%s2563 + $0x8] sm:$0x3]
        %s2566 = scalar_lea.vmem %s7, 480
        %v2567 = vld [vmem:[%s2566] sm:$0xff]
        %v2568 = vld [vmem:[%s2566 + $0x8] sm:$0xff]
        %v2569 = vld [vmem:[%s2566 + $0x10] sm:$0xff]
        %v2570 = vld [vmem:[%s2566 + $0x18] sm:$0xff]
        %v2572 = vsel %vm2002, %v2564, 0
        %v2575 = vsel %vm2002, %v2565, 0
        %2577 = vmatpush.msra.mxu0 0.0
        %2578 = vmatpush.msra.mxu0 0.0
        %2579 = vmatpush.msra.mxu0 0.0
        %2580 = vmatpush.msra.mxu0 0.0
        %2581 = vmatpush.msra.mxu0 0.0
        %2582 = vmatpush.msra.mxu0 0.0
        %2583 = vmatpush.msra.mxu0 0.0
        %2584 = vmatpush.msra.mxu0 0.0
        %2585 = vmatpush.msra.mxu0 0.0
        %2586 = vmatpush.msra.mxu0 0.0
        %2587 = vmatpush.msra.mxu0 0.0
        %2588 = vmatpush.msra.mxu0 0.0
        %2589 = vmatpush.msra.mxu0 %v2570
        %2590 = vmatpush.msra.mxu0 %v2569
        %2591 = vmatpush.msra.mxu0 %v2568
        %2592 = vmatpush.msra.mxu0 %v2567
        %2593 = vmatmul.f32.gmra.mxu0 %v2572
        %v2594 = vpop.f32.mrf.mxu0
        %v2595 = vadd.f32 0.0, %v2594
        %2596 = vmatmul.f32.gmra.mxu0 %v2575
        %v2597 = vpop.f32.mrf.mxu0
        %v2598 = vadd.f32 0.0, %v2597
        %2599 = vdwg.mxu0
        %v2600 = vadd.f32 %v2559, %v2595
        %v2601 = vadd.f32 %v2560, %v2598
        %v2602 = vld [vmem:[%s2563 + $0x1] sm:$0xff]
        %v2603 = vld [vmem:[%s2563 + $0x9] sm:$0x3]
        %s2604 = scalar_lea.vmem %s7, 512
        %v2605 = vld [vmem:[%s2604] sm:$0xff]
        %v2606 = vld [vmem:[%s2604 + $0x8] sm:$0xff]
        %v2607 = vld [vmem:[%s2604 + $0x10] sm:$0xff]
        %v2608 = vld [vmem:[%s2604 + $0x18] sm:$0xff]
        %v2610 = vsel %vm2002, %v2602, 0
        %v2613 = vsel %vm2002, %v2603, 0
        %2615 = vmatpush.msra.mxu0 0.0
        %2616 = vmatpush.msra.mxu0 0.0
        %2617 = vmatpush.msra.mxu0 0.0
        %2618 = vmatpush.msra.mxu0 0.0
        %2619 = vmatpush.msra.mxu0 0.0
        %2620 = vmatpush.msra.mxu0 0.0
        %2621 = vmatpush.msra.mxu0 0.0
        %2622 = vmatpush.msra.mxu0 0.0
        %2623 = vmatpush.msra.mxu0 0.0
        %2624 = vmatpush.msra.mxu0 0.0
        %2625 = vmatpush.msra.mxu0 0.0
        %2626 = vmatpush.msra.mxu0 0.0
        %2627 = vmatpush.msra.mxu0 %v2608
        %2628 = vmatpush.msra.mxu0 %v2607
        %2629 = vmatpush.msra.mxu0 %v2606
        %2630 = vmatpush.msra.mxu0 %v2605
        %2631 = vmatmul.f32.gmra.mxu0 %v2610
        %v2632 = vpop.f32.mrf.mxu0
        %v2633 = vadd.f32 0.0, %v2632
        %2634 = vmatmul.f32.gmra.mxu0 %v2613
        %v2635 = vpop.f32.mrf.mxu0
        %v2636 = vadd.f32 0.0, %v2635
        %2637 = vdwg.mxu0
        %v2638 = vadd.f32 %v2600, %v2633
        %v2639 = vadd.f32 %v2601, %v2636
        %v2640 = vld [vmem:[%s2563 + $0x2] sm:$0xff]
        %v2641 = vld [vmem:[%s2563 + $0xa] sm:$0x3]
        %s2642 = scalar_lea.vmem %s7, 544
        %v2643 = vld [vmem:[%s2642] sm:$0xff]
        %v2644 = vld [vmem:[%s2642 + $0x8] sm:$0xff]
        %v2645 = vld [vmem:[%s2642 + $0x10] sm:$0xff]
        %v2646 = vld [vmem:[%s2642 + $0x18] sm:$0xff]
        %v2648 = vsel %vm2002, %v2640, 0
        %v2651 = vsel %vm2002, %v2641, 0
        %2653 = vmatpush.msra.mxu0 0.0
        %2654 = vmatpush.msra.mxu0 0.0
        %2655 = vmatpush.msra.mxu0 0.0
        %2656 = vmatpush.msra.mxu0 0.0
        %2657 = vmatpush.msra.mxu0 0.0
        %2658 = vmatpush.msra.mxu0 0.0
        %2659 = vmatpush.msra.mxu0 0.0
        %2660 = vmatpush.msra.mxu0 0.0
        %2661 = vmatpush.msra.mxu0 0.0
        %2662 = vmatpush.msra.mxu0 0.0
        %2663 = vmatpush.msra.mxu0 0.0
        %2664 = vmatpush.msra.mxu0 0.0
        %2665 = vmatpush.msra.mxu0 %v2646
        %2666 = vmatpush.msra.mxu0 %v2645
        %2667 = vmatpush.msra.mxu0 %v2644
        %2668 = vmatpush.msra.mxu0 %v2643
        %2669 = vmatmul.f32.gmra.mxu0 %v2648
        %v2670 = vpop.f32.mrf.mxu0
        %v2671 = vadd.f32 0.0, %v2670
        %2672 = vmatmul.f32.gmra.mxu0 %v2651
        %v2673 = vpop.f32.mrf.mxu0
        %v2674 = vadd.f32 0.0, %v2673
        %2675 = vdwg.mxu0
        %v2676 = vadd.f32 %v2638, %v2671
        %v2677 = vadd.f32 %v2639, %v2674
        %v2678 = vld [vmem:[%s2563 + $0x3] sm:$0xff]
        %v2679 = vld [vmem:[%s2563 + $0xb] sm:$0x3]
        %s2680 = scalar_lea.vmem %s7, 576
        %v2681 = vld [vmem:[%s2680] sm:$0xff]
        %v2682 = vld [vmem:[%s2680 + $0x8] sm:$0xff]
        %v2683 = vld [vmem:[%s2680 + $0x10] sm:$0xff]
        %v2684 = vld [vmem:[%s2680 + $0x18] sm:$0xff]
        %v2686 = vsel %vm2002, %v2678, 0
        %v2689 = vsel %vm2002, %v2679, 0
        %2691 = vmatpush.msra.mxu0 0.0
        %2692 = vmatpush.msra.mxu0 0.0
        %2693 = vmatpush.msra.mxu0 0.0
        %2694 = vmatpush.msra.mxu0 0.0
        %2695 = vmatpush.msra.mxu0 0.0
        %2696 = vmatpush.msra.mxu0 0.0
        %2697 = vmatpush.msra.mxu0 0.0
        %2698 = vmatpush.msra.mxu0 0.0
        %2699 = vmatpush.msra.mxu0 0.0
        %2700 = vmatpush.msra.mxu0 0.0
        %2701 = vmatpush.msra.mxu0 0.0
        %2702 = vmatpush.msra.mxu0 0.0
        %2703 = vmatpush.msra.mxu0 %v2684
        %2704 = vmatpush.msra.mxu0 %v2683
        %2705 = vmatpush.msra.mxu0 %v2682
        %2706 = vmatpush.msra.mxu0 %v2681
        %2707 = vmatmul.f32.gmra.mxu0 %v2686
        %v2708 = vpop.f32.mrf.mxu0
        %v2709 = vadd.f32 0.0, %v2708
        %2710 = vmatmul.f32.gmra.mxu0 %v2689
        %v2711 = vpop.f32.mrf.mxu0
        %v2712 = vadd.f32 0.0, %v2711
        %2713 = vdwg.mxu0
        %v2714 = vadd.f32 %v2676, %v2709
        %v2715 = vadd.f32 %v2677, %v2712
        %v2716 = vld [vmem:[%s2563 + $0x4] sm:$0xff]
        %v2717 = vld [vmem:[%s2563 + $0xc] sm:$0x3]
        %s2718 = scalar_lea.vmem %s7, 608
        %v2719 = vld [vmem:[%s2718] sm:$0xff]
        %v2720 = vld [vmem:[%s2718 + $0x8] sm:$0xff]
        %v2721 = vld [vmem:[%s2718 + $0x10] sm:$0xff]
        %v2722 = vld [vmem:[%s2718 + $0x18] sm:$0xff]
        %v2724 = vsel %vm2002, %v2716, 0
        %v2727 = vsel %vm2002, %v2717, 0
        %2729 = vmatpush.msra.mxu0 0.0
        %2730 = vmatpush.msra.mxu0 0.0
        %2731 = vmatpush.msra.mxu0 0.0
        %2732 = vmatpush.msra.mxu0 0.0
        %2733 = vmatpush.msra.mxu0 0.0
        %2734 = vmatpush.msra.mxu0 0.0
        %2735 = vmatpush.msra.mxu0 0.0
        %2736 = vmatpush.msra.mxu0 0.0
        %2737 = vmatpush.msra.mxu0 0.0
        %2738 = vmatpush.msra.mxu0 0.0
        %2739 = vmatpush.msra.mxu0 0.0
        %2740 = vmatpush.msra.mxu0 0.0
        %2741 = vmatpush.msra.mxu0 %v2722
        %2742 = vmatpush.msra.mxu0 %v2721
        %2743 = vmatpush.msra.mxu0 %v2720
        %2744 = vmatpush.msra.mxu0 %v2719
        %2745 = vmatmul.f32.gmra.mxu0 %v2724
        %v2746 = vpop.f32.mrf.mxu0
        %v2747 = vadd.f32 0.0, %v2746
        %2748 = vmatmul.f32.gmra.mxu0 %v2727
        %v2749 = vpop.f32.mrf.mxu0
        %v2750 = vadd.f32 0.0, %v2749
        %2751 = vdwg.mxu0
        %v2752 = vadd.f32 %v2714, %v2747
        %v2753 = vadd.f32 %v2715, %v2750
        %s2754 = sadd.s32 %s1982, 4
        %s2755 = smul.u32 %s2754, 16
        %s2756 = scalar_lea.vmem [#allocation5], %s2755
        %v2757 = vld [vmem:[%s2756] sm:$0xff]
        %v2758 = vld [vmem:[%s2756 + $0x8] sm:$0x3]
        %s2759 = scalar_lea.vmem %s7, 640
        %v2760 = vld [vmem:[%s2759] sm:$0xff]
        %v2761 = vld [vmem:[%s2759 + $0x8] sm:$0xff]
        %v2762 = vld [vmem:[%s2759 + $0x10] sm:$0xff]
        %v2763 = vld [vmem:[%s2759 + $0x18] sm:$0xff]
        %v2765 = vsel %vm2002, %v2757, 0
        %v2768 = vsel %vm2002, %v2758, 0
        %2770 = vmatpush.msra.mxu0 0.0
        %2771 = vmatpush.msra.mxu0 0.0
        %2772 = vmatpush.msra.mxu0 0.0
        %2773 = vmatpush.msra.mxu0 0.0
        %2774 = vmatpush.msra.mxu0 0.0
        %2775 = vmatpush.msra.mxu0 0.0
        %2776 = vmatpush.msra.mxu0 0.0
        %2777 = vmatpush.msra.mxu0 0.0
        %2778 = vmatpush.msra.mxu0 0.0
        %2779 = vmatpush.msra.mxu0 0.0
        %2780 = vmatpush.msra.mxu0 0.0
        %2781 = vmatpush.msra.mxu0 0.0
        %2782 = vmatpush.msra.mxu0 %v2763
        %2783 = vmatpush.msra.mxu0 %v2762
        %2784 = vmatpush.msra.mxu0 %v2761
        %2785 = vmatpush.msra.mxu0 %v2760
        %2786 = vmatmul.f32.gmra.mxu0 %v2765
        %v2787 = vpop.f32.mrf.mxu0
        %v2788 = vadd.f32 0.0, %v2787
        %2789 = vmatmul.f32.gmra.mxu0 %v2768
        %v2790 = vpop.f32.mrf.mxu0
        %v2791 = vadd.f32 0.0, %v2790
        %2792 = vdwg.mxu0
        %v2793 = vadd.f32 %v2752, %v2788
        %v2794 = vadd.f32 %v2753, %v2791
        %v2795 = vld [vmem:[%s2756 + $0x1] sm:$0xff]
        %v2796 = vld [vmem:[%s2756 + $0x9] sm:$0x3]
        %s2797 = scalar_lea.vmem %s7, 672
        %v2798 = vld [vmem:[%s2797] sm:$0xff]
        %v2799 = vld [vmem:[%s2797 + $0x8] sm:$0xff]
        %v2800 = vld [vmem:[%s2797 + $0x10] sm:$0xff]
        %v2801 = vld [vmem:[%s2797 + $0x18] sm:$0xff]
        %v2803 = vsel %vm2002, %v2795, 0
        %v2806 = vsel %vm2002, %v2796, 0
        %2808 = vmatpush.msra.mxu0 0.0
        %2809 = vmatpush.msra.mxu0 0.0
        %2810 = vmatpush.msra.mxu0 0.0
        %2811 = vmatpush.msra.mxu0 0.0
        %2812 = vmatpush.msra.mxu0 0.0
        %2813 = vmatpush.msra.mxu0 0.0
        %2814 = vmatpush.msra.mxu0 0.0
        %2815 = vmatpush.msra.mxu0 0.0
        %2816 = vmatpush.msra.mxu0 0.0
        %2817 = vmatpush.msra.mxu0 0.0
        %2818 = vmatpush.msra.mxu0 0.0
        %2819 = vmatpush.msra.mxu0 0.0
        %2820 = vmatpush.msra.mxu0 %v2801
        %2821 = vmatpush.msra.mxu0 %v2800
        %2822 = vmatpush.msra.mxu0 %v2799
        %2823 = vmatpush.msra.mxu0 %v2798
        %2824 = vmatmul.f32.gmra.mxu0 %v2803
        %v2825 = vpop.f32.mrf.mxu0
        %v2826 = vadd.f32 0.0, %v2825
        %2827 = vmatmul.f32.gmra.mxu0 %v2806
        %v2828 = vpop.f32.mrf.mxu0
        %v2829 = vadd.f32 0.0, %v2828
        %2830 = vdwg.mxu0
        %v2831 = vadd.f32 %v2793, %v2826
        %v2832 = vadd.f32 %v2794, %v2829
        %v2833 = vld [vmem:[%s2756 + $0x2] sm:$0xff]
        %v2834 = vld [vmem:[%s2756 + $0xa] sm:$0x3]
        %s2835 = scalar_lea.vmem %s7, 704
        %v2836 = vld [vmem:[%s2835] sm:$0xff]
        %v2837 = vld [vmem:[%s2835 + $0x8] sm:$0xff]
        %v2838 = vld [vmem:[%s2835 + $0x10] sm:$0xff]
        %v2839 = vld [vmem:[%s2835 + $0x18] sm:$0xff]
        %v2841 = vsel %vm2002, %v2833, 0
        %v2844 = vsel %vm2002, %v2834, 0
        %2846 = vmatpush.msra.mxu0 0.0
        %2847 = vmatpush.msra.mxu0 0.0
        %2848 = vmatpush.msra.mxu0 0.0
        %2849 = vmatpush.msra.mxu0 0.0
        %2850 = vmatpush.msra.mxu0 0.0
        %2851 = vmatpush.msra.mxu0 0.0
        %2852 = vmatpush.msra.mxu0 0.0
        %2853 = vmatpush.msra.mxu0 0.0
        %2854 = vmatpush.msra.mxu0 0.0
        %2855 = vmatpush.msra.mxu0 0.0
        %2856 = vmatpush.msra.mxu0 0.0
        %2857 = vmatpush.msra.mxu0 0.0
        %2858 = vmatpush.msra.mxu0 %v2839
        %2859 = vmatpush.msra.mxu0 %v2838
        %2860 = vmatpush.msra.mxu0 %v2837
        %2861 = vmatpush.msra.mxu0 %v2836
        %2862 = vmatmul.f32.gmra.mxu0 %v2841
        %v2863 = vpop.f32.mrf.mxu0
        %v2864 = vadd.f32 0.0, %v2863
        %2865 = vmatmul.f32.gmra.mxu0 %v2844
        %v2866 = vpop.f32.mrf.mxu0
        %v2867 = vadd.f32 0.0, %v2866
        %2868 = vdwg.mxu0
        %v2869 = vadd.f32 %v2831, %v2864
        %v2870 = vadd.f32 %v2832, %v2867
        %v2871 = vld [vmem:[%s2756 + $0x3] sm:$0xff]
        %v2872 = vld [vmem:[%s2756 + $0xb] sm:$0x3]
        %s2873 = scalar_lea.vmem %s7, 736
        %v2874 = vld [vmem:[%s2873] sm:$0xff]
        %v2875 = vld [vmem:[%s2873 + $0x8] sm:$0xff]
        %v2876 = vld [vmem:[%s2873 + $0x10] sm:$0xff]
        %v2877 = vld [vmem:[%s2873 + $0x18] sm:$0xff]
        %v2879 = vsel %vm2002, %v2871, 0
        %v2882 = vsel %vm2002, %v2872, 0
        %2884 = vmatpush.msra.mxu0 0.0
        %2885 = vmatpush.msra.mxu0 0.0
        %2886 = vmatpush.msra.mxu0 0.0
        %2887 = vmatpush.msra.mxu0 0.0
        %2888 = vmatpush.msra.mxu0 0.0
        %2889 = vmatpush.msra.mxu0 0.0
        %2890 = vmatpush.msra.mxu0 0.0
        %2891 = vmatpush.msra.mxu0 0.0
        %2892 = vmatpush.msra.mxu0 0.0
        %2893 = vmatpush.msra.mxu0 0.0
        %2894 = vmatpush.msra.mxu0 0.0
        %2895 = vmatpush.msra.mxu0 0.0
        %2896 = vmatpush.msra.mxu0 %v2877
        %2897 = vmatpush.msra.mxu0 %v2876
        %2898 = vmatpush.msra.mxu0 %v2875
        %2899 = vmatpush.msra.mxu0 %v2874
        %2900 = vmatmul.f32.gmra.mxu0 %v2879
        %v2901 = vpop.f32.mrf.mxu0
        %v2902 = vadd.f32 0.0, %v2901
        %2903 = vmatmul.f32.gmra.mxu0 %v2882
        %v2904 = vpop.f32.mrf.mxu0
        %v2905 = vadd.f32 0.0, %v2904
        %2906 = vdwg.mxu0
        %v2907 = vadd.f32 %v2869, %v2902
        %v2908 = vadd.f32 %v2870, %v2905
        %v2909 = vld [vmem:[%s2756 + $0x4] sm:$0xff]
        %v2910 = vld [vmem:[%s2756 + $0xc] sm:$0x3]
        %s2911 = scalar_lea.vmem %s7, 768
        %v2912 = vld [vmem:[%s2911] sm:$0xff]
        %v2913 = vld [vmem:[%s2911 + $0x8] sm:$0xff]
        %v2914 = vld [vmem:[%s2911 + $0x10] sm:$0xff]
        %v2915 = vld [vmem:[%s2911 + $0x18] sm:$0xff]
        %v2917 = vsel %vm2002, %v2909, 0
        %v2920 = vsel %vm2002, %v2910, 0
        %2922 = vmatpush.msra.mxu0 0.0
        %2923 = vmatpush.msra.mxu0 0.0
        %2924 = vmatpush.msra.mxu0 0.0
        %2925 = vmatpush.msra.mxu0 0.0
        %2926 = vmatpush.msra.mxu0 0.0
        %2927 = vmatpush.msra.mxu0 0.0
        %2928 = vmatpush.msra.mxu0 0.0
        %2929 = vmatpush.msra.mxu0 0.0
        %2930 = vmatpush.msra.mxu0 0.0
        %2931 = vmatpush.msra.mxu0 0.0
        %2932 = vmatpush.msra.mxu0 0.0
        %2933 = vmatpush.msra.mxu0 0.0
        %2934 = vmatpush.msra.mxu0 %v2915
        %2935 = vmatpush.msra.mxu0 %v2914
        %2936 = vmatpush.msra.mxu0 %v2913
        %2937 = vmatpush.msra.mxu0 %v2912
        %2938 = vmatmul.f32.gmra.mxu0 %v2917
        %v2939 = vpop.f32.mrf.mxu0
        %v2940 = vadd.f32 0.0, %v2939
        %2941 = vmatmul.f32.gmra.mxu0 %v2920
        %v2942 = vpop.f32.mrf.mxu0
        %v2943 = vadd.f32 0.0, %v2942
        %2944 = vdwg.mxu0
        %v2945 = vadd.f32 %v2907, %v2940
        %v2946 = vadd.f32 %v2908, %v2943
        %v2947 = vld [vmem:[%s8] sm:$0x1]
        %v2949 = vperm.slane %v2947, 0
        %v2951 = vadd.f32 %v2945, %v2949
        %v2952 = vadd.f32 %v2946, %v2949
        %vm2953 = vcmp.gt.f32.partialorder %v2951, 0.0
        %vm2954 = vcmp.gt.f32.partialorder %v2952, 0.0
        %v2955 = vmul.f32 %v2951, 0.2
        %v2956 = vmul.f32 %v2952, 0.2
        %v2957 = vsel %vm2953, %v2951, %v2955
        %v2958 = vsel %vm2954, %v2952, %v2956
        %s2959 = scalar_lea.vmem [#allocation6], %s1987
        %vm2960 = vcmask 523264
        %2961 = vst.msk [vmem:[%s2959] sm:$0xff] %vm2960, %v2957
        %vm2962 = vcmask 517120
        %2963 = vst.msk [vmem:[%s2959 + $0x8] sm:$0x3] %vm2962, %v2958
      $region105: #{discriminator_forward.1} parent=71 // loop_footer
        %s1986 = sadd.s32 1, %s1982
      $region106: #{discriminator_forward.1} parent=71 // loop_footer_branch
        %1981 = sbr.rel target = $region102
      $region107: #{discriminator_forward.1} parent=71 // loop_exit
        _
      %v2964 = vld [vmem:[#allocation6] sm:$0x1]
      %v2965 = vld [vmem:[#allocation6 + $0x1] sm:$0x1]
      %v2966 = vmax.f32 %v2964, %v2965
      %v2967 = vld [vmem:[#allocation6 + $0x2] sm:$0x1]
      %v2968 = vmax.f32 %v2966, %v2967
      %s2969 = scalar_lea.vmem [#allocation6], 16
      %v2970 = vld [vmem:[%s2969] sm:$0x1]
      %v2971 = vmax.f32 %v2968, %v2970
      %v2972 = vld [vmem:[%s2969 + $0x1] sm:$0x1]
      %v2973 = vmax.f32 %v2971, %v2972
      %v2974 = vld [vmem:[%s2969 + $0x2] sm:$0x1]
      %v2975 = vmax.f32 %v2973, %v2974
      %s2976 = scalar_lea.vmem [#allocation6], 32
      %v2977 = vld [vmem:[%s2976] sm:$0x1]
      %v2978 = vmax.f32 %v2975, %v2977
      %v2979 = vld [vmem:[%s2976 + $0x1] sm:$0x1]
      %v2980 = vmax.f32 %v2978, %v2979
      %v2981 = vld [vmem:[%s2976 + $0x2] sm:$0x1]
      %v2982 = vmax.f32 %v2980, %v2981
      %v2983 = vld [vmem:[%s9] sm:$0xff]
      %v2984 = vld [vmem:[%s9 + $0x8] sm:$0xff]
      %v2985 = vld [vmem:[%s9 + $0x10] sm:$0xff]
      %v2986 = vld [vmem:[%s9 + $0x18] sm:$0xff]
      %v2987 = vld [vmem:[%s9 + $0x20] sm:$0xff]
      %v2988 = vld [vmem:[%s9 + $0x28] sm:$0xff]
      %v2989 = vld [vmem:[%s9 + $0x30] sm:$0xff]
      %v2990 = vld [vmem:[%s9 + $0x38] sm:$0xff]
      %v2991 = vld [vmem:[%s9 + $0x40] sm:$0xff]
      %v2992 = vld [vmem:[%s9 + $0x48] sm:$0xff]
      %v2993 = vld [vmem:[%s9 + $0x50] sm:$0xff]
      %v2994 = vld [vmem:[%s9 + $0x58] sm:$0xff]
      %v2995 = vld [vmem:[%s9 + $0x60] sm:$0xff]
      %v2996 = vld [vmem:[%s9 + $0x68] sm:$0xff]
      %v2997 = vld [vmem:[%s9 + $0x70] sm:$0xff]
      %v2998 = vld [vmem:[%s9 + $0x78] sm:$0xff]
      %v2999 = vld [vmem:[#allocation6 + $0x3] sm:$0x1]
      %v3000 = vmax.f32 %v2967, %v2999
      %v3001 = vld [vmem:[#allocation6 + $0x4] sm:$0x1]
      %v3002 = vmax.f32 %v3000, %v3001
      %v3003 = vmax.f32 %v3002, %v2974
      %v3004 = vld [vmem:[%s2969 + $0x3] sm:$0x1]
      %v3005 = vmax.f32 %v3003, %v3004
      %v3006 = vld [vmem:[%s2969 + $0x4] sm:$0x1]
      %v3007 = vmax.f32 %v3005, %v3006
      %v3008 = vmax.f32 %v3007, %v2981
      %v3009 = vld [vmem:[%s2976 + $0x3] sm:$0x1]
      %v3010 = vmax.f32 %v3008, %v3009
      %v3011 = vld [vmem:[%s2976 + $0x4] sm:$0x1]
      %v3012 = vmax.f32 %v3010, %v3011
      %s3013 = scalar_lea.vmem %s9, 128
      %v3014 = vld [vmem:[%s3013] sm:$0xff]
      %v3015 = vld [vmem:[%s3013 + $0x8] sm:$0xff]
      %v3016 = vld [vmem:[%s3013 + $0x10] sm:$0xff]
      %v3017 = vld [vmem:[%s3013 + $0x18] sm:$0xff]
      %v3018 = vld [vmem:[%s3013 + $0x20] sm:$0xff]
      %v3019 = vld [vmem:[%s3013 + $0x28] sm:$0xff]
      %v3020 = vld [vmem:[%s3013 + $0x30] sm:$0xff]
      %v3021 = vld [vmem:[%s3013 + $0x38] sm:$0xff]
      %v3022 = vld [vmem:[%s3013 + $0x40] sm:$0xff]
      %v3023 = vld [vmem:[%s3013 + $0x48] sm:$0xff]
      %v3024 = vld [vmem:[%s3013 + $0x50] sm:$0xff]
      %v3025 = vld [vmem:[%s3013 + $0x58] sm:$0xff]
      %v3026 = vld [vmem:[%s3013 + $0x60] sm:$0xff]
      %v3027 = vld [vmem:[%s3013 + $0x68] sm:$0xff]
      %v3028 = vld [vmem:[%s3013 + $0x70] sm:$0xff]
      %v3029 = vld [vmem:[%s3013 + $0x78] sm:$0xff]
      %vm3030 = vcmask 523264
      %v3032 = vsel %vm3030, %v3012, 0
      %3034 = vmatpush.msra.mxu0 0.0
      %3035 = vmatpush.msra.mxu0 0.0
      %3036 = vmatpush.msra.mxu0 0.0
      %3037 = vmatpush.msra.mxu0 0.0
      %3038 = vmatpush.msra.mxu0 0.0
      %3039 = vmatpush.msra.mxu0 0.0
      %3040 = vmatpush.msra.mxu0 0.0
      %3041 = vmatpush.msra.mxu0 0.0
      %3042 = vmatpush.msra.mxu0 %v3028
      %3043 = vmatpush.msra.mxu0 %v3026
      %3044 = vmatpush.msra.mxu0 %v3024
      %3045 = vmatpush.msra.mxu0 %v3022
      %3046 = vmatpush.msra.mxu0 %v3020
      %3047 = vmatpush.msra.mxu0 %v3018
      %3048 = vmatpush.msra.mxu0 %v3016
      %3049 = vmatpush.msra.mxu0 %v3014
      %3050 = vmatmul.f32.gmra.mxu0 %v3032
      %v3051 = vpop.f32.mrf.mxu0
      %v3052 = vadd.f32 0.0, %v3051
      %3053 = vdwg.mxu0
      %3054 = vmatpush.msra.mxu0 0.0
      %3055 = vmatpush.msra.mxu0 0.0
      %3056 = vmatpush.msra.mxu0 0.0
      %3057 = vmatpush.msra.mxu0 0.0
      %3058 = vmatpush.msra.mxu0 0.0
      %3059 = vmatpush.msra.mxu0 0.0
      %3060 = vmatpush.msra.mxu0 0.0
      %3061 = vmatpush.msra.mxu0 0.0
      %3062 = vmatpush.msra.mxu0 %v3029
      %3063 = vmatpush.msra.mxu0 %v3027
      %3064 = vmatpush.msra.mxu0 %v3025
      %3065 = vmatpush.msra.mxu0 %v3023
      %3066 = vmatpush.msra.mxu0 %v3021
      %3067 = vmatpush.msra.mxu0 %v3019
      %3068 = vmatpush.msra.mxu0 %v3017
      %3069 = vmatpush.msra.mxu0 %v3015
      %3070 = vmatmul.f32.gmra.mxu0 %v3032
      %v3071 = vpop.f32.mrf.mxu0
      %v3072 = vadd.f32 0.0, %v3071
      %3073 = vdwg.mxu0
      %v3075 = vsel %vm3030, %v2982, 0
      %3077 = vmatpush.msra.mxu0 0.0
      %3078 = vmatpush.msra.mxu0 0.0
      %3079 = vmatpush.msra.mxu0 0.0
      %3080 = vmatpush.msra.mxu0 0.0
      %3081 = vmatpush.msra.mxu0 0.0
      %3082 = vmatpush.msra.mxu0 0.0
      %3083 = vmatpush.msra.mxu0 0.0
      %3084 = vmatpush.msra.mxu0 0.0
      %3085 = vmatpush.msra.mxu0 %v2997
      %3086 = vmatpush.msra.mxu0 %v2995
      %3087 = vmatpush.msra.mxu0 %v2993
      %3088 = vmatpush.msra.mxu0 %v2991
      %3089 = vmatpush.msra.mxu0 %v2989
      %3090 = vmatpush.msra.mxu0 %v2987
      %3091 = vmatpush.msra.mxu0 %v2985
      %3092 = vmatpush.msra.mxu0 %v2983
      %3093 = vmatmul.f32.gmra.mxu0 %v3075
      %v3094 = vpop.f32.mrf.mxu0
      %v3095 = vadd.f32 %v3052, %v3094
      %3096 = vdwg.mxu0
      %3097 = vmatpush.msra.mxu0 0.0
      %3098 = vmatpush.msra.mxu0 0.0
      %3099 = vmatpush.msra.mxu0 0.0
      %3100 = vmatpush.msra.mxu0 0.0
      %3101 = vmatpush.msra.mxu0 0.0
      %3102 = vmatpush.msra.mxu0 0.0
      %3103 = vmatpush.msra.mxu0 0.0
      %3104 = vmatpush.msra.mxu0 0.0
      %3105 = vmatpush.msra.mxu0 %v2998
      %3106 = vmatpush.msra.mxu0 %v2996
      %3107 = vmatpush.msra.mxu0 %v2994
      %3108 = vmatpush.msra.mxu0 %v2992
      %3109 = vmatpush.msra.mxu0 %v2990
      %3110 = vmatpush.msra.mxu0 %v2988
      %3111 = vmatpush.msra.mxu0 %v2986
      %3112 = vmatpush.msra.mxu0 %v2984
      %3113 = vmatmul.f32.gmra.mxu0 %v3075
      %v3114 = vpop.f32.mrf.mxu0
      %v3115 = vadd.f32 %v3072, %v3114
      %3116 = vdwg.mxu0
      %v3117 = vld [vmem:[#allocation6 + $0x5] sm:$0x1]
      %v3118 = vmax.f32 %v3001, %v3117
      %v3119 = vld [vmem:[#allocation6 + $0x6] sm:$0x1]
      %v3120 = vmax.f32 %v3118, %v3119
      %v3121 = vmax.f32 %v3120, %v3006
      %v3122 = vld [vmem:[%s2969 + $0x5] sm:$0x1]
      %v3123 = vmax.f32 %v3121, %v3122
      %v3124 = vld [vmem:[%s2969 + $0x6] sm:$0x1]
      %v3125 = vmax.f32 %v3123, %v3124
      %v3126 = vmax.f32 %v3125, %v3011
      %v3127 = vld [vmem:[%s2976 + $0x5] sm:$0x1]
      %v3128 = vmax.f32 %v3126, %v3127
      %v3129 = vld [vmem:[%s2976 + $0x6] sm:$0x1]
      %v3130 = vmax.f32 %v3128, %v3129
      %s3131 = scalar_lea.vmem %s9, 256
      %v3132 = vld [vmem:[%s3131] sm:$0xff]
      %v3133 = vld [vmem:[%s3131 + $0x8] sm:$0xff]
      %v3134 = vld [vmem:[%s3131 + $0x10] sm:$0xff]
      %v3135 = vld [vmem:[%s3131 + $0x18] sm:$0xff]
      %v3136 = vld [vmem:[%s3131 + $0x20] sm:$0xff]
      %v3137 = vld [vmem:[%s3131 + $0x28] sm:$0xff]
      %v3138 = vld [vmem:[%s3131 + $0x30] sm:$0xff]
      %v3139 = vld [vmem:[%s3131 + $0x38] sm:$0xff]
      %v3140 = vld [vmem:[%s3131 + $0x40] sm:$0xff]
      %v3141 = vld [vmem:[%s3131 + $0x48] sm:$0xff]
      %v3142 = vld [vmem:[%s3131 + $0x50] sm:$0xff]
      %v3143 = vld [vmem:[%s3131 + $0x58] sm:$0xff]
      %v3144 = vld [vmem:[%s3131 + $0x60] sm:$0xff]
      %v3145 = vld [vmem:[%s3131 + $0x68] sm:$0xff]
      %v3146 = vld [vmem:[%s3131 + $0x70] sm:$0xff]
      %v3147 = vld [vmem:[%s3131 + $0x78] sm:$0xff]
      %v3149 = vsel %vm3030, %v3130, 0
      %3151 = vmatpush.msra.mxu0 0.0
      %3152 = vmatpush.msra.mxu0 0.0
      %3153 = vmatpush.msra.mxu0 0.0
      %3154 = vmatpush.msra.mxu0 0.0
      %3155 = vmatpush.msra.mxu0 0.0
      %3156 = vmatpush.msra.mxu0 0.0
      %3157 = vmatpush.msra.mxu0 0.0
      %3158 = vmatpush.msra.mxu0 0.0
      %3159 = vmatpush.msra.mxu0 %v3146
      %3160 = vmatpush.msra.mxu0 %v3144
      %3161 = vmatpush.msra.mxu0 %v3142
      %3162 = vmatpush.msra.mxu0 %v3140
      %3163 = vmatpush.msra.mxu0 %v3138
      %3164 = vmatpush.msra.mxu0 %v3136
      %3165 = vmatpush.msra.mxu0 %v3134
      %3166 = vmatpush.msra.mxu0 %v3132
      %3167 = vmatmul.f32.gmra.mxu0 %v3149
      %v3168 = vpop.f32.mrf.mxu0
      %v3169 = vadd.f32 0.0, %v3168
      %3170 = vdwg.mxu0
      %3171 = vmatpush.msra.mxu0 0.0
      %3172 = vmatpush.msra.mxu0 0.0
      %3173 = vmatpush.msra.mxu0 0.0
      %3174 = vmatpush.msra.mxu0 0.0
      %3175 = vmatpush.msra.mxu0 0.0
      %3176 = vmatpush.msra.mxu0 0.0
      %3177 = vmatpush.msra.mxu0 0.0
      %3178 = vmatpush.msra.mxu0 0.0
      %3179 = vmatpush.msra.mxu0 %v3147
      %3180 = vmatpush.msra.mxu0 %v3145
      %3181 = vmatpush.msra.mxu0 %v3143
      %3182 = vmatpush.msra.mxu0 %v3141
      %3183 = vmatpush.msra.mxu0 %v3139
      %3184 = vmatpush.msra.mxu0 %v3137
      %3185 = vmatpush.msra.mxu0 %v3135
      %3186 = vmatpush.msra.mxu0 %v3133
      %3187 = vmatmul.f32.gmra.mxu0 %v3149
      %v3188 = vpop.f32.mrf.mxu0
      %v3189 = vadd.f32 0.0, %v3188
      %3190 = vdwg.mxu0
      %v3191 = vadd.f32 %v3095, %v3169
      %v3192 = vadd.f32 %v3115, %v3189
      %v3193 = vld [vmem:[#allocation6 + $0x7] sm:$0x1]
      %v3194 = vmax.f32 %v3119, %v3193
      %v3195 = vld [vmem:[#allocation6 + $0x8] sm:$0x1]
      %v3196 = vmax.f32 %v3194, %v3195
      %v3197 = vmax.f32 %v3196, %v3124
      %v3198 = vld [vmem:[%s2969 + $0x7] sm:$0x1]
      %v3199 = vmax.f32 %v3197, %v3198
      %v3200 = vld [vmem:[%s2969 + $0x8] sm:$0x1]
      %v3201 = vmax.f32 %v3199, %v3200
      %v3202 = vmax.f32 %v3201, %v3129
      %v3203 = vld [vmem:[%s2976 + $0x7] sm:$0x1]
      %v3204 = vmax.f32 %v3202, %v3203
      %v3205 = vld [vmem:[%s2976 + $0x8] sm:$0x1]
      %v3206 = vmax.f32 %v3204, %v3205
      %s3207 = scalar_lea.vmem %s9, 384
      %v3208 = vld [vmem:[%s3207] sm:$0xff]
      %v3209 = vld [vmem:[%s3207 + $0x8] sm:$0xff]
      %v3210 = vld [vmem:[%s3207 + $0x10] sm:$0xff]
      %v3211 = vld [vmem:[%s3207 + $0x18] sm:$0xff]
      %v3212 = vld [vmem:[%s3207 + $0x20] sm:$0xff]
      %v3213 = vld [vmem:[%s3207 + $0x28] sm:$0xff]
      %v3214 = vld [vmem:[%s3207 + $0x30] sm:$0xff]
      %v3215 = vld [vmem:[%s3207 + $0x38] sm:$0xff]
      %v3216 = vld [vmem:[%s3207 + $0x40] sm:$0xff]
      %v3217 = vld [vmem:[%s3207 + $0x48] sm:$0xff]
      %v3218 = vld [vmem:[%s3207 + $0x50] sm:$0xff]
      %v3219 = vld [vmem:[%s3207 + $0x58] sm:$0xff]
      %v3220 = vld [vmem:[%s3207 + $0x60] sm:$0xff]
      %v3221 = vld [vmem:[%s3207 + $0x68] sm:$0xff]
      %v3222 = vld [vmem:[%s3207 + $0x70] sm:$0xff]
      %v3223 = vld [vmem:[%s3207 + $0x78] sm:$0xff]
      %v3225 = vsel %vm3030, %v3206, 0
      %3227 = vmatpush.msra.mxu0 0.0
      %3228 = vmatpush.msra.mxu0 0.0
      %3229 = vmatpush.msra.mxu0 0.0
      %3230 = vmatpush.msra.mxu0 0.0
      %3231 = vmatpush.msra.mxu0 0.0
      %3232 = vmatpush.msra.mxu0 0.0
      %3233 = vmatpush.msra.mxu0 0.0
      %3234 = vmatpush.msra.mxu0 0.0
      %3235 = vmatpush.msra.mxu0 %v3222
      %3236 = vmatpush.msra.mxu0 %v3220
      %3237 = vmatpush.msra.mxu0 %v3218
      %3238 = vmatpush.msra.mxu0 %v3216
      %3239 = vmatpush.msra.mxu0 %v3214
      %3240 = vmatpush.msra.mxu0 %v3212
      %3241 = vmatpush.msra.mxu0 %v3210
      %3242 = vmatpush.msra.mxu0 %v3208
      %3243 = vmatmul.f32.gmra.mxu0 %v3225
      %v3244 = vpop.f32.mrf.mxu0
      %v3245 = vadd.f32 0.0, %v3244
      %3246 = vdwg.mxu0
      %3247 = vmatpush.msra.mxu0 0.0
      %3248 = vmatpush.msra.mxu0 0.0
      %3249 = vmatpush.msra.mxu0 0.0
      %3250 = vmatpush.msra.mxu0 0.0
      %3251 = vmatpush.msra.mxu0 0.0
      %3252 = vmatpush.msra.mxu0 0.0
      %3253 = vmatpush.msra.mxu0 0.0
      %3254 = vmatpush.msra.mxu0 0.0
      %3255 = vmatpush.msra.mxu0 %v3223
      %3256 = vmatpush.msra.mxu0 %v3221
      %3257 = vmatpush.msra.mxu0 %v3219
      %3258 = vmatpush.msra.mxu0 %v3217
      %3259 = vmatpush.msra.mxu0 %v3215
      %3260 = vmatpush.msra.mxu0 %v3213
      %3261 = vmatpush.msra.mxu0 %v3211
      %3262 = vmatpush.msra.mxu0 %v3209
      %3263 = vmatmul.f32.gmra.mxu0 %v3225
      %v3264 = vpop.f32.mrf.mxu0
      %v3265 = vadd.f32 0.0, %v3264
      %3266 = vdwg.mxu0
      %v3267 = vadd.f32 %v3191, %v3245
      %v3268 = vadd.f32 %v3192, %v3265
      %v3269 = vmax.f32 %v2977, %v2979
      %v3270 = vmax.f32 %v3269, %v2981
      %s3271 = scalar_lea.vmem [#allocation6], 48
      %v3272 = vld [vmem:[%s3271] sm:$0x1]
      %v3273 = vmax.f32 %v3270, %v3272
      %v3274 = vld [vmem:[%s3271 + $0x1] sm:$0x1]
      %v3275 = vmax.f32 %v3273, %v3274
      %v3276 = vld [vmem:[%s3271 + $0x2] sm:$0x1]
      %v3277 = vmax.f32 %v3275, %v3276
      %s3278 = scalar_lea.vmem [#allocation6], 64
      %v3279 = vld [vmem:[%s3278] sm:$0x1]
      %v3280 = vmax.f32 %v3277, %v3279
      %v3281 = vld [vmem:[%s3278 + $0x1] sm:$0x1]
      %v3282 = vmax.f32 %v3280, %v3281
      %v3283 = vld [vmem:[%s3278 + $0x2] sm:$0x1]
      %v3284 = vmax.f32 %v3282, %v3283
      %s3285 = scalar_lea.vmem %s9, 512
      %v3286 = vld [vmem:[%s3285] sm:$0xff]
      %v3287 = vld [vmem:[%s3285 + $0x8] sm:$0xff]
      %v3288 = vld [vmem:[%s3285 + $0x10] sm:$0xff]
      %v3289 = vld [vmem:[%s3285 + $0x18] sm:$0xff]
      %v3290 = vld [vmem:[%s3285 + $0x20] sm:$0xff]
      %v3291 = vld [vmem:[%s3285 + $0x28] sm:$0xff]
      %v3292 = vld [vmem:[%s3285 + $0x30] sm:$0xff]
      %v3293 = vld [vmem:[%s3285 + $0x38] sm:$0xff]
      %v3294 = vld [vmem:[%s3285 + $0x40] sm:$0xff]
      %v3295 = vld [vmem:[%s3285 + $0x48] sm:$0xff]
      %v3296 = vld [vmem:[%s3285 + $0x50] sm:$0xff]
      %v3297 = vld [vmem:[%s3285 + $0x58] sm:$0xff]
      %v3298 = vld [vmem:[%s3285 + $0x60] sm:$0xff]
      %v3299 = vld [vmem:[%s3285 + $0x68] sm:$0xff]
      %v3300 = vld [vmem:[%s3285 + $0x70] sm:$0xff]
      %v3301 = vld [vmem:[%s3285 + $0x78] sm:$0xff]
      %v3303 = vsel %vm3030, %v3284, 0
      %3305 = vmatpush.msra.mxu0 0.0
      %3306 = vmatpush.msra.mxu0 0.0
      %3307 = vmatpush.msra.mxu0 0.0
      %3308 = vmatpush.msra.mxu0 0.0
      %3309 = vmatpush.msra.mxu0 0.0
      %3310 = vmatpush.msra.mxu0 0.0
      %3311 = vmatpush.msra.mxu0 0.0
      %3312 = vmatpush.msra.mxu0 0.0
      %3313 = vmatpush.msra.mxu0 %v3300
      %3314 = vmatpush.msra.mxu0 %v3298
      %3315 = vmatpush.msra.mxu0 %v3296
      %3316 = vmatpush.msra.mxu0 %v3294
      %3317 = vmatpush.msra.mxu0 %v3292
      %3318 = vmatpush.msra.mxu0 %v3290
      %3319 = vmatpush.msra.mxu0 %v3288
      %3320 = vmatpush.msra.mxu0 %v3286
      %3321 = vmatmul.f32.gmra.mxu0 %v3303
      %v3322 = vpop.f32.mrf.mxu0
      %v3323 = vadd.f32 0.0, %v3322
      %3324 = vdwg.mxu0
      %3325 = vmatpush.msra.mxu0 0.0
      %3326 = vmatpush.msra.mxu0 0.0
      %3327 = vmatpush.msra.mxu0 0.0
      %3328 = vmatpush.msra.mxu0 0.0
      %3329 = vmatpush.msra.mxu0 0.0
      %3330 = vmatpush.msra.mxu0 0.0
      %3331 = vmatpush.msra.mxu0 0.0
      %3332 = vmatpush.msra.mxu0 0.0
      %3333 = vmatpush.msra.mxu0 %v3301
      %3334 = vmatpush.msra.mxu0 %v3299
      %3335 = vmatpush.msra.mxu0 %v3297
      %3336 = vmatpush.msra.mxu0 %v3295
      %3337 = vmatpush.msra.mxu0 %v3293
      %3338 = vmatpush.msra.mxu0 %v3291
      %3339 = vmatpush.msra.mxu0 %v3289
      %3340 = vmatpush.msra.mxu0 %v3287
      %3341 = vmatmul.f32.gmra.mxu0 %v3303
      %v3342 = vpop.f32.mrf.mxu0
      %v3343 = vadd.f32 0.0, %v3342
      %3344 = vdwg.mxu0
      %v3345 = vadd.f32 %v3267, %v3323
      %v3346 = vadd.f32 %v3268, %v3343
      %v3347 = vmax.f32 %v2981, %v3009
      %v3348 = vmax.f32 %v3347, %v3011
      %v3349 = vmax.f32 %v3348, %v3276
      %v3350 = vld [vmem:[%s3271 + $0x3] sm:$0x1]
      %v3351 = vmax.f32 %v3349, %v3350
      %v3352 = vld [vmem:[%s3271 + $0x4] sm:$0x1]
      %v3353 = vmax.f32 %v3351, %v3352
      %v3354 = vmax.f32 %v3353, %v3283
      %v3355 = vld [vmem:[%s3278 + $0x3] sm:$0x1]
      %v3356 = vmax.f32 %v3354, %v3355
      %v3357 = vld [vmem:[%s3278 + $0x4] sm:$0x1]
      %v3358 = vmax.f32 %v3356, %v3357
      %s3359 = scalar_lea.vmem %s9, 640
      %v3360 = vld [vmem:[%s3359] sm:$0xff]
      %v3361 = vld [vmem:[%s3359 + $0x8] sm:$0xff]
      %v3362 = vld [vmem:[%s3359 + $0x10] sm:$0xff]
      %v3363 = vld [vmem:[%s3359 + $0x18] sm:$0xff]
      %v3364 = vld [vmem:[%s3359 + $0x20] sm:$0xff]
      %v3365 = vld [vmem:[%s3359 + $0x28] sm:$0xff]
      %v3366 = vld [vmem:[%s3359 + $0x30] sm:$0xff]
      %v3367 = vld [vmem:[%s3359 + $0x38] sm:$0xff]
      %v3368 = vld [vmem:[%s3359 + $0x40] sm:$0xff]
      %v3369 = vld [vmem:[%s3359 + $0x48] sm:$0xff]
      %v3370 = vld [vmem:[%s3359 + $0x50] sm:$0xff]
      %v3371 = vld [vmem:[%s3359 + $0x58] sm:$0xff]
      %v3372 = vld [vmem:[%s3359 + $0x60] sm:$0xff]
      %v3373 = vld [vmem:[%s3359 + $0x68] sm:$0xff]
      %v3374 = vld [vmem:[%s3359 + $0x70] sm:$0xff]
      %v3375 = vld [vmem:[%s3359 + $0x78] sm:$0xff]
      %v3377 = vsel %vm3030, %v3358, 0
      %3379 = vmatpush.msra.mxu0 0.0
      %3380 = vmatpush.msra.mxu0 0.0
      %3381 = vmatpush.msra.mxu0 0.0
      %3382 = vmatpush.msra.mxu0 0.0
      %3383 = vmatpush.msra.mxu0 0.0
      %3384 = vmatpush.msra.mxu0 0.0
      %3385 = vmatpush.msra.mxu0 0.0
      %3386 = vmatpush.msra.mxu0 0.0
      %3387 = vmatpush.msra.mxu0 %v3374
      %3388 = vmatpush.msra.mxu0 %v3372
      %3389 = vmatpush.msra.mxu0 %v3370
      %3390 = vmatpush.msra.mxu0 %v3368
      %3391 = vmatpush.msra.mxu0 %v3366
      %3392 = vmatpush.msra.mxu0 %v3364
      %3393 = vmatpush.msra.mxu0 %v3362
      %3394 = vmatpush.msra.mxu0 %v3360
      %3395 = vmatmul.f32.gmra.mxu0 %v3377
      %v3396 = vpop.f32.mrf.mxu0
      %v3397 = vadd.f32 0.0, %v3396
      %3398 = vdwg.mxu0
      %3399 = vmatpush.msra.mxu0 0.0
      %3400 = vmatpush.msra.mxu0 0.0
      %3401 = vmatpush.msra.mxu0 0.0
      %3402 = vmatpush.msra.mxu0 0.0
      %3403 = vmatpush.msra.mxu0 0.0
      %3404 = vmatpush.msra.mxu0 0.0
      %3405 = vmatpush.msra.mxu0 0.0
      %3406 = vmatpush.msra.mxu0 0.0
      %3407 = vmatpush.msra.mxu0 %v3375
      %3408 = vmatpush.msra.mxu0 %v3373
      %3409 = vmatpush.msra.mxu0 %v3371
      %3410 = vmatpush.msra.mxu0 %v3369
      %3411 = vmatpush.msra.mxu0 %v3367
      %3412 = vmatpush.msra.mxu0 %v3365
      %3413 = vmatpush.msra.mxu0 %v3363
      %3414 = vmatpush.msra.mxu0 %v3361
      %3415 = vmatmul.f32.gmra.mxu0 %v3377
      %v3416 = vpop.f32.mrf.mxu0
      %v3417 = vadd.f32 0.0, %v3416
      %3418 = vdwg.mxu0
      %v3419 = vadd.f32 %v3345, %v3397
      %v3420 = vadd.f32 %v3346, %v3417
      %v3421 = vmax.f32 %v3011, %v3127
      %v3422 = vmax.f32 %v3421, %v3129
      %v3423 = vmax.f32 %v3422, %v3352
      %v3424 = vld [vmem:[%s3271 + $0x5] sm:$0x1]
      %v3425 = vmax.f32 %v3423, %v3424
      %v3426 = vld [vmem:[%s3271 + $0x6] sm:$0x1]
      %v3427 = vmax.f32 %v3425, %v3426
      %v3428 = vmax.f32 %v3427, %v3357
      %v3429 = vld [vmem:[%s3278 + $0x5] sm:$0x1]
      %v3430 = vmax.f32 %v3428, %v3429
      %v3431 = vld [vmem:[%s3278 + $0x6] sm:$0x1]
      %v3432 = vmax.f32 %v3430, %v3431
      %s3433 = scalar_lea.vmem %s9, 768
      %v3434 = vld [vmem:[%s3433] sm:$0xff]
      %v3435 = vld [vmem:[%s3433 + $0x8] sm:$0xff]
      %v3436 = vld [vmem:[%s3433 + $0x10] sm:$0xff]
      %v3437 = vld [vmem:[%s3433 + $0x18] sm:$0xff]
      %v3438 = vld [vmem:[%s3433 + $0x20] sm:$0xff]
      %v3439 = vld [vmem:[%s3433 + $0x28] sm:$0xff]
      %v3440 = vld [vmem:[%s3433 + $0x30] sm:$0xff]
      %v3441 = vld [vmem:[%s3433 + $0x38] sm:$0xff]
      %v3442 = vld [vmem:[%s3433 + $0x40] sm:$0xff]
      %v3443 = vld [vmem:[%s3433 + $0x48] sm:$0xff]
      %v3444 = vld [vmem:[%s3433 + $0x50] sm:$0xff]
      %v3445 = vld [vmem:[%s3433 + $0x58] sm:$0xff]
      %v3446 = vld [vmem:[%s3433 + $0x60] sm:$0xff]
      %v3447 = vld [vmem:[%s3433 + $0x68] sm:$0xff]
      %v3448 = vld [vmem:[%s3433 + $0x70] sm:$0xff]
      %v3449 = vld [vmem:[%s3433 + $0x78] sm:$0xff]
      %v3451 = vsel %vm3030, %v3432, 0
      %3453 = vmatpush.msra.mxu0 0.0
      %3454 = vmatpush.msra.mxu0 0.0
      %3455 = vmatpush.msra.mxu0 0.0
      %3456 = vmatpush.msra.mxu0 0.0
      %3457 = vmatpush.msra.mxu0 0.0
      %3458 = vmatpush.msra.mxu0 0.0
      %3459 = vmatpush.msra.mxu0 0.0
      %3460 = vmatpush.msra.mxu0 0.0
      %3461 = vmatpush.msra.mxu0 %v3448
      %3462 = vmatpush.msra.mxu0 %v3446
      %3463 = vmatpush.msra.mxu0 %v3444
      %3464 = vmatpush.msra.mxu0 %v3442
      %3465 = vmatpush.msra.mxu0 %v3440
      %3466 = vmatpush.msra.mxu0 %v3438
      %3467 = vmatpush.msra.mxu0 %v3436
      %3468 = vmatpush.msra.mxu0 %v3434
      %3469 = vmatmul.f32.gmra.mxu0 %v3451
      %v3470 = vpop.f32.mrf.mxu0
      %v3471 = vadd.f32 0.0, %v3470
      %3472 = vdwg.mxu0
      %3473 = vmatpush.msra.mxu0 0.0
      %3474 = vmatpush.msra.mxu0 0.0
      %3475 = vmatpush.msra.mxu0 0.0
      %3476 = vmatpush.msra.mxu0 0.0
      %3477 = vmatpush.msra.mxu0 0.0
      %3478 = vmatpush.msra.mxu0 0.0
      %3479 = vmatpush.msra.mxu0 0.0
      %3480 = vmatpush.msra.mxu0 0.0
      %3481 = vmatpush.msra.mxu0 %v3449
      %3482 = vmatpush.msra.mxu0 %v3447
      %3483 = vmatpush.msra.mxu0 %v3445
      %3484 = vmatpush.msra.mxu0 %v3443
      %3485 = vmatpush.msra.mxu0 %v3441
      %3486 = vmatpush.msra.mxu0 %v3439
      %3487 = vmatpush.msra.mxu0 %v3437
      %3488 = vmatpush.msra.mxu0 %v3435
      %3489 = vmatmul.f32.gmra.mxu0 %v3451
      %v3490 = vpop.f32.mrf.mxu0
      %v3491 = vadd.f32 0.0, %v3490
      %3492 = vdwg.mxu0
      %v3493 = vadd.f32 %v3419, %v3471
      %v3494 = vadd.f32 %v3420, %v3491
      %v3495 = vmax.f32 %v3129, %v3203
      %v3496 = vmax.f32 %v3495, %v3205
      %v3497 = vmax.f32 %v3496, %v3426
      %v3498 = vld [vmem:[%s3271 + $0x7] sm:$0x1]
      %v3499 = vmax.f32 %v3497, %v3498
      %v3500 = vld [vmem:[%s3271 + $0x8] sm:$0x1]
      %v3501 = vmax.f32 %v3499, %v3500
      %v3502 = vmax.f32 %v3501, %v3431
      %v3503 = vld [vmem:[%s3278 + $0x7] sm:$0x1]
      %v3504 = vmax.f32 %v3502, %v3503
      %v3505 = vld [vmem:[%s3278 + $0x8] sm:$0x1]
      %v3506 = vmax.f32 %v3504, %v3505
      %s3507 = scalar_lea.vmem %s9, 896
      %v3508 = vld [vmem:[%s3507] sm:$0xff]
      %v3509 = vld [vmem:[%s3507 + $0x8] sm:$0xff]
      %v3510 = vld [vmem:[%s3507 + $0x10] sm:$0xff]
      %v3511 = vld [vmem:[%s3507 + $0x18] sm:$0xff]
      %v3512 = vld [vmem:[%s3507 + $0x20] sm:$0xff]
      %v3513 = vld [vmem:[%s3507 + $0x28] sm:$0xff]
      %v3514 = vld [vmem:[%s3507 + $0x30] sm:$0xff]
      %v3515 = vld [vmem:[%s3507 + $0x38] sm:$0xff]
      %v3516 = vld [vmem:[%s3507 + $0x40] sm:$0xff]
      %v3517 = vld [vmem:[%s3507 + $0x48] sm:$0xff]
      %v3518 = vld [vmem:[%s3507 + $0x50] sm:$0xff]
      %v3519 = vld [vmem:[%s3507 + $0x58] sm:$0xff]
      %v3520 = vld [vmem:[%s3507 + $0x60] sm:$0xff]
      %v3521 = vld [vmem:[%s3507 + $0x68] sm:$0xff]
      %v3522 = vld [vmem:[%s3507 + $0x70] sm:$0xff]
      %v3523 = vld [vmem:[%s3507 + $0x78] sm:$0xff]
      %v3525 = vsel %vm3030, %v3506, 0
      %3527 = vmatpush.msra.mxu0 0.0
      %3528 = vmatpush.msra.mxu0 0.0
      %3529 = vmatpush.msra.mxu0 0.0
      %3530 = vmatpush.msra.mxu0 0.0
      %3531 = vmatpush.msra.mxu0 0.0
      %3532 = vmatpush.msra.mxu0 0.0
      %3533 = vmatpush.msra.mxu0 0.0
      %3534 = vmatpush.msra.mxu0 0.0
      %3535 = vmatpush.msra.mxu0 %v3522
      %3536 = vmatpush.msra.mxu0 %v3520
      %3537 = vmatpush.msra.mxu0 %v3518
      %3538 = vmatpush.msra.mxu0 %v3516
      %3539 = vmatpush.msra.mxu0 %v3514
      %3540 = vmatpush.msra.mxu0 %v3512
      %3541 = vmatpush.msra.mxu0 %v3510
      %3542 = vmatpush.msra.mxu0 %v3508
      %3543 = vmatmul.f32.gmra.mxu0 %v3525
      %v3544 = vpop.f32.mrf.mxu0
      %v3545 = vadd.f32 0.0, %v3544
      %3546 = vdwg.mxu0
      %3547 = vmatpush.msra.mxu0 0.0
      %3548 = vmatpush.msra.mxu0 0.0
      %3549 = vmatpush.msra.mxu0 0.0
      %3550 = vmatpush.msra.mxu0 0.0
      %3551 = vmatpush.msra.mxu0 0.0
      %3552 = vmatpush.msra.mxu0 0.0
      %3553 = vmatpush.msra.mxu0 0.0
      %3554 = vmatpush.msra.mxu0 0.0
      %3555 = vmatpush.msra.mxu0 %v3523
      %3556 = vmatpush.msra.mxu0 %v3521
      %3557 = vmatpush.msra.mxu0 %v3519
      %3558 = vmatpush.msra.mxu0 %v3517
      %3559 = vmatpush.msra.mxu0 %v3515
      %3560 = vmatpush.msra.mxu0 %v3513
      %3561 = vmatpush.msra.mxu0 %v3511
      %3562 = vmatpush.msra.mxu0 %v3509
      %3563 = vmatmul.f32.gmra.mxu0 %v3525
      %v3564 = vpop.f32.mrf.mxu0
      %v3565 = vadd.f32 0.0, %v3564
      %3566 = vdwg.mxu0
      %v3567 = vadd.f32 %v3493, %v3545
      %v3568 = vadd.f32 %v3494, %v3565
      %v3569 = vmax.f32 %v3279, %v3281
      %v3570 = vmax.f32 %v3569, %v3283
      %s3571 = scalar_lea.vmem [#allocation6], 80
      %v3572 = vld [vmem:[%s3571] sm:$0x1]
      %v3573 = vmax.f32 %v3570, %v3572
      %v3574 = vld [vmem:[%s3571 + $0x1] sm:$0x1]
      %v3575 = vmax.f32 %v3573, %v3574
      %v3576 = vld [vmem:[%s3571 + $0x2] sm:$0x1]
      %v3577 = vmax.f32 %v3575, %v3576
      %s3578 = scalar_lea.vmem [#allocation6], 96
      %v3579 = vld [vmem:[%s3578] sm:$0x1]
      %v3580 = vmax.f32 %v3577, %v3579
      %v3581 = vld [vmem:[%s3578 + $0x1] sm:$0x1]
      %v3582 = vmax.f32 %v3580, %v3581
      %v3583 = vld [vmem:[%s3578 + $0x2] sm:$0x1]
      %v3584 = vmax.f32 %v3582, %v3583
      %s3585 = scalar_lea.vmem %s9, 1024
      %v3586 = vld [vmem:[%s3585] sm:$0xff]
      %v3587 = vld [vmem:[%s3585 + $0x8] sm:$0xff]
      %v3588 = vld [vmem:[%s3585 + $0x10] sm:$0xff]
      %v3589 = vld [vmem:[%s3585 + $0x18] sm:$0xff]
      %v3590 = vld [vmem:[%s3585 + $0x20] sm:$0xff]
      %v3591 = vld [vmem:[%s3585 + $0x28] sm:$0xff]
      %v3592 = vld [vmem:[%s3585 + $0x30] sm:$0xff]
      %v3593 = vld [vmem:[%s3585 + $0x38] sm:$0xff]
      %v3594 = vld [vmem:[%s3585 + $0x40] sm:$0xff]
      %v3595 = vld [vmem:[%s3585 + $0x48] sm:$0xff]
      %v3596 = vld [vmem:[%s3585 + $0x50] sm:$0xff]
      %v3597 = vld [vmem:[%s3585 + $0x58] sm:$0xff]
      %v3598 = vld [vmem:[%s3585 + $0x60] sm:$0xff]
      %v3599 = vld [vmem:[%s3585 + $0x68] sm:$0xff]
      %v3600 = vld [vmem:[%s3585 + $0x70] sm:$0xff]
      %v3601 = vld [vmem:[%s3585 + $0x78] sm:$0xff]
      %v3603 = vsel %vm3030, %v3584, 0
      %3605 = vmatpush.msra.mxu0 0.0
      %3606 = vmatpush.msra.mxu0 0.0
      %3607 = vmatpush.msra.mxu0 0.0
      %3608 = vmatpush.msra.mxu0 0.0
      %3609 = vmatpush.msra.mxu0 0.0
      %3610 = vmatpush.msra.mxu0 0.0
      %3611 = vmatpush.msra.mxu0 0.0
      %3612 = vmatpush.msra.mxu0 0.0
      %3613 = vmatpush.msra.mxu0 %v3600
      %3614 = vmatpush.msra.mxu0 %v3598
      %3615 = vmatpush.msra.mxu0 %v3596
      %3616 = vmatpush.msra.mxu0 %v3594
      %3617 = vmatpush.msra.mxu0 %v3592
      %3618 = vmatpush.msra.mxu0 %v3590
      %3619 = vmatpush.msra.mxu0 %v3588
      %3620 = vmatpush.msra.mxu0 %v3586
      %3621 = vmatmul.f32.gmra.mxu0 %v3603
      %v3622 = vpop.f32.mrf.mxu0
      %v3623 = vadd.f32 0.0, %v3622
      %3624 = vdwg.mxu0
      %3625 = vmatpush.msra.mxu0 0.0
      %3626 = vmatpush.msra.mxu0 0.0
      %3627 = vmatpush.msra.mxu0 0.0
      %3628 = vmatpush.msra.mxu0 0.0
      %3629 = vmatpush.msra.mxu0 0.0
      %3630 = vmatpush.msra.mxu0 0.0
      %3631 = vmatpush.msra.mxu0 0.0
      %3632 = vmatpush.msra.mxu0 0.0
      %3633 = vmatpush.msra.mxu0 %v3601
      %3634 = vmatpush.msra.mxu0 %v3599
      %3635 = vmatpush.msra.mxu0 %v3597
      %3636 = vmatpush.msra.mxu0 %v3595
      %3637 = vmatpush.msra.mxu0 %v3593
      %3638 = vmatpush.msra.mxu0 %v3591
      %3639 = vmatpush.msra.mxu0 %v3589
      %3640 = vmatpush.msra.mxu0 %v3587
      %3641 = vmatmul.f32.gmra.mxu0 %v3603
      %v3642 = vpop.f32.mrf.mxu0
      %v3643 = vadd.f32 0.0, %v3642
      %3644 = vdwg.mxu0
      %v3645 = vadd.f32 %v3567, %v3623
      %v3646 = vadd.f32 %v3568, %v3643
      %v3647 = vmax.f32 %v3283, %v3355
      %v3648 = vmax.f32 %v3647, %v3357
      %v3649 = vmax.f32 %v3648, %v3576
      %v3650 = vld [vmem:[%s3571 + $0x3] sm:$0x1]
      %v3651 = vmax.f32 %v3649, %v3650
      %v3652 = vld [vmem:[%s3571 + $0x4] sm:$0x1]
      %v3653 = vmax.f32 %v3651, %v3652
      %v3654 = vmax.f32 %v3653, %v3583
      %v3655 = vld [vmem:[%s3578 + $0x3] sm:$0x1]
      %v3656 = vmax.f32 %v3654, %v3655
      %v3657 = vld [vmem:[%s3578 + $0x4] sm:$0x1]
      %v3658 = vmax.f32 %v3656, %v3657
      %s3659 = scalar_lea.vmem %s9, 1152
      %v3660 = vld [vmem:[%s3659] sm:$0xff]
      %v3661 = vld [vmem:[%s3659 + $0x8] sm:$0xff]
      %v3662 = vld [vmem:[%s3659 + $0x10] sm:$0xff]
      %v3663 = vld [vmem:[%s3659 + $0x18] sm:$0xff]
      %v3664 = vld [vmem:[%s3659 + $0x20] sm:$0xff]
      %v3665 = vld [vmem:[%s3659 + $0x28] sm:$0xff]
      %v3666 = vld [vmem:[%s3659 + $0x30] sm:$0xff]
      %v3667 = vld [vmem:[%s3659 + $0x38] sm:$0xff]
      %v3668 = vld [vmem:[%s3659 + $0x40] sm:$0xff]
      %v3669 = vld [vmem:[%s3659 + $0x48] sm:$0xff]
      %v3670 = vld [vmem:[%s3659 + $0x50] sm:$0xff]
      %v3671 = vld [vmem:[%s3659 + $0x58] sm:$0xff]
      %v3672 = vld [vmem:[%s3659 + $0x60] sm:$0xff]
      %v3673 = vld [vmem:[%s3659 + $0x68] sm:$0xff]
      %v3674 = vld [vmem:[%s3659 + $0x70] sm:$0xff]
      %v3675 = vld [vmem:[%s3659 + $0x78] sm:$0xff]
      %v3677 = vsel %vm3030, %v3658, 0
      %3679 = vmatpush.msra.mxu0 0.0
      %3680 = vmatpush.msra.mxu0 0.0
      %3681 = vmatpush.msra.mxu0 0.0
      %3682 = vmatpush.msra.mxu0 0.0
      %3683 = vmatpush.msra.mxu0 0.0
      %3684 = vmatpush.msra.mxu0 0.0
      %3685 = vmatpush.msra.mxu0 0.0
      %3686 = vmatpush.msra.mxu0 0.0
      %3687 = vmatpush.msra.mxu0 %v3674
      %3688 = vmatpush.msra.mxu0 %v3672
      %3689 = vmatpush.msra.mxu0 %v3670
      %3690 = vmatpush.msra.mxu0 %v3668
      %3691 = vmatpush.msra.mxu0 %v3666
      %3692 = vmatpush.msra.mxu0 %v3664
      %3693 = vmatpush.msra.mxu0 %v3662
      %3694 = vmatpush.msra.mxu0 %v3660
      %3695 = vmatmul.f32.gmra.mxu0 %v3677
      %v3696 = vpop.f32.mrf.mxu0
      %v3697 = vadd.f32 0.0, %v3696
      %3698 = vdwg.mxu0
      %3699 = vmatpush.msra.mxu0 0.0
      %3700 = vmatpush.msra.mxu0 0.0
      %3701 = vmatpush.msra.mxu0 0.0
      %3702 = vmatpush.msra.mxu0 0.0
      %3703 = vmatpush.msra.mxu0 0.0
      %3704 = vmatpush.msra.mxu0 0.0
      %3705 = vmatpush.msra.mxu0 0.0
      %3706 = vmatpush.msra.mxu0 0.0
      %3707 = vmatpush.msra.mxu0 %v3675
      %3708 = vmatpush.msra.mxu0 %v3673
      %3709 = vmatpush.msra.mxu0 %v3671
      %3710 = vmatpush.msra.mxu0 %v3669
      %3711 = vmatpush.msra.mxu0 %v3667
      %3712 = vmatpush.msra.mxu0 %v3665
      %3713 = vmatpush.msra.mxu0 %v3663
      %3714 = vmatpush.msra.mxu0 %v3661
      %3715 = vmatmul.f32.gmra.mxu0 %v3677
      %v3716 = vpop.f32.mrf.mxu0
      %v3717 = vadd.f32 0.0, %v3716
      %3718 = vdwg.mxu0
      %v3719 = vadd.f32 %v3645, %v3697
      %v3720 = vadd.f32 %v3646, %v3717
      %v3721 = vmax.f32 %v3357, %v3429
      %v3722 = vmax.f32 %v3721, %v3431
      %v3723 = vmax.f32 %v3722, %v3652
      %v3724 = vld [vmem:[%s3571 + $0x5] sm:$0x1]
      %v3725 = vmax.f32 %v3723, %v3724
      %v3726 = vld [vmem:[%s3571 + $0x6] sm:$0x1]
      %v3727 = vmax.f32 %v3725, %v3726
      %v3728 = vmax.f32 %v3727, %v3657
      %v3729 = vld [vmem:[%s3578 + $0x5] sm:$0x1]
      %v3730 = vmax.f32 %v3728, %v3729
      %v3731 = vld [vmem:[%s3578 + $0x6] sm:$0x1]
      %v3732 = vmax.f32 %v3730, %v3731
      %s3733 = scalar_lea.vmem %s9, 1280
      %v3734 = vld [vmem:[%s3733] sm:$0xff]
      %v3735 = vld [vmem:[%s3733 + $0x8] sm:$0xff]
      %v3736 = vld [vmem:[%s3733 + $0x10] sm:$0xff]
      %v3737 = vld [vmem:[%s3733 + $0x18] sm:$0xff]
      %v3738 = vld [vmem:[%s3733 + $0x20] sm:$0xff]
      %v3739 = vld [vmem:[%s3733 + $0x28] sm:$0xff]
      %v3740 = vld [vmem:[%s3733 + $0x30] sm:$0xff]
      %v3741 = vld [vmem:[%s3733 + $0x38] sm:$0xff]
      %v3742 = vld [vmem:[%s3733 + $0x40] sm:$0xff]
      %v3743 = vld [vmem:[%s3733 + $0x48] sm:$0xff]
      %v3744 = vld [vmem:[%s3733 + $0x50] sm:$0xff]
      %v3745 = vld [vmem:[%s3733 + $0x58] sm:$0xff]
      %v3746 = vld [vmem:[%s3733 + $0x60] sm:$0xff]
      %v3747 = vld [vmem:[%s3733 + $0x68] sm:$0xff]
      %v3748 = vld [vmem:[%s3733 + $0x70] sm:$0xff]
      %v3749 = vld [vmem:[%s3733 + $0x78] sm:$0xff]
      %v3751 = vsel %vm3030, %v3732, 0
      %3753 = vmatpush.msra.mxu0 0.0
      %3754 = vmatpush.msra.mxu0 0.0
      %3755 = vmatpush.msra.mxu0 0.0
      %3756 = vmatpush.msra.mxu0 0.0
      %3757 = vmatpush.msra.mxu0 0.0
      %3758 = vmatpush.msra.mxu0 0.0
      %3759 = vmatpush.msra.mxu0 0.0
      %3760 = vmatpush.msra.mxu0 0.0
      %3761 = vmatpush.msra.mxu0 %v3748
      %3762 = vmatpush.msra.mxu0 %v3746
      %3763 = vmatpush.msra.mxu0 %v3744
      %3764 = vmatpush.msra.mxu0 %v3742
      %3765 = vmatpush.msra.mxu0 %v3740
      %3766 = vmatpush.msra.mxu0 %v3738
      %3767 = vmatpush.msra.mxu0 %v3736
      %3768 = vmatpush.msra.mxu0 %v3734
      %3769 = vmatmul.f32.gmra.mxu0 %v3751
      %v3770 = vpop.f32.mrf.mxu0
      %v3771 = vadd.f32 0.0, %v3770
      %3772 = vdwg.mxu0
      %3773 = vmatpush.msra.mxu0 0.0
      %3774 = vmatpush.msra.mxu0 0.0
      %3775 = vmatpush.msra.mxu0 0.0
      %3776 = vmatpush.msra.mxu0 0.0
      %3777 = vmatpush.msra.mxu0 0.0
      %3778 = vmatpush.msra.mxu0 0.0
      %3779 = vmatpush.msra.mxu0 0.0
      %3780 = vmatpush.msra.mxu0 0.0
      %3781 = vmatpush.msra.mxu0 %v3749
      %3782 = vmatpush.msra.mxu0 %v3747
      %3783 = vmatpush.msra.mxu0 %v3745
      %3784 = vmatpush.msra.mxu0 %v3743
      %3785 = vmatpush.msra.mxu0 %v3741
      %3786 = vmatpush.msra.mxu0 %v3739
      %3787 = vmatpush.msra.mxu0 %v3737
      %3788 = vmatpush.msra.mxu0 %v3735
      %3789 = vmatmul.f32.gmra.mxu0 %v3751
      %v3790 = vpop.f32.mrf.mxu0
      %v3791 = vadd.f32 0.0, %v3790
      %3792 = vdwg.mxu0
      %v3793 = vadd.f32 %v3719, %v3771
      %v3794 = vadd.f32 %v3720, %v3791
      %v3795 = vmax.f32 %v3431, %v3503
      %v3796 = vmax.f32 %v3795, %v3505
      %v3797 = vmax.f32 %v3796, %v3726
      %v3798 = vld [vmem:[%s3571 + $0x7] sm:$0x1]
      %v3799 = vmax.f32 %v3797, %v3798
      %v3800 = vld [vmem:[%s3571 + $0x8] sm:$0x1]
      %v3801 = vmax.f32 %v3799, %v3800
      %v3802 = vmax.f32 %v3801, %v3731
      %v3803 = vld [vmem:[%s3578 + $0x7] sm:$0x1]
      %v3804 = vmax.f32 %v3802, %v3803
      %v3805 = vld [vmem:[%s3578 + $0x8] sm:$0x1]
      %v3806 = vmax.f32 %v3804, %v3805
      %s3807 = scalar_lea.vmem %s9, 1408
      %v3808 = vld [vmem:[%s3807] sm:$0xff]
      %v3809 = vld [vmem:[%s3807 + $0x8] sm:$0xff]
      %v3810 = vld [vmem:[%s3807 + $0x10] sm:$0xff]
      %v3811 = vld [vmem:[%s3807 + $0x18] sm:$0xff]
      %v3812 = vld [vmem:[%s3807 + $0x20] sm:$0xff]
      %v3813 = vld [vmem:[%s3807 + $0x28] sm:$0xff]
      %v3814 = vld [vmem:[%s3807 + $0x30] sm:$0xff]
      %v3815 = vld [vmem:[%s3807 + $0x38] sm:$0xff]
      %v3816 = vld [vmem:[%s3807 + $0x40] sm:$0xff]
      %v3817 = vld [vmem:[%s3807 + $0x48] sm:$0xff]
      %v3818 = vld [vmem:[%s3807 + $0x50] sm:$0xff]
      %v3819 = vld [vmem:[%s3807 + $0x58] sm:$0xff]
      %v3820 = vld [vmem:[%s3807 + $0x60] sm:$0xff]
      %v3821 = vld [vmem:[%s3807 + $0x68] sm:$0xff]
      %v3822 = vld [vmem:[%s3807 + $0x70] sm:$0xff]
      %v3823 = vld [vmem:[%s3807 + $0x78] sm:$0xff]
      %v3825 = vsel %vm3030, %v3806, 0
      %3827 = vmatpush.msra.mxu0 0.0
      %3828 = vmatpush.msra.mxu0 0.0
      %3829 = vmatpush.msra.mxu0 0.0
      %3830 = vmatpush.msra.mxu0 0.0
      %3831 = vmatpush.msra.mxu0 0.0
      %3832 = vmatpush.msra.mxu0 0.0
      %3833 = vmatpush.msra.mxu0 0.0
      %3834 = vmatpush.msra.mxu0 0.0
      %3835 = vmatpush.msra.mxu0 %v3822
      %3836 = vmatpush.msra.mxu0 %v3820
      %3837 = vmatpush.msra.mxu0 %v3818
      %3838 = vmatpush.msra.mxu0 %v3816
      %3839 = vmatpush.msra.mxu0 %v3814
      %3840 = vmatpush.msra.mxu0 %v3812
      %3841 = vmatpush.msra.mxu0 %v3810
      %3842 = vmatpush.msra.mxu0 %v3808
      %3843 = vmatmul.f32.gmra.mxu0 %v3825
      %v3844 = vpop.f32.mrf.mxu0
      %v3845 = vadd.f32 0.0, %v3844
      %3846 = vdwg.mxu0
      %3847 = vmatpush.msra.mxu0 0.0
      %3848 = vmatpush.msra.mxu0 0.0
      %3849 = vmatpush.msra.mxu0 0.0
      %3850 = vmatpush.msra.mxu0 0.0
      %3851 = vmatpush.msra.mxu0 0.0
      %3852 = vmatpush.msra.mxu0 0.0
      %3853 = vmatpush.msra.mxu0 0.0
      %3854 = vmatpush.msra.mxu0 0.0
      %3855 = vmatpush.msra.mxu0 %v3823
      %3856 = vmatpush.msra.mxu0 %v3821
      %3857 = vmatpush.msra.mxu0 %v3819
      %3858 = vmatpush.msra.mxu0 %v3817
      %3859 = vmatpush.msra.mxu0 %v3815
      %3860 = vmatpush.msra.mxu0 %v3813
      %3861 = vmatpush.msra.mxu0 %v3811
      %3862 = vmatpush.msra.mxu0 %v3809
      %3863 = vmatmul.f32.gmra.mxu0 %v3825
      %v3864 = vpop.f32.mrf.mxu0
      %v3865 = vadd.f32 0.0, %v3864
      %3866 = vdwg.mxu0
      %v3867 = vadd.f32 %v3793, %v3845
      %v3868 = vadd.f32 %v3794, %v3865
      %v3869 = vmax.f32 %v3579, %v3581
      %v3870 = vmax.f32 %v3869, %v3583
      %s3871 = scalar_lea.vmem [#allocation6], 112
      %v3872 = vld [vmem:[%s3871] sm:$0x1]
      %v3873 = vmax.f32 %v3870, %v3872
      %v3874 = vld [vmem:[%s3871 + $0x1] sm:$0x1]
      %v3875 = vmax.f32 %v3873, %v3874
      %v3876 = vld [vmem:[%s3871 + $0x2] sm:$0x1]
      %v3877 = vmax.f32 %v3875, %v3876
      %s3878 = scalar_lea.vmem [#allocation6], 128
      %v3879 = vld [vmem:[%s3878] sm:$0x1]
      %v3880 = vmax.f32 %v3877, %v3879
      %v3881 = vld [vmem:[%s3878 + $0x1] sm:$0x1]
      %v3882 = vmax.f32 %v3880, %v3881
      %v3883 = vld [vmem:[%s3878 + $0x2] sm:$0x1]
      %v3884 = vmax.f32 %v3882, %v3883
      %s3885 = scalar_lea.vmem %s9, 1536
      %v3886 = vld [vmem:[%s3885] sm:$0xff]
      %v3887 = vld [vmem:[%s3885 + $0x8] sm:$0xff]
      %v3888 = vld [vmem:[%s3885 + $0x10] sm:$0xff]
      %v3889 = vld [vmem:[%s3885 + $0x18] sm:$0xff]
      %v3890 = vld [vmem:[%s3885 + $0x20] sm:$0xff]
      %v3891 = vld [vmem:[%s3885 + $0x28] sm:$0xff]
      %v3892 = vld [vmem:[%s3885 + $0x30] sm:$0xff]
      %v3893 = vld [vmem:[%s3885 + $0x38] sm:$0xff]
      %v3894 = vld [vmem:[%s3885 + $0x40] sm:$0xff]
      %v3895 = vld [vmem:[%s3885 + $0x48] sm:$0xff]
      %v3896 = vld [vmem:[%s3885 + $0x50] sm:$0xff]
      %v3897 = vld [vmem:[%s3885 + $0x58] sm:$0xff]
      %v3898 = vld [vmem:[%s3885 + $0x60] sm:$0xff]
      %v3899 = vld [vmem:[%s3885 + $0x68] sm:$0xff]
      %v3900 = vld [vmem:[%s3885 + $0x70] sm:$0xff]
      %v3901 = vld [vmem:[%s3885 + $0x78] sm:$0xff]
      %v3903 = vsel %vm3030, %v3884, 0
      %3905 = vmatpush.msra.mxu0 0.0
      %3906 = vmatpush.msra.mxu0 0.0
      %3907 = vmatpush.msra.mxu0 0.0
      %3908 = vmatpush.msra.mxu0 0.0
      %3909 = vmatpush.msra.mxu0 0.0
      %3910 = vmatpush.msra.mxu0 0.0
      %3911 = vmatpush.msra.mxu0 0.0
      %3912 = vmatpush.msra.mxu0 0.0
      %3913 = vmatpush.msra.mxu0 %v3900
      %3914 = vmatpush.msra.mxu0 %v3898
      %3915 = vmatpush.msra.mxu0 %v3896
      %3916 = vmatpush.msra.mxu0 %v3894
      %3917 = vmatpush.msra.mxu0 %v3892
      %3918 = vmatpush.msra.mxu0 %v3890
      %3919 = vmatpush.msra.mxu0 %v3888
      %3920 = vmatpush.msra.mxu0 %v3886
      %3921 = vmatmul.f32.gmra.mxu0 %v3903
      %v3922 = vpop.f32.mrf.mxu0
      %v3923 = vadd.f32 0.0, %v3922
      %3924 = vdwg.mxu0
      %3925 = vmatpush.msra.mxu0 0.0
      %3926 = vmatpush.msra.mxu0 0.0
      %3927 = vmatpush.msra.mxu0 0.0
      %3928 = vmatpush.msra.mxu0 0.0
      %3929 = vmatpush.msra.mxu0 0.0
      %3930 = vmatpush.msra.mxu0 0.0
      %3931 = vmatpush.msra.mxu0 0.0
      %3932 = vmatpush.msra.mxu0 0.0
      %3933 = vmatpush.msra.mxu0 %v3901
      %3934 = vmatpush.msra.mxu0 %v3899
      %3935 = vmatpush.msra.mxu0 %v3897
      %3936 = vmatpush.msra.mxu0 %v3895
      %3937 = vmatpush.msra.mxu0 %v3893
      %3938 = vmatpush.msra.mxu0 %v3891
      %3939 = vmatpush.msra.mxu0 %v3889
      %3940 = vmatpush.msra.mxu0 %v3887
      %3941 = vmatmul.f32.gmra.mxu0 %v3903
      %v3942 = vpop.f32.mrf.mxu0
      %v3943 = vadd.f32 0.0, %v3942
      %3944 = vdwg.mxu0
      %v3945 = vadd.f32 %v3867, %v3923
      %v3946 = vadd.f32 %v3868, %v3943
      %v3947 = vmax.f32 %v3583, %v3655
      %v3948 = vmax.f32 %v3947, %v3657
      %v3949 = vmax.f32 %v3948, %v3876
      %v3950 = vld [vmem:[%s3871 + $0x3] sm:$0x1]
      %v3951 = vmax.f32 %v3949, %v3950
      %v3952 = vld [vmem:[%s3871 + $0x4] sm:$0x1]
      %v3953 = vmax.f32 %v3951, %v3952
      %v3954 = vmax.f32 %v3953, %v3883
      %v3955 = vld [vmem:[%s3878 + $0x3] sm:$0x1]
      %v3956 = vmax.f32 %v3954, %v3955
      %v3957 = vld [vmem:[%s3878 + $0x4] sm:$0x1]
      %v3958 = vmax.f32 %v3956, %v3957
      %s3959 = scalar_lea.vmem %s9, 1664
      %v3960 = vld [vmem:[%s3959] sm:$0xff]
      %v3961 = vld [vmem:[%s3959 + $0x8] sm:$0xff]
      %v3962 = vld [vmem:[%s3959 + $0x10] sm:$0xff]
      %v3963 = vld [vmem:[%s3959 + $0x18] sm:$0xff]
      %v3964 = vld [vmem:[%s3959 + $0x20] sm:$0xff]
      %v3965 = vld [vmem:[%s3959 + $0x28] sm:$0xff]
      %v3966 = vld [vmem:[%s3959 + $0x30] sm:$0xff]
      %v3967 = vld [vmem:[%s3959 + $0x38] sm:$0xff]
      %v3968 = vld [vmem:[%s3959 + $0x40] sm:$0xff]
      %v3969 = vld [vmem:[%s3959 + $0x48] sm:$0xff]
      %v3970 = vld [vmem:[%s3959 + $0x50] sm:$0xff]
      %v3971 = vld [vmem:[%s3959 + $0x58] sm:$0xff]
      %v3972 = vld [vmem:[%s3959 + $0x60] sm:$0xff]
      %v3973 = vld [vmem:[%s3959 + $0x68] sm:$0xff]
      %v3974 = vld [vmem:[%s3959 + $0x70] sm:$0xff]
      %v3975 = vld [vmem:[%s3959 + $0x78] sm:$0xff]
      %v3977 = vsel %vm3030, %v3958, 0
      %3979 = vmatpush.msra.mxu0 0.0
      %3980 = vmatpush.msra.mxu0 0.0
      %3981 = vmatpush.msra.mxu0 0.0
      %3982 = vmatpush.msra.mxu0 0.0
      %3983 = vmatpush.msra.mxu0 0.0
      %3984 = vmatpush.msra.mxu0 0.0
      %3985 = vmatpush.msra.mxu0 0.0
      %3986 = vmatpush.msra.mxu0 0.0
      %3987 = vmatpush.msra.mxu0 %v3974
      %3988 = vmatpush.msra.mxu0 %v3972
      %3989 = vmatpush.msra.mxu0 %v3970
      %3990 = vmatpush.msra.mxu0 %v3968
      %3991 = vmatpush.msra.mxu0 %v3966
      %3992 = vmatpush.msra.mxu0 %v3964
      %3993 = vmatpush.msra.mxu0 %v3962
      %3994 = vmatpush.msra.mxu0 %v3960
      %3995 = vmatmul.f32.gmra.mxu0 %v3977
      %v3996 = vpop.f32.mrf.mxu0
      %v3997 = vadd.f32 0.0, %v3996
      %3998 = vdwg.mxu0
      %3999 = vmatpush.msra.mxu0 0.0
      %4000 = vmatpush.msra.mxu0 0.0
      %4001 = vmatpush.msra.mxu0 0.0
      %4002 = vmatpush.msra.mxu0 0.0
      %4003 = vmatpush.msra.mxu0 0.0
      %4004 = vmatpush.msra.mxu0 0.0
      %4005 = vmatpush.msra.mxu0 0.0
      %4006 = vmatpush.msra.mxu0 0.0
      %4007 = vmatpush.msra.mxu0 %v3975
      %4008 = vmatpush.msra.mxu0 %v3973
      %4009 = vmatpush.msra.mxu0 %v3971
      %4010 = vmatpush.msra.mxu0 %v3969
      %4011 = vmatpush.msra.mxu0 %v3967
      %4012 = vmatpush.msra.mxu0 %v3965
      %4013 = vmatpush.msra.mxu0 %v3963
      %4014 = vmatpush.msra.mxu0 %v3961
      %4015 = vmatmul.f32.gmra.mxu0 %v3977
      %v4016 = vpop.f32.mrf.mxu0
      %v4017 = vadd.f32 0.0, %v4016
      %4018 = vdwg.mxu0
      %v4019 = vadd.f32 %v3945, %v3997
      %v4020 = vadd.f32 %v3946, %v4017
      %v4021 = vmax.f32 %v3657, %v3729
      %v4022 = vmax.f32 %v4021, %v3731
      %v4023 = vmax.f32 %v4022, %v3952
      %v4024 = vld [vmem:[%s3871 + $0x5] sm:$0x1]
      %v4025 = vmax.f32 %v4023, %v4024
      %v4026 = vld [vmem:[%s3871 + $0x6] sm:$0x1]
      %v4027 = vmax.f32 %v4025, %v4026
      %v4028 = vmax.f32 %v4027, %v3957
      %v4029 = vld [vmem:[%s3878 + $0x5] sm:$0x1]
      %v4030 = vmax.f32 %v4028, %v4029
      %v4031 = vld [vmem:[%s3878 + $0x6] sm:$0x1]
      %v4032 = vmax.f32 %v4030, %v4031
      %s4033 = scalar_lea.vmem %s9, 1792
      %v4034 = vld [vmem:[%s4033] sm:$0xff]
      %v4035 = vld [vmem:[%s4033 + $0x8] sm:$0xff]
      %v4036 = vld [vmem:[%s4033 + $0x10] sm:$0xff]
      %v4037 = vld [vmem:[%s4033 + $0x18] sm:$0xff]
      %v4038 = vld [vmem:[%s4033 + $0x20] sm:$0xff]
      %v4039 = vld [vmem:[%s4033 + $0x28] sm:$0xff]
      %v4040 = vld [vmem:[%s4033 + $0x30] sm:$0xff]
      %v4041 = vld [vmem:[%s4033 + $0x38] sm:$0xff]
      %v4042 = vld [vmem:[%s4033 + $0x40] sm:$0xff]
      %v4043 = vld [vmem:[%s4033 + $0x48] sm:$0xff]
      %v4044 = vld [vmem:[%s4033 + $0x50] sm:$0xff]
      %v4045 = vld [vmem:[%s4033 + $0x58] sm:$0xff]
      %v4046 = vld [vmem:[%s4033 + $0x60] sm:$0xff]
      %v4047 = vld [vmem:[%s4033 + $0x68] sm:$0xff]
      %v4048 = vld [vmem:[%s4033 + $0x70] sm:$0xff]
      %v4049 = vld [vmem:[%s4033 + $0x78] sm:$0xff]
      %v4051 = vsel %vm3030, %v4032, 0
      %4053 = vmatpush.msra.mxu0 0.0
      %4054 = vmatpush.msra.mxu0 0.0
      %4055 = vmatpush.msra.mxu0 0.0
      %4056 = vmatpush.msra.mxu0 0.0
      %4057 = vmatpush.msra.mxu0 0.0
      %4058 = vmatpush.msra.mxu0 0.0
      %4059 = vmatpush.msra.mxu0 0.0
      %4060 = vmatpush.msra.mxu0 0.0
      %4061 = vmatpush.msra.mxu0 %v4048
      %4062 = vmatpush.msra.mxu0 %v4046
      %4063 = vmatpush.msra.mxu0 %v4044
      %4064 = vmatpush.msra.mxu0 %v4042
      %4065 = vmatpush.msra.mxu0 %v4040
      %4066 = vmatpush.msra.mxu0 %v4038
      %4067 = vmatpush.msra.mxu0 %v4036
      %4068 = vmatpush.msra.mxu0 %v4034
      %4069 = vmatmul.f32.gmra.mxu0 %v4051
      %v4070 = vpop.f32.mrf.mxu0
      %v4071 = vadd.f32 0.0, %v4070
      %4072 = vdwg.mxu0
      %4073 = vmatpush.msra.mxu0 0.0
      %4074 = vmatpush.msra.mxu0 0.0
      %4075 = vmatpush.msra.mxu0 0.0
      %4076 = vmatpush.msra.mxu0 0.0
      %4077 = vmatpush.msra.mxu0 0.0
      %4078 = vmatpush.msra.mxu0 0.0
      %4079 = vmatpush.msra.mxu0 0.0
      %4080 = vmatpush.msra.mxu0 0.0
      %4081 = vmatpush.msra.mxu0 %v4049
      %4082 = vmatpush.msra.mxu0 %v4047
      %4083 = vmatpush.msra.mxu0 %v4045
      %4084 = vmatpush.msra.mxu0 %v4043
      %4085 = vmatpush.msra.mxu0 %v4041
      %4086 = vmatpush.msra.mxu0 %v4039
      %4087 = vmatpush.msra.mxu0 %v4037
      %4088 = vmatpush.msra.mxu0 %v4035
      %4089 = vmatmul.f32.gmra.mxu0 %v4051
      %v4090 = vpop.f32.mrf.mxu0
      %v4091 = vadd.f32 0.0, %v4090
      %4092 = vdwg.mxu0
      %v4093 = vadd.f32 %v4019, %v4071
      %v4094 = vadd.f32 %v4020, %v4091
      %v4095 = vmax.f32 %v3731, %v3803
      %v4096 = vmax.f32 %v4095, %v3805
      %v4097 = vmax.f32 %v4096, %v4026
      %v4098 = vld [vmem:[%s3871 + $0x7] sm:$0x1]
      %v4099 = vmax.f32 %v4097, %v4098
      %v4100 = vld [vmem:[%s3871 + $0x8] sm:$0x1]
      %v4101 = vmax.f32 %v4099, %v4100
      %v4102 = vmax.f32 %v4101, %v4031
      %v4103 = vld [vmem:[%s3878 + $0x7] sm:$0x1]
      %v4104 = vmax.f32 %v4102, %v4103
      %v4105 = vld [vmem:[%s3878 + $0x8] sm:$0x1]
      %v4106 = vmax.f32 %v4104, %v4105
      %s4107 = scalar_lea.vmem %s9, 1920
      %v4108 = vld [vmem:[%s4107] sm:$0xff]
      %v4109 = vld [vmem:[%s4107 + $0x8] sm:$0xff]
      %v4110 = vld [vmem:[%s4107 + $0x10] sm:$0xff]
      %v4111 = vld [vmem:[%s4107 + $0x18] sm:$0xff]
      %v4112 = vld [vmem:[%s4107 + $0x20] sm:$0xff]
      %v4113 = vld [vmem:[%s4107 + $0x28] sm:$0xff]
      %v4114 = vld [vmem:[%s4107 + $0x30] sm:$0xff]
      %v4115 = vld [vmem:[%s4107 + $0x38] sm:$0xff]
      %v4116 = vld [vmem:[%s4107 + $0x40] sm:$0xff]
      %v4117 = vld [vmem:[%s4107 + $0x48] sm:$0xff]
      %v4118 = vld [vmem:[%s4107 + $0x50] sm:$0xff]
      %v4119 = vld [vmem:[%s4107 + $0x58] sm:$0xff]
      %v4120 = vld [vmem:[%s4107 + $0x60] sm:$0xff]
      %v4121 = vld [vmem:[%s4107 + $0x68] sm:$0xff]
      %v4122 = vld [vmem:[%s4107 + $0x70] sm:$0xff]
      %v4123 = vld [vmem:[%s4107 + $0x78] sm:$0xff]
      %v4125 = vsel %vm3030, %v4106, 0
      %4127 = vmatpush.msra.mxu0 0.0
      %4128 = vmatpush.msra.mxu0 0.0
      %4129 = vmatpush.msra.mxu0 0.0
      %4130 = vmatpush.msra.mxu0 0.0
      %4131 = vmatpush.msra.mxu0 0.0
      %4132 = vmatpush.msra.mxu0 0.0
      %4133 = vmatpush.msra.mxu0 0.0
      %4134 = vmatpush.msra.mxu0 0.0
      %4135 = vmatpush.msra.mxu0 %v4122
      %4136 = vmatpush.msra.mxu0 %v4120
      %4137 = vmatpush.msra.mxu0 %v4118
      %4138 = vmatpush.msra.mxu0 %v4116
      %4139 = vmatpush.msra.mxu0 %v4114
      %4140 = vmatpush.msra.mxu0 %v4112
      %4141 = vmatpush.msra.mxu0 %v4110
      %4142 = vmatpush.msra.mxu0 %v4108
      %4143 = vmatmul.f32.gmra.mxu0 %v4125
      %v4144 = vpop.f32.mrf.mxu0
      %v4145 = vadd.f32 0.0, %v4144
      %4146 = vdwg.mxu0
      %4147 = vmatpush.msra.mxu0 0.0
      %4148 = vmatpush.msra.mxu0 0.0
      %4149 = vmatpush.msra.mxu0 0.0
      %4150 = vmatpush.msra.mxu0 0.0
      %4151 = vmatpush.msra.mxu0 0.0
      %4152 = vmatpush.msra.mxu0 0.0
      %4153 = vmatpush.msra.mxu0 0.0
      %4154 = vmatpush.msra.mxu0 0.0
      %4155 = vmatpush.msra.mxu0 %v4123
      %4156 = vmatpush.msra.mxu0 %v4121
      %4157 = vmatpush.msra.mxu0 %v4119
      %4158 = vmatpush.msra.mxu0 %v4117
      %4159 = vmatpush.msra.mxu0 %v4115
      %4160 = vmatpush.msra.mxu0 %v4113
      %4161 = vmatpush.msra.mxu0 %v4111
      %4162 = vmatpush.msra.mxu0 %v4109
      %4163 = vmatmul.f32.gmra.mxu0 %v4125
      %v4164 = vpop.f32.mrf.mxu0
      %v4165 = vadd.f32 0.0, %v4164
      %4166 = vdwg.mxu0
      %v4167 = vadd.f32 %v4093, %v4145
      %v4168 = vadd.f32 %v4094, %v4165
      %v4169 = vld [vmem:[%s10] sm:$0x3]
      %v4171 = vperm.slane %v4169, 0
      %v4172 = vperm.slane %v4169, 1
      %v4175 = vadd.f32 %v4167, %v4171
      %v4176 = vadd.f32 %v4168, %v4172
      %vm4177 = vcmp.gt.f32.partialorder %v4175, 0.0
      %vm4178 = vcmp.gt.f32.partialorder %v4176, 0.0
      %v4179 = vmul.f32 %v4175, 0.2
      %v4180 = vmul.f32 %v4176, 0.2
      %v4181 = vsel %vm4177, %v4175, %v4179
      %v4182 = vsel %vm4178, %v4176, %v4180
      %v4183 = vld [vmem:[%s11] sm:$0x3]
      %v4185 = vperm.slane %v4183, 0
      %v4186 = vperm.slane %v4183, 1
      %v4189 = vmul.f32 %v4181, %v4185
      %v4190 = vmul.f32 %v4182, %v4186
      %vm4191 = vcmask 1040384
      %v4192 = vsel %vm4191, %v4189, 0.0
      %v4193 = vsel %vm4191, %v4190, 0.0
      %v4194 = vadd.f32 %v4192, %v4193
      %4195 = vadd.xlane.f32.xlu0 %v4194
      %v4196 = vpop.xlane.xlu0 %4195
      %v4197 = vld [vmem:[#allocation7] sm:$0x1]
      %v4198 = vadd.f32 %v4196, %v4197
      %vm4199 = vcmask 0
      %4200 = vst.msk [vmem:[%s438] sm:$0x1] %vm4199, %v4198
      %p4201 = scmp.lt.s32.totalorder %s26, 1
      %s4202 = scalar_select %p4201, %s26, 1
      %s4203 = scalar_lea.vmem %s13, %s4202
      // Predicated region
      $region108: #{discriminator_forward.1} parent=71 // pred_check
        %p4204 = pneg %p322
      $region109: #{discriminator_forward.1} parent=71 // pred_check_branch
        %4206 = sbr.rel (%p4204) target = $region111
      $region110: #{discriminator_forward.1} parent=71 // pred_region
        _
      $region111: #{discriminator_forward.1} parent=71 // pred_fallthru
        _
    $region72: #{discriminator_forward.1} parent=5 // pred_fallthru
      _
    %p4207 = scmp.le.s32.totalorder 2, %s21
    // Predicated region
    $region112: #{discriminator_forward.1} parent=5 // pred_check
      %p4208 = pneg %p4207
    $region113: #{discriminator_forward.1} parent=5 // pred_check_branch
      %4210 = sbr.rel (%p4208) target = $region115
    $region114: #{discriminator_forward.1} parent=5 // pred_region
      %s4211 = ssub.s32 %s21, 2
      // Predicated region
      $region116: #{discriminator_forward.1} parent=114 // pred_check
        %p4212 = pneg %p328
      $region117: #{discriminator_forward.1} parent=114 // pred_check_branch
        %4214 = sbr.rel (%p4212) target = $region119
      $region118: #{discriminator_forward.1} parent=114 // pred_region
        %p4215 = scmp.lt.s32.totalorder %s27, 1
        %s4216 = scalar_select %p4215, %s27, 1
        %s4217 = scalar_lea.vmem %s13, %s4216
      $region119: #{discriminator_forward.1} parent=114 // pred_fallthru
        _
    $region115: #{discriminator_forward.1} parent=5 // pred_fallthru
      _
  $region6: #{discriminator_forward.1} parent=0 // loop_footer
    %s25 = sadd.s32 1, %s21
  $region7: #{discriminator_forward.1} parent=0 // loop_footer_branch
    %20 = sbr.rel target = $region3
  $region8: #{discriminator_forward.1} parent=0 // loop_exit
    _

</llo_original>
